<compile_context>
chip_gen: v7x
topology: tpu7x:2x2x1
jax: 0.10.0
libtpu: 0.0.40
codegen_flags: <defaults>
</compile_context>

<pallas_src>
import functools

import jax
import jax.numpy as jnp
from jax.experimental import pallas as pl
from jax.experimental.pallas import tpu as pltpu

# ----------------------------- hyperparameters -----------------------------
EMBED_DIM = 64
IMAGE_SIZE = 32
NUM_CLASSES = 10
NUM_HEADS = 8
NUM_LAYERS = 11
PATCH_SIZE = 4
NUM_PATCHES = (IMAGE_SIZE // PATCH_SIZE) ** 2            # 64
FF_DIM = 2048                                            # TransformerEncoderLayer default
HEAD_DIM = EMBED_DIM // NUM_HEADS                         # 8
PATCH_FEATS = 3 * PATCH_SIZE * PATCH_SIZE                 # 48
LN_EPS = 1e-5
BN_EPS = 1e-5


def _detect_ffn_bf16():
    """bf16 elementwise FFN math only where the VPU has native bf16 (v6e/v7x)."""
    try:
        kind = jax.devices()[0].device_kind.lower()
    except Exception:
        return True
    return not any(t in kind for t in ("v5 lite", "v5e", "v5litepod"))


FFN_BF16 = _detect_ffn_bf16()


# --------------------------- single fused kernel ----------------------------
def _vit_kernel(patches_ref, pw_ref, pb_ref, bna_ref, bnc_ref,
                wqkv_ref, bqkv_ref, wo_ref, bo_ref,
                ln1g_ref, ln1b_ref, w1_ref, b1_ref, w2_ref, b2_ref,
                ln2g_ref, ln2b_ref, bigmask_ref, bigmaskt_ref,
                clsw_ref, clsb_ref, d1w_ref, d1b_ref, d2w_ref, d2b_ref,
                logits_ref, recon_ref, h_ref, *, S, N, ffn_bf16):
    """grid=(NUM_LAYERS,). One encoder layer per step; embed at step 0, head at
    the last step. Residual stream (S*N, E) stays resident in VMEM scratch."""
    E, H = EMBED_DIM, NUM_HEADS
    l = pl.program_id(0)

    # ---- step 0: patch embed + eval-BatchNorm + pos embed (dropout == id) ----
    @pl.when(l == 0)
    def _():
        emb = jnp.dot(patches_ref[...].astype(jnp.bfloat16), pw_ref[...],
                      preferred_element_type=jnp.float32) + pb_ref[...]
        a = jnp.concatenate([bna_ref[...]] * S, axis=0)           # (S*N, 1)
        c = jnp.concatenate([bnc_ref[...]] * S, axis=0)           # (S*N, E)
        h_ref[...] = emb * a + c

    h = h_ref[...]                                                # (S*N, E) f32
    hb = h.astype(jnp.bfloat16)

    # ---- fused QKV projection (1/sqrt(Dh) folded into the q columns) ----
    qkv = jnp.dot(hb, wqkv_ref[0], preferred_element_type=jnp.float32) + bqkv_ref[0]
    q, k, v = qkv[:, :E], qkv[:, E:2 * E], qkv[:, 2 * E:]

    # ---- widened attention: mixes over the sequence axis (= batch; the
    #      batch_first=False quirk). One score matmul + one expand matmul. ----
    k_cat = jnp.concatenate([k[j * N:(j + 1) * N] for j in range(S)], axis=-1)
    v_cat = jnp.concatenate([v[j * N:(j + 1) * N] for j in range(S)], axis=-1)
    k_full = jnp.concatenate([k_cat] * S, axis=0)                 # (S*N, S*E)
    v_full = jnp.concatenate([v_cat] * S, axis=0)                 # (S*N, S*E)
    q_full = jnp.concatenate([q] * S, axis=-1)                    # (S*N, S*E)

    s_all = jnp.dot(q_full * k_full, bigmask_ref[...],
                    preferred_element_type=jnp.float32)           # (S*N, S*H)
    m = s_all[:, :H]
    for j in range(1, S):
        m = jnp.maximum(m, s_all[:, j * H:(j + 1) * H])
    p = jnp.exp(s_all - jnp.concatenate([m] * S, axis=-1))
    den = p[:, :H]
    for j in range(1, S):
        den = den + p[:, j * H:(j + 1) * H]
    inv = pl.reciprocal(den, approx=True)                         # (S*N, H)
    p = p * jnp.concatenate([inv] * S, axis=-1)
    wv = jnp.dot(p, bigmaskt_ref[...],
                 preferred_element_type=jnp.float32) * v_full     # (S*N, S*E)
    attn = wv[:, :E]
    for j in range(1, S):
        attn = attn + wv[:, j * E:(j + 1) * E]                    # (S*N, E)

    proj = jnp.dot(attn.astype(jnp.bfloat16), wo_ref[0],
                   preferred_element_type=jnp.float32) + bo_ref[0]

    # ---- residual + LN1 (post-norm, PyTorch default) ----
    x = h + proj
    xc = x - jnp.mean(x, axis=-1, keepdims=True)
    var = jnp.mean(xc * xc, axis=-1, keepdims=True)
    h1 = xc * jax.lax.rsqrt(var + LN_EPS) * ln1g_ref[0] + ln1b_ref[0]

    # ---- FFN (relu); the (S*N, FF_DIM) intermediate never leaves VMEM ----
    ff = jnp.dot(h1.astype(jnp.bfloat16), w1_ref[0],
                 preferred_element_type=jnp.float32) + b1_ref[0]
    if ffn_bf16:
        ff = jnp.maximum(ff.astype(jnp.bfloat16), 0)    # bf16 ReLU (v6e/v7x VPU)
    else:
        ff = jnp.maximum(ff, 0.0).astype(jnp.bfloat16)  # f32 ReLU (v5e: no bf16 VPU)
    y = jnp.dot(ff, w2_ref[0], preferred_element_type=jnp.float32) + b2_ref[0]

    # ---- residual + LN2 ----
    x2 = h1 + y
    xc2 = x2 - jnp.mean(x2, axis=-1, keepdims=True)
    var2 = jnp.mean(xc2 * xc2, axis=-1, keepdims=True)
    h_new = xc2 * jax.lax.rsqrt(var2 + LN_EPS) * ln2g_ref[0] + ln2b_ref[0]
    h_ref[...] = h_new

    # ---- last step: classifier (mean over patches) + flattened decoder ----
    @pl.when(l == pl.num_programs(0) - 1)
    def _():
        xm = jnp.concatenate(
            [jnp.mean(h_new[b * N:(b + 1) * N], axis=0, keepdims=True)
             for b in range(S)], axis=0)                          # (S, E)
        logits_ref[...] = (jnp.dot(xm.astype(jnp.bfloat16), clsw_ref[...],
                                   preferred_element_type=jnp.float32)
                           + clsb_ref[...])
        d = jnp.dot(h_new.astype(jnp.bfloat16), d1w_ref[...],
                    preferred_element_type=jnp.float32) + d1b_ref[...]
        d = jnp.maximum(d, 0.0).astype(jnp.bfloat16)
        recon_ref[...] = jnp.dot(d, d2w_ref[...],
                                 preferred_element_type=jnp.float32) + d2b_ref[...]


def _c2(l):
    return (0, 0)


def _pl3(l):
    return (l, 0, 0)


def vit_pallas(prep, patches, B):
    E, P, L, H = EMBED_DIM, NUM_PATCHES, NUM_LAYERS, NUM_HEADS
    FF, C, F = FF_DIM, NUM_CLASSES, PATCH_FEATS
    S = B                                     # sequence axis = batch (quirk)
    M = S * P

    # block-diagonal head-sum / head-expand masks (tiny constants)
    mask = (jnp.arange(E)[:, None] // HEAD_DIM ==
            jnp.arange(H)[None, :]).astype(jnp.float32)           # (E, H)
    bigmask = jnp.kron(jnp.eye(S, dtype=jnp.float32), mask)       # (S*E, S*H)
    bigmaskt = bigmask.T                                          # (S*H, S*E)

    kernel = functools.partial(_vit_kernel, S=S, N=P, ffn_bf16=FFN_BF16)
    grid_spec = pltpu.PrefetchScalarGridSpec(
        num_scalar_prefetch=0,
        grid=(L,),
        in_specs=[
            pl.BlockSpec((M, F), _c2),                  # patches
            pl.BlockSpec((F, E), _c2),                  # patch_w
            pl.BlockSpec((1, E), _c2),                  # patch_b
            pl.BlockSpec((P, 1), _c2),                  # bn scale
            pl.BlockSpec((P, E), _c2),                  # bn shift + pos embed
            pl.BlockSpec((1, E, 3 * E), _pl3),          # wqkv (fused q|k|v)
            pl.BlockSpec((1, 1, 3 * E), _pl3),          # bqkv
            pl.BlockSpec((1, E, E), _pl3),              # wo
            pl.BlockSpec((1, 1, E), _pl3),              # bo
            pl.BlockSpec((1, 1, E), _pl3),              # ln1 gamma
            pl.BlockSpec((1, 1, E), _pl3),              # ln1 beta
            # TODO(synk): on v5e add pipeline_mode=pl.Buffered(3) to w1/w2 if a
            # profile shows exposed weight DMA.
            pl.BlockSpec((1, E, FF), _pl3),             # w1
            pl.BlockSpec((1, 1, FF), _pl3),             # b1
            pl.BlockSpec((1, FF, E), _pl3),             # w2
            pl.BlockSpec((1, 1, E), _pl3),              # b2
            pl.BlockSpec((1, 1, E), _pl3),              # ln2 gamma
            pl.BlockSpec((1, 1, E), _pl3),              # ln2 beta
            pl.BlockSpec((S * E, S * H), _c2),          # block-diag head-sum mask
            pl.BlockSpec((S * H, S * E), _c2),          # block-diag head-expand mask
            pl.BlockSpec((E, C), _c2),                  # classifier w
            pl.BlockSpec((1, C), _c2),                  # classifier b
            pl.BlockSpec((E, E), _c2),                  # decoder lin1 w
            pl.BlockSpec((1, E), _c2),                  # decoder lin1 b
            pl.BlockSpec((E, F), _c2),                  # decoder lin2 w
            pl.BlockSpec((1, F), _c2),                  # decoder lin2 b
        ],
        out_specs=(pl.BlockSpec((S, C), _c2),           # logits (written at last step)
                   pl.BlockSpec((M, F), _c2)),          # recon  (written at last step)
        scratch_shapes=[pltpu.VMEM((M, E), jnp.float32)],   # resident residual stream
    )
    return pl.pallas_call(
        kernel,
        out_shape=(jax.ShapeDtypeStruct((S, C), jnp.float32),
                   jax.ShapeDtypeStruct((M, F), jnp.float32)),
        grid_spec=grid_spec,
        compiler_params=pltpu.CompilerParams(dimension_semantics=("arbitrary",)),
    )(patches,
      prep["patch_w"], prep["patch_b"], prep["bn_a"], prep["bn_c"],
      prep["wqkv"], prep["bqkv"], prep["wo"], prep["bo"],
      prep["ln1g"], prep["ln1b"], prep["w1"], prep["b1"],
      prep["w2"], prep["b2"], prep["ln2g"], prep["ln2b"],
      bigmask, bigmaskt,
      prep["cls_w"], prep["cls_b"],
      prep["dec1_w"], prep["dec1_b"], prep["dec2_w"], prep["dec2_b"])


# ------------------------------- parameters --------------------------------
def init_params(key):
    keys = iter(jax.random.split(key, 160))

    def randn(shape, std=0.05):
        return std * jax.random.normal(next(keys), shape, jnp.float32)

    p = {
        "patch_w": randn((EMBED_DIM, 3, PATCH_SIZE, PATCH_SIZE), 0.1),
        "patch_b": randn((EMBED_DIM,), 0.1),
        "bn_gamma": 1.0 + randn((NUM_PATCHES,)),
        "bn_beta": randn((NUM_PATCHES,)),
        "bn_mean": randn((NUM_PATCHES,)),
        "bn_var": 1.0 + jnp.abs(randn((NUM_PATCHES,))),
        "pos_embed": randn((1, NUM_PATCHES, EMBED_DIM), 0.02),
        "cls_w": randn((NUM_CLASSES, EMBED_DIM)),
        "cls_b": randn((NUM_CLASSES,)),
        "dec1_w": randn((EMBED_DIM, EMBED_DIM)),
        "dec1_b": randn((EMBED_DIM,)),
        "dec2_w": randn((PATCH_FEATS, EMBED_DIM)),
        "dec2_b": randn((PATCH_FEATS,)),
    }
    layers = []
    for _ in range(NUM_LAYERS):
        layers.append(dict(
            in_proj_w=randn((3 * EMBED_DIM, EMBED_DIM)),
            in_proj_b=randn((3 * EMBED_DIM,)),
            out_proj_w=randn((EMBED_DIM, EMBED_DIM)),
            out_proj_b=randn((EMBED_DIM,)),
            lin1_w=randn((FF_DIM, EMBED_DIM)),
            lin1_b=randn((FF_DIM,)),
            lin2_w=randn((EMBED_DIM, FF_DIM)),
            lin2_b=randn((EMBED_DIM,)),
            ln1_g=1.0 + randn((EMBED_DIM,)),
            ln1_b=randn((EMBED_DIM,)),
            ln2_g=1.0 + randn((EMBED_DIM,)),
            ln2_b=randn((EMBED_DIM,)),
        ))
    p["layers"] = layers
    return p


def prepare_params(p):
    """One-time prep: transpose to (K, N), fuse q|k|v, stack over layers, bf16-cast."""
    E = EMBED_DIM
    scale = 1.0 / (HEAD_DIM ** 0.5)
    layers = p["layers"]

    def qkv_w(lp):
        w = lp["in_proj_w"]                                   # (3E, E)
        return jnp.concatenate([w[:E].T * scale, w[E:2 * E].T, w[2 * E:].T], axis=1)

    def qkv_b(lp):
        b = lp["in_proj_b"]
        return jnp.concatenate([b[:E] * scale, b[E:2 * E], b[2 * E:]]).reshape(1, 3 * E)

    sp = {
        "wqkv": jnp.stack([qkv_w(lp) for lp in layers]).astype(jnp.bfloat16),   # (L,E,3E)
        "bqkv": jnp.stack([qkv_b(lp) for lp in layers]).astype(jnp.float32),    # (L,1,3E)
        "wo": jnp.stack([lp["out_proj_w"].T for lp in layers]).astype(jnp.bfloat16),
        "bo": jnp.stack([lp["out_proj_b"].reshape(1, E) for lp in layers]),
        "w1": jnp.stack([lp["lin1_w"].T for lp in layers]).astype(jnp.bfloat16),  # (L,E,FF)
        "b1": jnp.stack([lp["lin1_b"].reshape(1, FF_DIM) for lp in layers]),
        "w2": jnp.stack([lp["lin2_w"].T for lp in layers]).astype(jnp.bfloat16),  # (L,FF,E)
        "b2": jnp.stack([lp["lin2_b"].reshape(1, E) for lp in layers]),
        "ln1g": jnp.stack([lp["ln1_g"].reshape(1, E) for lp in layers]),
        "ln1b": jnp.stack([lp["ln1_b"].reshape(1, E) for lp in layers]),
        "ln2g": jnp.stack([lp["ln2_g"].reshape(1, E) for lp in layers]),
        "ln2b": jnp.stack([lp["ln2_b"].reshape(1, E) for lp in layers]),
    }

    # patch embed + folded eval-mode BatchNorm + pos embed
    sp["patch_w"] = p["patch_w"].reshape(E, -1).T.astype(jnp.bfloat16)   # (48, E)
    sp["patch_b"] = p["patch_b"].reshape(1, E)
    bn_a = p["bn_gamma"] / jnp.sqrt(p["bn_var"] + BN_EPS)                # (P,)
    bn_shift = p["bn_beta"] - p["bn_mean"] * bn_a
    sp["bn_a"] = bn_a[:, None].astype(jnp.float32)                       # (P, 1)
    sp["bn_c"] = (bn_shift[:, None] + p["pos_embed"][0]).astype(jnp.float32)  # (P, E)

    # head (classifier + decoder)
    sp["cls_w"] = p["cls_w"].T.astype(jnp.bfloat16)        # (E, C)
    sp["cls_b"] = p["cls_b"].reshape(1, NUM_CLASSES)
    sp["dec1_w"] = p["dec1_w"].T.astype(jnp.bfloat16)      # (E, E)
    sp["dec1_b"] = p["dec1_b"].reshape(1, E)
    sp["dec2_w"] = p["dec2_w"].T.astype(jnp.bfloat16)      # (E, 48)
    sp["dec2_b"] = p["dec2_b"].reshape(1, PATCH_FEATS)
    return sp


# --------------------------------- forward ----------------------------------
def vit_forward(prep, x):
    B = x.shape[0]
    Hp = IMAGE_SIZE // PATCH_SIZE

    # patch extraction: Conv2d(3, E, k=4, s=4) == per-patch matmul
    patches = x.reshape(B, 3, Hp, PATCH_SIZE, Hp, PATCH_SIZE)
    patches = patches.transpose(0, 2, 4, 1, 3, 5).reshape(B * NUM_PATCHES, PATCH_FEATS)

    logits, recon = vit_pallas(prep, patches, B)

    # same naive reassembly as the PyTorch reference
    x_recon = (recon.reshape(B, NUM_PATCHES, PATCH_FEATS)
                    .transpose(0, 2, 1)
                    .reshape(B, 3, IMAGE_SIZE, IMAGE_SIZE))
    return logits, x_recon


# ----------------------------------- main ------------------------------------
if __name__ == "__main__":
    key = jax.random.PRNGKey(0)
    pkey, xkey = jax.random.split(key)
    params = init_params(pkey)
    prep = prepare_params(params)                     # one-time weight prep (outside jit)
    x = jax.random.normal(xkey, (2, 3, IMAGE_SIZE, IMAGE_SIZE), jnp.float32)

    fwd = jax.jit(vit_forward)
    logits, x_recon = fwd(prep, x)
    jax.block_until_ready((logits, x_recon))

    assert logits.shape == (2, NUM_CLASSES)
    assert x_recon.shape == (2, 3, IMAGE_SIZE, IMAGE_SIZE)
    assert logits.dtype == jnp.float32 and x_recon.dtype == jnp.float32
    assert bool(jnp.all(jnp.isfinite(logits)))
    assert bool(jnp.all(jnp.isfinite(x_recon)))
    print("KERNEL_OK")
</pallas_src>

<mosaic_0001>
module attributes {stable_mosaic.version = 11 : i64} {
  func.func @_vit_kernel(%arg0: i32, %arg1: memref<128x48xf32, #tpu.memory_space<vmem>>, %arg2: memref<48x64xbf16, #tpu.memory_space<vmem>>, %arg3: memref<1x64xf32, #tpu.memory_space<vmem>>, %arg4: memref<64x1xf32, #tpu.memory_space<vmem>>, %arg5: memref<64x64xf32, #tpu.memory_space<vmem>>, %arg6: memref<1x64x192xbf16, #tpu.memory_space<vmem>>, %arg7: memref<1x1x192xf32, #tpu.memory_space<vmem>>, %arg8: memref<1x64x64xbf16, #tpu.memory_space<vmem>>, %arg9: memref<1x1x64xf32, #tpu.memory_space<vmem>>, %arg10: memref<1x1x64xf32, #tpu.memory_space<vmem>>, %arg11: memref<1x1x64xf32, #tpu.memory_space<vmem>>, %arg12: memref<1x64x2048xbf16, #tpu.memory_space<vmem>>, %arg13: memref<1x1x2048xf32, #tpu.memory_space<vmem>>, %arg14: memref<1x2048x64xbf16, #tpu.memory_space<vmem>>, %arg15: memref<1x1x64xf32, #tpu.memory_space<vmem>>, %arg16: memref<1x1x64xf32, #tpu.memory_space<vmem>>, %arg17: memref<1x1x64xf32, #tpu.memory_space<vmem>>, %arg18: memref<128x16xf32, #tpu.memory_space<vmem>>, %arg19: memref<16x128xf32, #tpu.memory_space<vmem>>, %arg20: memref<64x10xbf16, #tpu.memory_space<vmem>>, %arg21: memref<1x10xf32, #tpu.memory_space<vmem>>, %arg22: memref<64x64xbf16, #tpu.memory_space<vmem>>, %arg23: memref<1x64xf32, #tpu.memory_space<vmem>>, %arg24: memref<64x48xbf16, #tpu.memory_space<vmem>>, %arg25: memref<1x48xf32, #tpu.memory_space<vmem>>, %arg26: memref<2x10xf32, #tpu.memory_space<vmem>>, %arg27: memref<128x48xf32, #tpu.memory_space<vmem>>, %arg28: memref<128x64xf32, #tpu.memory_space<vmem>>) attributes {dimension_semantics = [#tpu.dimension_semantics<arbitrary>], iteration_bounds = array<i64: 11>, scalar_prefetch = 0 : i64, scratch_operands = 1 : i64, tpu.core_type = #tpu.core_type<tc>, window_params = [{pipeline_mode = #tpu.pipeline_mode<synchronous>, transform_indices = @transform_0, window_bounds = array<i64: 128, 48>}, {pipeline_mode = #tpu.pipeline_mode<synchronous>, transform_indices = @transform_1, window_bounds = array<i64: 48, 64>}, {pipeline_mode = #tpu.pipeline_mode<synchronous>, transform_indices = @transform_2, window_bounds = array<i64: 1, 64>}, {pipeline_mode = #tpu.pipeline_mode<synchronous>, transform_indices = @transform_3, window_bounds = array<i64: 64, 1>}, {pipeline_mode = #tpu.pipeline_mode<synchronous>, transform_indices = @transform_4, window_bounds = array<i64: 64, 64>}, {transform_indices = @transform_5, window_bounds = array<i64: 1, 64, 192>}, {transform_indices = @transform_6, window_bounds = array<i64: 1, 1, 192>}, {transform_indices = @transform_7, window_bounds = array<i64: 1, 64, 64>}, {transform_indices = @transform_8, window_bounds = array<i64: 1, 1, 64>}, {transform_indices = @transform_9, window_bounds = array<i64: 1, 1, 64>}, {transform_indices = @transform_10, window_bounds = array<i64: 1, 1, 64>}, {transform_indices = @transform_11, window_bounds = array<i64: 1, 64, 2048>}, {transform_indices = @transform_12, window_bounds = array<i64: 1, 1, 2048>}, {transform_indices = @transform_13, window_bounds = array<i64: 1, 2048, 64>}, {transform_indices = @transform_14, window_bounds = array<i64: 1, 1, 64>}, {transform_indices = @transform_15, window_bounds = array<i64: 1, 1, 64>}, {transform_indices = @transform_16, window_bounds = array<i64: 1, 1, 64>}, {pipeline_mode = #tpu.pipeline_mode<synchronous>, transform_indices = @transform_17, window_bounds = array<i64: 128, 16>}, {pipeline_mode = #tpu.pipeline_mode<synchronous>, transform_indices = @transform_18, window_bounds = array<i64: 16, 128>}, {pipeline_mode = #tpu.pipeline_mode<synchronous>, transform_indices = @transform_19, window_bounds = array<i64: 64, 10>}, {pipeline_mode = #tpu.pipeline_mode<synchronous>, transform_indices = @transform_20, window_bounds = array<i64: 1, 10>}, {pipeline_mode = #tpu.pipeline_mode<synchronous>, transform_indices = @transform_21, window_bounds = array<i64: 64, 64>}, {pipeline_mode = #tpu.pipeline_mode<synchronous>, transform_indices = @transform_22, window_bounds = array<i64: 1, 64>}, {pipeline_mode = #tpu.pipeline_mode<synchronous>, transform_indices = @transform_23, window_bounds = array<i64: 64, 48>}, {pipeline_mode = #tpu.pipeline_mode<synchronous>, transform_indices = @transform_24, window_bounds = array<i64: 1, 48>}, {pipeline_mode = #tpu.pipeline_mode<synchronous>, transform_indices = @transform_25, window_bounds = array<i64: 2, 10>}, {pipeline_mode = #tpu.pipeline_mode<synchronous>, transform_indices = @transform_26, window_bounds = array<i64: 128, 48>}]} {
    %c0_i32 = arith.constant 0 : i32
    %0 = arith.cmpi eq, %arg0, %c0_i32 : i32
    %1 = arith.extui %0 : i1 to i32
    %c0_i32_0 = arith.constant 0 : i32
    %2 = arith.cmpi ne, %1, %c0_i32_0 : i32
    scf.if %2 {
      %c0_61 = arith.constant 0 : index
      %c0_62 = arith.constant 0 : index
      %125 = vector.load %arg1[%c0_61, %c0_62] : memref<128x48xf32, #tpu.memory_space<vmem>>, vector<128x48xf32>
      %126 = arith.truncf %125 : vector<128x48xf32> to vector<128x48xbf16>
      %c0_63 = arith.constant 0 : index
      %c0_64 = arith.constant 0 : index
      %127 = vector.load %arg2[%c0_63, %c0_64] : memref<48x64xbf16, #tpu.memory_space<vmem>>, vector<48x64xbf16>
      %cst_65 = arith.constant dense<0.000000e+00> : vector<128x64xf32>
      %128 = tpu.matmul %126, %127, %cst_65 {dimension_numbers = #tpu.dot_dimension_numbers<[1], [0], [0], [1], [0, 0, 1, 1], [], []>} : vector<128x48xbf16>, vector<48x64xbf16>, vector<128x64xf32> -> vector<128x64xf32>
      %c0_66 = arith.constant 0 : index
      %c0_67 = arith.constant 0 : index
      %129 = vector.load %arg3[%c0_66, %c0_67] : memref<1x64xf32, #tpu.memory_space<vmem>>, vector<1x64xf32>
      %130 = vector.broadcast %129 : vector<1x64xf32> to vector<128x64xf32>
      %131 = arith.addf %128, %130 : vector<128x64xf32>
      %c0_68 = arith.constant 0 : index
      %c0_69 = arith.constant 0 : index
      %132 = vector.load %arg4[%c0_68, %c0_69] : memref<64x1xf32, #tpu.memory_space<vmem>>, vector<64x1xf32>
      %133 = tpu.concatenate %132, %132 in 0 : vector<64x1xf32>, vector<64x1xf32> -> vector<128x1xf32>
      %c0_70 = arith.constant 0 : index
      %c0_71 = arith.constant 0 : index
      %134 = vector.load %arg5[%c0_70, %c0_71] : memref<64x64xf32, #tpu.memory_space<vmem>>, vector<64x64xf32>
      %135 = tpu.concatenate %134, %134 in 0 : vector<64x64xf32>, vector<64x64xf32> -> vector<128x64xf32>
      %136 = vector.broadcast %133 : vector<128x1xf32> to vector<128x64xf32>
      %137 = arith.mulf %131, %136 : vector<128x64xf32>
      %138 = arith.addf %137, %135 : vector<128x64xf32>
      %c0_72 = arith.constant 0 : index
      %c0_73 = arith.constant 0 : index
      %139 = vector.load %arg28[%c0_72, %c0_73] : memref<128x64xf32, #tpu.memory_space<vmem>>, vector<128x64xf32>
      tpu.vector_store %arg28[%c0_72, %c0_73], %138 {strides = array<i32>} : memref<128x64xf32, #tpu.memory_space<vmem>>, vector<128x64xf32>,
    } else {
    }
    %c0 = arith.constant 0 : index
    %c0_1 = arith.constant 0 : index
    %3 = vector.load %arg28[%c0, %c0_1] : memref<128x64xf32, #tpu.memory_space<vmem>>, vector<128x64xf32>
    %4 = arith.truncf %3 : vector<128x64xf32> to vector<128x64xbf16>
    %c0_2 = arith.constant 0 : index
    %c0_3 = arith.constant 0 : index
    %c0_4 = arith.constant 0 : index
    %5 = vector.load %arg6[%c0_2, %c0_3, %c0_4] : memref<1x64x192xbf16, #tpu.memory_space<vmem>>, vector<1x64x192xbf16>
    %6 = vector.shape_cast %5 : vector<1x64x192xbf16> to vector<64x192xbf16>
    %cst = arith.constant dense<0.000000e+00> : vector<128x192xf32>
    %7 = tpu.matmul %4, %6, %cst {dimension_numbers = #tpu.dot_dimension_numbers<[1], [0], [0], [1], [0, 0, 1, 1], [], []>} : vector<128x64xbf16>, vector<64x192xbf16>, vector<128x192xf32> -> vector<128x192xf32>
    %c0_5 = arith.constant 0 : index
    %c0_6 = arith.constant 0 : index
    %c0_7 = arith.constant 0 : index
    %8 = vector.load %arg7[%c0_5, %c0_6, %c0_7] : memref<1x1x192xf32, #tpu.memory_space<vmem>>, vector<1x1x192xf32>
    %9 = vector.shape_cast %8 : vector<1x1x192xf32> to vector<1x192xf32>
    %10 = vector.broadcast %9 : vector<1x192xf32> to vector<128x192xf32>
    %11 = arith.addf %7, %10 : vector<128x192xf32>
    %12 = vector.extract_strided_slice %11 {offsets = [0, 0], sizes = [128, 64], strides = [1, 1]} : vector<128x192xf32> to vector<128x64xf32>
    %13 = vector.extract_strided_slice %11 {offsets = [0, 64], sizes = [128, 64], strides = [1, 1]} : vector<128x192xf32> to vector<128x64xf32>
    %14 = vector.extract_strided_slice %11 {offsets = [0, 128], sizes = [128, 64], strides = [1, 1]} : vector<128x192xf32> to vector<128x64xf32>
    %15 = vector.extract_strided_slice %13 {offsets = [0, 0], sizes = [64, 64], strides = [1, 1]} : vector<128x64xf32> to vector<64x64xf32>
    %16 = vector.extract_strided_slice %13 {offsets = [64, 0], sizes = [64, 64], strides = [1, 1]} : vector<128x64xf32> to vector<64x64xf32>
    %17 = tpu.concatenate %15, %16 in 1 : vector<64x64xf32>, vector<64x64xf32> -> vector<64x128xf32>
    %18 = vector.extract_strided_slice %14 {offsets = [0, 0], sizes = [64, 64], strides = [1, 1]} : vector<128x64xf32> to vector<64x64xf32>
    %19 = vector.extract_strided_slice %14 {offsets = [64, 0], sizes = [64, 64], strides = [1, 1]} : vector<128x64xf32> to vector<64x64xf32>
    %20 = tpu.concatenate %18, %19 in 1 : vector<64x64xf32>, vector<64x64xf32> -> vector<64x128xf32>
    %21 = tpu.concatenate %17, %17 in 0 : vector<64x128xf32>, vector<64x128xf32> -> vector<128x128xf32>
    %22 = tpu.concatenate %20, %20 in 0 : vector<64x128xf32>, vector<64x128xf32> -> vector<128x128xf32>
    %23 = tpu.concatenate %12, %12 in 1 : vector<128x64xf32>, vector<128x64xf32> -> vector<128x128xf32>
    %24 = arith.mulf %23, %21 : vector<128x128xf32>
    %c0_8 = arith.constant 0 : index
    %c0_9 = arith.constant 0 : index
    %25 = vector.load %arg18[%c0_8, %c0_9] : memref<128x16xf32, #tpu.memory_space<vmem>>, vector<128x16xf32>
    %cst_10 = arith.constant dense<0.000000e+00> : vector<128x16xf32>
    %26 = tpu.matmul %24, %25, %cst_10 {dimension_numbers = #tpu.dot_dimension_numbers<[1], [0], [0], [1], [0, 0, 1, 1], [], []>} : vector<128x128xf32>, vector<128x16xf32>, vector<128x16xf32> -> vector<128x16xf32>
    %27 = vector.extract_strided_slice %26 {offsets = [0, 0], sizes = [128, 8], strides = [1, 1]} : vector<128x16xf32> to vector<128x8xf32>
    %28 = vector.extract_strided_slice %26 {offsets = [0, 8], sizes = [128, 8], strides = [1, 1]} : vector<128x16xf32> to vector<128x8xf32>
    %29 = arith.maximumf %27, %28 : vector<128x8xf32>
    %30 = tpu.concatenate %29, %29 in 1 : vector<128x8xf32>, vector<128x8xf32> -> vector<128x16xf32>
    %31 = arith.subf %26, %30 : vector<128x16xf32>
    %32 = math.exp %31 : vector<128x16xf32>
    %33 = vector.extract_strided_slice %32 {offsets = [0, 0], sizes = [128, 8], strides = [1, 1]} : vector<128x16xf32> to vector<128x8xf32>
    %34 = vector.extract_strided_slice %32 {offsets = [0, 8], sizes = [128, 8], strides = [1, 1]} : vector<128x16xf32> to vector<128x8xf32>
    %35 = arith.addf %33, %34 : vector<128x8xf32>
    %36 = tpu.reciprocal %35 {approx = true} : vector<128x8xf32> -> vector<128x8xf32>
    %37 = tpu.concatenate %36, %36 in 1 : vector<128x8xf32>, vector<128x8xf32> -> vector<128x16xf32>
    %38 = arith.mulf %32, %37 : vector<128x16xf32>
    %c0_11 = arith.constant 0 : index
    %c0_12 = arith.constant 0 : index
    %39 = vector.load %arg19[%c0_11, %c0_12] : memref<16x128xf32, #tpu.memory_space<vmem>>, vector<16x128xf32>
    %cst_13 = arith.constant dense<0.000000e+00> : vector<128x128xf32>
    %40 = tpu.matmul %38, %39, %cst_13 {dimension_numbers = #tpu.dot_dimension_numbers<[1], [0], [0], [1], [0, 0, 1, 1], [], []>} : vector<128x16xf32>, vector<16x128xf32>, vector<128x128xf32> -> vector<128x128xf32>
    %41 = arith.mulf %40, %22 : vector<128x128xf32>
    %42 = vector.extract_strided_slice %41 {offsets = [0, 0], sizes = [128, 64], strides = [1, 1]} : vector<128x128xf32> to vector<128x64xf32>
    %43 = vector.extract_strided_slice %41 {offsets = [0, 64], sizes = [128, 64], strides = [1, 1]} : vector<128x128xf32> to vector<128x64xf32>
    %44 = arith.addf %42, %43 : vector<128x64xf32>
    %45 = arith.truncf %44 : vector<128x64xf32> to vector<128x64xbf16>
    %c0_14 = arith.constant 0 : index
    %c0_15 = arith.constant 0 : index
    %c0_16 = arith.constant 0 : index
    %46 = vector.load %arg8[%c0_14, %c0_15, %c0_16] : memref<1x64x64xbf16, #tpu.memory_space<vmem>>, vector<1x64x64xbf16>
    %47 = vector.shape_cast %46 : vector<1x64x64xbf16> to vector<64x64xbf16>
    %cst_17 = arith.constant dense<0.000000e+00> : vector<128x64xf32>
    %48 = tpu.matmul %45, %47, %cst_17 {dimension_numbers = #tpu.dot_dimension_numbers<[1], [0], [0], [1], [0, 0, 1, 1], [], []>} : vector<128x64xbf16>, vector<64x64xbf16>, vector<128x64xf32> -> vector<128x64xf32>
    %c0_18 = arith.constant 0 : index
    %c0_19 = arith.constant 0 : index
    %c0_20 = arith.constant 0 : index
    %49 = vector.load %arg9[%c0_18, %c0_19, %c0_20] : memref<1x1x64xf32, #tpu.memory_space<vmem>>, vector<1x1x64xf32>
    %50 = vector.shape_cast %49 : vector<1x1x64xf32> to vector<1x64xf32>
    %51 = vector.broadcast %50 : vector<1x64xf32> to vector<128x64xf32>
    %52 = arith.addf %48, %51 : vector<128x64xf32>
    %53 = arith.addf %3, %52 : vector<128x64xf32>
    %cst_21 = arith.constant dense<0.000000e+00> : vector<128xf32>
    %54 = vector.multi_reduction <add>, %53, %cst_21 [1] : vector<128x64xf32> to vector<128xf32>
    %55 = vector.shape_cast %54 : vector<128xf32> to vector<128x1xf32>
    %cst_22 = arith.constant 6.400000e+01 : f32
    %56 = vector.broadcast %cst_22 : f32 to vector<128x1xf32>
    %57 = arith.divf %55, %56 : vector<128x1xf32>
    %58 = vector.broadcast %57 : vector<128x1xf32> to vector<128x64xf32>
    %59 = arith.subf %53, %58 : vector<128x64xf32>
    %60 = arith.mulf %59, %59 : vector<128x64xf32>
    %cst_23 = arith.constant dense<0.000000e+00> : vector<128xf32>
    %61 = vector.multi_reduction <add>, %60, %cst_23 [1] : vector<128x64xf32> to vector<128xf32>
    %62 = vector.shape_cast %61 : vector<128xf32> to vector<128x1xf32>
    %cst_24 = arith.constant 6.400000e+01 : f32
    %63 = vector.broadcast %cst_24 : f32 to vector<128x1xf32>
    %64 = arith.divf %62, %63 : vector<128x1xf32>
    %cst_25 = arith.constant 9.99999974E-6 : f32
    %65 = vector.broadcast %cst_25 : f32 to vector<128x1xf32>
    %66 = arith.addf %64, %65 : vector<128x1xf32>
    %67 = math.rsqrt %66 : vector<128x1xf32>
    %68 = vector.broadcast %67 : vector<128x1xf32> to vector<128x64xf32>
    %69 = arith.mulf %59, %68 : vector<128x64xf32>
    %c0_26 = arith.constant 0 : index
    %c0_27 = arith.constant 0 : index
    %c0_28 = arith.constant 0 : index
    %70 = vector.load %arg10[%c0_26, %c0_27, %c0_28] : memref<1x1x64xf32, #tpu.memory_space<vmem>>, vector<1x1x64xf32>
    %71 = vector.shape_cast %70 : vector<1x1x64xf32> to vector<1x64xf32>
    %72 = vector.broadcast %71 : vector<1x64xf32> to vector<128x64xf32>
    %73 = arith.mulf %69, %72 : vector<128x64xf32>
    %c0_29 = arith.constant 0 : index
    %c0_30 = arith.constant 0 : index
    %c0_31 = arith.constant 0 : index
    %74 = vector.load %arg11[%c0_29, %c0_30, %c0_31] : memref<1x1x64xf32, #tpu.memory_space<vmem>>, vector<1x1x64xf32>
    %75 = vector.shape_cast %74 : vector<1x1x64xf32> to vector<1x64xf32>
    %76 = vector.broadcast %75 : vector<1x64xf32> to vector<128x64xf32>
    %77 = arith.addf %73, %76 : vector<128x64xf32>
    %78 = arith.truncf %77 : vector<128x64xf32> to vector<128x64xbf16>
    %c0_32 = arith.constant 0 : index
    %c0_33 = arith.constant 0 : index
    %c0_34 = arith.constant 0 : index
    %79 = vector.load %arg12[%c0_32, %c0_33, %c0_34] : memref<1x64x2048xbf16, #tpu.memory_space<vmem>>, vector<1x64x2048xbf16>
    %80 = vector.shape_cast %79 : vector<1x64x2048xbf16> to vector<64x2048xbf16>
    %cst_35 = arith.constant dense<0.000000e+00> : vector<128x2048xf32>
    %81 = tpu.matmul %78, %80, %cst_35 {dimension_numbers = #tpu.dot_dimension_numbers<[1], [0], [0], [1], [0, 0, 1, 1], [], []>} : vector<128x64xbf16>, vector<64x2048xbf16>, vector<128x2048xf32> -> vector<128x2048xf32>
    %c0_36 = arith.constant 0 : index
    %c0_37 = arith.constant 0 : index
    %c0_38 = arith.constant 0 : index
    %82 = vector.load %arg13[%c0_36, %c0_37, %c0_38] : memref<1x1x2048xf32, #tpu.memory_space<vmem>>, vector<1x1x2048xf32>
    %83 = vector.shape_cast %82 : vector<1x1x2048xf32> to vector<1x2048xf32>
    %84 = vector.broadcast %83 : vector<1x2048xf32> to vector<128x2048xf32>
    %85 = arith.addf %81, %84 : vector<128x2048xf32>
    %86 = arith.truncf %85 : vector<128x2048xf32> to vector<128x2048xbf16>
    %cst_39 = arith.constant 0.000000e+00 : bf16
    %87 = vector.broadcast %cst_39 : bf16 to vector<128x2048xbf16>
    %88 = arith.maximumf %86, %87 : vector<128x2048xbf16>
    %c0_40 = arith.constant 0 : index
    %c0_41 = arith.constant 0 : index
    %c0_42 = arith.constant 0 : index
    %89 = vector.load %arg14[%c0_40, %c0_41, %c0_42] : memref<1x2048x64xbf16, #tpu.memory_space<vmem>>, vector<1x2048x64xbf16>
    %90 = vector.shape_cast %89 : vector<1x2048x64xbf16> to vector<2048x64xbf16>
    %cst_43 = arith.constant dense<0.000000e+00> : vector<128x64xf32>
    %91 = tpu.matmul %88, %90, %cst_43 {dimension_numbers = #tpu.dot_dimension_numbers<[1], [0], [0], [1], [0, 0, 1, 1], [], []>} : vector<128x2048xbf16>, vector<2048x64xbf16>, vector<128x64xf32> -> vector<128x64xf32>
    %c0_44 = arith.constant 0 : index
    %c0_45 = arith.constant 0 : index
    %c0_46 = arith.constant 0 : index
    %92 = vector.load %arg15[%c0_44, %c0_45, %c0_46] : memref<1x1x64xf32, #tpu.memory_space<vmem>>, vector<1x1x64xf32>
    %93 = vector.shape_cast %92 : vector<1x1x64xf32> to vector<1x64xf32>
    %94 = vector.broadcast %93 : vector<1x64xf32> to vector<128x64xf32>
    %95 = arith.addf %91, %94 : vector<128x64xf32>
    %96 = arith.addf %77, %95 : vector<128x64xf32>
    %cst_47 = arith.constant dense<0.000000e+00> : vector<128xf32>
    %97 = vector.multi_reduction <add>, %96, %cst_47 [1] : vector<128x64xf32> to vector<128xf32>
    %98 = vector.shape_cast %97 : vector<128xf32> to vector<128x1xf32>
    %cst_48 = arith.constant 6.400000e+01 : f32
    %99 = vector.broadcast %cst_48 : f32 to vector<128x1xf32>
    %100 = arith.divf %98, %99 : vector<128x1xf32>
    %101 = vector.broadcast %100 : vector<128x1xf32> to vector<128x64xf32>
    %102 = arith.subf %96, %101 : vector<128x64xf32>
    %103 = arith.mulf %102, %102 : vector<128x64xf32>
    %cst_49 = arith.constant dense<0.000000e+00> : vector<128xf32>
    %104 = vector.multi_reduction <add>, %103, %cst_49 [1] : vector<128x64xf32> to vector<128xf32>
    %105 = vector.shape_cast %104 : vector<128xf32> to vector<128x1xf32>
    %cst_50 = arith.constant 6.400000e+01 : f32
    %106 = vector.broadcast %cst_50 : f32 to vector<128x1xf32>
    %107 = arith.divf %105, %106 : vector<128x1xf32>
    %cst_51 = arith.constant 9.99999974E-6 : f32
    %108 = vector.broadcast %cst_51 : f32 to vector<128x1xf32>
    %109 = arith.addf %107, %108 : vector<128x1xf32>
    %110 = math.rsqrt %109 : vector<128x1xf32>
    %111 = vector.broadcast %110 : vector<128x1xf32> to vector<128x64xf32>
    %112 = arith.mulf %102, %111 : vector<128x64xf32>
    %c0_52 = arith.constant 0 : index
    %c0_53 = arith.constant 0 : index
    %c0_54 = arith.constant 0 : index
    %113 = vector.load %arg16[%c0_52, %c0_53, %c0_54] : memref<1x1x64xf32, #tpu.memory_space<vmem>>, vector<1x1x64xf32>
    %114 = vector.shape_cast %113 : vector<1x1x64xf32> to vector<1x64xf32>
    %115 = vector.broadcast %114 : vector<1x64xf32> to vector<128x64xf32>
    %116 = arith.mulf %112, %115 : vector<128x64xf32>
    %c0_55 = arith.constant 0 : index
    %c0_56 = arith.constant 0 : index
    %c0_57 = arith.constant 0 : index
    %117 = vector.load %arg17[%c0_55, %c0_56, %c0_57] : memref<1x1x64xf32, #tpu.memory_space<vmem>>, vector<1x1x64xf32>
    %118 = vector.shape_cast %117 : vector<1x1x64xf32> to vector<1x64xf32>
    %119 = vector.broadcast %118 : vector<1x64xf32> to vector<128x64xf32>
    %120 = arith.addf %116, %119 : vector<128x64xf32>
    %c0_58 = arith.constant 0 : index
    %c0_59 = arith.constant 0 : index
    %121 = vector.load %arg28[%c0_58, %c0_59] : memref<128x64xf32, #tpu.memory_space<vmem>>, vector<128x64xf32>
    tpu.vector_store %arg28[%c0_58, %c0_59], %120 {strides = array<i32>} : memref<128x64xf32, #tpu.memory_space<vmem>>, vector<128x64xf32>,
    %c10_i32 = arith.constant 10 : i32
    %122 = arith.cmpi eq, %arg0, %c10_i32 : i32
    %123 = arith.extui %122 : i1 to i32
    %c0_i32_60 = arith.constant 0 : i32
    %124 = arith.cmpi ne, %123, %c0_i32_60 : i32
    scf.if %124 {
      %125 = vector.extract_strided_slice %120 {offsets = [0, 0], sizes = [64, 64], strides = [1, 1]} : vector<128x64xf32> to vector<64x64xf32>
      %cst_61 = arith.constant dense<0.000000e+00> : vector<64xf32>
      %126 = vector.multi_reduction <add>, %125, %cst_61 [0] : vector<64x64xf32> to vector<64xf32>
      %127 = vector.shape_cast %126 : vector<64xf32> to vector<1x64xf32>
      %cst_62 = arith.constant 6.400000e+01 : f32
      %128 = vector.broadcast %cst_62 : f32 to vector<1x64xf32>
      %129 = arith.divf %127, %128 : vector<1x64xf32>
      %130 = vector.extract_strided_slice %120 {offsets = [64, 0], sizes = [64, 64], strides = [1, 1]} : vector<128x64xf32> to vector<64x64xf32>
      %cst_63 = arith.constant dense<0.000000e+00> : vector<64xf32>
      %131 = vector.multi_reduction <add>, %130, %cst_63 [0] : vector<64x64xf32> to vector<64xf32>
      %132 = vector.shape_cast %131 : vector<64xf32> to vector<1x64xf32>
      %cst_64 = arith.constant 6.400000e+01 : f32
      %133 = vector.broadcast %cst_64 : f32 to vector<1x64xf32>
      %134 = arith.divf %132, %133 : vector<1x64xf32>
      %135 = tpu.concatenate %129, %134 in 0 : vector<1x64xf32>, vector<1x64xf32> -> vector<2x64xf32>
      %136 = arith.truncf %135 : vector<2x64xf32> to vector<2x64xbf16>
      %c0_65 = arith.constant 0 : index
      %c0_66 = arith.constant 0 : index
      %137 = vector.load %arg20[%c0_65, %c0_66] : memref<64x10xbf16, #tpu.memory_space<vmem>>, vector<64x10xbf16>
      %cst_67 = arith.constant dense<0.000000e+00> : vector<2x10xf32>
      %138 = tpu.matmul %136, %137, %cst_67 {dimension_numbers = #tpu.dot_dimension_numbers<[1], [0], [0], [1], [0, 0, 1, 1], [], []>} : vector<2x64xbf16>, vector<64x10xbf16>, vector<2x10xf32> -> vector<2x10xf32>
      %c0_68 = arith.constant 0 : index
      %c0_69 = arith.constant 0 : index
      %139 = vector.load %arg21[%c0_68, %c0_69] : memref<1x10xf32, #tpu.memory_space<vmem>>, vector<1x10xf32>
      %140 = vector.broadcast %139 : vector<1x10xf32> to vector<2x10xf32>
      %141 = arith.addf %138, %140 : vector<2x10xf32>
      %c0_70 = arith.constant 0 : index
      %c0_71 = arith.constant 0 : index
      %142 = vector.load %arg26[%c0_70, %c0_71] : memref<2x10xf32, #tpu.memory_space<vmem>>, vector<2x10xf32>
      tpu.vector_store %arg26[%c0_70, %c0_71], %141 {strides = array<i32>} : memref<2x10xf32, #tpu.memory_space<vmem>>, vector<2x10xf32>,
      %143 = arith.truncf %120 : vector<128x64xf32> to vector<128x64xbf16>
      %c0_72 = arith.constant 0 : index
      %c0_73 = arith.constant 0 : index
      %144 = vector.load %arg22[%c0_72, %c0_73] : memref<64x64xbf16, #tpu.memory_space<vmem>>, vector<64x64xbf16>
      %cst_74 = arith.constant dense<0.000000e+00> : vector<128x64xf32>
      %145 = tpu.matmul %143, %144, %cst_74 {dimension_numbers = #tpu.dot_dimension_numbers<[1], [0], [0], [1], [0, 0, 1, 1], [], []>} : vector<128x64xbf16>, vector<64x64xbf16>, vector<128x64xf32> -> vector<128x64xf32>
      %c0_75 = arith.constant 0 : index
      %c0_76 = arith.constant 0 : index
      %146 = vector.load %arg23[%c0_75, %c0_76] : memref<1x64xf32, #tpu.memory_space<vmem>>, vector<1x64xf32>
      %147 = vector.broadcast %146 : vector<1x64xf32> to vector<128x64xf32>
      %148 = arith.addf %145, %147 : vector<128x64xf32>
      %cst_77 = arith.constant 0.000000e+00 : f32
      %149 = vector.broadcast %cst_77 : f32 to vector<128x64xf32>
      %150 = arith.maximumf %148, %149 : vector<128x64xf32>
      %151 = arith.truncf %150 : vector<128x64xf32> to vector<128x64xbf16>
      %c0_78 = arith.constant 0 : index
      %c0_79 = arith.constant 0 : index
      %152 = vector.load %arg24[%c0_78, %c0_79] : memref<64x48xbf16, #tpu.memory_space<vmem>>, vector<64x48xbf16>
      %cst_80 = arith.constant dense<0.000000e+00> : vector<128x48xf32>
      %153 = tpu.matmul %151, %152, %cst_80 {dimension_numbers = #tpu.dot_dimension_numbers<[1], [0], [0], [1], [0, 0, 1, 1], [], []>} : vector<128x64xbf16>, vector<64x48xbf16>, vector<128x48xf32> -> vector<128x48xf32>
      %c0_81 = arith.constant 0 : index
      %c0_82 = arith.constant 0 : index
      %154 = vector.load %arg25[%c0_81, %c0_82] : memref<1x48xf32, #tpu.memory_space<vmem>>, vector<1x48xf32>
      %155 = vector.broadcast %154 : vector<1x48xf32> to vector<128x48xf32>
      %156 = arith.addf %153, %155 : vector<128x48xf32>
      %c0_83 = arith.constant 0 : index
      %c0_84 = arith.constant 0 : index
      %157 = vector.load %arg27[%c0_83, %c0_84] : memref<128x48xf32, #tpu.memory_space<vmem>>, vector<128x48xf32>
      tpu.vector_store %arg27[%c0_83, %c0_84], %156 {strides = array<i32>} : memref<128x48xf32, #tpu.memory_space<vmem>>, vector<128x48xf32>,
    } else {
    }
    return
  }
  func.func @transform_0(%arg0: i32) -> (i32, i32) {
    %c0_i32 = arith.constant 0 : i32
    %c0_i32_0 = arith.constant 0 : i32
    %c0_i32_1 = arith.constant 0 : i32
    return %c0_i32, %c0_i32_0 : i32, i32
  }
  func.func @transform_1(%arg0: i32) -> (i32, i32) {
    %c0_i32 = arith.constant 0 : i32
    %c0_i32_0 = arith.constant 0 : i32
    %c0_i32_1 = arith.constant 0 : i32
    return %c0_i32, %c0_i32_0 : i32, i32
  }
  func.func @transform_2(%arg0: i32) -> (i32, i32) {
    %c0_i32 = arith.constant 0 : i32
    %c0_i32_0 = arith.constant 0 : i32
    %c0_i32_1 = arith.constant 0 : i32
    return %c0_i32, %c0_i32_0 : i32, i32
  }
  func.func @transform_3(%arg0: i32) -> (i32, i32) {
    %c0_i32 = arith.constant 0 : i32
    %c0_i32_0 = arith.constant 0 : i32
    %c0_i32_1 = arith.constant 0 : i32
    return %c0_i32, %c0_i32_0 : i32, i32
  }
  func.func @transform_4(%arg0: i32) -> (i32, i32) {
    %c0_i32 = arith.constant 0 : i32
    %c0_i32_0 = arith.constant 0 : i32
    %c0_i32_1 = arith.constant 0 : i32
    return %c0_i32, %c0_i32_0 : i32, i32
  }
  func.func @transform_5(%arg0: i32) -> (i32, i32, i32) {
    %c0_i32 = arith.constant 0 : i32
    %c0_i32_0 = arith.constant 0 : i32
    %c0_i32_1 = arith.constant 0 : i32
    return %arg0, %c0_i32, %c0_i32_0 : i32, i32, i32
  }
  func.func @transform_6(%arg0: i32) -> (i32, i32, i32) {
    %c0_i32 = arith.constant 0 : i32
    %c0_i32_0 = arith.constant 0 : i32
    %c0_i32_1 = arith.constant 0 : i32
    return %arg0, %c0_i32, %c0_i32_0 : i32, i32, i32
  }
  func.func @transform_7(%arg0: i32) -> (i32, i32, i32) {
    %c0_i32 = arith.constant 0 : i32
    %c0_i32_0 = arith.constant 0 : i32
    %c0_i32_1 = arith.constant 0 : i32
    return %arg0, %c0_i32, %c0_i32_0 : i32, i32, i32
  }
  func.func @transform_8(%arg0: i32) -> (i32, i32, i32) {
    %c0_i32 = arith.constant 0 : i32
    %c0_i32_0 = arith.constant 0 : i32
    %c0_i32_1 = arith.constant 0 : i32
    return %arg0, %c0_i32, %c0_i32_0 : i32, i32, i32
  }
  func.func @transform_9(%arg0: i32) -> (i32, i32, i32) {
    %c0_i32 = arith.constant 0 : i32
    %c0_i32_0 = arith.constant 0 : i32
    %c0_i32_1 = arith.constant 0 : i32
    return %arg0, %c0_i32, %c0_i32_0 : i32, i32, i32
  }
  func.func @transform_10(%arg0: i32) -> (i32, i32, i32) {
    %c0_i32 = arith.constant 0 : i32
    %c0_i32_0 = arith.constant 0 : i32
    %c0_i32_1 = arith.constant 0 : i32
    return %arg0, %c0_i32, %c0_i32_0 : i32, i32, i32
  }
  func.func @transform_11(%arg0: i32) -> (i32, i32, i32) {
    %c0_i32 = arith.constant 0 : i32
    %c0_i32_0 = arith.constant 0 : i32
    %c0_i32_1 = arith.constant 0 : i32
    return %arg0, %c0_i32, %c0_i32_0 : i32, i32, i32
  }
  func.func @transform_12(%arg0: i32) -> (i32, i32, i32) {
    %c0_i32 = arith.constant 0 : i32
    %c0_i32_0 = arith.constant 0 : i32
    %c0_i32_1 = arith.constant 0 : i32
    return %arg0, %c0_i32, %c0_i32_0 : i32, i32, i32
  }
  func.func @transform_13(%arg0: i32) -> (i32, i32, i32) {
    %c0_i32 = arith.constant 0 : i32
    %c0_i32_0 = arith.constant 0 : i32
    %c0_i32_1 = arith.constant 0 : i32
    return %arg0, %c0_i32, %c0_i32_0 : i32, i32, i32
  }
  func.func @transform_14(%arg0: i32) -> (i32, i32, i32) {
    %c0_i32 = arith.constant 0 : i32
    %c0_i32_0 = arith.constant 0 : i32
    %c0_i32_1 = arith.constant 0 : i32
    return %arg0, %c0_i32, %c0_i32_0 : i32, i32, i32
  }
  func.func @transform_15(%arg0: i32) -> (i32, i32, i32) {
    %c0_i32 = arith.constant 0 : i32
    %c0_i32_0 = arith.constant 0 : i32
    %c0_i32_1 = arith.constant 0 : i32
    return %arg0, %c0_i32, %c0_i32_0 : i32, i32, i32
  }
  func.func @transform_16(%arg0: i32) -> (i32, i32, i32) {
    %c0_i32 = arith.constant 0 : i32
    %c0_i32_0 = arith.constant 0 : i32
    %c0_i32_1 = arith.constant 0 : i32
    return %arg0, %c0_i32, %c0_i32_0 : i32, i32, i32
  }
  func.func @transform_17(%arg0: i32) -> (i32, i32) {
    %c0_i32 = arith.constant 0 : i32
    %c0_i32_0 = arith.constant 0 : i32
    %c0_i32_1 = arith.constant 0 : i32
    return %c0_i32, %c0_i32_0 : i32, i32
  }
  func.func @transform_18(%arg0: i32) -> (i32, i32) {
    %c0_i32 = arith.constant 0 : i32
    %c0_i32_0 = arith.constant 0 : i32
    %c0_i32_1 = arith.constant 0 : i32
    return %c0_i32, %c0_i32_0 : i32, i32
  }
  func.func @transform_19(%arg0: i32) -> (i32, i32) {
    %c0_i32 = arith.constant 0 : i32
    %c0_i32_0 = arith.constant 0 : i32
    %c0_i32_1 = arith.constant 0 : i32
    return %c0_i32, %c0_i32_0 : i32, i32
  }
  func.func @transform_20(%arg0: i32) -> (i32, i32) {
    %c0_i32 = arith.constant 0 : i32
    %c0_i32_0 = arith.constant 0 : i32
    %c0_i32_1 = arith.constant 0 : i32
    return %c0_i32, %c0_i32_0 : i32, i32
  }
  func.func @transform_21(%arg0: i32) -> (i32, i32) {
    %c0_i32 = arith.constant 0 : i32
    %c0_i32_0 = arith.constant 0 : i32
    %c0_i32_1 = arith.constant 0 : i32
    return %c0_i32, %c0_i32_0 : i32, i32
  }
  func.func @transform_22(%arg0: i32) -> (i32, i32) {
    %c0_i32 = arith.constant 0 : i32
    %c0_i32_0 = arith.constant 0 : i32
    %c0_i32_1 = arith.constant 0 : i32
    return %c0_i32, %c0_i32_0 : i32, i32
  }
  func.func @transform_23(%arg0: i32) -> (i32, i32) {
    %c0_i32 = arith.constant 0 : i32
    %c0_i32_0 = arith.constant 0 : i32
    %c0_i32_1 = arith.constant 0 : i32
    return %c0_i32, %c0_i32_0 : i32, i32
  }
  func.func @transform_24(%arg0: i32) -> (i32, i32) {
    %c0_i32 = arith.constant 0 : i32
    %c0_i32_0 = arith.constant 0 : i32
    %c0_i32_1 = arith.constant 0 : i32
    return %c0_i32, %c0_i32_0 : i32, i32
  }
  func.func @transform_25(%arg0: i32) -> (i32, i32) {
    %c0_i32 = arith.constant 0 : i32
    %c0_i32_0 = arith.constant 0 : i32
    %c0_i32_1 = arith.constant 0 : i32
    return %c0_i32, %c0_i32_0 : i32, i32
  }
  func.func @transform_26(%arg0: i32) -> (i32, i32) {
    %c0_i32 = arith.constant 0 : i32
    %c0_i32_0 = arith.constant 0 : i32
    %c0_i32_1 = arith.constant 0 : i32
    return %c0_i32, %c0_i32_0 : i32, i32
  }
}

</mosaic_0001>

<llo_original>
// kernel: vit_forward.1
$region0: #{vit_forward.1}
  #allocation0 [shape = 'u32[]', space=smem, size = 0x4, offset = 0x4, fixed_abs, tag = 'smem constant byte address 0x4 - core index']
  #allocation1 [shape = 'u32[144,128]{1,0:T(1,128)}', space=vmem, size = 0x12000, scoped, tag = 'internal scratch']
  #allocation2 [shape = 'f32[128,64]{1,0:T(8,128)}', space=vmem, size = 0x10000, scoped, tag = 'scratch operand']
  %s0 = inlined_call_operand.vmem [shape: f32[128,48], index: 0, kind: input, shape index: {}]
  %s1 = inlined_call_operand.vmem [shape: bf16[48,64], index: 1, kind: input, shape index: {}]
  %s2 = inlined_call_operand.vmem [shape: f32[1,64], index: 2, kind: input, shape index: {}]
  %s3 = inlined_call_operand.vmem [shape: f32[64,1], index: 3, kind: input, shape index: {}]
  %s4 = inlined_call_operand.vmem [shape: f32[64,64], index: 4, kind: input, shape index: {}]
  %s5 = inlined_call_operand.vmem [shape: bf16[11,64,192], index: 5, kind: input, shape index: {}]
  %s6 = inlined_call_operand.vmem [shape: f32[11,1,192], index: 6, kind: input, shape index: {}]
  %s7 = inlined_call_operand.vmem [shape: bf16[11,64,64], index: 7, kind: input, shape index: {}]
  %s8 = inlined_call_operand.vmem [shape: f32[11,1,64], index: 8, kind: input, shape index: {}]
  %s9 = inlined_call_operand.vmem [shape: f32[11,1,64], index: 9, kind: input, shape index: {}]
  %s10 = inlined_call_operand.vmem [shape: f32[11,1,64], index: 10, kind: input, shape index: {}]
  %s11 = inlined_call_operand.vmem [shape: bf16[11,64,2048], index: 11, kind: input, shape index: {}]
  %s12 = inlined_call_operand.vmem [shape: f32[11,1,2048], index: 12, kind: input, shape index: {}]
  %s13 = inlined_call_operand.vmem [shape: bf16[11,2048,64], index: 13, kind: input, shape index: {}]
  %s14 = inlined_call_operand.vmem [shape: f32[11,1,64], index: 14, kind: input, shape index: {}]
  %s15 = inlined_call_operand.vmem [shape: f32[11,1,64], index: 15, kind: input, shape index: {}]
  %s16 = inlined_call_operand.vmem [shape: f32[11,1,64], index: 16, kind: input, shape index: {}]
  %s17 = inlined_call_operand.vmem [shape: f32[128,16], index: 17, kind: input, shape index: {}]
  %s18 = inlined_call_operand.vmem [shape: f32[16,128], index: 18, kind: input, shape index: {}]
  %s19 = inlined_call_operand.vmem [shape: bf16[64,10], index: 19, kind: input, shape index: {}]
  %s20 = inlined_call_operand.vmem [shape: f32[1,10], index: 20, kind: input, shape index: {}]
  %s21 = inlined_call_operand.vmem [shape: bf16[64,64], index: 21, kind: input, shape index: {}]
  %s22 = inlined_call_operand.vmem [shape: f32[1,64], index: 22, kind: input, shape index: {}]
  %s23 = inlined_call_operand.vmem [shape: bf16[64,48], index: 23, kind: input, shape index: {}]
  %s24 = inlined_call_operand.vmem [shape: f32[1,48], index: 24, kind: input, shape index: {}]
  %s25 = inlined_call_operand.hbm [shape: f32[2,10], index: 25, kind: output, shape index: {0}]
  %s26 = inlined_call_operand.vmem [shape: f32[128,48], index: 26, kind: output, shape index: {1}]
  %27 = xla_tuple %s25, %s26
  %s28 = sld [smem:[#allocation0]]
  $region149: #{vit_forward.1} parent=0
    _
  %s30 = ssub.s32 1, %s28
  %s31 = scalar_select 0, %s30, %s28
  $region1: #{vit_forward.1} parent=0
    #allocation3 [shape = 'u8[1024]{0}', space=vmem, size = 0x400, scoped, tag = 'output window, operand 0, single buffered']
    #allocation4 [shape = 's32[2]{0}', space=sflag, size = 0x8, scoped, tag = 'scoped memory for vit_forward.1']
    %32 = vsyncpa [#allocation4], 0
    loop: start=0, step=1, limit=13
    $region2: #{vit_forward.1} parent=1 // loop_pre_header
      _
    $region3: #{vit_forward.1} parent=1 // loop_header
      %s34 = sphi 0, %s38
      %p35 = scmp.ge.s32.totalorder %s34, 13
      %s42 = sphi 0, %s42
      %s44 = sphi 0, %s42
      %s45 = sphi 0, %s44
      %s59 = sphi 0, %s45
      %s63 = sphi 0, %s63
      %s65 = sphi 0, %s63
      %s66 = sphi 0, %s65
      %s80 = sphi 0, %s66
      %s84 = sphi 0, %s84
      %s86 = sphi 0, %s84
      %s87 = sphi 0, %s86
      %s101 = sphi 0, %s87
      %s105 = sphi 0, %s105
      %s107 = sphi 0, %s105
      %s108 = sphi 0, %s107
      %s122 = sphi 0, %s108
      %s126 = sphi 0, %s126
      %s128 = sphi 0, %s126
      %s129 = sphi 0, %s128
      %s143 = sphi 0, %s129
      %s149 = sphi 0, %s151
      %s152 = sphi 0, %s149
      %s153 = sphi 0, %s152
      %s169 = sphi 0, %s153
      %s175 = sphi 0, %s177
      %s178 = sphi 0, %s175
      %s179 = sphi 0, %s178
      %s195 = sphi 0, %s179
      %s201 = sphi 0, %s203
      %s204 = sphi 0, %s201
      %s205 = sphi 0, %s204
      %s221 = sphi 0, %s205
      %s227 = sphi 0, %s229
      %s230 = sphi 0, %s227
      %s231 = sphi 0, %s230
      %s247 = sphi 0, %s231
      %s253 = sphi 0, %s255
      %s256 = sphi 0, %s253
      %s257 = sphi 0, %s256
      %s273 = sphi 0, %s257
      %s279 = sphi 0, %s281
      %s282 = sphi 0, %s279
      %s283 = sphi 0, %s282
      %s299 = sphi 0, %s283
      %s305 = sphi 0, %s307
      %s308 = sphi 0, %s305
      %s309 = sphi 0, %s308
      %s325 = sphi 0, %s309
      %s331 = sphi 0, %s333
      %s334 = sphi 0, %s331
      %s335 = sphi 0, %s334
      %s351 = sphi 0, %s335
      %s357 = sphi 0, %s359
      %s360 = sphi 0, %s357
      %s361 = sphi 0, %s360
      %s377 = sphi 0, %s361
      %s383 = sphi 0, %s385
      %s386 = sphi 0, %s383
      %s387 = sphi 0, %s386
      %s403 = sphi 0, %s387
      %s409 = sphi 0, %s411
      %s412 = sphi 0, %s409
      %s413 = sphi 0, %s412
      %s429 = sphi 0, %s413
      %s435 = sphi 0, %s437
      %s438 = sphi 0, %s435
      %s439 = sphi 0, %s438
      %s455 = sphi 0, %s439
      %s459 = sphi 0, %s459
      %s461 = sphi 0, %s459
      %s462 = sphi 0, %s461
      %s476 = sphi 0, %s462
      %s480 = sphi 0, %s480
      %s482 = sphi 0, %s480
      %s483 = sphi 0, %s482
      %s497 = sphi 0, %s483
      %s501 = sphi 0, %s501
      %s503 = sphi 0, %s501
      %s504 = sphi 0, %s503
      %s518 = sphi 0, %s504
      %s522 = sphi 0, %s522
      %s524 = sphi 0, %s522
      %s525 = sphi 0, %s524
      %s539 = sphi 0, %s525
      %s543 = sphi 0, %s543
      %s545 = sphi 0, %s543
      %s546 = sphi 0, %s545
      %s560 = sphi 0, %s546
      %s564 = sphi 0, %s564
      %s566 = sphi 0, %s564
      %s567 = sphi 0, %s566
      %s581 = sphi 0, %s567
      %s585 = sphi 0, %s585
      %s587 = sphi 0, %s585
      %s588 = sphi 0, %s587
      %s602 = sphi 0, %s588
      %s606 = sphi 0, %s606
      %s608 = sphi 0, %s606
      %s609 = sphi 0, %s608
      %s623 = sphi 0, %s609
      %s627 = sphi 0, %s627
      %s629 = sphi 0, %s627
      %s630 = sphi 0, %s629
      %s644 = sphi 0, %s630
      %s648 = sphi 0, %s648
      %s650 = sphi 0, %s648
      %s651 = sphi 0, %s650
      %s665 = sphi 0, %s651
    $region4: #{vit_forward.1} parent=1 // loop_header_branch
      %37 = sbr.rel (%p35) target = $region8
    $region5: #{vit_forward.1} parent=1 // loop_body
      %s39 = ssub.s32 %s34, 1
      %s40 = ssub.s32 %s34, 2
      %s41 = sadd.s32 %s34, 1
      %s43 = sadd.s32 %s42, 1
      %p46 = scmp.eq.s32.totalorder %s34, 10
      %p47 = scmp.ne.s32.totalorder %s42, %s44
      %p48 = scmp.eq.s32.totalorder %s34, 0
      %p49 = por %p47, %p48
      %p50 = scmp.ne.s32.totalorder %s42, %s44
      %p51 = scmp.eq.s32.totalorder %s39, 10
      %p52 = por %p50, %p51
      %p53 = scmp.ne.s32.totalorder %s44, %s45
      %p54 = scmp.eq.s32.totalorder %s39, 0
      %p55 = por %p53, %p54
      %p56 = scmp.ne.s32.totalorder %s44, %s45
      %p57 = scmp.eq.s32.totalorder %s40, 10
      %p58 = por %p56, %p57
      %p60 = scmp.ne.s32.totalorder %s45, %s59
      %p61 = scmp.eq.s32.totalorder %s40, 0
      %p62 = por %p60, %p61
      %s64 = sadd.s32 %s63, 1
      %p67 = scmp.eq.s32.totalorder %s34, 10
      %p68 = scmp.ne.s32.totalorder %s63, %s65
      %p69 = scmp.eq.s32.totalorder %s34, 0
      %p70 = por %p68, %p69
      %p71 = scmp.ne.s32.totalorder %s63, %s65
      %p72 = scmp.eq.s32.totalorder %s39, 10
      %p73 = por %p71, %p72
      %p74 = scmp.ne.s32.totalorder %s65, %s66
      %p75 = scmp.eq.s32.totalorder %s39, 0
      %p76 = por %p74, %p75
      %p77 = scmp.ne.s32.totalorder %s65, %s66
      %p78 = scmp.eq.s32.totalorder %s40, 10
      %p79 = por %p77, %p78
      %p81 = scmp.ne.s32.totalorder %s66, %s80
      %p82 = scmp.eq.s32.totalorder %s40, 0
      %p83 = por %p81, %p82
      %s85 = sadd.s32 %s84, 1
      %p88 = scmp.eq.s32.totalorder %s34, 10
      %p89 = scmp.ne.s32.totalorder %s84, %s86
      %p90 = scmp.eq.s32.totalorder %s34, 0
      %p91 = por %p89, %p90
      %p92 = scmp.ne.s32.totalorder %s84, %s86
      %p93 = scmp.eq.s32.totalorder %s39, 10
      %p94 = por %p92, %p93
      %p95 = scmp.ne.s32.totalorder %s86, %s87
      %p96 = scmp.eq.s32.totalorder %s39, 0
      %p97 = por %p95, %p96
      %p98 = scmp.ne.s32.totalorder %s86, %s87
      %p99 = scmp.eq.s32.totalorder %s40, 10
      %p100 = por %p98, %p99
      %p102 = scmp.ne.s32.totalorder %s87, %s101
      %p103 = scmp.eq.s32.totalorder %s40, 0
      %p104 = por %p102, %p103
      %s106 = sadd.s32 %s105, 1
      %p109 = scmp.eq.s32.totalorder %s34, 10
      %p110 = scmp.ne.s32.totalorder %s105, %s107
      %p111 = scmp.eq.s32.totalorder %s34, 0
      %p112 = por %p110, %p111
      %p113 = scmp.ne.s32.totalorder %s105, %s107
      %p114 = scmp.eq.s32.totalorder %s39, 10
      %p115 = por %p113, %p114
      %p116 = scmp.ne.s32.totalorder %s107, %s108
      %p117 = scmp.eq.s32.totalorder %s39, 0
      %p118 = por %p116, %p117
      %p119 = scmp.ne.s32.totalorder %s107, %s108
      %p120 = scmp.eq.s32.totalorder %s40, 10
      %p121 = por %p119, %p120
      %p123 = scmp.ne.s32.totalorder %s108, %s122
      %p124 = scmp.eq.s32.totalorder %s40, 0
      %p125 = por %p123, %p124
      %s127 = sadd.s32 %s126, 1
      %p130 = scmp.eq.s32.totalorder %s34, 10
      %p131 = scmp.ne.s32.totalorder %s126, %s128
      %p132 = scmp.eq.s32.totalorder %s34, 0
      %p133 = por %p131, %p132
      %p134 = scmp.ne.s32.totalorder %s126, %s128
      %p135 = scmp.eq.s32.totalorder %s39, 10
      %p136 = por %p134, %p135
      %p137 = scmp.ne.s32.totalorder %s128, %s129
      %p138 = scmp.eq.s32.totalorder %s39, 0
      %p139 = por %p137, %p138
      %p140 = scmp.ne.s32.totalorder %s128, %s129
      %p141 = scmp.eq.s32.totalorder %s40, 10
      %p142 = por %p140, %p141
      %p144 = scmp.ne.s32.totalorder %s129, %s143
      %p145 = scmp.eq.s32.totalorder %s40, 0
      %p146 = por %p144, %p145
      %s147 = ssub.s32 %s34, %s41
      %p148 = scmp.eq.s32.totalorder %s147, 0
      %s150 = sadd.s32 %s149, 1
      %s151 = scalar_select %p148, %s149, %s150
      %p154 = pneg %p148
      %p155 = scmp.eq.s32.totalorder %s34, 10
      %p156 = por %p154, %p155
      %p157 = scmp.ne.s32.totalorder %s149, %s152
      %p158 = scmp.eq.s32.totalorder %s34, 0
      %p159 = por %p157, %p158
      %p160 = scmp.ne.s32.totalorder %s149, %s152
      %p161 = scmp.eq.s32.totalorder %s39, 10
      %p162 = por %p160, %p161
      %p163 = scmp.ne.s32.totalorder %s152, %s153
      %p164 = scmp.eq.s32.totalorder %s39, 0
      %p165 = por %p163, %p164
      %p166 = scmp.ne.s32.totalorder %s152, %s153
      %p167 = scmp.eq.s32.totalorder %s40, 10
      %p168 = por %p166, %p167
      %p170 = scmp.ne.s32.totalorder %s153, %s169
      %p171 = scmp.eq.s32.totalorder %s40, 0
      %p172 = por %p170, %p171
      %s173 = ssub.s32 %s34, %s41
      %p174 = scmp.eq.s32.totalorder %s173, 0
      %s176 = sadd.s32 %s175, 1
      %s177 = scalar_select %p174, %s175, %s176
      %p180 = pneg %p174
      %p181 = scmp.eq.s32.totalorder %s34, 10
      %p182 = por %p180, %p181
      %p183 = scmp.ne.s32.totalorder %s175, %s178
      %p184 = scmp.eq.s32.totalorder %s34, 0
      %p185 = por %p183, %p184
      %p186 = scmp.ne.s32.totalorder %s175, %s178
      %p187 = scmp.eq.s32.totalorder %s39, 10
      %p188 = por %p186, %p187
      %p189 = scmp.ne.s32.totalorder %s178, %s179
      %p190 = scmp.eq.s32.totalorder %s39, 0
      %p191 = por %p189, %p190
      %p192 = scmp.ne.s32.totalorder %s178, %s179
      %p193 = scmp.eq.s32.totalorder %s40, 10
      %p194 = por %p192, %p193
      %p196 = scmp.ne.s32.totalorder %s179, %s195
      %p197 = scmp.eq.s32.totalorder %s40, 0
      %p198 = por %p196, %p197
      %s199 = ssub.s32 %s34, %s41
      %p200 = scmp.eq.s32.totalorder %s199, 0
      %s202 = sadd.s32 %s201, 1
      %s203 = scalar_select %p200, %s201, %s202
      %p206 = pneg %p200
      %p207 = scmp.eq.s32.totalorder %s34, 10
      %p208 = por %p206, %p207
      %p209 = scmp.ne.s32.totalorder %s201, %s204
      %p210 = scmp.eq.s32.totalorder %s34, 0
      %p211 = por %p209, %p210
      %p212 = scmp.ne.s32.totalorder %s201, %s204
      %p213 = scmp.eq.s32.totalorder %s39, 10
      %p214 = por %p212, %p213
      %p215 = scmp.ne.s32.totalorder %s204, %s205
      %p216 = scmp.eq.s32.totalorder %s39, 0
      %p217 = por %p215, %p216
      %p218 = scmp.ne.s32.totalorder %s204, %s205
      %p219 = scmp.eq.s32.totalorder %s40, 10
      %p220 = por %p218, %p219
      %p222 = scmp.ne.s32.totalorder %s205, %s221
      %p223 = scmp.eq.s32.totalorder %s40, 0
      %p224 = por %p222, %p223
      %s225 = ssub.s32 %s34, %s41
      %p226 = scmp.eq.s32.totalorder %s225, 0
      %s228 = sadd.s32 %s227, 1
      %s229 = scalar_select %p226, %s227, %s228
      %p232 = pneg %p226
      %p233 = scmp.eq.s32.totalorder %s34, 10
      %p234 = por %p232, %p233
      %p235 = scmp.ne.s32.totalorder %s227, %s230
      %p236 = scmp.eq.s32.totalorder %s34, 0
      %p237 = por %p235, %p236
      %p238 = scmp.ne.s32.totalorder %s227, %s230
      %p239 = scmp.eq.s32.totalorder %s39, 10
      %p240 = por %p238, %p239
      %p241 = scmp.ne.s32.totalorder %s230, %s231
      %p242 = scmp.eq.s32.totalorder %s39, 0
      %p243 = por %p241, %p242
      %p244 = scmp.ne.s32.totalorder %s230, %s231
      %p245 = scmp.eq.s32.totalorder %s40, 10
      %p246 = por %p244, %p245
      %p248 = scmp.ne.s32.totalorder %s231, %s247
      %p249 = scmp.eq.s32.totalorder %s40, 0
      %p250 = por %p248, %p249
      %s251 = ssub.s32 %s34, %s41
      %p252 = scmp.eq.s32.totalorder %s251, 0
      %s254 = sadd.s32 %s253, 1
      %s255 = scalar_select %p252, %s253, %s254
      %p258 = pneg %p252
      %p259 = scmp.eq.s32.totalorder %s34, 10
      %p260 = por %p258, %p259
      %p261 = scmp.ne.s32.totalorder %s253, %s256
      %p262 = scmp.eq.s32.totalorder %s34, 0
      %p263 = por %p261, %p262
      %p264 = scmp.ne.s32.totalorder %s253, %s256
      %p265 = scmp.eq.s32.totalorder %s39, 10
      %p266 = por %p264, %p265
      %p267 = scmp.ne.s32.totalorder %s256, %s257
      %p268 = scmp.eq.s32.totalorder %s39, 0
      %p269 = por %p267, %p268
      %p270 = scmp.ne.s32.totalorder %s256, %s257
      %p271 = scmp.eq.s32.totalorder %s40, 10
      %p272 = por %p270, %p271
      %p274 = scmp.ne.s32.totalorder %s257, %s273
      %p275 = scmp.eq.s32.totalorder %s40, 0
      %p276 = por %p274, %p275
      %s277 = ssub.s32 %s34, %s41
      %p278 = scmp.eq.s32.totalorder %s277, 0
      %s280 = sadd.s32 %s279, 1
      %s281 = scalar_select %p278, %s279, %s280
      %p284 = pneg %p278
      %p285 = scmp.eq.s32.totalorder %s34, 10
      %p286 = por %p284, %p285
      %p287 = scmp.ne.s32.totalorder %s279, %s282
      %p288 = scmp.eq.s32.totalorder %s34, 0
      %p289 = por %p287, %p288
      %p290 = scmp.ne.s32.totalorder %s279, %s282
      %p291 = scmp.eq.s32.totalorder %s39, 10
      %p292 = por %p290, %p291
      %p293 = scmp.ne.s32.totalorder %s282, %s283
      %p294 = scmp.eq.s32.totalorder %s39, 0
      %p295 = por %p293, %p294
      %p296 = scmp.ne.s32.totalorder %s282, %s283
      %p297 = scmp.eq.s32.totalorder %s40, 10
      %p298 = por %p296, %p297
      %p300 = scmp.ne.s32.totalorder %s283, %s299
      %p301 = scmp.eq.s32.totalorder %s40, 0
      %p302 = por %p300, %p301
      %s303 = ssub.s32 %s34, %s41
      %p304 = scmp.eq.s32.totalorder %s303, 0
      %s306 = sadd.s32 %s305, 1
      %s307 = scalar_select %p304, %s305, %s306
      %p310 = pneg %p304
      %p311 = scmp.eq.s32.totalorder %s34, 10
      %p312 = por %p310, %p311
      %p313 = scmp.ne.s32.totalorder %s305, %s308
      %p314 = scmp.eq.s32.totalorder %s34, 0
      %p315 = por %p313, %p314
      %p316 = scmp.ne.s32.totalorder %s305, %s308
      %p317 = scmp.eq.s32.totalorder %s39, 10
      %p318 = por %p316, %p317
      %p319 = scmp.ne.s32.totalorder %s308, %s309
      %p320 = scmp.eq.s32.totalorder %s39, 0
      %p321 = por %p319, %p320
      %p322 = scmp.ne.s32.totalorder %s308, %s309
      %p323 = scmp.eq.s32.totalorder %s40, 10
      %p324 = por %p322, %p323
      %p326 = scmp.ne.s32.totalorder %s309, %s325
      %p327 = scmp.eq.s32.totalorder %s40, 0
      %p328 = por %p326, %p327
      %s329 = ssub.s32 %s34, %s41
      %p330 = scmp.eq.s32.totalorder %s329, 0
      %s332 = sadd.s32 %s331, 1
      %s333 = scalar_select %p330, %s331, %s332
      %p336 = pneg %p330
      %p337 = scmp.eq.s32.totalorder %s34, 10
      %p338 = por %p336, %p337
      %p339 = scmp.ne.s32.totalorder %s331, %s334
      %p340 = scmp.eq.s32.totalorder %s34, 0
      %p341 = por %p339, %p340
      %p342 = scmp.ne.s32.totalorder %s331, %s334
      %p343 = scmp.eq.s32.totalorder %s39, 10
      %p344 = por %p342, %p343
      %p345 = scmp.ne.s32.totalorder %s334, %s335
      %p346 = scmp.eq.s32.totalorder %s39, 0
      %p347 = por %p345, %p346
      %p348 = scmp.ne.s32.totalorder %s334, %s335
      %p349 = scmp.eq.s32.totalorder %s40, 10
      %p350 = por %p348, %p349
      %p352 = scmp.ne.s32.totalorder %s335, %s351
      %p353 = scmp.eq.s32.totalorder %s40, 0
      %p354 = por %p352, %p353
      %s355 = ssub.s32 %s34, %s41
      %p356 = scmp.eq.s32.totalorder %s355, 0
      %s358 = sadd.s32 %s357, 1
      %s359 = scalar_select %p356, %s357, %s358
      %p362 = pneg %p356
      %p363 = scmp.eq.s32.totalorder %s34, 10
      %p364 = por %p362, %p363
      %p365 = scmp.ne.s32.totalorder %s357, %s360
      %p366 = scmp.eq.s32.totalorder %s34, 0
      %p367 = por %p365, %p366
      %p368 = scmp.ne.s32.totalorder %s357, %s360
      %p369 = scmp.eq.s32.totalorder %s39, 10
      %p370 = por %p368, %p369
      %p371 = scmp.ne.s32.totalorder %s360, %s361
      %p372 = scmp.eq.s32.totalorder %s39, 0
      %p373 = por %p371, %p372
      %p374 = scmp.ne.s32.totalorder %s360, %s361
      %p375 = scmp.eq.s32.totalorder %s40, 10
      %p376 = por %p374, %p375
      %p378 = scmp.ne.s32.totalorder %s361, %s377
      %p379 = scmp.eq.s32.totalorder %s40, 0
      %p380 = por %p378, %p379
      %s381 = ssub.s32 %s34, %s41
      %p382 = scmp.eq.s32.totalorder %s381, 0
      %s384 = sadd.s32 %s383, 1
      %s385 = scalar_select %p382, %s383, %s384
      %p388 = pneg %p382
      %p389 = scmp.eq.s32.totalorder %s34, 10
      %p390 = por %p388, %p389
      %p391 = scmp.ne.s32.totalorder %s383, %s386
      %p392 = scmp.eq.s32.totalorder %s34, 0
      %p393 = por %p391, %p392
      %p394 = scmp.ne.s32.totalorder %s383, %s386
      %p395 = scmp.eq.s32.totalorder %s39, 10
      %p396 = por %p394, %p395
      %p397 = scmp.ne.s32.totalorder %s386, %s387
      %p398 = scmp.eq.s32.totalorder %s39, 0
      %p399 = por %p397, %p398
      %p400 = scmp.ne.s32.totalorder %s386, %s387
      %p401 = scmp.eq.s32.totalorder %s40, 10
      %p402 = por %p400, %p401
      %p404 = scmp.ne.s32.totalorder %s387, %s403
      %p405 = scmp.eq.s32.totalorder %s40, 0
      %p406 = por %p404, %p405
      %s407 = ssub.s32 %s34, %s41
      %p408 = scmp.eq.s32.totalorder %s407, 0
      %s410 = sadd.s32 %s409, 1
      %s411 = scalar_select %p408, %s409, %s410
      %p414 = pneg %p408
      %p415 = scmp.eq.s32.totalorder %s34, 10
      %p416 = por %p414, %p415
      %p417 = scmp.ne.s32.totalorder %s409, %s412
      %p418 = scmp.eq.s32.totalorder %s34, 0
      %p419 = por %p417, %p418
      %p420 = scmp.ne.s32.totalorder %s409, %s412
      %p421 = scmp.eq.s32.totalorder %s39, 10
      %p422 = por %p420, %p421
      %p423 = scmp.ne.s32.totalorder %s412, %s413
      %p424 = scmp.eq.s32.totalorder %s39, 0
      %p425 = por %p423, %p424
      %p426 = scmp.ne.s32.totalorder %s412, %s413
      %p427 = scmp.eq.s32.totalorder %s40, 10
      %p428 = por %p426, %p427
      %p430 = scmp.ne.s32.totalorder %s413, %s429
      %p431 = scmp.eq.s32.totalorder %s40, 0
      %p432 = por %p430, %p431
      %s433 = ssub.s32 %s34, %s41
      %p434 = scmp.eq.s32.totalorder %s433, 0
      %s436 = sadd.s32 %s435, 1
      %s437 = scalar_select %p434, %s435, %s436
      %p440 = pneg %p434
      %p441 = scmp.eq.s32.totalorder %s34, 10
      %p442 = por %p440, %p441
      %p443 = scmp.ne.s32.totalorder %s435, %s438
      %p444 = scmp.eq.s32.totalorder %s34, 0
      %p445 = por %p443, %p444
      %p446 = scmp.ne.s32.totalorder %s435, %s438
      %p447 = scmp.eq.s32.totalorder %s39, 10
      %p448 = por %p446, %p447
      %p449 = scmp.ne.s32.totalorder %s438, %s439
      %p450 = scmp.eq.s32.totalorder %s39, 0
      %p451 = por %p449, %p450
      %p452 = scmp.ne.s32.totalorder %s438, %s439
      %p453 = scmp.eq.s32.totalorder %s40, 10
      %p454 = por %p452, %p453
      %p456 = scmp.ne.s32.totalorder %s439, %s455
      %p457 = scmp.eq.s32.totalorder %s40, 0
      %p458 = por %p456, %p457
      %s460 = sadd.s32 %s459, 1
      %p463 = scmp.eq.s32.totalorder %s34, 10
      %p464 = scmp.ne.s32.totalorder %s459, %s461
      %p465 = scmp.eq.s32.totalorder %s34, 0
      %p466 = por %p464, %p465
      %p467 = scmp.ne.s32.totalorder %s459, %s461
      %p468 = scmp.eq.s32.totalorder %s39, 10
      %p469 = por %p467, %p468
      %p470 = scmp.ne.s32.totalorder %s461, %s462
      %p471 = scmp.eq.s32.totalorder %s39, 0
      %p472 = por %p470, %p471
      %p473 = scmp.ne.s32.totalorder %s461, %s462
      %p474 = scmp.eq.s32.totalorder %s40, 10
      %p475 = por %p473, %p474
      %p477 = scmp.ne.s32.totalorder %s462, %s476
      %p478 = scmp.eq.s32.totalorder %s40, 0
      %p479 = por %p477, %p478
      %s481 = sadd.s32 %s480, 1
      %p484 = scmp.eq.s32.totalorder %s34, 10
      %p485 = scmp.ne.s32.totalorder %s480, %s482
      %p486 = scmp.eq.s32.totalorder %s34, 0
      %p487 = por %p485, %p486
      %p488 = scmp.ne.s32.totalorder %s480, %s482
      %p489 = scmp.eq.s32.totalorder %s39, 10
      %p490 = por %p488, %p489
      %p491 = scmp.ne.s32.totalorder %s482, %s483
      %p492 = scmp.eq.s32.totalorder %s39, 0
      %p493 = por %p491, %p492
      %p494 = scmp.ne.s32.totalorder %s482, %s483
      %p495 = scmp.eq.s32.totalorder %s40, 10
      %p496 = por %p494, %p495
      %p498 = scmp.ne.s32.totalorder %s483, %s497
      %p499 = scmp.eq.s32.totalorder %s40, 0
      %p500 = por %p498, %p499
      %s502 = sadd.s32 %s501, 1
      %p505 = scmp.eq.s32.totalorder %s34, 10
      %p506 = scmp.ne.s32.totalorder %s501, %s503
      %p507 = scmp.eq.s32.totalorder %s34, 0
      %p508 = por %p506, %p507
      %p509 = scmp.ne.s32.totalorder %s501, %s503
      %p510 = scmp.eq.s32.totalorder %s39, 10
      %p511 = por %p509, %p510
      %p512 = scmp.ne.s32.totalorder %s503, %s504
      %p513 = scmp.eq.s32.totalorder %s39, 0
      %p514 = por %p512, %p513
      %p515 = scmp.ne.s32.totalorder %s503, %s504
      %p516 = scmp.eq.s32.totalorder %s40, 10
      %p517 = por %p515, %p516
      %p519 = scmp.ne.s32.totalorder %s504, %s518
      %p520 = scmp.eq.s32.totalorder %s40, 0
      %p521 = por %p519, %p520
      %s523 = sadd.s32 %s522, 1
      %p526 = scmp.eq.s32.totalorder %s34, 10
      %p527 = scmp.ne.s32.totalorder %s522, %s524
      %p528 = scmp.eq.s32.totalorder %s34, 0
      %p529 = por %p527, %p528
      %p530 = scmp.ne.s32.totalorder %s522, %s524
      %p531 = scmp.eq.s32.totalorder %s39, 10
      %p532 = por %p530, %p531
      %p533 = scmp.ne.s32.totalorder %s524, %s525
      %p534 = scmp.eq.s32.totalorder %s39, 0
      %p535 = por %p533, %p534
      %p536 = scmp.ne.s32.totalorder %s524, %s525
      %p537 = scmp.eq.s32.totalorder %s40, 10
      %p538 = por %p536, %p537
      %p540 = scmp.ne.s32.totalorder %s525, %s539
      %p541 = scmp.eq.s32.totalorder %s40, 0
      %p542 = por %p540, %p541
      %s544 = sadd.s32 %s543, 1
      %p547 = scmp.eq.s32.totalorder %s34, 10
      %p548 = scmp.ne.s32.totalorder %s543, %s545
      %p549 = scmp.eq.s32.totalorder %s34, 0
      %p550 = por %p548, %p549
      %p551 = scmp.ne.s32.totalorder %s543, %s545
      %p552 = scmp.eq.s32.totalorder %s39, 10
      %p553 = por %p551, %p552
      %p554 = scmp.ne.s32.totalorder %s545, %s546
      %p555 = scmp.eq.s32.totalorder %s39, 0
      %p556 = por %p554, %p555
      %p557 = scmp.ne.s32.totalorder %s545, %s546
      %p558 = scmp.eq.s32.totalorder %s40, 10
      %p559 = por %p557, %p558
      %p561 = scmp.ne.s32.totalorder %s546, %s560
      %p562 = scmp.eq.s32.totalorder %s40, 0
      %p563 = por %p561, %p562
      %s565 = sadd.s32 %s564, 1
      %p568 = scmp.eq.s32.totalorder %s34, 10
      %p569 = scmp.ne.s32.totalorder %s564, %s566
      %p570 = scmp.eq.s32.totalorder %s34, 0
      %p571 = por %p569, %p570
      %p572 = scmp.ne.s32.totalorder %s564, %s566
      %p573 = scmp.eq.s32.totalorder %s39, 10
      %p574 = por %p572, %p573
      %p575 = scmp.ne.s32.totalorder %s566, %s567
      %p576 = scmp.eq.s32.totalorder %s39, 0
      %p577 = por %p575, %p576
      %p578 = scmp.ne.s32.totalorder %s566, %s567
      %p579 = scmp.eq.s32.totalorder %s40, 10
      %p580 = por %p578, %p579
      %p582 = scmp.ne.s32.totalorder %s567, %s581
      %p583 = scmp.eq.s32.totalorder %s40, 0
      %p584 = por %p582, %p583
      %s586 = sadd.s32 %s585, 1
      %p589 = scmp.eq.s32.totalorder %s34, 10
      %p590 = scmp.ne.s32.totalorder %s585, %s587
      %p591 = scmp.eq.s32.totalorder %s34, 0
      %p592 = por %p590, %p591
      %p593 = scmp.ne.s32.totalorder %s585, %s587
      %p594 = scmp.eq.s32.totalorder %s39, 10
      %p595 = por %p593, %p594
      %p596 = scmp.ne.s32.totalorder %s587, %s588
      %p597 = scmp.eq.s32.totalorder %s39, 0
      %p598 = por %p596, %p597
      %p599 = scmp.ne.s32.totalorder %s587, %s588
      %p600 = scmp.eq.s32.totalorder %s40, 10
      %p601 = por %p599, %p600
      %p603 = scmp.ne.s32.totalorder %s588, %s602
      %p604 = scmp.eq.s32.totalorder %s40, 0
      %p605 = por %p603, %p604
      %s607 = sadd.s32 %s606, 1
      %p610 = scmp.eq.s32.totalorder %s34, 10
      %p611 = scmp.ne.s32.totalorder %s606, %s608
      %p612 = scmp.eq.s32.totalorder %s34, 0
      %p613 = por %p611, %p612
      %p614 = scmp.ne.s32.totalorder %s606, %s608
      %p615 = scmp.eq.s32.totalorder %s39, 10
      %p616 = por %p614, %p615
      %p617 = scmp.ne.s32.totalorder %s608, %s609
      %p618 = scmp.eq.s32.totalorder %s39, 0
      %p619 = por %p617, %p618
      %p620 = scmp.ne.s32.totalorder %s608, %s609
      %p621 = scmp.eq.s32.totalorder %s40, 10
      %p622 = por %p620, %p621
      %p624 = scmp.ne.s32.totalorder %s609, %s623
      %p625 = scmp.eq.s32.totalorder %s40, 0
      %p626 = por %p624, %p625
      %s628 = sadd.s32 %s627, 1
      %p631 = scmp.eq.s32.totalorder %s34, 10
      %p632 = scmp.ne.s32.totalorder %s627, %s629
      %p633 = scmp.eq.s32.totalorder %s34, 0
      %p634 = por %p632, %p633
      %p635 = scmp.ne.s32.totalorder %s627, %s629
      %p636 = scmp.eq.s32.totalorder %s39, 10
      %p637 = por %p635, %p636
      %p638 = scmp.ne.s32.totalorder %s629, %s630
      %p639 = scmp.eq.s32.totalorder %s39, 0
      %p640 = por %p638, %p639
      %p641 = scmp.ne.s32.totalorder %s629, %s630
      %p642 = scmp.eq.s32.totalorder %s40, 10
      %p643 = por %p641, %p642
      %p645 = scmp.ne.s32.totalorder %s630, %s644
      %p646 = scmp.eq.s32.totalorder %s40, 0
      %p647 = por %p645, %p646
      %s649 = sadd.s32 %s648, 1
      %p652 = scmp.eq.s32.totalorder %s34, 10
      %p653 = scmp.ne.s32.totalorder %s648, %s650
      %p654 = scmp.eq.s32.totalorder %s34, 0
      %p655 = por %p653, %p654
      %p656 = scmp.ne.s32.totalorder %s648, %s650
      %p657 = scmp.eq.s32.totalorder %s39, 10
      %p658 = por %p656, %p657
      %p659 = scmp.ne.s32.totalorder %s650, %s651
      %p660 = scmp.eq.s32.totalorder %s39, 0
      %p661 = por %p659, %p660
      %p662 = scmp.ne.s32.totalorder %s650, %s651
      %p663 = scmp.eq.s32.totalorder %s40, 10
      %p664 = por %p662, %p663
      %p666 = scmp.ne.s32.totalorder %s651, %s665
      %p667 = scmp.eq.s32.totalorder %s40, 0
      %p668 = por %p666, %p667
      %p669 = scmp.le.s32.totalorder 1, %s34
      %p670 = scmp.lt.s32.totalorder %s34, 12
      %p671 = pnand %p669, %p670
      %p672 = pneg %p671
      // Predicated region
      $region9: #{vit_forward.1} parent=5 // pred_check
        _
      $region10: #{vit_forward.1} parent=5 // pred_check_branch
        %674 = sbr.rel (%p671) target = $region12
      $region11: #{vit_forward.1} parent=5 // pred_region
        %s675 = ssub.s32 %s34, 1
        // Predicated region
        $region13: #{vit_forward.1} parent=11 // pred_check
          %p676 = pneg %p55
        $region14: #{vit_forward.1} parent=11 // pred_check_branch
          %678 = sbr.rel (%p676) target = $region16
        $region15: #{vit_forward.1} parent=11 // pred_region
          _
        $region16: #{vit_forward.1} parent=11 // pred_fallthru
          _
        // Predicated region
        $region17: #{vit_forward.1} parent=11 // pred_check
          %p679 = pneg %p76
        $region18: #{vit_forward.1} parent=11 // pred_check_branch
          %681 = sbr.rel (%p679) target = $region20
        $region19: #{vit_forward.1} parent=11 // pred_region
          _
        $region20: #{vit_forward.1} parent=11 // pred_fallthru
          _
        // Predicated region
        $region21: #{vit_forward.1} parent=11 // pred_check
          %p682 = pneg %p97
        $region22: #{vit_forward.1} parent=11 // pred_check_branch
          %684 = sbr.rel (%p682) target = $region24
        $region23: #{vit_forward.1} parent=11 // pred_region
          _
        $region24: #{vit_forward.1} parent=11 // pred_fallthru
          _
        // Predicated region
        $region25: #{vit_forward.1} parent=11 // pred_check
          %p685 = pneg %p118
        $region26: #{vit_forward.1} parent=11 // pred_check_branch
          %687 = sbr.rel (%p685) target = $region28
        $region27: #{vit_forward.1} parent=11 // pred_region
          _
        $region28: #{vit_forward.1} parent=11 // pred_fallthru
          _
        // Predicated region
        $region29: #{vit_forward.1} parent=11 // pred_check
          %p688 = pneg %p139
        $region30: #{vit_forward.1} parent=11 // pred_check_branch
          %690 = sbr.rel (%p688) target = $region32
        $region31: #{vit_forward.1} parent=11 // pred_region
          _
        $region32: #{vit_forward.1} parent=11 // pred_fallthru
          _
        // Predicated region
        $region33: #{vit_forward.1} parent=11 // pred_check
          %p691 = pneg %p472
        $region34: #{vit_forward.1} parent=11 // pred_check_branch
          %693 = sbr.rel (%p691) target = $region36
        $region35: #{vit_forward.1} parent=11 // pred_region
          _
        $region36: #{vit_forward.1} parent=11 // pred_fallthru
          _
        // Predicated region
        $region37: #{vit_forward.1} parent=11 // pred_check
          %p694 = pneg %p493
        $region38: #{vit_forward.1} parent=11 // pred_check_branch
          %696 = sbr.rel (%p694) target = $region40
        $region39: #{vit_forward.1} parent=11 // pred_region
          _
        $region40: #{vit_forward.1} parent=11 // pred_fallthru
          _
        // Predicated region
        $region41: #{vit_forward.1} parent=11 // pred_check
          %p697 = pneg %p514
        $region42: #{vit_forward.1} parent=11 // pred_check_branch
          %699 = sbr.rel (%p697) target = $region44
        $region43: #{vit_forward.1} parent=11 // pred_region
          _
        $region44: #{vit_forward.1} parent=11 // pred_fallthru
          _
        // Predicated region
        $region45: #{vit_forward.1} parent=11 // pred_check
          %p700 = pneg %p535
        $region46: #{vit_forward.1} parent=11 // pred_check_branch
          %702 = sbr.rel (%p700) target = $region48
        $region47: #{vit_forward.1} parent=11 // pred_region
          _
        $region48: #{vit_forward.1} parent=11 // pred_fallthru
          _
        // Predicated region
        $region49: #{vit_forward.1} parent=11 // pred_check
          %p703 = pneg %p556
        $region50: #{vit_forward.1} parent=11 // pred_check_branch
          %705 = sbr.rel (%p703) target = $region52
        $region51: #{vit_forward.1} parent=11 // pred_region
          _
        $region52: #{vit_forward.1} parent=11 // pred_fallthru
          _
        // Predicated region
        $region53: #{vit_forward.1} parent=11 // pred_check
          %p706 = pneg %p577
        $region54: #{vit_forward.1} parent=11 // pred_check_branch
          %708 = sbr.rel (%p706) target = $region56
        $region55: #{vit_forward.1} parent=11 // pred_region
          _
        $region56: #{vit_forward.1} parent=11 // pred_fallthru
          _
        // Predicated region
        $region57: #{vit_forward.1} parent=11 // pred_check
          %p709 = pneg %p598
        $region58: #{vit_forward.1} parent=11 // pred_check_branch
          %711 = sbr.rel (%p709) target = $region60
        $region59: #{vit_forward.1} parent=11 // pred_region
          _
        $region60: #{vit_forward.1} parent=11 // pred_fallthru
          _
        // Predicated region
        $region61: #{vit_forward.1} parent=11 // pred_check
          %p712 = pneg %p619
        $region62: #{vit_forward.1} parent=11 // pred_check_branch
          %714 = sbr.rel (%p712) target = $region64
        $region63: #{vit_forward.1} parent=11 // pred_region
          _
        $region64: #{vit_forward.1} parent=11 // pred_fallthru
          _
      $region12: #{vit_forward.1} parent=5 // pred_fallthru
        _
      %p715 = scmp.lt.s32.totalorder %s34, 11
      // Predicated region
      $region65: #{vit_forward.1} parent=5 // pred_check
        %p716 = pneg %p715
      $region66: #{vit_forward.1} parent=5 // pred_check_branch
        %718 = sbr.rel (%p716) target = $region68
      $region67: #{vit_forward.1} parent=5 // pred_region
        // Predicated region
        $region69: #{vit_forward.1} parent=67 // pred_check
          %p719 = pneg %p159
        $region70: #{vit_forward.1} parent=67 // pred_check_branch
          %721 = sbr.rel (%p719) target = $region72
        $region71: #{vit_forward.1} parent=67 // pred_region
          %p722 = scmp.lt.s32.totalorder %s34, 10
          %s723 = scalar_select %p722, %s34, 10
          %s724 = smul.addr %s723, 16
          %s725 = smul.addr %s724, 4
          %s726 = scalar_lea.vmem %s5, %s725
        $region72: #{vit_forward.1} parent=67 // pred_fallthru
          _
        // Predicated region
        $region73: #{vit_forward.1} parent=67 // pred_check
          %p727 = pneg %p185
        $region74: #{vit_forward.1} parent=67 // pred_check_branch
          %729 = sbr.rel (%p727) target = $region76
        $region75: #{vit_forward.1} parent=67 // pred_region
          %p730 = scmp.lt.s32.totalorder %s34, 10
          %s731 = scalar_select %p730, %s34, 10
          %s732 = smul.addr %s731, 2
          %s733 = scalar_lea.vmem %s6, %s732
        $region76: #{vit_forward.1} parent=67 // pred_fallthru
          _
        // Predicated region
        $region77: #{vit_forward.1} parent=67 // pred_check
          %p734 = pneg %p211
        $region78: #{vit_forward.1} parent=67 // pred_check_branch
          %736 = sbr.rel (%p734) target = $region80
        $region79: #{vit_forward.1} parent=67 // pred_region
          %p737 = scmp.lt.s32.totalorder %s34, 10
          %s738 = scalar_select %p737, %s34, 10
          %s739 = smul.addr %s738, 8
          %s740 = smul.addr %s739, 4
          %s741 = scalar_lea.vmem %s7, %s740
        $region80: #{vit_forward.1} parent=67 // pred_fallthru
          _
        // Predicated region
        $region81: #{vit_forward.1} parent=67 // pred_check
          %p742 = pneg %p237
        $region82: #{vit_forward.1} parent=67 // pred_check_branch
          %744 = sbr.rel (%p742) target = $region84
        $region83: #{vit_forward.1} parent=67 // pred_region
          %p745 = scmp.lt.s32.totalorder %s34, 10
          %s746 = scalar_select %p745, %s34, 10
          %s747 = scalar_lea.vmem %s8, %s746
        $region84: #{vit_forward.1} parent=67 // pred_fallthru
          _
        // Predicated region
        $region85: #{vit_forward.1} parent=67 // pred_check
          %p748 = pneg %p263
        $region86: #{vit_forward.1} parent=67 // pred_check_branch
          %750 = sbr.rel (%p748) target = $region88
        $region87: #{vit_forward.1} parent=67 // pred_region
          %p751 = scmp.lt.s32.totalorder %s34, 10
          %s752 = scalar_select %p751, %s34, 10
          %s753 = scalar_lea.vmem %s9, %s752
        $region88: #{vit_forward.1} parent=67 // pred_fallthru
          _
        // Predicated region
        $region89: #{vit_forward.1} parent=67 // pred_check
          %p754 = pneg %p289
        $region90: #{vit_forward.1} parent=67 // pred_check_branch
          %756 = sbr.rel (%p754) target = $region92
        $region91: #{vit_forward.1} parent=67 // pred_region
          %p757 = scmp.lt.s32.totalorder %s34, 10
          %s758 = scalar_select %p757, %s34, 10
          %s759 = scalar_lea.vmem %s10, %s758
        $region92: #{vit_forward.1} parent=67 // pred_fallthru
          _
        // Predicated region
        $region93: #{vit_forward.1} parent=67 // pred_check
          %p760 = pneg %p315
        $region94: #{vit_forward.1} parent=67 // pred_check_branch
          %762 = sbr.rel (%p760) target = $region96
        $region95: #{vit_forward.1} parent=67 // pred_region
          %p763 = scmp.lt.s32.totalorder %s34, 10
          %s764 = scalar_select %p763, %s34, 10
          %s765 = smul.addr %s764, 128
          %s766 = smul.addr %s765, 4
          %s767 = scalar_lea.vmem %s11, %s766
        $region96: #{vit_forward.1} parent=67 // pred_fallthru
          _
        // Predicated region
        $region97: #{vit_forward.1} parent=67 // pred_check
          %p768 = pneg %p341
        $region98: #{vit_forward.1} parent=67 // pred_check_branch
          %770 = sbr.rel (%p768) target = $region100
        $region99: #{vit_forward.1} parent=67 // pred_region
          %p771 = scmp.lt.s32.totalorder %s34, 10
          %s772 = scalar_select %p771, %s34, 10
          %s773 = smul.addr %s772, 16
          %s774 = scalar_lea.vmem %s12, %s773
        $region100: #{vit_forward.1} parent=67 // pred_fallthru
          _
        // Predicated region
        $region101: #{vit_forward.1} parent=67 // pred_check
          %p775 = pneg %p367
        $region102: #{vit_forward.1} parent=67 // pred_check_branch
          %777 = sbr.rel (%p775) target = $region104
        $region103: #{vit_forward.1} parent=67 // pred_region
          %p778 = scmp.lt.s32.totalorder %s34, 10
          %s779 = scalar_select %p778, %s34, 10
          %s780 = smul.addr %s779, 256
          %s781 = smul.addr %s780, 4
          %s782 = scalar_lea.vmem %s13, %s781
        $region104: #{vit_forward.1} parent=67 // pred_fallthru
          _
        // Predicated region
        $region105: #{vit_forward.1} parent=67 // pred_check
          %p783 = pneg %p393
        $region106: #{vit_forward.1} parent=67 // pred_check_branch
          %785 = sbr.rel (%p783) target = $region108
        $region107: #{vit_forward.1} parent=67 // pred_region
          %p786 = scmp.lt.s32.totalorder %s34, 10
          %s787 = scalar_select %p786, %s34, 10
          %s788 = scalar_lea.vmem %s14, %s787
        $region108: #{vit_forward.1} parent=67 // pred_fallthru
          _
        // Predicated region
        $region109: #{vit_forward.1} parent=67 // pred_check
          %p789 = pneg %p419
        $region110: #{vit_forward.1} parent=67 // pred_check_branch
          %791 = sbr.rel (%p789) target = $region112
        $region111: #{vit_forward.1} parent=67 // pred_region
          %p792 = scmp.lt.s32.totalorder %s34, 10
          %s793 = scalar_select %p792, %s34, 10
          %s794 = scalar_lea.vmem %s15, %s793
        $region112: #{vit_forward.1} parent=67 // pred_fallthru
          _
        // Predicated region
        $region113: #{vit_forward.1} parent=67 // pred_check
          %p795 = pneg %p445
        $region114: #{vit_forward.1} parent=67 // pred_check_branch
          %797 = sbr.rel (%p795) target = $region116
        $region115: #{vit_forward.1} parent=67 // pred_region
          %p798 = scmp.lt.s32.totalorder %s34, 10
          %s799 = scalar_select %p798, %s34, 10
          %s800 = scalar_lea.vmem %s16, %s799
        $region116: #{vit_forward.1} parent=67 // pred_fallthru
          _
      $region68: #{vit_forward.1} parent=5 // pred_fallthru
        _
      %p801 = scmp.le.s32.totalorder 1, %s34
      %p802 = scmp.lt.s32.totalorder %s34, 12
      %p803 = pnand %p801, %p802
      %p804 = pneg %p803
      // Predicated region
      $region117: #{vit_forward.1} parent=5 // pred_check
        _
      $region118: #{vit_forward.1} parent=5 // pred_check_branch
        %806 = sbr.rel (%p803) target = $region120
      $region119: #{vit_forward.1} parent=5 // pred_region
        %s807 = ssub.s32 %s34, 1
        %p808 = pneg %p55
        %p809 = pneg %p52
        %p810 = pneg %p76
        %p811 = pneg %p73
        %p812 = pneg %p97
        %p813 = pneg %p94
        %p814 = pneg %p118
        %p815 = pneg %p115
        %p816 = pneg %p139
        %p817 = pneg %p136
        %p818 = scmp.lt.s32.totalorder %s39, 10
        %s819 = scalar_select %p818, %s39, 10
        %s820 = smul.addr %s819, 16
        %s821 = smul.addr %s820, 4
        %s822 = scalar_lea.vmem %s5, %s821
        %p823 = pneg %p165
        %p824 = pneg %p162
        %p825 = scmp.lt.s32.totalorder %s39, 10
        %s826 = scalar_select %p825, %s39, 10
        %s827 = smul.addr %s826, 2
        %s828 = scalar_lea.vmem %s6, %s827
        %p829 = pneg %p191
        %p830 = pneg %p188
        %p831 = scmp.lt.s32.totalorder %s39, 10
        %s832 = scalar_select %p831, %s39, 10
        %s833 = smul.addr %s832, 8
        %s834 = smul.addr %s833, 4
        %s835 = scalar_lea.vmem %s7, %s834
        %p836 = pneg %p217
        %p837 = pneg %p214
        %p838 = scmp.lt.s32.totalorder %s39, 10
        %s839 = scalar_select %p838, %s39, 10
        %s840 = scalar_lea.vmem %s8, %s839
        %p841 = pneg %p243
        %p842 = pneg %p240
        %p843 = scmp.lt.s32.totalorder %s39, 10
        %s844 = scalar_select %p843, %s39, 10
        %s845 = scalar_lea.vmem %s9, %s844
        %p846 = pneg %p269
        %p847 = pneg %p266
        %p848 = scmp.lt.s32.totalorder %s39, 10
        %s849 = scalar_select %p848, %s39, 10
        %s850 = scalar_lea.vmem %s10, %s849
        %p851 = pneg %p295
        %p852 = pneg %p292
        %p853 = scmp.lt.s32.totalorder %s39, 10
        %s854 = scalar_select %p853, %s39, 10
        %s855 = smul.addr %s854, 128
        %s856 = smul.addr %s855, 4
        %s857 = scalar_lea.vmem %s11, %s856
        %p858 = pneg %p321
        %p859 = pneg %p318
        %p860 = scmp.lt.s32.totalorder %s39, 10
        %s861 = scalar_select %p860, %s39, 10
        %s862 = smul.addr %s861, 16
        %s863 = scalar_lea.vmem %s12, %s862
        %p864 = pneg %p347
        %p865 = pneg %p344
        %p866 = scmp.lt.s32.totalorder %s39, 10
        %s867 = scalar_select %p866, %s39, 10
        %s868 = smul.addr %s867, 256
        %s869 = smul.addr %s868, 4
        %s870 = scalar_lea.vmem %s13, %s869
        %p871 = pneg %p373
        %p872 = pneg %p370
        %p873 = scmp.lt.s32.totalorder %s39, 10
        %s874 = scalar_select %p873, %s39, 10
        %s875 = scalar_lea.vmem %s14, %s874
        %p876 = pneg %p399
        %p877 = pneg %p396
        %p878 = scmp.lt.s32.totalorder %s39, 10
        %s879 = scalar_select %p878, %s39, 10
        %s880 = scalar_lea.vmem %s15, %s879
        %p881 = pneg %p425
        %p882 = pneg %p422
        %p883 = scmp.lt.s32.totalorder %s39, 10
        %s884 = scalar_select %p883, %s39, 10
        %s885 = scalar_lea.vmem %s16, %s884
        %p886 = pneg %p451
        %p887 = pneg %p448
        %p888 = pneg %p472
        %p889 = pneg %p469
        %p890 = pneg %p493
        %p891 = pneg %p490
        %p892 = pneg %p514
        %p893 = pneg %p511
        %p894 = pneg %p535
        %p895 = pneg %p532
        %p896 = pneg %p556
        %p897 = pneg %p553
        %p898 = pneg %p577
        %p899 = pneg %p574
        %p900 = pneg %p598
        %p901 = pneg %p595
        %p902 = pneg %p619
        %p903 = pneg %p616
        %p904 = pneg %p640
        %p905 = pneg %p637
        %p906 = pneg %p661
        %p907 = pneg %p658
        %p908 = scmp.lt.s32.totalorder %s39, 10
        %s909 = scalar_select %p908, %s39, 10
        %s910 = smul.addr %s909, 16
        %s911 = smul.addr %s910, 4
        %s912 = scalar_lea.vmem %s5, %s911
        %p913 = scmp.lt.s32.totalorder %s39, 10
        %s914 = scalar_select %p913, %s39, 10
        %s915 = smul.addr %s914, 2
        %s916 = scalar_lea.vmem %s6, %s915
        %p917 = scmp.lt.s32.totalorder %s39, 10
        %s918 = scalar_select %p917, %s39, 10
        %s919 = smul.addr %s918, 8
        %s920 = smul.addr %s919, 4
        %s921 = scalar_lea.vmem %s7, %s920
        %p922 = scmp.lt.s32.totalorder %s39, 10
        %s923 = scalar_select %p922, %s39, 10
        %s924 = scalar_lea.vmem %s8, %s923
        %p925 = scmp.lt.s32.totalorder %s39, 10
        %s926 = scalar_select %p925, %s39, 10
        %s927 = scalar_lea.vmem %s9, %s926
        %p928 = scmp.lt.s32.totalorder %s39, 10
        %s929 = scalar_select %p928, %s39, 10
        %s930 = scalar_lea.vmem %s10, %s929
        %p931 = scmp.lt.s32.totalorder %s39, 10
        %s932 = scalar_select %p931, %s39, 10
        %s933 = smul.addr %s932, 128
        %s934 = smul.addr %s933, 4
        %s935 = scalar_lea.vmem %s11, %s934
        %p936 = scmp.lt.s32.totalorder %s39, 10
        %s937 = scalar_select %p936, %s39, 10
        %s938 = smul.addr %s937, 16
        %s939 = scalar_lea.vmem %s12, %s938
        %p940 = scmp.lt.s32.totalorder %s39, 10
        %s941 = scalar_select %p940, %s39, 10
        %s942 = smul.addr %s941, 256
        %s943 = smul.addr %s942, 4
        %s944 = scalar_lea.vmem %s13, %s943
        %p945 = scmp.lt.s32.totalorder %s39, 10
        %s946 = scalar_select %p945, %s39, 10
        %s947 = scalar_lea.vmem %s14, %s946
        %p948 = scmp.lt.s32.totalorder %s39, 10
        %s949 = scalar_select %p948, %s39, 10
        %s950 = scalar_lea.vmem %s15, %s949
        %p951 = scmp.lt.s32.totalorder %s39, 10
        %s952 = scalar_select %p951, %s39, 10
        %s953 = scalar_lea.vmem %s16, %s952
        %p955 = scmp.eq.s32.totalorder %s39, 0
        // Predicated region
        $region121: #{vit_forward.1} parent=119 // pred_check
          %p956 = pneg %p955
        $region122: #{vit_forward.1} parent=119 // pred_check_branch
          %958 = sbr.rel (%p956) target = $region124
        $region123: #{vit_forward.1} parent=119 // pred_region
          %v959 = vld [vmem:[%s0] sm:$0xff]
          %v960 = vld [vmem:[%s0 + $0x8] sm:$0xff]
          %v961 = vld [vmem:[%s0 + $0x10] sm:$0xff]
          %v962 = vld [vmem:[%s0 + $0x18] sm:$0xff]
          %v963 = vld [vmem:[%s0 + $0x20] sm:$0xff]
          %v964 = vld [vmem:[%s0 + $0x28] sm:$0xff]
          %v965 = vld [vmem:[%s0 + $0x30] sm:$0xff]
          %v966 = vld [vmem:[%s0 + $0x38] sm:$0xff]
          %v967 = vld [vmem:[%s0 + $0x40] sm:$0xff]
          %v968 = vld [vmem:[%s0 + $0x48] sm:$0xff]
          %v969 = vld [vmem:[%s0 + $0x50] sm:$0xff]
          %v970 = vld [vmem:[%s0 + $0x58] sm:$0xff]
          %v971 = vld [vmem:[%s0 + $0x60] sm:$0xff]
          %v972 = vld [vmem:[%s0 + $0x68] sm:$0xff]
          %v973 = vld [vmem:[%s0 + $0x70] sm:$0xff]
          %v974 = vld [vmem:[%s0 + $0x78] sm:$0xff]
          %v975 = vpack.c.bf16 %v960, %v959
          %v976 = vpack.c.bf16 %v962, %v961
          %v977 = vpack.c.bf16 %v964, %v963
          %v978 = vpack.c.bf16 %v966, %v965
          %v979 = vpack.c.bf16 %v968, %v967
          %v980 = vpack.c.bf16 %v970, %v969
          %v981 = vpack.c.bf16 %v972, %v971
          %v982 = vpack.c.bf16 %v974, %v973
          %v983 = vld [vmem:[%s1] sm:$0xf]
          %v984 = vld [vmem:[%s1 + $0x4] sm:$0xf]
          %v985 = vld [vmem:[%s1 + $0x8] sm:$0xf]
          %v986 = vld [vmem:[%s1 + $0xc] sm:$0xf]
          %v987 = vld [vmem:[%s1 + $0x10] sm:$0xf]
          %v988 = vld [vmem:[%s1 + $0x14] sm:$0xf]
          %v989 = vld [vmem:[%s2] sm:$0x1]
          %v991 = vlaneseq
          %v992 = vshrl.u32 %v991, 7
          %v993 = vsub.s32 0, %v992
          %v994 = vrot.slane %v989, %v993
          %v1002 = vunpack.c.l.b16 %v983
          %v1003 = vunpack.c.l.b16 %v984
          %v1004 = vunpack.c.l.b16 %v985
          %v1005 = vunpack.c.l.b16 %v986
          %v1006 = vunpack.c.l.b16 %v987
          %v1007 = vunpack.c.l.b16 %v988
          %v1008 = vpack.c.b16 %v1003, %v1002
          %v1009 = vpack.c.b16 %v1005, %v1004
          %v1010 = vpack.c.b16 %v1007, %v1006
          %vm1014 = vcmask 392192
          %v1016 = vsel %vm1014, %v975, 0
          %v1019 = vsel %vm1014, %v976, 0
          %v1022 = vsel %vm1014, %v977, 0
          %v1025 = vsel %vm1014, %v978, 0
          %v1028 = vsel %vm1014, %v979, 0
          %v1031 = vsel %vm1014, %v980, 0
          %v1034 = vsel %vm1014, %v981, 0
          %v1037 = vsel %vm1014, %v982, 0
          %1039 = vmatprep.subr.bf16.mxu0 0
          %1040 = vmatpush1.bf16.msra.mxu0 %v1008
          %1041 = vmatprep.subr.bf16.mxu0 0
          %1042 = vmatpush1.bf16.msra.mxu0 %v1009
          %1043 = vmatprep.subr.bf16.mxu0 0
          %1044 = vmatpush1.bf16.msra.mxu0 %v1010
          %1045 = vmatprep.subr.bf16.mxu0 0
          %1046 = vmatpush1.bf16.msra.mxu0 0
          %1047 = vmatprep.subr.bf16.mxu0 0
          %1048 = vmatpush1.bf16.msra.mxu0 0
          %1049 = vmatprep.subr.bf16.mxu0 0
          %1050 = vmatpush1.bf16.msra.mxu0 0
          %1051 = vmatprep.subr.bf16.mxu0 0
          %1052 = vmatpush1.bf16.msra.mxu0 0
          %1053 = vmatprep.subr.bf16.mxu0 0
          %1054 = vmatpush1.bf16.msra.mxu0 0
          %1055 = vmatprep.subr.bf16.mxu0 0
          %1056 = vmatpush1.bf16.msra.mxu0 0
          %1057 = vmatprep.subr.bf16.mxu0 0
          %1058 = vmatpush1.bf16.msra.mxu0 0
          %1059 = vmatprep.subr.bf16.mxu0 0
          %1060 = vmatpush1.bf16.msra.mxu0 0
          %1061 = vmatprep.subr.bf16.mxu0 0
          %1062 = vmatpush1.bf16.msra.mxu0 0
          %1063 = vmatprep.subr.bf16.mxu0 0
          %1064 = vmatpush1.bf16.msra.mxu0 0
          %1065 = vmatprep.subr.bf16.mxu0 0
          %1066 = vmatpush1.bf16.msra.mxu0 0
          %1067 = vmatprep.subr.bf16.mxu0 0
          %1068 = vmatpush1.bf16.msra.mxu0 0
          %1069 = vmatprep.subr.bf16.mxu0 0
          %1070 = vmatpush1.bf16.msra.mxu0 0
          %1071 = vmatprep.mubr.bf16.mxu0 0
          %1072 = vmatmul.mubr.bf16.gmra.mrb[0].mxu0 %v1016
          %v1073 = vpop.f32.mrb[0].mxu0
          %v1074 = vadd.f32 %v994, %v1073
          %v1075 = vpop.f32.mrb[0].mxu0
          %v1076 = vpop.f32.mrb[0].mxu0
          %v1077 = vadd.f32 %v994, %v1076
          %v1078 = vpop.f32.mrb[0].mxu0
          %1079 = vmatprep.mubr.bf16.mxu0 0
          %1080 = vmatmul.mubr.bf16.gmra.mrb[0].mxu0 %v1019
          %v1081 = vpop.f32.mrb[0].mxu0
          %v1082 = vadd.f32 %v994, %v1081
          %v1083 = vpop.f32.mrb[0].mxu0
          %v1084 = vpop.f32.mrb[0].mxu0
          %v1085 = vadd.f32 %v994, %v1084
          %v1086 = vpop.f32.mrb[0].mxu0
          %1087 = vmatprep.mubr.bf16.mxu0 0
          %1088 = vmatmul.mubr.bf16.gmra.mrb[0].mxu0 %v1022
          %v1089 = vpop.f32.mrb[0].mxu0
          %v1090 = vadd.f32 %v994, %v1089
          %v1091 = vpop.f32.mrb[0].mxu0
          %v1092 = vpop.f32.mrb[0].mxu0
          %v1093 = vadd.f32 %v994, %v1092
          %v1094 = vpop.f32.mrb[0].mxu0
          %1095 = vmatprep.mubr.bf16.mxu0 0
          %1096 = vmatmul.mubr.bf16.gmra.mrb[0].mxu0 %v1025
          %v1097 = vpop.f32.mrb[0].mxu0
          %v1098 = vadd.f32 %v994, %v1097
          %v1099 = vpop.f32.mrb[0].mxu0
          %v1100 = vpop.f32.mrb[0].mxu0
          %v1101 = vadd.f32 %v994, %v1100
          %v1102 = vpop.f32.mrb[0].mxu0
          %1103 = vmatprep.mubr.bf16.mxu0 0
          %1104 = vmatmul.mubr.bf16.gmra.mrb[0].mxu0 %v1028
          %v1105 = vpop.f32.mrb[0].mxu0
          %v1106 = vadd.f32 %v994, %v1105
          %v1107 = vpop.f32.mrb[0].mxu0
          %v1108 = vpop.f32.mrb[0].mxu0
          %v1109 = vadd.f32 %v994, %v1108
          %v1110 = vpop.f32.mrb[0].mxu0
          %1111 = vmatprep.mubr.bf16.mxu0 0
          %1112 = vmatmul.mubr.bf16.gmra.mrb[0].mxu0 %v1031
          %v1113 = vpop.f32.mrb[0].mxu0
          %v1114 = vadd.f32 %v994, %v1113
          %v1115 = vpop.f32.mrb[0].mxu0
          %v1116 = vpop.f32.mrb[0].mxu0
          %v1117 = vadd.f32 %v994, %v1116
          %v1118 = vpop.f32.mrb[0].mxu0
          %1119 = vmatprep.mubr.bf16.mxu0 0
          %1120 = vmatmul.mubr.bf16.gmra.mrb[0].mxu0 %v1034
          %v1121 = vpop.f32.mrb[0].mxu0
          %v1122 = vadd.f32 %v994, %v1121
          %v1123 = vpop.f32.mrb[0].mxu0
          %v1124 = vpop.f32.mrb[0].mxu0
          %v1125 = vadd.f32 %v994, %v1124
          %v1126 = vpop.f32.mrb[0].mxu0
          %1127 = vmatprep.mubr.bf16.mxu0 0
          %1128 = vmatmul.mubr.bf16.gmra.mrb[0].mxu0 %v1037
          %v1129 = vpop.f32.mrb[0].mxu0
          %v1130 = vadd.f32 %v994, %v1129
          %v1131 = vpop.f32.mrb[0].mxu0
          %v1132 = vpop.f32.mrb[0].mxu0
          %v1133 = vadd.f32 %v994, %v1132
          %v1134 = vpop.f32.mrb[0].mxu0
          %1135 = vdwg.mxu0
          %v1136 = vld [vmem:[%s3] sm:$0xff]
          %v1137 = vld [vmem:[%s3 + $0x8] sm:$0xff]
          %v1138 = vld [vmem:[%s3 + $0x10] sm:$0xff]
          %v1139 = vld [vmem:[%s3 + $0x18] sm:$0xff]
          %v1140 = vld [vmem:[%s3 + $0x20] sm:$0xff]
          %v1141 = vld [vmem:[%s3 + $0x28] sm:$0xff]
          %v1142 = vld [vmem:[%s3 + $0x30] sm:$0xff]
          %v1143 = vld [vmem:[%s3 + $0x38] sm:$0xff]
          %v1144 = vld [vmem:[%s4] sm:$0xff]
          %v1145 = vld [vmem:[%s4 + $0x8] sm:$0xff]
          %v1146 = vld [vmem:[%s4 + $0x10] sm:$0xff]
          %v1147 = vld [vmem:[%s4 + $0x18] sm:$0xff]
          %v1148 = vld [vmem:[%s4 + $0x20] sm:$0xff]
          %v1149 = vld [vmem:[%s4 + $0x28] sm:$0xff]
          %v1150 = vld [vmem:[%s4 + $0x30] sm:$0xff]
          %v1151 = vld [vmem:[%s4 + $0x38] sm:$0xff]
          %1153 = vset.pattern.permute.xlu0 0
          %1154 = vperm.xlu0 %1153, %v1136
          %v1155 = vpop.permute.xlu0 %1154
          %1158 = vset.pattern.permute.xlu0 0
          %1159 = vperm.xlu0 %1158, %v1137
          %v1160 = vpop.permute.xlu0 %1159
          %1163 = vset.pattern.permute.xlu0 0
          %1164 = vperm.xlu0 %1163, %v1138
          %v1165 = vpop.permute.xlu0 %1164
          %1168 = vset.pattern.permute.xlu0 0
          %1169 = vperm.xlu0 %1168, %v1139
          %v1170 = vpop.permute.xlu0 %1169
          %1173 = vset.pattern.permute.xlu0 0
          %1174 = vperm.xlu0 %1173, %v1140
          %v1175 = vpop.permute.xlu0 %1174
          %1178 = vset.pattern.permute.xlu0 0
          %1179 = vperm.xlu0 %1178, %v1141
          %v1180 = vpop.permute.xlu0 %1179
          %1183 = vset.pattern.permute.xlu0 0
          %1184 = vperm.xlu0 %1183, %v1142
          %v1185 = vpop.permute.xlu0 %1184
          %1188 = vset.pattern.permute.xlu0 0
          %1189 = vperm.xlu0 %1188, %v1143
          %v1190 = vpop.permute.xlu0 %1189
          %v1192 = vmul.f32 %v1074, %v1155
          %v1193 = vmul.f32 %v1077, %v1160
          %v1194 = vmul.f32 %v1082, %v1165
          %v1195 = vmul.f32 %v1085, %v1170
          %v1196 = vmul.f32 %v1090, %v1175
          %v1197 = vmul.f32 %v1093, %v1180
          %v1198 = vmul.f32 %v1098, %v1185
          %v1199 = vmul.f32 %v1101, %v1190
          %v1200 = vmul.f32 %v1106, %v1155
          %v1201 = vmul.f32 %v1109, %v1160
          %v1202 = vmul.f32 %v1114, %v1165
          %v1203 = vmul.f32 %v1117, %v1170
          %v1204 = vmul.f32 %v1122, %v1175
          %v1205 = vmul.f32 %v1125, %v1180
          %v1206 = vmul.f32 %v1130, %v1185
          %v1207 = vmul.f32 %v1133, %v1190
          %v1208 = vadd.f32 %v1192, %v1144
          %v1209 = vadd.f32 %v1193, %v1145
          %v1210 = vadd.f32 %v1194, %v1146
          %v1211 = vadd.f32 %v1195, %v1147
          %v1212 = vadd.f32 %v1196, %v1148
          %v1213 = vadd.f32 %v1197, %v1149
          %v1214 = vadd.f32 %v1198, %v1150
          %v1215 = vadd.f32 %v1199, %v1151
          %v1216 = vadd.f32 %v1200, %v1144
          %v1217 = vadd.f32 %v1201, %v1145
          %v1218 = vadd.f32 %v1202, %v1146
          %v1219 = vadd.f32 %v1203, %v1147
          %v1220 = vadd.f32 %v1204, %v1148
          %v1221 = vadd.f32 %v1205, %v1149
          %v1222 = vadd.f32 %v1206, %v1150
          %v1223 = vadd.f32 %v1207, %v1151
          %vm1224 = vcmask 523264
          %1225 = vst.msk [vmem:[#allocation2] sm:$0xff] %vm1224, %v1208
          %1226 = vst.msk [vmem:[#allocation2 + $0x8] sm:$0xff] %vm1224, %v1209
          %1227 = vst.msk [vmem:[#allocation2 + $0x10] sm:$0xff] %vm1224, %v1210
          %1228 = vst.msk [vmem:[#allocation2 + $0x18] sm:$0xff] %vm1224, %v1211
          %1229 = vst.msk [vmem:[#allocation2 + $0x20] sm:$0xff] %vm1224, %v1212
          %1230 = vst.msk [vmem:[#allocation2 + $0x28] sm:$0xff] %vm1224, %v1213
          %1231 = vst.msk [vmem:[#allocation2 + $0x30] sm:$0xff] %vm1224, %v1214
          %1232 = vst.msk [vmem:[#allocation2 + $0x38] sm:$0xff] %vm1224, %v1215
          %1233 = vst.msk [vmem:[#allocation2 + $0x40] sm:$0xff] %vm1224, %v1216
          %1234 = vst.msk [vmem:[#allocation2 + $0x48] sm:$0xff] %vm1224, %v1217
          %1235 = vst.msk [vmem:[#allocation2 + $0x50] sm:$0xff] %vm1224, %v1218
          %1236 = vst.msk [vmem:[#allocation2 + $0x58] sm:$0xff] %vm1224, %v1219
          %1237 = vst.msk [vmem:[#allocation2 + $0x60] sm:$0xff] %vm1224, %v1220
          %1238 = vst.msk [vmem:[#allocation2 + $0x68] sm:$0xff] %vm1224, %v1221
          %1239 = vst.msk [vmem:[#allocation2 + $0x70] sm:$0xff] %vm1224, %v1222
          %1240 = vst.msk [vmem:[#allocation2 + $0x78] sm:$0xff] %vm1224, %v1223
        $region124: #{vit_forward.1} parent=119 // pred_fallthru
          _
        %v1241 = vld [vmem:[#allocation2] sm:$0xff]
        %v1242 = vld [vmem:[#allocation2 + $0x8] sm:$0xff]
        %v1243 = vld [vmem:[#allocation2 + $0x10] sm:$0xff]
        %v1244 = vld [vmem:[#allocation2 + $0x18] sm:$0xff]
        %v1245 = vld [vmem:[#allocation2 + $0x20] sm:$0xff]
        %v1246 = vld [vmem:[#allocation2 + $0x28] sm:$0xff]
        %v1247 = vld [vmem:[#allocation2 + $0x30] sm:$0xff]
        %v1248 = vld [vmem:[#allocation2 + $0x38] sm:$0xff]
        %v1249 = vld [vmem:[#allocation2 + $0x40] sm:$0xff]
        %v1250 = vld [vmem:[#allocation2 + $0x48] sm:$0xff]
        %v1251 = vld [vmem:[#allocation2 + $0x50] sm:$0xff]
        %v1252 = vld [vmem:[#allocation2 + $0x58] sm:$0xff]
        %v1253 = vld [vmem:[#allocation2 + $0x60] sm:$0xff]
        %v1254 = vld [vmem:[#allocation2 + $0x68] sm:$0xff]
        %v1255 = vld [vmem:[#allocation2 + $0x70] sm:$0xff]
        %v1256 = vld [vmem:[#allocation2 + $0x78] sm:$0xff]
        %v1257 = vpack.c.bf16 %v1242, %v1241
        %v1258 = vpack.c.bf16 %v1244, %v1243
        %v1259 = vpack.c.bf16 %v1246, %v1245
        %v1260 = vpack.c.bf16 %v1248, %v1247
        %v1261 = vpack.c.bf16 %v1250, %v1249
        %v1262 = vpack.c.bf16 %v1252, %v1251
        %v1263 = vpack.c.bf16 %v1254, %v1253
        %v1264 = vpack.c.bf16 %v1256, %v1255
        %v1265 = vld [vmem:[%s912] sm:$0xff]
        %v1266 = vld [vmem:[%s912 + $0x8] sm:$0xff]
        %v1267 = vld [vmem:[%s912 + $0x10] sm:$0xff]
        %v1268 = vld [vmem:[%s912 + $0x18] sm:$0xff]
        %v1269 = vld [vmem:[%s912 + $0x20] sm:$0xff]
        %v1270 = vld [vmem:[%s912 + $0x28] sm:$0xff]
        %v1271 = vld [vmem:[%s912 + $0x30] sm:$0xff]
        %v1272 = vld [vmem:[%s912 + $0x38] sm:$0xff]
        %v1273 = vld [vmem:[%s916] sm:$0x3]
        %v1275 = vlaneseq
        %v1276 = vshrl.u32 %v1275, 7
        %v1277 = vsub.s32 0, %v1276
        %v1278 = vrot.slane %v1273, %v1277
        %v1279 = vlaneseq
        %v1280 = vshrl.u32 %v1279, 7
        %v1281 = vsub.s32 1, %v1280
        %v1282 = vrot.slane %v1273, %v1281
        %v1293 = vunpack.c.l.b16 %v1265
        %v1294 = vunpack.c.h.b16 %v1265
        %v1295 = vunpack.c.l.b16 %v1266
        %v1296 = vunpack.c.h.b16 %v1266
        %v1297 = vunpack.c.l.b16 %v1267
        %v1298 = vunpack.c.h.b16 %v1267
        %v1299 = vunpack.c.l.b16 %v1268
        %v1300 = vunpack.c.h.b16 %v1268
        %v1301 = vunpack.c.l.b16 %v1269
        %v1302 = vunpack.c.h.b16 %v1269
        %v1303 = vunpack.c.l.b16 %v1270
        %v1304 = vunpack.c.h.b16 %v1270
        %v1305 = vunpack.c.l.b16 %v1271
        %v1306 = vunpack.c.h.b16 %v1271
        %v1307 = vunpack.c.l.b16 %v1272
        %v1308 = vunpack.c.h.b16 %v1272
        %v1309 = vpack.c.b16 %v1295, %v1293
        %v1310 = vpack.c.b16 %v1296, %v1294
        %v1311 = vpack.c.b16 %v1299, %v1297
        %v1312 = vpack.c.b16 %v1300, %v1298
        %v1313 = vpack.c.b16 %v1303, %v1301
        %v1314 = vpack.c.b16 %v1304, %v1302
        %v1315 = vpack.c.b16 %v1307, %v1305
        %v1316 = vpack.c.b16 %v1308, %v1306
        %vm1325 = vcmask 523264
        %v1327 = vsel %vm1325, %v1257, 0
        %v1330 = vsel %vm1325, %v1258, 0
        %v1333 = vsel %vm1325, %v1259, 0
        %v1336 = vsel %vm1325, %v1260, 0
        %v1339 = vsel %vm1325, %v1261, 0
        %v1342 = vsel %vm1325, %v1262, 0
        %v1345 = vsel %vm1325, %v1263, 0
        %v1348 = vsel %vm1325, %v1264, 0
        %1350 = vmatprep.subr.bf16.mxu0 %v1310
        %1351 = vmatpush1.bf16.msra.mxu0 %v1309
        %1352 = vmatprep.subr.bf16.mxu0 %v1312
        %1353 = vmatpush1.bf16.msra.mxu0 %v1311
        %1354 = vmatprep.subr.bf16.mxu0 %v1314
        %1355 = vmatpush1.bf16.msra.mxu0 %v1313
        %1356 = vmatprep.subr.bf16.mxu0 %v1316
        %1357 = vmatpush1.bf16.msra.mxu0 %v1315
        %1358 = vmatprep.subr.bf16.mxu0 0
        %1359 = vmatpush1.bf16.msra.mxu0 0
        %1360 = vmatprep.subr.bf16.mxu0 0
        %1361 = vmatpush1.bf16.msra.mxu0 0
        %1362 = vmatprep.subr.bf16.mxu0 0
        %1363 = vmatpush1.bf16.msra.mxu0 0
        %1364 = vmatprep.subr.bf16.mxu0 0
        %1365 = vmatpush1.bf16.msra.mxu0 0
        %1366 = vmatprep.subr.bf16.mxu0 0
        %1367 = vmatpush1.bf16.msra.mxu0 0
        %1368 = vmatprep.subr.bf16.mxu0 0
        %1369 = vmatpush1.bf16.msra.mxu0 0
        %1370 = vmatprep.subr.bf16.mxu0 0
        %1371 = vmatpush1.bf16.msra.mxu0 0
        %1372 = vmatprep.subr.bf16.mxu0 0
        %1373 = vmatpush1.bf16.msra.mxu0 0
        %1374 = vmatprep.subr.bf16.mxu0 0
        %1375 = vmatpush1.bf16.msra.mxu0 0
        %1376 = vmatprep.subr.bf16.mxu0 0
        %1377 = vmatpush1.bf16.msra.mxu0 0
        %1378 = vmatprep.subr.bf16.mxu0 0
        %1379 = vmatpush1.bf16.msra.mxu0 0
        %1380 = vmatprep.subr.bf16.mxu0 0
        %1381 = vmatpush1.bf16.msra.mxu0 0
        %1382 = vmatprep.mubr.bf16.mxu0 0
        %1383 = vmatmul.mubr.bf16.gmra.mrb[0].mxu0 %v1327
        %v1384 = vpop.f32.mrb[0].mxu0
        %v1385 = vadd.f32 %v1278, %v1384
        %v1386 = vpop.f32.mrb[0].mxu0
        %v1387 = vadd.f32 %v1282, %v1386
        %v1388 = vpop.f32.mrb[0].mxu0
        %v1389 = vadd.f32 %v1278, %v1388
        %v1390 = vpop.f32.mrb[0].mxu0
        %v1391 = vadd.f32 %v1282, %v1390
        %1392 = vmatprep.mubr.bf16.mxu0 0
        %1393 = vmatmul.mubr.bf16.gmra.mrb[0].mxu0 %v1330
        %v1394 = vpop.f32.mrb[0].mxu0
        %v1395 = vadd.f32 %v1278, %v1394
        %v1396 = vpop.f32.mrb[0].mxu0
        %v1397 = vadd.f32 %v1282, %v1396
        %v1398 = vpop.f32.mrb[0].mxu0
        %v1399 = vadd.f32 %v1278, %v1398
        %v1400 = vpop.f32.mrb[0].mxu0
        %v1401 = vadd.f32 %v1282, %v1400
        %1402 = vmatprep.mubr.bf16.mxu0 0
        %1403 = vmatmul.mubr.bf16.gmra.mrb[0].mxu0 %v1333
        %v1404 = vpop.f32.mrb[0].mxu0
        %v1405 = vadd.f32 %v1278, %v1404
        %v1406 = vpop.f32.mrb[0].mxu0
        %v1407 = vadd.f32 %v1282, %v1406
        %v1408 = vpop.f32.mrb[0].mxu0
        %v1409 = vadd.f32 %v1278, %v1408
        %v1410 = vpop.f32.mrb[0].mxu0
        %v1411 = vadd.f32 %v1282, %v1410
        %1412 = vmatprep.mubr.bf16.mxu0 0
        %1413 = vmatmul.mubr.bf16.gmra.mrb[0].mxu0 %v1336
        %v1414 = vpop.f32.mrb[0].mxu0
        %v1415 = vadd.f32 %v1278, %v1414
        %v1416 = vpop.f32.mrb[0].mxu0
        %v1417 = vadd.f32 %v1282, %v1416
        %v1418 = vpop.f32.mrb[0].mxu0
        %v1419 = vadd.f32 %v1278, %v1418
        %v1420 = vpop.f32.mrb[0].mxu0
        %v1421 = vadd.f32 %v1282, %v1420
        %1422 = vmatprep.mubr.bf16.mxu0 0
        %1423 = vmatmul.mubr.bf16.gmra.mrb[0].mxu0 %v1339
        %v1424 = vpop.f32.mrb[0].mxu0
        %v1425 = vadd.f32 %v1278, %v1424
        %v1426 = vpop.f32.mrb[0].mxu0
        %v1427 = vadd.f32 %v1282, %v1426
        %v1428 = vpop.f32.mrb[0].mxu0
        %v1429 = vadd.f32 %v1278, %v1428
        %v1430 = vpop.f32.mrb[0].mxu0
        %v1431 = vadd.f32 %v1282, %v1430
        %1432 = vmatprep.mubr.bf16.mxu0 0
        %1433 = vmatmul.mubr.bf16.gmra.mrb[0].mxu0 %v1342
        %v1434 = vpop.f32.mrb[0].mxu0
        %v1435 = vadd.f32 %v1278, %v1434
        %v1436 = vpop.f32.mrb[0].mxu0
        %v1437 = vadd.f32 %v1282, %v1436
        %v1438 = vpop.f32.mrb[0].mxu0
        %v1439 = vadd.f32 %v1278, %v1438
        %v1440 = vpop.f32.mrb[0].mxu0
        %v1441 = vadd.f32 %v1282, %v1440
        %1442 = vmatprep.mubr.bf16.mxu0 0
        %1443 = vmatmul.mubr.bf16.gmra.mrb[0].mxu0 %v1345
        %v1444 = vpop.f32.mrb[0].mxu0
        %v1445 = vadd.f32 %v1278, %v1444
        %v1446 = vpop.f32.mrb[0].mxu0
        %v1447 = vadd.f32 %v1282, %v1446
        %v1448 = vpop.f32.mrb[0].mxu0
        %v1449 = vadd.f32 %v1278, %v1448
        %v1450 = vpop.f32.mrb[0].mxu0
        %v1451 = vadd.f32 %v1282, %v1450
        %1452 = vmatprep.mubr.bf16.mxu0 0
        %1453 = vmatmul.mubr.bf16.gmra.mrb[0].mxu0 %v1348
        %v1454 = vpop.f32.mrb[0].mxu0
        %v1455 = vadd.f32 %v1278, %v1454
        %v1456 = vpop.f32.mrb[0].mxu0
        %v1457 = vadd.f32 %v1282, %v1456
        %v1458 = vpop.f32.mrb[0].mxu0
        %v1459 = vadd.f32 %v1278, %v1458
        %v1460 = vpop.f32.mrb[0].mxu0
        %v1461 = vadd.f32 %v1282, %v1460
        %1462 = vdwg.mxu0
        %1471 = vrot.lane.b32.xlu0 %v1385, 64
        %v1472 = vpop.permute.xlu0 %1471
        %1473 = vrot.lane.b32.xlu0 %v1389, 64
        %v1474 = vpop.permute.xlu0 %1473
        %1475 = vrot.lane.b32.xlu0 %v1395, 64
        %v1476 = vpop.permute.xlu0 %1475
        %1477 = vrot.lane.b32.xlu0 %v1399, 64
        %v1478 = vpop.permute.xlu0 %1477
        %1479 = vrot.lane.b32.xlu0 %v1405, 64
        %v1480 = vpop.permute.xlu0 %1479
        %1481 = vrot.lane.b32.xlu0 %v1409, 64
        %v1482 = vpop.permute.xlu0 %1481
        %1483 = vrot.lane.b32.xlu0 %v1415, 64
        %v1484 = vpop.permute.xlu0 %1483
        %1485 = vrot.lane.b32.xlu0 %v1419, 64
        %v1486 = vpop.permute.xlu0 %1485
        %v1495 = vsel %vm1325, %v1472, %v1425
        %v1496 = vsel %vm1325, %v1474, %v1429
        %v1497 = vsel %vm1325, %v1476, %v1435
        %v1498 = vsel %vm1325, %v1478, %v1439
        %v1499 = vsel %vm1325, %v1480, %v1445
        %v1500 = vsel %vm1325, %v1482, %v1449
        %v1501 = vsel %vm1325, %v1484, %v1455
        %v1502 = vsel %vm1325, %v1486, %v1459
        %1511 = vrot.lane.b32.xlu0 %v1427, 64
        %v1512 = vpop.permute.xlu0 %1511
        %1513 = vrot.lane.b32.xlu0 %v1431, 64
        %v1514 = vpop.permute.xlu0 %1513
        %1515 = vrot.lane.b32.xlu0 %v1437, 64
        %v1516 = vpop.permute.xlu0 %1515
        %1517 = vrot.lane.b32.xlu0 %v1441, 64
        %v1518 = vpop.permute.xlu0 %1517
        %1519 = vrot.lane.b32.xlu0 %v1447, 64
        %v1520 = vpop.permute.xlu0 %1519
        %1521 = vrot.lane.b32.xlu0 %v1451, 64
        %v1522 = vpop.permute.xlu0 %1521
        %1523 = vrot.lane.b32.xlu0 %v1457, 64
        %v1524 = vpop.permute.xlu0 %1523
        %1525 = vrot.lane.b32.xlu0 %v1461, 64
        %v1526 = vpop.permute.xlu0 %1525
        %v1535 = vsel %vm1325, %v1387, %v1512
        %v1536 = vsel %vm1325, %v1391, %v1514
        %v1537 = vsel %vm1325, %v1397, %v1516
        %v1538 = vsel %vm1325, %v1401, %v1518
        %v1539 = vsel %vm1325, %v1407, %v1520
        %v1540 = vsel %vm1325, %v1411, %v1522
        %v1541 = vsel %vm1325, %v1417, %v1524
        %v1542 = vsel %vm1325, %v1421, %v1526
        %1551 = vrot.lane.b32.xlu0 %v1425, 64
        %v1552 = vpop.permute.xlu0 %1551
        %1553 = vrot.lane.b32.xlu0 %v1429, 64
        %v1554 = vpop.permute.xlu0 %1553
        %1555 = vrot.lane.b32.xlu0 %v1435, 64
        %v1556 = vpop.permute.xlu0 %1555
        %1557 = vrot.lane.b32.xlu0 %v1439, 64
        %v1558 = vpop.permute.xlu0 %1557
        %1559 = vrot.lane.b32.xlu0 %v1445, 64
        %v1560 = vpop.permute.xlu0 %1559
        %1561 = vrot.lane.b32.xlu0 %v1449, 64
        %v1562 = vpop.permute.xlu0 %1561
        %1563 = vrot.lane.b32.xlu0 %v1455, 64
        %v1564 = vpop.permute.xlu0 %1563
        %1565 = vrot.lane.b32.xlu0 %v1459, 64
        %v1566 = vpop.permute.xlu0 %1565
        %v1575 = vsel %vm1325, %v1385, %v1472
        %v1576 = vsel %vm1325, %v1389, %v1474
        %v1577 = vsel %vm1325, %v1395, %v1476
        %v1578 = vsel %vm1325, %v1399, %v1478
        %v1579 = vsel %vm1325, %v1405, %v1480
        %v1580 = vsel %vm1325, %v1409, %v1482
        %v1581 = vsel %vm1325, %v1415, %v1484
        %v1582 = vsel %vm1325, %v1419, %v1486
        %v1583 = vsel %vm1325, %v1425, %v1552
        %v1584 = vsel %vm1325, %v1429, %v1554
        %v1585 = vsel %vm1325, %v1435, %v1556
        %v1586 = vsel %vm1325, %v1439, %v1558
        %v1587 = vsel %vm1325, %v1445, %v1560
        %v1588 = vsel %vm1325, %v1449, %v1562
        %v1589 = vsel %vm1325, %v1455, %v1564
        %v1590 = vsel %vm1325, %v1459, %v1566
        %v1591 = vmul.f32 %v1575, %v1495
        %v1592 = vmul.f32 %v1576, %v1496
        %v1593 = vmul.f32 %v1577, %v1497
        %v1594 = vmul.f32 %v1578, %v1498
        %v1595 = vmul.f32 %v1579, %v1499
        %v1596 = vmul.f32 %v1580, %v1500
        %v1597 = vmul.f32 %v1581, %v1501
        %v1598 = vmul.f32 %v1582, %v1502
        %v1599 = vmul.f32 %v1583, %v1495
        %v1600 = vmul.f32 %v1584, %v1496
        %v1601 = vmul.f32 %v1585, %v1497
        %v1602 = vmul.f32 %v1586, %v1498
        %v1603 = vmul.f32 %v1587, %v1499
        %v1604 = vmul.f32 %v1588, %v1500
        %v1605 = vmul.f32 %v1589, %v1501
        %v1606 = vmul.f32 %v1590, %v1502
        %v1607 = vld [vmem:[%s17] sm:$0xff]
        %v1608 = vld [vmem:[%s17 + $0x8] sm:$0xff]
        %v1609 = vld [vmem:[%s17 + $0x10] sm:$0xff]
        %v1610 = vld [vmem:[%s17 + $0x18] sm:$0xff]
        %v1611 = vld [vmem:[%s17 + $0x20] sm:$0xff]
        %v1612 = vld [vmem:[%s17 + $0x28] sm:$0xff]
        %v1613 = vld [vmem:[%s17 + $0x30] sm:$0xff]
        %v1614 = vld [vmem:[%s17 + $0x38] sm:$0xff]
        %v1615 = vld [vmem:[%s17 + $0x40] sm:$0xff]
        %v1616 = vld [vmem:[%s17 + $0x48] sm:$0xff]
        %v1617 = vld [vmem:[%s17 + $0x50] sm:$0xff]
        %v1618 = vld [vmem:[%s17 + $0x58] sm:$0xff]
        %v1619 = vld [vmem:[%s17 + $0x60] sm:$0xff]
        %v1620 = vld [vmem:[%s17 + $0x68] sm:$0xff]
        %v1621 = vld [vmem:[%s17 + $0x70] sm:$0xff]
        %v1622 = vld [vmem:[%s17 + $0x78] sm:$0xff]
        %1623 = vmatprep.subr.mxu0 0.0
        %1624 = vmatpush1.msra.mxu0 %v1607
        %1625 = vmatprep.subr.mxu0 0.0
        %1626 = vmatpush1.msra.mxu0 %v1608
        %1627 = vmatprep.subr.mxu0 0.0
        %1628 = vmatpush1.msra.mxu0 %v1609
        %1629 = vmatprep.subr.mxu0 0.0
        %1630 = vmatpush1.msra.mxu0 %v1610
        %1631 = vmatprep.subr.mxu0 0.0
        %1632 = vmatpush1.msra.mxu0 %v1611
        %1633 = vmatprep.subr.mxu0 0.0
        %1634 = vmatpush1.msra.mxu0 %v1612
        %1635 = vmatprep.subr.mxu0 0.0
        %1636 = vmatpush1.msra.mxu0 %v1613
        %1637 = vmatprep.subr.mxu0 0.0
        %1638 = vmatpush1.msra.mxu0 %v1614
        %1639 = vmatprep.subr.mxu0 0.0
        %1640 = vmatpush1.msra.mxu0 %v1615
        %1641 = vmatprep.subr.mxu0 0.0
        %1642 = vmatpush1.msra.mxu0 %v1616
        %1643 = vmatprep.subr.mxu0 0.0
        %1644 = vmatpush1.msra.mxu0 %v1617
        %1645 = vmatprep.subr.mxu0 0.0
        %1646 = vmatpush1.msra.mxu0 %v1618
        %1647 = vmatprep.subr.mxu0 0.0
        %1648 = vmatpush1.msra.mxu0 %v1619
        %1649 = vmatprep.subr.mxu0 0.0
        %1650 = vmatpush1.msra.mxu0 %v1620
        %1651 = vmatprep.subr.mxu0 0.0
        %1652 = vmatpush1.msra.mxu0 %v1621
        %1653 = vmatprep.subr.mxu0 0.0
        %1654 = vmatpush1.msra.mxu0 %v1622
        %1655 = vmatprep.subr.mxu0 0.0
        %1656 = vmatpush1.msra.mxu0 0.0
        %1657 = vmatprep.subr.mxu0 0.0
        %1658 = vmatpush1.msra.mxu0 0.0
        %1659 = vmatprep.subr.mxu0 0.0
        %1660 = vmatpush1.msra.mxu0 0.0
        %1661 = vmatprep.subr.mxu0 0.0
        %1662 = vmatpush1.msra.mxu0 0.0
        %1663 = vmatprep.subr.mxu0 0.0
        %1664 = vmatpush1.msra.mxu0 0.0
        %1665 = vmatprep.subr.mxu0 0.0
        %1666 = vmatpush1.msra.mxu0 0.0
        %1667 = vmatprep.subr.mxu0 0.0
        %1668 = vmatpush1.msra.mxu0 0.0
        %1669 = vmatprep.subr.mxu0 0.0
        %1670 = vmatpush1.msra.mxu0 0.0
        %1671 = vmatprep.subr.mxu0 0.0
        %1672 = vmatpush1.msra.mxu0 0.0
        %1673 = vmatprep.subr.mxu0 0.0
        %1674 = vmatpush1.msra.mxu0 0.0
        %1675 = vmatprep.subr.mxu0 0.0
        %1676 = vmatpush1.msra.mxu0 0.0
        %1677 = vmatprep.subr.mxu0 0.0
        %1678 = vmatpush1.msra.mxu0 0.0
        %1679 = vmatprep.subr.mxu0 0.0
        %1680 = vmatpush1.msra.mxu0 0.0
        %1681 = vmatprep.subr.mxu0 0.0
        %1682 = vmatpush1.msra.mxu0 0.0
        %1683 = vmatprep.subr.mxu0 0.0
        %1684 = vmatpush1.msra.mxu0 0.0
        %1685 = vmatprep.subr.mxu0 0.0
        %1686 = vmatpush1.msra.mxu0 0.0
        %1687 = vmatprep.mubr.f32.mxu0 0.0
        %1688 = vmatmul.mubr.f32.gmra.mrb[0].mxu0 %v1591
        %v1689 = vpop.f32.mrb[0].mxu0
        %v1690 = vadd.f32 0.0, %v1689
        %v1691 = vpop.f32.mrb[0].mxu0
        %1692 = vmatprep.mubr.f32.mxu0 0.0
        %1693 = vmatmul.mubr.f32.gmra.mrb[0].mxu0 %v1592
        %v1694 = vpop.f32.mrb[0].mxu0
        %v1695 = vadd.f32 0.0, %v1694
        %v1696 = vpop.f32.mrb[0].mxu0
        %1697 = vmatprep.mubr.f32.mxu0 0.0
        %1698 = vmatmul.mubr.f32.gmra.mrb[0].mxu0 %v1593
        %v1699 = vpop.f32.mrb[0].mxu0
        %v1700 = vadd.f32 0.0, %v1699
        %v1701 = vpop.f32.mrb[0].mxu0
        %1702 = vmatprep.mubr.f32.mxu0 0.0
        %1703 = vmatmul.mubr.f32.gmra.mrb[0].mxu0 %v1594
        %v1704 = vpop.f32.mrb[0].mxu0
        %v1705 = vadd.f32 0.0, %v1704
        %v1706 = vpop.f32.mrb[0].mxu0
        %1707 = vmatprep.mubr.f32.mxu0 0.0
        %1708 = vmatmul.mubr.f32.gmra.mrb[0].mxu0 %v1595
        %v1709 = vpop.f32.mrb[0].mxu0
        %v1710 = vadd.f32 0.0, %v1709
        %v1711 = vpop.f32.mrb[0].mxu0
        %1712 = vmatprep.mubr.f32.mxu0 0.0
        %1713 = vmatmul.mubr.f32.gmra.mrb[0].mxu0 %v1596
        %v1714 = vpop.f32.mrb[0].mxu0
        %v1715 = vadd.f32 0.0, %v1714
        %v1716 = vpop.f32.mrb[0].mxu0
        %1717 = vmatprep.mubr.f32.mxu0 0.0
        %1718 = vmatmul.mubr.f32.gmra.mrb[0].mxu0 %v1597
        %v1719 = vpop.f32.mrb[0].mxu0
        %v1720 = vadd.f32 0.0, %v1719
        %v1721 = vpop.f32.mrb[0].mxu0
        %1722 = vmatprep.mubr.f32.mxu0 0.0
        %1723 = vmatmul.mubr.f32.gmra.mrb[0].mxu0 %v1598
        %v1724 = vpop.f32.mrb[0].mxu0
        %v1725 = vadd.f32 0.0, %v1724
        %v1726 = vpop.f32.mrb[0].mxu0
        %1727 = vmatprep.mubr.f32.mxu0 0.0
        %1728 = vmatmul.mubr.f32.gmra.mrb[0].mxu0 %v1599
        %v1729 = vpop.f32.mrb[0].mxu0
        %v1730 = vadd.f32 0.0, %v1729
        %v1731 = vpop.f32.mrb[0].mxu0
        %1732 = vmatprep.mubr.f32.mxu0 0.0
        %1733 = vmatmul.mubr.f32.gmra.mrb[0].mxu0 %v1600
        %v1734 = vpop.f32.mrb[0].mxu0
        %v1735 = vadd.f32 0.0, %v1734
        %v1736 = vpop.f32.mrb[0].mxu0
        %1737 = vmatprep.mubr.f32.mxu0 0.0
        %1738 = vmatmul.mubr.f32.gmra.mrb[0].mxu0 %v1601
        %v1739 = vpop.f32.mrb[0].mxu0
        %v1740 = vadd.f32 0.0, %v1739
        %v1741 = vpop.f32.mrb[0].mxu0
        %1742 = vmatprep.mubr.f32.mxu0 0.0
        %1743 = vmatmul.mubr.f32.gmra.mrb[0].mxu0 %v1602
        %v1744 = vpop.f32.mrb[0].mxu0
        %v1745 = vadd.f32 0.0, %v1744
        %v1746 = vpop.f32.mrb[0].mxu0
        %1747 = vmatprep.mubr.f32.mxu0 0.0
        %1748 = vmatmul.mubr.f32.gmra.mrb[0].mxu0 %v1603
        %v1749 = vpop.f32.mrb[0].mxu0
        %v1750 = vadd.f32 0.0, %v1749
        %v1751 = vpop.f32.mrb[0].mxu0
        %1752 = vmatprep.mubr.f32.mxu0 0.0
        %1753 = vmatmul.mubr.f32.gmra.mrb[0].mxu0 %v1604
        %v1754 = vpop.f32.mrb[0].mxu0
        %v1755 = vadd.f32 0.0, %v1754
        %v1756 = vpop.f32.mrb[0].mxu0
        %1757 = vmatprep.mubr.f32.mxu0 0.0
        %1758 = vmatmul.mubr.f32.gmra.mrb[0].mxu0 %v1605
        %v1759 = vpop.f32.mrb[0].mxu0
        %v1760 = vadd.f32 0.0, %v1759
        %v1761 = vpop.f32.mrb[0].mxu0
        %1762 = vmatprep.mubr.f32.mxu0 0.0
        %1763 = vmatmul.mubr.f32.gmra.mrb[0].mxu0 %v1606
        %v1764 = vpop.f32.mrb[0].mxu0
        %v1765 = vadd.f32 0.0, %v1764
        %v1766 = vpop.f32.mrb[0].mxu0
        %1767 = vdwg.mxu0
        %1784 = vrot.lane.b32.xlu0 %v1690, 120
        %v1785 = vpop.permute.xlu0 %1784
        %1786 = vrot.lane.b32.xlu0 %v1695, 120
        %v1787 = vpop.permute.xlu0 %1786
        %1788 = vrot.lane.b32.xlu0 %v1700, 120
        %v1789 = vpop.permute.xlu0 %1788
        %1790 = vrot.lane.b32.xlu0 %v1705, 120
        %v1791 = vpop.permute.xlu0 %1790
        %1792 = vrot.lane.b32.xlu0 %v1710, 120
        %v1793 = vpop.permute.xlu0 %1792
        %1794 = vrot.lane.b32.xlu0 %v1715, 120
        %v1795 = vpop.permute.xlu0 %1794
        %1796 = vrot.lane.b32.xlu0 %v1720, 120
        %v1797 = vpop.permute.xlu0 %1796
        %1798 = vrot.lane.b32.xlu0 %v1725, 120
        %v1799 = vpop.permute.xlu0 %1798
        %1800 = vrot.lane.b32.xlu0 %v1730, 120
        %v1801 = vpop.permute.xlu0 %1800
        %1802 = vrot.lane.b32.xlu0 %v1735, 120
        %v1803 = vpop.permute.xlu0 %1802
        %1804 = vrot.lane.b32.xlu0 %v1740, 120
        %v1805 = vpop.permute.xlu0 %1804
        %1806 = vrot.lane.b32.xlu0 %v1745, 120
        %v1807 = vpop.permute.xlu0 %1806
        %1808 = vrot.lane.b32.xlu0 %v1750, 120
        %v1809 = vpop.permute.xlu0 %1808
        %1810 = vrot.lane.b32.xlu0 %v1755, 120
        %v1811 = vpop.permute.xlu0 %1810
        %1812 = vrot.lane.b32.xlu0 %v1760, 120
        %v1813 = vpop.permute.xlu0 %1812
        %1814 = vrot.lane.b32.xlu0 %v1765, 120
        %v1815 = vpop.permute.xlu0 %1814
        %v1832 = vmax.f32 %v1690, %v1785
        %v1833 = vmax.f32 %v1695, %v1787
        %v1834 = vmax.f32 %v1700, %v1789
        %v1835 = vmax.f32 %v1705, %v1791
        %v1836 = vmax.f32 %v1710, %v1793
        %v1837 = vmax.f32 %v1715, %v1795
        %v1838 = vmax.f32 %v1720, %v1797
        %v1839 = vmax.f32 %v1725, %v1799
        %v1840 = vmax.f32 %v1730, %v1801
        %v1841 = vmax.f32 %v1735, %v1803
        %v1842 = vmax.f32 %v1740, %v1805
        %v1843 = vmax.f32 %v1745, %v1807
        %v1844 = vmax.f32 %v1750, %v1809
        %v1845 = vmax.f32 %v1755, %v1811
        %v1846 = vmax.f32 %v1760, %v1813
        %v1847 = vmax.f32 %v1765, %v1815
        %1864 = vrot.lane.b32.xlu0 %v1832, 8
        %v1865 = vpop.permute.xlu0 %1864
        %1866 = vrot.lane.b32.xlu0 %v1833, 8
        %v1867 = vpop.permute.xlu0 %1866
        %1868 = vrot.lane.b32.xlu0 %v1834, 8
        %v1869 = vpop.permute.xlu0 %1868
        %1870 = vrot.lane.b32.xlu0 %v1835, 8
        %v1871 = vpop.permute.xlu0 %1870
        %1872 = vrot.lane.b32.xlu0 %v1836, 8
        %v1873 = vpop.permute.xlu0 %1872
        %1874 = vrot.lane.b32.xlu0 %v1837, 8
        %v1875 = vpop.permute.xlu0 %1874
        %1876 = vrot.lane.b32.xlu0 %v1838, 8
        %v1877 = vpop.permute.xlu0 %1876
        %1878 = vrot.lane.b32.xlu0 %v1839, 8
        %v1879 = vpop.permute.xlu0 %1878
        %1880 = vrot.lane.b32.xlu0 %v1840, 8
        %v1881 = vpop.permute.xlu0 %1880
        %1882 = vrot.lane.b32.xlu0 %v1841, 8
        %v1883 = vpop.permute.xlu0 %1882
        %1884 = vrot.lane.b32.xlu0 %v1842, 8
        %v1885 = vpop.permute.xlu0 %1884
        %1886 = vrot.lane.b32.xlu0 %v1843, 8
        %v1887 = vpop.permute.xlu0 %1886
        %1888 = vrot.lane.b32.xlu0 %v1844, 8
        %v1889 = vpop.permute.xlu0 %1888
        %1890 = vrot.lane.b32.xlu0 %v1845, 8
        %v1891 = vpop.permute.xlu0 %1890
        %1892 = vrot.lane.b32.xlu0 %v1846, 8
        %v1893 = vpop.permute.xlu0 %1892
        %1894 = vrot.lane.b32.xlu0 %v1847, 8
        %v1895 = vpop.permute.xlu0 %1894
        %vm1912 = vcmask 64512
        %v1913 = vsel %vm1912, %v1832, %v1865
        %v1914 = vsel %vm1912, %v1833, %v1867
        %v1915 = vsel %vm1912, %v1834, %v1869
        %v1916 = vsel %vm1912, %v1835, %v1871
        %v1917 = vsel %vm1912, %v1836, %v1873
        %v1918 = vsel %vm1912, %v1837, %v1875
        %v1919 = vsel %vm1912, %v1838, %v1877
        %v1920 = vsel %vm1912, %v1839, %v1879
        %v1921 = vsel %vm1912, %v1840, %v1881
        %v1922 = vsel %vm1912, %v1841, %v1883
        %v1923 = vsel %vm1912, %v1842, %v1885
        %v1924 = vsel %vm1912, %v1843, %v1887
        %v1925 = vsel %vm1912, %v1844, %v1889
        %v1926 = vsel %vm1912, %v1845, %v1891
        %v1927 = vsel %vm1912, %v1846, %v1893
        %v1928 = vsel %vm1912, %v1847, %v1895
        %v1929 = vsub.f32 %v1690, %v1913
        %v1930 = vsub.f32 %v1695, %v1914
        %v1931 = vsub.f32 %v1700, %v1915
        %v1932 = vsub.f32 %v1705, %v1916
        %v1933 = vsub.f32 %v1710, %v1917
        %v1934 = vsub.f32 %v1715, %v1918
        %v1935 = vsub.f32 %v1720, %v1919
        %v1936 = vsub.f32 %v1725, %v1920
        %v1937 = vsub.f32 %v1730, %v1921
        %v1938 = vsub.f32 %v1735, %v1922
        %v1939 = vsub.f32 %v1740, %v1923
        %v1940 = vsub.f32 %v1745, %v1924
        %v1941 = vsub.f32 %v1750, %v1925
        %v1942 = vsub.f32 %v1755, %v1926
        %v1943 = vsub.f32 %v1760, %v1927
        %v1944 = vsub.f32 %v1765, %v1928
        %v1945 = vmul.f32 %v1929, 1.442695
        %v1946 = vpow.pop %v1945
        %v1947 = vmul.f32 %v1930, 1.442695
        %v1948 = vpow.pop %v1947
        %v1949 = vmul.f32 %v1931, 1.442695
        %v1950 = vpow.pop %v1949
        %v1951 = vmul.f32 %v1932, 1.442695
        %v1952 = vpow.pop %v1951
        %v1953 = vmul.f32 %v1933, 1.442695
        %v1954 = vpow.pop %v1953
        %v1955 = vmul.f32 %v1934, 1.442695
        %v1956 = vpow.pop %v1955
        %v1957 = vmul.f32 %v1935, 1.442695
        %v1958 = vpow.pop %v1957
        %v1959 = vmul.f32 %v1936, 1.442695
        %v1960 = vpow.pop %v1959
        %v1961 = vmul.f32 %v1937, 1.442695
        %v1962 = vpow.pop %v1961
        %v1963 = vmul.f32 %v1938, 1.442695
        %v1964 = vpow.pop %v1963
        %v1965 = vmul.f32 %v1939, 1.442695
        %v1966 = vpow.pop %v1965
        %v1967 = vmul.f32 %v1940, 1.442695
        %v1968 = vpow.pop %v1967
        %v1969 = vmul.f32 %v1941, 1.442695
        %v1970 = vpow.pop %v1969
        %v1971 = vmul.f32 %v1942, 1.442695
        %v1972 = vpow.pop %v1971
        %v1973 = vmul.f32 %v1943, 1.442695
        %v1974 = vpow.pop %v1973
        %v1975 = vmul.f32 %v1944, 1.442695
        %v1976 = vpow.pop %v1975
        %1993 = vrot.lane.b32.xlu0 %v1946, 120
        %v1994 = vpop.permute.xlu0 %1993
        %1995 = vrot.lane.b32.xlu0 %v1948, 120
        %v1996 = vpop.permute.xlu0 %1995
        %1997 = vrot.lane.b32.xlu0 %v1950, 120
        %v1998 = vpop.permute.xlu0 %1997
        %1999 = vrot.lane.b32.xlu0 %v1952, 120
        %v2000 = vpop.permute.xlu0 %1999
        %2001 = vrot.lane.b32.xlu0 %v1954, 120
        %v2002 = vpop.permute.xlu0 %2001
        %2003 = vrot.lane.b32.xlu0 %v1956, 120
        %v2004 = vpop.permute.xlu0 %2003
        %2005 = vrot.lane.b32.xlu0 %v1958, 120
        %v2006 = vpop.permute.xlu0 %2005
        %2007 = vrot.lane.b32.xlu0 %v1960, 120
        %v2008 = vpop.permute.xlu0 %2007
        %2009 = vrot.lane.b32.xlu0 %v1962, 120
        %v2010 = vpop.permute.xlu0 %2009
        %2011 = vrot.lane.b32.xlu0 %v1964, 120
        %v2012 = vpop.permute.xlu0 %2011
        %2013 = vrot.lane.b32.xlu0 %v1966, 120
        %v2014 = vpop.permute.xlu0 %2013
        %2015 = vrot.lane.b32.xlu0 %v1968, 120
        %v2016 = vpop.permute.xlu0 %2015
        %2017 = vrot.lane.b32.xlu0 %v1970, 120
        %v2018 = vpop.permute.xlu0 %2017
        %2019 = vrot.lane.b32.xlu0 %v1972, 120
        %v2020 = vpop.permute.xlu0 %2019
        %2021 = vrot.lane.b32.xlu0 %v1974, 120
        %v2022 = vpop.permute.xlu0 %2021
        %2023 = vrot.lane.b32.xlu0 %v1976, 120
        %v2024 = vpop.permute.xlu0 %2023
        %v2041 = vadd.f32 %v1946, %v1994
        %v2042 = vadd.f32 %v1948, %v1996
        %v2043 = vadd.f32 %v1950, %v1998
        %v2044 = vadd.f32 %v1952, %v2000
        %v2045 = vadd.f32 %v1954, %v2002
        %v2046 = vadd.f32 %v1956, %v2004
        %v2047 = vadd.f32 %v1958, %v2006
        %v2048 = vadd.f32 %v1960, %v2008
        %v2049 = vadd.f32 %v1962, %v2010
        %v2050 = vadd.f32 %v1964, %v2012
        %v2051 = vadd.f32 %v1966, %v2014
        %v2052 = vadd.f32 %v1968, %v2016
        %v2053 = vadd.f32 %v1970, %v2018
        %v2054 = vadd.f32 %v1972, %v2020
        %v2055 = vadd.f32 %v1974, %v2022
        %v2056 = vadd.f32 %v1976, %v2024
        %v2057 = vrcp.pop %v2041
        %v2058 = vrcp.pop %v2042
        %v2059 = vrcp.pop %v2043
        %v2060 = vrcp.pop %v2044
        %v2061 = vrcp.pop %v2045
        %v2062 = vrcp.pop %v2046
        %v2063 = vrcp.pop %v2047
        %v2064 = vrcp.pop %v2048
        %v2065 = vrcp.pop %v2049
        %v2066 = vrcp.pop %v2050
        %v2067 = vrcp.pop %v2051
        %v2068 = vrcp.pop %v2052
        %v2069 = vrcp.pop %v2053
        %v2070 = vrcp.pop %v2054
        %v2071 = vrcp.pop %v2055
        %v2072 = vrcp.pop %v2056
        %2089 = vrot.lane.b32.xlu0 %v2057, 8
        %v2090 = vpop.permute.xlu0 %2089
        %2091 = vrot.lane.b32.xlu0 %v2058, 8
        %v2092 = vpop.permute.xlu0 %2091
        %2093 = vrot.lane.b32.xlu0 %v2059, 8
        %v2094 = vpop.permute.xlu0 %2093
        %2095 = vrot.lane.b32.xlu0 %v2060, 8
        %v2096 = vpop.permute.xlu0 %2095
        %2097 = vrot.lane.b32.xlu0 %v2061, 8
        %v2098 = vpop.permute.xlu0 %2097
        %2099 = vrot.lane.b32.xlu0 %v2062, 8
        %v2100 = vpop.permute.xlu0 %2099
        %2101 = vrot.lane.b32.xlu0 %v2063, 8
        %v2102 = vpop.permute.xlu0 %2101
        %2103 = vrot.lane.b32.xlu0 %v2064, 8
        %v2104 = vpop.permute.xlu0 %2103
        %2105 = vrot.lane.b32.xlu0 %v2065, 8
        %v2106 = vpop.permute.xlu0 %2105
        %2107 = vrot.lane.b32.xlu0 %v2066, 8
        %v2108 = vpop.permute.xlu0 %2107
        %2109 = vrot.lane.b32.xlu0 %v2067, 8
        %v2110 = vpop.permute.xlu0 %2109
        %2111 = vrot.lane.b32.xlu0 %v2068, 8
        %v2112 = vpop.permute.xlu0 %2111
        %2113 = vrot.lane.b32.xlu0 %v2069, 8
        %v2114 = vpop.permute.xlu0 %2113
        %2115 = vrot.lane.b32.xlu0 %v2070, 8
        %v2116 = vpop.permute.xlu0 %2115
        %2117 = vrot.lane.b32.xlu0 %v2071, 8
        %v2118 = vpop.permute.xlu0 %2117
        %2119 = vrot.lane.b32.xlu0 %v2072, 8
        %v2120 = vpop.permute.xlu0 %2119
        %v2137 = vsel %vm1912, %v2057, %v2090
        %v2138 = vsel %vm1912, %v2058, %v2092
        %v2139 = vsel %vm1912, %v2059, %v2094
        %v2140 = vsel %vm1912, %v2060, %v2096
        %v2141 = vsel %vm1912, %v2061, %v2098
        %v2142 = vsel %vm1912, %v2062, %v2100
        %v2143 = vsel %vm1912, %v2063, %v2102
        %v2144 = vsel %vm1912, %v2064, %v2104
        %v2145 = vsel %vm1912, %v2065, %v2106
        %v2146 = vsel %vm1912, %v2066, %v2108
        %v2147 = vsel %vm1912, %v2067, %v2110
        %v2148 = vsel %vm1912, %v2068, %v2112
        %v2149 = vsel %vm1912, %v2069, %v2114
        %v2150 = vsel %vm1912, %v2070, %v2116
        %v2151 = vsel %vm1912, %v2071, %v2118
        %v2152 = vsel %vm1912, %v2072, %v2120
        %v2153 = vmul.f32 %v1946, %v2137
        %v2154 = vmul.f32 %v1948, %v2138
        %v2155 = vmul.f32 %v1950, %v2139
        %v2156 = vmul.f32 %v1952, %v2140
        %v2157 = vmul.f32 %v1954, %v2141
        %v2158 = vmul.f32 %v1956, %v2142
        %v2159 = vmul.f32 %v1958, %v2143
        %v2160 = vmul.f32 %v1960, %v2144
        %v2161 = vmul.f32 %v1962, %v2145
        %v2162 = vmul.f32 %v1964, %v2146
        %v2163 = vmul.f32 %v1966, %v2147
        %v2164 = vmul.f32 %v1968, %v2148
        %v2165 = vmul.f32 %v1970, %v2149
        %v2166 = vmul.f32 %v1972, %v2150
        %v2167 = vmul.f32 %v1974, %v2151
        %v2168 = vmul.f32 %v1976, %v2152
        %v2169 = vld [vmem:[%s18] sm:$0xff]
        %v2170 = vld [vmem:[%s18 + $0x8] sm:$0xff]
        %vm2171 = vcmask 130048
        %v2173 = vsel %vm2171, %v2153, 0
        %v2176 = vsel %vm2171, %v2154, 0
        %v2179 = vsel %vm2171, %v2155, 0
        %v2182 = vsel %vm2171, %v2156, 0
        %v2185 = vsel %vm2171, %v2157, 0
        %v2188 = vsel %vm2171, %v2158, 0
        %v2191 = vsel %vm2171, %v2159, 0
        %v2194 = vsel %vm2171, %v2160, 0
        %v2197 = vsel %vm2171, %v2161, 0
        %v2200 = vsel %vm2171, %v2162, 0
        %v2203 = vsel %vm2171, %v2163, 0
        %v2206 = vsel %vm2171, %v2164, 0
        %v2209 = vsel %vm2171, %v2165, 0
        %v2212 = vsel %vm2171, %v2166, 0
        %v2215 = vsel %vm2171, %v2167, 0
        %v2218 = vsel %vm2171, %v2168, 0
        %2220 = vmatprep.subr.mxu0 0.0
        %2221 = vmatpush1.msra.mxu0 %v2169
        %2222 = vmatprep.subr.mxu0 0.0
        %2223 = vmatpush1.msra.mxu0 %v2170
        %2224 = vmatprep.subr.mxu0 0.0
        %2225 = vmatpush1.msra.mxu0 0.0
        %2226 = vmatprep.subr.mxu0 0.0
        %2227 = vmatpush1.msra.mxu0 0.0
        %2228 = vmatprep.subr.mxu0 0.0
        %2229 = vmatpush1.msra.mxu0 0.0
        %2230 = vmatprep.subr.mxu0 0.0
        %2231 = vmatpush1.msra.mxu0 0.0
        %2232 = vmatprep.subr.mxu0 0.0
        %2233 = vmatpush1.msra.mxu0 0.0
        %2234 = vmatprep.subr.mxu0 0.0
        %2235 = vmatpush1.msra.mxu0 0.0
        %2236 = vmatprep.subr.mxu0 0.0
        %2237 = vmatpush1.msra.mxu0 0.0
        %2238 = vmatprep.subr.mxu0 0.0
        %2239 = vmatpush1.msra.mxu0 0.0
        %2240 = vmatprep.subr.mxu0 0.0
        %2241 = vmatpush1.msra.mxu0 0.0
        %2242 = vmatprep.subr.mxu0 0.0
        %2243 = vmatpush1.msra.mxu0 0.0
        %2244 = vmatprep.subr.mxu0 0.0
        %2245 = vmatpush1.msra.mxu0 0.0
        %2246 = vmatprep.subr.mxu0 0.0
        %2247 = vmatpush1.msra.mxu0 0.0
        %2248 = vmatprep.subr.mxu0 0.0
        %2249 = vmatpush1.msra.mxu0 0.0
        %2250 = vmatprep.subr.mxu0 0.0
        %2251 = vmatpush1.msra.mxu0 0.0
        %2252 = vmatprep.subr.mxu0 0.0
        %2253 = vmatpush1.msra.mxu0 0.0
        %2254 = vmatprep.subr.mxu0 0.0
        %2255 = vmatpush1.msra.mxu0 0.0
        %2256 = vmatprep.subr.mxu0 0.0
        %2257 = vmatpush1.msra.mxu0 0.0
        %2258 = vmatprep.subr.mxu0 0.0
        %2259 = vmatpush1.msra.mxu0 0.0
        %2260 = vmatprep.subr.mxu0 0.0
        %2261 = vmatpush1.msra.mxu0 0.0
        %2262 = vmatprep.subr.mxu0 0.0
        %2263 = vmatpush1.msra.mxu0 0.0
        %2264 = vmatprep.subr.mxu0 0.0
        %2265 = vmatpush1.msra.mxu0 0.0
        %2266 = vmatprep.subr.mxu0 0.0
        %2267 = vmatpush1.msra.mxu0 0.0
        %2268 = vmatprep.subr.mxu0 0.0
        %2269 = vmatpush1.msra.mxu0 0.0
        %2270 = vmatprep.subr.mxu0 0.0
        %2271 = vmatpush1.msra.mxu0 0.0
        %2272 = vmatprep.subr.mxu0 0.0
        %2273 = vmatpush1.msra.mxu0 0.0
        %2274 = vmatprep.subr.mxu0 0.0
        %2275 = vmatpush1.msra.mxu0 0.0
        %2276 = vmatprep.subr.mxu0 0.0
        %2277 = vmatpush1.msra.mxu0 0.0
        %2278 = vmatprep.subr.mxu0 0.0
        %2279 = vmatpush1.msra.mxu0 0.0
        %2280 = vmatprep.subr.mxu0 0.0
        %2281 = vmatpush1.msra.mxu0 0.0
        %2282 = vmatprep.subr.mxu0 0.0
        %2283 = vmatpush1.msra.mxu0 0.0
        %2284 = vmatprep.mubr.f32.mxu0 0.0
        %2285 = vmatmul.mubr.f32.gmra.mrb[0].mxu0 %v2173
        %v2286 = vpop.f32.mrb[0].mxu0
        %v2287 = vadd.f32 0.0, %v2286
        %v2288 = vpop.f32.mrb[0].mxu0
        %2289 = vmatprep.mubr.f32.mxu0 0.0
        %2290 = vmatmul.mubr.f32.gmra.mrb[0].mxu0 %v2176
        %v2291 = vpop.f32.mrb[0].mxu0
        %v2292 = vadd.f32 0.0, %v2291
        %v2293 = vpop.f32.mrb[0].mxu0
        %2294 = vmatprep.mubr.f32.mxu0 0.0
        %2295 = vmatmul.mubr.f32.gmra.mrb[0].mxu0 %v2179
        %v2296 = vpop.f32.mrb[0].mxu0
        %v2297 = vadd.f32 0.0, %v2296
        %v2298 = vpop.f32.mrb[0].mxu0
        %2299 = vmatprep.mubr.f32.mxu0 0.0
        %2300 = vmatmul.mubr.f32.gmra.mrb[0].mxu0 %v2182
        %v2301 = vpop.f32.mrb[0].mxu0
        %v2302 = vadd.f32 0.0, %v2301
        %v2303 = vpop.f32.mrb[0].mxu0
        %2304 = vmatprep.mubr.f32.mxu0 0.0
        %2305 = vmatmul.mubr.f32.gmra.mrb[0].mxu0 %v2185
        %v2306 = vpop.f32.mrb[0].mxu0
        %v2307 = vadd.f32 0.0, %v2306
        %v2308 = vpop.f32.mrb[0].mxu0
        %2309 = vmatprep.mubr.f32.mxu0 0.0
        %2310 = vmatmul.mubr.f32.gmra.mrb[0].mxu0 %v2188
        %v2311 = vpop.f32.mrb[0].mxu0
        %v2312 = vadd.f32 0.0, %v2311
        %v2313 = vpop.f32.mrb[0].mxu0
        %2314 = vmatprep.mubr.f32.mxu0 0.0
        %2315 = vmatmul.mubr.f32.gmra.mrb[0].mxu0 %v2191
        %v2316 = vpop.f32.mrb[0].mxu0
        %v2317 = vadd.f32 0.0, %v2316
        %v2318 = vpop.f32.mrb[0].mxu0
        %2319 = vmatprep.mubr.f32.mxu0 0.0
        %2320 = vmatmul.mubr.f32.gmra.mrb[0].mxu0 %v2194
        %v2321 = vpop.f32.mrb[0].mxu0
        %v2322 = vadd.f32 0.0, %v2321
        %v2323 = vpop.f32.mrb[0].mxu0
        %2324 = vmatprep.mubr.f32.mxu0 0.0
        %2325 = vmatmul.mubr.f32.gmra.mrb[0].mxu0 %v2197
        %v2326 = vpop.f32.mrb[0].mxu0
        %v2327 = vadd.f32 0.0, %v2326
        %v2328 = vpop.f32.mrb[0].mxu0
        %2329 = vmatprep.mubr.f32.mxu0 0.0
        %2330 = vmatmul.mubr.f32.gmra.mrb[0].mxu0 %v2200
        %v2331 = vpop.f32.mrb[0].mxu0
        %v2332 = vadd.f32 0.0, %v2331
        %v2333 = vpop.f32.mrb[0].mxu0
        %2334 = vmatprep.mubr.f32.mxu0 0.0
        %2335 = vmatmul.mubr.f32.gmra.mrb[0].mxu0 %v2203
        %v2336 = vpop.f32.mrb[0].mxu0
        %v2337 = vadd.f32 0.0, %v2336
        %v2338 = vpop.f32.mrb[0].mxu0
        %2339 = vmatprep.mubr.f32.mxu0 0.0
        %2340 = vmatmul.mubr.f32.gmra.mrb[0].mxu0 %v2206
        %v2341 = vpop.f32.mrb[0].mxu0
        %v2342 = vadd.f32 0.0, %v2341
        %v2343 = vpop.f32.mrb[0].mxu0
        %2344 = vmatprep.mubr.f32.mxu0 0.0
        %2345 = vmatmul.mubr.f32.gmra.mrb[0].mxu0 %v2209
        %v2346 = vpop.f32.mrb[0].mxu0
        %v2347 = vadd.f32 0.0, %v2346
        %v2348 = vpop.f32.mrb[0].mxu0
        %2349 = vmatprep.mubr.f32.mxu0 0.0
        %2350 = vmatmul.mubr.f32.gmra.mrb[0].mxu0 %v2212
        %v2351 = vpop.f32.mrb[0].mxu0
        %v2352 = vadd.f32 0.0, %v2351
        %v2353 = vpop.f32.mrb[0].mxu0
        %2354 = vmatprep.mubr.f32.mxu0 0.0
        %2355 = vmatmul.mubr.f32.gmra.mrb[0].mxu0 %v2215
        %v2356 = vpop.f32.mrb[0].mxu0
        %v2357 = vadd.f32 0.0, %v2356
        %v2358 = vpop.f32.mrb[0].mxu0
        %2359 = vmatprep.mubr.f32.mxu0 0.0
        %2360 = vmatmul.mubr.f32.gmra.mrb[0].mxu0 %v2218
        %v2361 = vpop.f32.mrb[0].mxu0
        %v2362 = vadd.f32 0.0, %v2361
        %v2363 = vpop.f32.mrb[0].mxu0
        %2364 = vdwg.mxu0
        %v2365 = vmul.f32 %v2287, %v1535
        %v2366 = vmul.f32 %v2292, %v1536
        %v2367 = vmul.f32 %v2297, %v1537
        %v2368 = vmul.f32 %v2302, %v1538
        %v2369 = vmul.f32 %v2307, %v1539
        %v2370 = vmul.f32 %v2312, %v1540
        %v2371 = vmul.f32 %v2317, %v1541
        %v2372 = vmul.f32 %v2322, %v1542
        %v2373 = vmul.f32 %v2327, %v1535
        %v2374 = vmul.f32 %v2332, %v1536
        %v2375 = vmul.f32 %v2337, %v1537
        %v2376 = vmul.f32 %v2342, %v1538
        %v2377 = vmul.f32 %v2347, %v1539
        %v2378 = vmul.f32 %v2352, %v1540
        %v2379 = vmul.f32 %v2357, %v1541
        %v2380 = vmul.f32 %v2362, %v1542
        %2397 = vrot.lane.b32.xlu0 %v2365, 64
        %v2398 = vpop.permute.xlu0 %2397
        %2399 = vrot.lane.b32.xlu0 %v2366, 64
        %v2400 = vpop.permute.xlu0 %2399
        %2401 = vrot.lane.b32.xlu0 %v2367, 64
        %v2402 = vpop.permute.xlu0 %2401
        %2403 = vrot.lane.b32.xlu0 %v2368, 64
        %v2404 = vpop.permute.xlu0 %2403
        %2405 = vrot.lane.b32.xlu0 %v2369, 64
        %v2406 = vpop.permute.xlu0 %2405
        %2407 = vrot.lane.b32.xlu0 %v2370, 64
        %v2408 = vpop.permute.xlu0 %2407
        %2409 = vrot.lane.b32.xlu0 %v2371, 64
        %v2410 = vpop.permute.xlu0 %2409
        %2411 = vrot.lane.b32.xlu0 %v2372, 64
        %v2412 = vpop.permute.xlu0 %2411
        %2413 = vrot.lane.b32.xlu0 %v2373, 64
        %v2414 = vpop.permute.xlu0 %2413
        %2415 = vrot.lane.b32.xlu0 %v2374, 64
        %v2416 = vpop.permute.xlu0 %2415
        %2417 = vrot.lane.b32.xlu0 %v2375, 64
        %v2418 = vpop.permute.xlu0 %2417
        %2419 = vrot.lane.b32.xlu0 %v2376, 64
        %v2420 = vpop.permute.xlu0 %2419
        %2421 = vrot.lane.b32.xlu0 %v2377, 64
        %v2422 = vpop.permute.xlu0 %2421
        %2423 = vrot.lane.b32.xlu0 %v2378, 64
        %v2424 = vpop.permute.xlu0 %2423
        %2425 = vrot.lane.b32.xlu0 %v2379, 64
        %v2426 = vpop.permute.xlu0 %2425
        %2427 = vrot.lane.b32.xlu0 %v2380, 64
        %v2428 = vpop.permute.xlu0 %2427
        %v2445 = vadd.f32 %v2365, %v2398
        %v2446 = vadd.f32 %v2366, %v2400
        %v2447 = vadd.f32 %v2367, %v2402
        %v2448 = vadd.f32 %v2368, %v2404
        %v2449 = vadd.f32 %v2369, %v2406
        %v2450 = vadd.f32 %v2370, %v2408
        %v2451 = vadd.f32 %v2371, %v2410
        %v2452 = vadd.f32 %v2372, %v2412
        %v2453 = vadd.f32 %v2373, %v2414
        %v2454 = vadd.f32 %v2374, %v2416
        %v2455 = vadd.f32 %v2375, %v2418
        %v2456 = vadd.f32 %v2376, %v2420
        %v2457 = vadd.f32 %v2377, %v2422
        %v2458 = vadd.f32 %v2378, %v2424
        %v2459 = vadd.f32 %v2379, %v2426
        %v2460 = vadd.f32 %v2380, %v2428
        %v2461 = vpack.c.bf16 %v2446, %v2445
        %v2462 = vpack.c.bf16 %v2448, %v2447
        %v2463 = vpack.c.bf16 %v2450, %v2449
        %v2464 = vpack.c.bf16 %v2452, %v2451
        %v2465 = vpack.c.bf16 %v2454, %v2453
        %v2466 = vpack.c.bf16 %v2456, %v2455
        %v2467 = vpack.c.bf16 %v2458, %v2457
        %v2468 = vpack.c.bf16 %v2460, %v2459
        %v2469 = vld [vmem:[%s921] sm:$0xf]
        %v2470 = vld [vmem:[%s921 + $0x4] sm:$0xf]
        %v2471 = vld [vmem:[%s921 + $0x8] sm:$0xf]
        %v2472 = vld [vmem:[%s921 + $0xc] sm:$0xf]
        %v2473 = vld [vmem:[%s921 + $0x10] sm:$0xf]
        %v2474 = vld [vmem:[%s921 + $0x14] sm:$0xf]
        %v2475 = vld [vmem:[%s921 + $0x18] sm:$0xf]
        %v2476 = vld [vmem:[%s921 + $0x1c] sm:$0xf]
        %v2477 = vld [vmem:[%s924] sm:$0x1]
        %v2479 = vlaneseq
        %v2480 = vshrl.u32 %v2479, 7
        %v2481 = vsub.s32 0, %v2480
        %v2482 = vrot.slane %v2477, %v2481
        %v2492 = vunpack.c.l.b16 %v2469
        %v2493 = vunpack.c.l.b16 %v2470
        %v2494 = vunpack.c.l.b16 %v2471
        %v2495 = vunpack.c.l.b16 %v2472
        %v2496 = vunpack.c.l.b16 %v2473
        %v2497 = vunpack.c.l.b16 %v2474
        %v2498 = vunpack.c.l.b16 %v2475
        %v2499 = vunpack.c.l.b16 %v2476
        %v2500 = vpack.c.b16 %v2493, %v2492
        %v2501 = vpack.c.b16 %v2495, %v2494
        %v2502 = vpack.c.b16 %v2497, %v2496
        %v2503 = vpack.c.b16 %v2499, %v2498
        %v2509 = vsel %vm1325, %v2461, 0
        %v2512 = vsel %vm1325, %v2462, 0
        %v2515 = vsel %vm1325, %v2463, 0
        %v2518 = vsel %vm1325, %v2464, 0
        %v2521 = vsel %vm1325, %v2465, 0
        %v2524 = vsel %vm1325, %v2466, 0
        %v2527 = vsel %vm1325, %v2467, 0
        %v2530 = vsel %vm1325, %v2468, 0
        %2532 = vmatprep.subr.bf16.mxu0 0
        %2533 = vmatpush1.bf16.msra.mxu0 %v2500
        %2534 = vmatprep.subr.bf16.mxu0 0
        %2535 = vmatpush1.bf16.msra.mxu0 %v2501
        %2536 = vmatprep.subr.bf16.mxu0 0
        %2537 = vmatpush1.bf16.msra.mxu0 %v2502
        %2538 = vmatprep.subr.bf16.mxu0 0
        %2539 = vmatpush1.bf16.msra.mxu0 %v2503
        %2540 = vmatprep.subr.bf16.mxu0 0
        %2541 = vmatpush1.bf16.msra.mxu0 0
        %2542 = vmatprep.subr.bf16.mxu0 0
        %2543 = vmatpush1.bf16.msra.mxu0 0
        %2544 = vmatprep.subr.bf16.mxu0 0
        %2545 = vmatpush1.bf16.msra.mxu0 0
        %2546 = vmatprep.subr.bf16.mxu0 0
        %2547 = vmatpush1.bf16.msra.mxu0 0
        %2548 = vmatprep.subr.bf16.mxu0 0
        %2549 = vmatpush1.bf16.msra.mxu0 0
        %2550 = vmatprep.subr.bf16.mxu0 0
        %2551 = vmatpush1.bf16.msra.mxu0 0
        %2552 = vmatprep.subr.bf16.mxu0 0
        %2553 = vmatpush1.bf16.msra.mxu0 0
        %2554 = vmatprep.subr.bf16.mxu0 0
        %2555 = vmatpush1.bf16.msra.mxu0 0
        %2556 = vmatprep.subr.bf16.mxu0 0
        %2557 = vmatpush1.bf16.msra.mxu0 0
        %2558 = vmatprep.subr.bf16.mxu0 0
        %2559 = vmatpush1.bf16.msra.mxu0 0
        %2560 = vmatprep.subr.bf16.mxu0 0
        %2561 = vmatpush1.bf16.msra.mxu0 0
        %2562 = vmatprep.subr.bf16.mxu0 0
        %2563 = vmatpush1.bf16.msra.mxu0 0
        %2564 = vmatprep.mubr.bf16.mxu0 0
        %2565 = vmatmul.mubr.bf16.gmra.mrb[0].mxu0 %v2509
        %v2566 = vpop.f32.mrb[0].mxu0
        %v2567 = vadd.f32 %v2482, %v2566
        %v2568 = vpop.f32.mrb[0].mxu0
        %v2569 = vpop.f32.mrb[0].mxu0
        %v2570 = vadd.f32 %v2482, %v2569
        %v2571 = vpop.f32.mrb[0].mxu0
        %2572 = vmatprep.mubr.bf16.mxu0 0
        %2573 = vmatmul.mubr.bf16.gmra.mrb[0].mxu0 %v2512
        %v2574 = vpop.f32.mrb[0].mxu0
        %v2575 = vadd.f32 %v2482, %v2574
        %v2576 = vpop.f32.mrb[0].mxu0
        %v2577 = vpop.f32.mrb[0].mxu0
        %v2578 = vadd.f32 %v2482, %v2577
        %v2579 = vpop.f32.mrb[0].mxu0
        %2580 = vmatprep.mubr.bf16.mxu0 0
        %2581 = vmatmul.mubr.bf16.gmra.mrb[0].mxu0 %v2515
        %v2582 = vpop.f32.mrb[0].mxu0
        %v2583 = vadd.f32 %v2482, %v2582
        %v2584 = vpop.f32.mrb[0].mxu0
        %v2585 = vpop.f32.mrb[0].mxu0
        %v2586 = vadd.f32 %v2482, %v2585
        %v2587 = vpop.f32.mrb[0].mxu0
        %2588 = vmatprep.mubr.bf16.mxu0 0
        %2589 = vmatmul.mubr.bf16.gmra.mrb[0].mxu0 %v2518
        %v2590 = vpop.f32.mrb[0].mxu0
        %v2591 = vadd.f32 %v2482, %v2590
        %v2592 = vpop.f32.mrb[0].mxu0
        %v2593 = vpop.f32.mrb[0].mxu0
        %v2594 = vadd.f32 %v2482, %v2593
        %v2595 = vpop.f32.mrb[0].mxu0
        %2596 = vmatprep.mubr.bf16.mxu0 0
        %2597 = vmatmul.mubr.bf16.gmra.mrb[0].mxu0 %v2521
        %v2598 = vpop.f32.mrb[0].mxu0
        %v2599 = vadd.f32 %v2482, %v2598
        %v2600 = vpop.f32.mrb[0].mxu0
        %v2601 = vpop.f32.mrb[0].mxu0
        %v2602 = vadd.f32 %v2482, %v2601
        %v2603 = vpop.f32.mrb[0].mxu0
        %2604 = vmatprep.mubr.bf16.mxu0 0
        %2605 = vmatmul.mubr.bf16.gmra.mrb[0].mxu0 %v2524
        %v2606 = vpop.f32.mrb[0].mxu0
        %v2607 = vadd.f32 %v2482, %v2606
        %v2608 = vpop.f32.mrb[0].mxu0
        %v2609 = vpop.f32.mrb[0].mxu0
        %v2610 = vadd.f32 %v2482, %v2609
        %v2611 = vpop.f32.mrb[0].mxu0
        %2612 = vmatprep.mubr.bf16.mxu0 0
        %2613 = vmatmul.mubr.bf16.gmra.mrb[0].mxu0 %v2527
        %v2614 = vpop.f32.mrb[0].mxu0
        %v2615 = vadd.f32 %v2482, %v2614
        %v2616 = vpop.f32.mrb[0].mxu0
        %v2617 = vpop.f32.mrb[0].mxu0
        %v2618 = vadd.f32 %v2482, %v2617
        %v2619 = vpop.f32.mrb[0].mxu0
        %2620 = vmatprep.mubr.bf16.mxu0 0
        %2621 = vmatmul.mubr.bf16.gmra.mrb[0].mxu0 %v2530
        %v2622 = vpop.f32.mrb[0].mxu0
        %v2623 = vadd.f32 %v2482, %v2622
        %v2624 = vpop.f32.mrb[0].mxu0
        %v2625 = vpop.f32.mrb[0].mxu0
        %v2626 = vadd.f32 %v2482, %v2625
        %v2627 = vpop.f32.mrb[0].mxu0
        %2628 = vdwg.mxu0
        %v2629 = vadd.f32 %v1241, %v2567
        %v2630 = vadd.f32 %v1242, %v2570
        %v2631 = vadd.f32 %v1243, %v2575
        %v2632 = vadd.f32 %v1244, %v2578
        %v2633 = vadd.f32 %v1245, %v2583
        %v2634 = vadd.f32 %v1246, %v2586
        %v2635 = vadd.f32 %v1247, %v2591
        %v2636 = vadd.f32 %v1248, %v2594
        %v2637 = vadd.f32 %v1249, %v2599
        %v2638 = vadd.f32 %v1250, %v2602
        %v2639 = vadd.f32 %v1251, %v2607
        %v2640 = vadd.f32 %v1252, %v2610
        %v2641 = vadd.f32 %v1253, %v2615
        %v2642 = vadd.f32 %v1254, %v2618
        %v2643 = vadd.f32 %v1255, %v2623
        %v2644 = vadd.f32 %v1256, %v2626
        %v2645 = vsel %vm1325, %v2629, 0.0
        %2646 = vadd.xlane.f32.xlu0 %v2645
        %v2647 = vpop.xlane.xlu0 %2646
        %v2648 = vsel %vm1325, %v2630, 0.0
        %2649 = vadd.xlane.f32.xlu0 %v2648
        %v2650 = vpop.xlane.xlu0 %2649
        %v2651 = vsel %vm1325, %v2631, 0.0
        %2652 = vadd.xlane.f32.xlu0 %v2651
        %v2653 = vpop.xlane.xlu0 %2652
        %v2654 = vsel %vm1325, %v2632, 0.0
        %2655 = vadd.xlane.f32.xlu0 %v2654
        %v2656 = vpop.xlane.xlu0 %2655
        %v2657 = vsel %vm1325, %v2633, 0.0
        %2658 = vadd.xlane.f32.xlu0 %v2657
        %v2659 = vpop.xlane.xlu0 %2658
        %v2660 = vsel %vm1325, %v2634, 0.0
        %2661 = vadd.xlane.f32.xlu0 %v2660
        %v2662 = vpop.xlane.xlu0 %2661
        %v2663 = vsel %vm1325, %v2635, 0.0
        %2664 = vadd.xlane.f32.xlu0 %v2663
        %v2665 = vpop.xlane.xlu0 %2664
        %v2666 = vsel %vm1325, %v2636, 0.0
        %2667 = vadd.xlane.f32.xlu0 %v2666
        %v2668 = vpop.xlane.xlu0 %2667
        %v2669 = vsel %vm1325, %v2637, 0.0
        %2670 = vadd.xlane.f32.xlu0 %v2669
        %v2671 = vpop.xlane.xlu0 %2670
        %v2672 = vsel %vm1325, %v2638, 0.0
        %2673 = vadd.xlane.f32.xlu0 %v2672
        %v2674 = vpop.xlane.xlu0 %2673
        %v2675 = vsel %vm1325, %v2639, 0.0
        %2676 = vadd.xlane.f32.xlu0 %v2675
        %v2677 = vpop.xlane.xlu0 %2676
        %v2678 = vsel %vm1325, %v2640, 0.0
        %2679 = vadd.xlane.f32.xlu0 %v2678
        %v2680 = vpop.xlane.xlu0 %2679
        %v2681 = vsel %vm1325, %v2641, 0.0
        %2682 = vadd.xlane.f32.xlu0 %v2681
        %v2683 = vpop.xlane.xlu0 %2682
        %v2684 = vsel %vm1325, %v2642, 0.0
        %2685 = vadd.xlane.f32.xlu0 %v2684
        %v2686 = vpop.xlane.xlu0 %2685
        %v2687 = vsel %vm1325, %v2643, 0.0
        %2688 = vadd.xlane.f32.xlu0 %v2687
        %v2689 = vpop.xlane.xlu0 %2688
        %v2690 = vsel %vm1325, %v2644, 0.0
        %2691 = vadd.xlane.f32.xlu0 %v2690
        %v2692 = vpop.xlane.xlu0 %2691
        %v2693 = vrcp.pop 64.0
        %v2694 = vmul.f32 %v2647, %v2693
        %v2695 = vmul.f32 %v2650, %v2693
        %v2696 = vmul.f32 %v2653, %v2693
        %v2697 = vmul.f32 %v2656, %v2693
        %v2698 = vmul.f32 %v2659, %v2693
        %v2699 = vmul.f32 %v2662, %v2693
        %v2700 = vmul.f32 %v2665, %v2693
        %v2701 = vmul.f32 %v2668, %v2693
        %v2702 = vmul.f32 %v2671, %v2693
        %v2703 = vmul.f32 %v2674, %v2693
        %v2704 = vmul.f32 %v2677, %v2693
        %v2705 = vmul.f32 %v2680, %v2693
        %v2706 = vmul.f32 %v2683, %v2693
        %v2707 = vmul.f32 %v2686, %v2693
        %v2708 = vmul.f32 %v2689, %v2693
        %v2709 = vmul.f32 %v2692, %v2693
        %v2710 = vsub.f32 %v2629, %v2694
        %v2711 = vsub.f32 %v2630, %v2695
        %v2712 = vsub.f32 %v2631, %v2696
        %v2713 = vsub.f32 %v2632, %v2697
        %v2714 = vsub.f32 %v2633, %v2698
        %v2715 = vsub.f32 %v2634, %v2699
        %v2716 = vsub.f32 %v2635, %v2700
        %v2717 = vsub.f32 %v2636, %v2701
        %v2718 = vsub.f32 %v2637, %v2702
        %v2719 = vsub.f32 %v2638, %v2703
        %v2720 = vsub.f32 %v2639, %v2704
        %v2721 = vsub.f32 %v2640, %v2705
        %v2722 = vsub.f32 %v2641, %v2706
        %v2723 = vsub.f32 %v2642, %v2707
        %v2724 = vsub.f32 %v2643, %v2708
        %v2725 = vsub.f32 %v2644, %v2709
        %v2726 = vmul.f32 %v2710, %v2710
        %v2727 = vmul.f32 %v2711, %v2711
        %v2728 = vmul.f32 %v2712, %v2712
        %v2729 = vmul.f32 %v2713, %v2713
        %v2730 = vmul.f32 %v2714, %v2714
        %v2731 = vmul.f32 %v2715, %v2715
        %v2732 = vmul.f32 %v2716, %v2716
        %v2733 = vmul.f32 %v2717, %v2717
        %v2734 = vmul.f32 %v2718, %v2718
        %v2735 = vmul.f32 %v2719, %v2719
        %v2736 = vmul.f32 %v2720, %v2720
        %v2737 = vmul.f32 %v2721, %v2721
        %v2738 = vmul.f32 %v2722, %v2722
        %v2739 = vmul.f32 %v2723, %v2723
        %v2740 = vmul.f32 %v2724, %v2724
        %v2741 = vmul.f32 %v2725, %v2725
        %v2742 = vsel %vm1325, %v2726, 0.0
        %2743 = vadd.xlane.f32.xlu0 %v2742
        %v2744 = vpop.xlane.xlu0 %2743
        %v2745 = vsel %vm1325, %v2727, 0.0
        %2746 = vadd.xlane.f32.xlu0 %v2745
        %v2747 = vpop.xlane.xlu0 %2746
        %v2748 = vsel %vm1325, %v2728, 0.0
        %2749 = vadd.xlane.f32.xlu0 %v2748
        %v2750 = vpop.xlane.xlu0 %2749
        %v2751 = vsel %vm1325, %v2729, 0.0
        %2752 = vadd.xlane.f32.xlu0 %v2751
        %v2753 = vpop.xlane.xlu0 %2752
        %v2754 = vsel %vm1325, %v2730, 0.0
        %2755 = vadd.xlane.f32.xlu0 %v2754
        %v2756 = vpop.xlane.xlu0 %2755
        %v2757 = vsel %vm1325, %v2731, 0.0
        %2758 = vadd.xlane.f32.xlu0 %v2757
        %v2759 = vpop.xlane.xlu0 %2758
        %v2760 = vsel %vm1325, %v2732, 0.0
        %2761 = vadd.xlane.f32.xlu0 %v2760
        %v2762 = vpop.xlane.xlu0 %2761
        %v2763 = vsel %vm1325, %v2733, 0.0
        %2764 = vadd.xlane.f32.xlu0 %v2763
        %v2765 = vpop.xlane.xlu0 %2764
        %v2766 = vsel %vm1325, %v2734, 0.0
        %2767 = vadd.xlane.f32.xlu0 %v2766
        %v2768 = vpop.xlane.xlu0 %2767
        %v2769 = vsel %vm1325, %v2735, 0.0
        %2770 = vadd.xlane.f32.xlu0 %v2769
        %v2771 = vpop.xlane.xlu0 %2770
        %v2772 = vsel %vm1325, %v2736, 0.0
        %2773 = vadd.xlane.f32.xlu0 %v2772
        %v2774 = vpop.xlane.xlu0 %2773
        %v2775 = vsel %vm1325, %v2737, 0.0
        %2776 = vadd.xlane.f32.xlu0 %v2775
        %v2777 = vpop.xlane.xlu0 %2776
        %v2778 = vsel %vm1325, %v2738, 0.0
        %2779 = vadd.xlane.f32.xlu0 %v2778
        %v2780 = vpop.xlane.xlu0 %2779
        %v2781 = vsel %vm1325, %v2739, 0.0
        %2782 = vadd.xlane.f32.xlu0 %v2781
        %v2783 = vpop.xlane.xlu0 %2782
        %v2784 = vsel %vm1325, %v2740, 0.0
        %2785 = vadd.xlane.f32.xlu0 %v2784
        %v2786 = vpop.xlane.xlu0 %2785
        %v2787 = vsel %vm1325, %v2741, 0.0
        %2788 = vadd.xlane.f32.xlu0 %v2787
        %v2789 = vpop.xlane.xlu0 %2788
        %v2790 = vmul.f32 %v2744, %v2693
        %v2791 = vmul.f32 %v2747, %v2693
        %v2792 = vmul.f32 %v2750, %v2693
        %v2793 = vmul.f32 %v2753, %v2693
        %v2794 = vmul.f32 %v2756, %v2693
        %v2795 = vmul.f32 %v2759, %v2693
        %v2796 = vmul.f32 %v2762, %v2693
        %v2797 = vmul.f32 %v2765, %v2693
        %v2798 = vmul.f32 %v2768, %v2693
        %v2799 = vmul.f32 %v2771, %v2693
        %v2800 = vmul.f32 %v2774, %v2693
        %v2801 = vmul.f32 %v2777, %v2693
        %v2802 = vmul.f32 %v2780, %v2693
        %v2803 = vmul.f32 %v2783, %v2693
        %v2804 = vmul.f32 %v2786, %v2693
        %v2805 = vmul.f32 %v2789, %v2693
        %v2806 = vadd.f32 %v2790, 1e-05
        %v2807 = vadd.f32 %v2791, 1e-05
        %v2808 = vadd.f32 %v2792, 1e-05
        %v2809 = vadd.f32 %v2793, 1e-05
        %v2810 = vadd.f32 %v2794, 1e-05
        %v2811 = vadd.f32 %v2795, 1e-05
        %v2812 = vadd.f32 %v2796, 1e-05
        %v2813 = vadd.f32 %v2797, 1e-05
        %v2814 = vadd.f32 %v2798, 1e-05
        %v2815 = vadd.f32 %v2799, 1e-05
        %v2816 = vadd.f32 %v2800, 1e-05
        %v2817 = vadd.f32 %v2801, 1e-05
        %v2818 = vadd.f32 %v2802, 1e-05
        %v2819 = vadd.f32 %v2803, 1e-05
        %v2820 = vadd.f32 %v2804, 1e-05
        %v2821 = vadd.f32 %v2805, 1e-05
        %v2822 = vrsqrt.pop %v2806
        %v2823 = vrsqrt.pop %v2807
        %v2824 = vrsqrt.pop %v2808
        %v2825 = vrsqrt.pop %v2809
        %v2826 = vrsqrt.pop %v2810
        %v2827 = vrsqrt.pop %v2811
        %v2828 = vrsqrt.pop %v2812
        %v2829 = vrsqrt.pop %v2813
        %v2830 = vrsqrt.pop %v2814
        %v2831 = vrsqrt.pop %v2815
        %v2832 = vrsqrt.pop %v2816
        %v2833 = vrsqrt.pop %v2817
        %v2834 = vrsqrt.pop %v2818
        %v2835 = vrsqrt.pop %v2819
        %v2836 = vrsqrt.pop %v2820
        %v2837 = vrsqrt.pop %v2821
        %v2838 = vmul.f32 %v2710, %v2822
        %v2839 = vmul.f32 %v2711, %v2823
        %v2840 = vmul.f32 %v2712, %v2824
        %v2841 = vmul.f32 %v2713, %v2825
        %v2842 = vmul.f32 %v2714, %v2826
        %v2843 = vmul.f32 %v2715, %v2827
        %v2844 = vmul.f32 %v2716, %v2828
        %v2845 = vmul.f32 %v2717, %v2829
        %v2846 = vmul.f32 %v2718, %v2830
        %v2847 = vmul.f32 %v2719, %v2831
        %v2848 = vmul.f32 %v2720, %v2832
        %v2849 = vmul.f32 %v2721, %v2833
        %v2850 = vmul.f32 %v2722, %v2834
        %v2851 = vmul.f32 %v2723, %v2835
        %v2852 = vmul.f32 %v2724, %v2836
        %v2853 = vmul.f32 %v2725, %v2837
        %v2854 = vld [vmem:[%s927] sm:$0x1]
        %v2856 = vlaneseq
        %v2857 = vshrl.u32 %v2856, 7
        %v2858 = vsub.s32 0, %v2857
        %v2859 = vrot.slane %v2854, %v2858
        %v2861 = vmul.f32 %v2838, %v2859
        %v2862 = vmul.f32 %v2839, %v2859
        %v2863 = vmul.f32 %v2840, %v2859
        %v2864 = vmul.f32 %v2841, %v2859
        %v2865 = vmul.f32 %v2842, %v2859
        %v2866 = vmul.f32 %v2843, %v2859
        %v2867 = vmul.f32 %v2844, %v2859
        %v2868 = vmul.f32 %v2845, %v2859
        %v2869 = vmul.f32 %v2846, %v2859
        %v2870 = vmul.f32 %v2847, %v2859
        %v2871 = vmul.f32 %v2848, %v2859
        %v2872 = vmul.f32 %v2849, %v2859
        %v2873 = vmul.f32 %v2850, %v2859
        %v2874 = vmul.f32 %v2851, %v2859
        %v2875 = vmul.f32 %v2852, %v2859
        %v2876 = vmul.f32 %v2853, %v2859
        %v2877 = vld [vmem:[%s930] sm:$0x1]
        %v2879 = vlaneseq
        %v2880 = vshrl.u32 %v2879, 7
        %v2881 = vsub.s32 0, %v2880
        %v2882 = vrot.slane %v2877, %v2881
        %v2884 = vadd.f32 %v2861, %v2882
        %v2885 = vadd.f32 %v2862, %v2882
        %v2886 = vadd.f32 %v2863, %v2882
        %v2887 = vadd.f32 %v2864, %v2882
        %v2888 = vadd.f32 %v2865, %v2882
        %v2889 = vadd.f32 %v2866, %v2882
        %v2890 = vadd.f32 %v2867, %v2882
        %v2891 = vadd.f32 %v2868, %v2882
        %v2892 = vadd.f32 %v2869, %v2882
        %v2893 = vadd.f32 %v2870, %v2882
        %v2894 = vadd.f32 %v2871, %v2882
        %v2895 = vadd.f32 %v2872, %v2882
        %v2896 = vadd.f32 %v2873, %v2882
        %v2897 = vadd.f32 %v2874, %v2882
        %v2898 = vadd.f32 %v2875, %v2882
        %v2899 = vadd.f32 %v2876, %v2882
        %v2900 = vpack.c.bf16 %v2885, %v2884
        %v2901 = vpack.c.bf16 %v2887, %v2886
        %v2902 = vpack.c.bf16 %v2889, %v2888
        %v2903 = vpack.c.bf16 %v2891, %v2890
        %v2904 = vpack.c.bf16 %v2893, %v2892
        %v2905 = vpack.c.bf16 %v2895, %v2894
        %v2906 = vpack.c.bf16 %v2897, %v2896
        %v2907 = vpack.c.bf16 %v2899, %v2898
        %v2908 = vld [vmem:[%s935] sm:$0xff]
        %v2909 = vld [vmem:[%s935 + $0x8] sm:$0xff]
        %v2910 = vld [vmem:[%s935 + $0x10] sm:$0xff]
        %v2911 = vld [vmem:[%s935 + $0x18] sm:$0xff]
        %v2912 = vld [vmem:[%s935 + $0x20] sm:$0xff]
        %v2913 = vld [vmem:[%s935 + $0x28] sm:$0xff]
        %v2914 = vld [vmem:[%s935 + $0x30] sm:$0xff]
        %v2915 = vld [vmem:[%s935 + $0x38] sm:$0xff]
        %v2916 = vld [vmem:[%s935 + $0x40] sm:$0xff]
        %v2917 = vld [vmem:[%s935 + $0x48] sm:$0xff]
        %v2918 = vld [vmem:[%s935 + $0x50] sm:$0xff]
        %v2919 = vld [vmem:[%s935 + $0x58] sm:$0xff]
        %v2920 = vld [vmem:[%s935 + $0x60] sm:$0xff]
        %v2921 = vld [vmem:[%s935 + $0x68] sm:$0xff]
        %v2922 = vld [vmem:[%s935 + $0x70] sm:$0xff]
        %v2923 = vld [vmem:[%s935 + $0x78] sm:$0xff]
        %v2924 = vld [vmem:[%s935 + $0x80] sm:$0xff]
        %v2925 = vld [vmem:[%s935 + $0x88] sm:$0xff]
        %v2926 = vld [vmem:[%s935 + $0x90] sm:$0xff]
        %v2927 = vld [vmem:[%s935 + $0x98] sm:$0xff]
        %v2928 = vld [vmem:[%s935 + $0xa0] sm:$0xff]
        %v2929 = vld [vmem:[%s935 + $0xa8] sm:$0xff]
        %v2930 = vld [vmem:[%s935 + $0xb0] sm:$0xff]
        %v2931 = vld [vmem:[%s935 + $0xb8] sm:$0xff]
        %v2932 = vld [vmem:[%s935 + $0xc0] sm:$0xff]
        %v2933 = vld [vmem:[%s935 + $0xc8] sm:$0xff]
        %v2934 = vld [vmem:[%s935 + $0xd0] sm:$0xff]
        %v2935 = vld [vmem:[%s935 + $0xd8] sm:$0xff]
        %v2936 = vld [vmem:[%s935 + $0xe0] sm:$0xff]
        %v2937 = vld [vmem:[%s935 + $0xe8] sm:$0xff]
        %v2938 = vld [vmem:[%s935 + $0xf0] sm:$0xff]
        %v2939 = vld [vmem:[%s935 + $0xf8] sm:$0xff]
        %v2940 = vld [vmem:[%s935 + $0x100] sm:$0xff]
        %v2941 = vld [vmem:[%s935 + $0x108] sm:$0xff]
        %v2942 = vld [vmem:[%s935 + $0x110] sm:$0xff]
        %v2943 = vld [vmem:[%s935 + $0x118] sm:$0xff]
        %v2944 = vld [vmem:[%s935 + $0x120] sm:$0xff]
        %v2945 = vld [vmem:[%s935 + $0x128] sm:$0xff]
        %v2946 = vld [vmem:[%s935 + $0x130] sm:$0xff]
        %v2947 = vld [vmem:[%s935 + $0x138] sm:$0xff]
        %v2948 = vld [vmem:[%s935 + $0x140] sm:$0xff]
        %v2949 = vld [vmem:[%s935 + $0x148] sm:$0xff]
        %v2950 = vld [vmem:[%s935 + $0x150] sm:$0xff]
        %v2951 = vld [vmem:[%s935 + $0x158] sm:$0xff]
        %v2952 = vld [vmem:[%s935 + $0x160] sm:$0xff]
        %v2953 = vld [vmem:[%s935 + $0x168] sm:$0xff]
        %v2954 = vld [vmem:[%s935 + $0x170] sm:$0xff]
        %v2955 = vld [vmem:[%s935 + $0x178] sm:$0xff]
        %v2956 = vld [vmem:[%s935 + $0x180] sm:$0xff]
        %v2957 = vld [vmem:[%s935 + $0x188] sm:$0xff]
        %v2958 = vld [vmem:[%s935 + $0x190] sm:$0xff]
        %v2959 = vld [vmem:[%s935 + $0x198] sm:$0xff]
        %v2960 = vld [vmem:[%s935 + $0x1a0] sm:$0xff]
        %v2961 = vld [vmem:[%s935 + $0x1a8] sm:$0xff]
        %v2962 = vld [vmem:[%s935 + $0x1b0] sm:$0xff]
        %v2963 = vld [vmem:[%s935 + $0x1b8] sm:$0xff]
        %v2964 = vld [vmem:[%s935 + $0x1c0] sm:$0xff]
        %v2965 = vld [vmem:[%s935 + $0x1c8] sm:$0xff]
        %v2966 = vld [vmem:[%s935 + $0x1d0] sm:$0xff]
        %v2967 = vld [vmem:[%s935 + $0x1d8] sm:$0xff]
        %v2968 = vld [vmem:[%s935 + $0x1e0] sm:$0xff]
        %v2969 = vld [vmem:[%s935 + $0x1e8] sm:$0xff]
        %v2970 = vld [vmem:[%s935 + $0x1f0] sm:$0xff]
        %v2971 = vld [vmem:[%s935 + $0x1f8] sm:$0xff]
        %v2972 = vld [vmem:[%s939] sm:$0xff]
        %v2973 = vld [vmem:[%s939 + $0x8] sm:$0xff]
        %v2976 = vlaneseq
        %v2977 = vshrl.u32 %v2976, 7
        %v2978 = vsub.s32 0, %v2977
        %v2979 = vrot.slane %v2972, %v2978
        %v2980 = vlaneseq
        %v2981 = vshrl.u32 %v2980, 7
        %v2982 = vsub.s32 1, %v2981
        %v2983 = vrot.slane %v2972, %v2982
        %v2984 = vlaneseq
        %v2985 = vshrl.u32 %v2984, 7
        %v2986 = vsub.s32 2, %v2985
        %v2987 = vrot.slane %v2972, %v2986
        %v2988 = vlaneseq
        %v2989 = vshrl.u32 %v2988, 7
        %v2990 = vsub.s32 3, %v2989
        %v2991 = vrot.slane %v2972, %v2990
        %v2992 = vlaneseq
        %v2993 = vshrl.u32 %v2992, 7
        %v2994 = vsub.s32 4, %v2993
        %v2995 = vrot.slane %v2972, %v2994
        %v2996 = vlaneseq
        %v2997 = vshrl.u32 %v2996, 7
        %v2998 = vsub.s32 5, %v2997
        %v2999 = vrot.slane %v2972, %v2998
        %v3000 = vlaneseq
        %v3001 = vshrl.u32 %v3000, 7
        %v3002 = vsub.s32 6, %v3001
        %v3003 = vrot.slane %v2972, %v3002
        %v3004 = vlaneseq
        %v3005 = vshrl.u32 %v3004, 7
        %v3006 = vsub.s32 7, %v3005
        %v3007 = vrot.slane %v2972, %v3006
        %v3008 = vlaneseq
        %v3009 = vshrl.u32 %v3008, 7
        %v3010 = vsub.s32 0, %v3009
        %v3011 = vrot.slane %v2973, %v3010
        %v3012 = vlaneseq
        %v3013 = vshrl.u32 %v3012, 7
        %v3014 = vsub.s32 1, %v3013
        %v3015 = vrot.slane %v2973, %v3014
        %v3016 = vlaneseq
        %v3017 = vshrl.u32 %v3016, 7
        %v3018 = vsub.s32 2, %v3017
        %v3019 = vrot.slane %v2973, %v3018
        %v3020 = vlaneseq
        %v3021 = vshrl.u32 %v3020, 7
        %v3022 = vsub.s32 3, %v3021
        %v3023 = vrot.slane %v2973, %v3022
        %v3024 = vlaneseq
        %v3025 = vshrl.u32 %v3024, 7
        %v3026 = vsub.s32 4, %v3025
        %v3027 = vrot.slane %v2973, %v3026
        %v3028 = vlaneseq
        %v3029 = vshrl.u32 %v3028, 7
        %v3030 = vsub.s32 5, %v3029
        %v3031 = vrot.slane %v2973, %v3030
        %v3032 = vlaneseq
        %v3033 = vshrl.u32 %v3032, 7
        %v3034 = vsub.s32 6, %v3033
        %v3035 = vrot.slane %v2973, %v3034
        %v3036 = vlaneseq
        %v3037 = vshrl.u32 %v3036, 7
        %v3038 = vsub.s32 7, %v3037
        %v3039 = vrot.slane %v2973, %v3038
        %v3120 = vunpack.c.l.b16 %v2908
        %v3121 = vunpack.c.h.b16 %v2908
        %v3122 = vunpack.c.l.b16 %v2909
        %v3123 = vunpack.c.h.b16 %v2909
        %v3124 = vunpack.c.l.b16 %v2910
        %v3125 = vunpack.c.h.b16 %v2910
        %v3126 = vunpack.c.l.b16 %v2911
        %v3127 = vunpack.c.h.b16 %v2911
        %v3128 = vunpack.c.l.b16 %v2912
        %v3129 = vunpack.c.h.b16 %v2912
        %v3130 = vunpack.c.l.b16 %v2913
        %v3131 = vunpack.c.h.b16 %v2913
        %v3132 = vunpack.c.l.b16 %v2914
        %v3133 = vunpack.c.h.b16 %v2914
        %v3134 = vunpack.c.l.b16 %v2915
        %v3135 = vunpack.c.h.b16 %v2915
        %v3136 = vunpack.c.l.b16 %v2916
        %v3137 = vunpack.c.h.b16 %v2916
        %v3138 = vunpack.c.l.b16 %v2917
        %v3139 = vunpack.c.h.b16 %v2917
        %v3140 = vunpack.c.l.b16 %v2918
        %v3141 = vunpack.c.h.b16 %v2918
        %v3142 = vunpack.c.l.b16 %v2919
        %v3143 = vunpack.c.h.b16 %v2919
        %v3144 = vunpack.c.l.b16 %v2920
        %v3145 = vunpack.c.h.b16 %v2920
        %v3146 = vunpack.c.l.b16 %v2921
        %v3147 = vunpack.c.h.b16 %v2921
        %v3148 = vunpack.c.l.b16 %v2922
        %v3149 = vunpack.c.h.b16 %v2922
        %v3150 = vunpack.c.l.b16 %v2923
        %v3151 = vunpack.c.h.b16 %v2923
        %v3152 = vunpack.c.l.b16 %v2924
        %v3153 = vunpack.c.h.b16 %v2924
        %v3154 = vunpack.c.l.b16 %v2925
        %v3155 = vunpack.c.h.b16 %v2925
        %v3156 = vunpack.c.l.b16 %v2926
        %v3157 = vunpack.c.h.b16 %v2926
        %v3158 = vunpack.c.l.b16 %v2927
        %v3159 = vunpack.c.h.b16 %v2927
        %v3160 = vunpack.c.l.b16 %v2928
        %v3161 = vunpack.c.h.b16 %v2928
        %v3162 = vunpack.c.l.b16 %v2929
        %v3163 = vunpack.c.h.b16 %v2929
        %v3164 = vunpack.c.l.b16 %v2930
        %v3165 = vunpack.c.h.b16 %v2930
        %v3166 = vunpack.c.l.b16 %v2931
        %v3167 = vunpack.c.h.b16 %v2931
        %v3168 = vunpack.c.l.b16 %v2932
        %v3169 = vunpack.c.h.b16 %v2932
        %v3170 = vunpack.c.l.b16 %v2933
        %v3171 = vunpack.c.h.b16 %v2933
        %v3172 = vunpack.c.l.b16 %v2934
        %v3173 = vunpack.c.h.b16 %v2934
        %v3174 = vunpack.c.l.b16 %v2935
        %v3175 = vunpack.c.h.b16 %v2935
        %v3176 = vunpack.c.l.b16 %v2936
        %v3177 = vunpack.c.h.b16 %v2936
        %v3178 = vunpack.c.l.b16 %v2937
        %v3179 = vunpack.c.h.b16 %v2937
        %v3180 = vunpack.c.l.b16 %v2938
        %v3181 = vunpack.c.h.b16 %v2938
        %v3182 = vunpack.c.l.b16 %v2939
        %v3183 = vunpack.c.h.b16 %v2939
        %v3184 = vunpack.c.l.b16 %v2940
        %v3185 = vunpack.c.h.b16 %v2940
        %v3186 = vunpack.c.l.b16 %v2941
        %v3187 = vunpack.c.h.b16 %v2941
        %v3188 = vunpack.c.l.b16 %v2942
        %v3189 = vunpack.c.h.b16 %v2942
        %v3190 = vunpack.c.l.b16 %v2943
        %v3191 = vunpack.c.h.b16 %v2943
        %v3192 = vunpack.c.l.b16 %v2944
        %v3193 = vunpack.c.h.b16 %v2944
        %v3194 = vunpack.c.l.b16 %v2945
        %v3195 = vunpack.c.h.b16 %v2945
        %v3196 = vunpack.c.l.b16 %v2946
        %v3197 = vunpack.c.h.b16 %v2946
        %v3198 = vunpack.c.l.b16 %v2947
        %v3199 = vunpack.c.h.b16 %v2947
        %v3200 = vunpack.c.l.b16 %v2948
        %v3201 = vunpack.c.h.b16 %v2948
        %v3202 = vunpack.c.l.b16 %v2949
        %v3203 = vunpack.c.h.b16 %v2949
        %v3204 = vunpack.c.l.b16 %v2950
        %v3205 = vunpack.c.h.b16 %v2950
        %v3206 = vunpack.c.l.b16 %v2951
        %v3207 = vunpack.c.h.b16 %v2951
        %v3208 = vunpack.c.l.b16 %v2952
        %v3209 = vunpack.c.h.b16 %v2952
        %v3210 = vunpack.c.l.b16 %v2953
        %v3211 = vunpack.c.h.b16 %v2953
        %v3212 = vunpack.c.l.b16 %v2954
        %v3213 = vunpack.c.h.b16 %v2954
        %v3214 = vunpack.c.l.b16 %v2955
        %v3215 = vunpack.c.h.b16 %v2955
        %v3216 = vunpack.c.l.b16 %v2956
        %v3217 = vunpack.c.h.b16 %v2956
        %v3218 = vunpack.c.l.b16 %v2957
        %v3219 = vunpack.c.h.b16 %v2957
        %v3220 = vunpack.c.l.b16 %v2958
        %v3221 = vunpack.c.h.b16 %v2958
        %v3222 = vunpack.c.l.b16 %v2959
        %v3223 = vunpack.c.h.b16 %v2959
        %v3224 = vunpack.c.l.b16 %v2960
        %v3225 = vunpack.c.h.b16 %v2960
        %v3226 = vunpack.c.l.b16 %v2961
        %v3227 = vunpack.c.h.b16 %v2961
        %v3228 = vunpack.c.l.b16 %v2962
        %v3229 = vunpack.c.h.b16 %v2962
        %v3230 = vunpack.c.l.b16 %v2963
        %v3231 = vunpack.c.h.b16 %v2963
        %v3232 = vunpack.c.l.b16 %v2964
        %v3233 = vunpack.c.h.b16 %v2964
        %v3234 = vunpack.c.l.b16 %v2965
        %v3235 = vunpack.c.h.b16 %v2965
        %v3236 = vunpack.c.l.b16 %v2966
        %v3237 = vunpack.c.h.b16 %v2966
        %v3238 = vunpack.c.l.b16 %v2967
        %v3239 = vunpack.c.h.b16 %v2967
        %v3240 = vunpack.c.l.b16 %v2968
        %v3241 = vunpack.c.h.b16 %v2968
        %v3242 = vunpack.c.l.b16 %v2969
        %v3243 = vunpack.c.h.b16 %v2969
        %v3244 = vunpack.c.l.b16 %v2970
        %v3245 = vunpack.c.h.b16 %v2970
        %v3246 = vunpack.c.l.b16 %v2971
        %v3247 = vunpack.c.h.b16 %v2971
        %v3248 = vpack.c.b16 %v3136, %v3120
        %v3249 = vpack.c.b16 %v3137, %v3121
        %v3250 = vpack.c.b16 %v3138, %v3122
        %v3251 = vpack.c.b16 %v3139, %v3123
        %v3252 = vpack.c.b16 %v3140, %v3124
        %v3253 = vpack.c.b16 %v3141, %v3125
        %v3254 = vpack.c.b16 %v3142, %v3126
        %v3255 = vpack.c.b16 %v3143, %v3127
        %v3256 = vpack.c.b16 %v3144, %v3128
        %v3257 = vpack.c.b16 %v3145, %v3129
        %v3258 = vpack.c.b16 %v3146, %v3130
        %v3259 = vpack.c.b16 %v3147, %v3131
        %v3260 = vpack.c.b16 %v3148, %v3132
        %v3261 = vpack.c.b16 %v3149, %v3133
        %v3262 = vpack.c.b16 %v3150, %v3134
        %v3263 = vpack.c.b16 %v3151, %v3135
        %v3264 = vpack.c.b16 %v3168, %v3152
        %v3265 = vpack.c.b16 %v3169, %v3153
        %v3266 = vpack.c.b16 %v3170, %v3154
        %v3267 = vpack.c.b16 %v3171, %v3155
        %v3268 = vpack.c.b16 %v3172, %v3156
        %v3269 = vpack.c.b16 %v3173, %v3157
        %v3270 = vpack.c.b16 %v3174, %v3158
        %v3271 = vpack.c.b16 %v3175, %v3159
        %v3272 = vpack.c.b16 %v3176, %v3160
        %v3273 = vpack.c.b16 %v3177, %v3161
        %v3274 = vpack.c.b16 %v3178, %v3162
        %v3275 = vpack.c.b16 %v3179, %v3163
        %v3276 = vpack.c.b16 %v3180, %v3164
        %v3277 = vpack.c.b16 %v3181, %v3165
        %v3278 = vpack.c.b16 %v3182, %v3166
        %v3279 = vpack.c.b16 %v3183, %v3167
        %v3280 = vpack.c.b16 %v3200, %v3184
        %v3281 = vpack.c.b16 %v3201, %v3185
        %v3282 = vpack.c.b16 %v3202, %v3186
        %v3283 = vpack.c.b16 %v3203, %v3187
        %v3284 = vpack.c.b16 %v3204, %v3188
        %v3285 = vpack.c.b16 %v3205, %v3189
        %v3286 = vpack.c.b16 %v3206, %v3190
        %v3287 = vpack.c.b16 %v3207, %v3191
        %v3288 = vpack.c.b16 %v3208, %v3192
        %v3289 = vpack.c.b16 %v3209, %v3193
        %v3290 = vpack.c.b16 %v3210, %v3194
        %v3291 = vpack.c.b16 %v3211, %v3195
        %v3292 = vpack.c.b16 %v3212, %v3196
        %v3293 = vpack.c.b16 %v3213, %v3197
        %v3294 = vpack.c.b16 %v3214, %v3198
        %v3295 = vpack.c.b16 %v3215, %v3199
        %v3296 = vpack.c.b16 %v3232, %v3216
        %v3297 = vpack.c.b16 %v3233, %v3217
        %v3298 = vpack.c.b16 %v3234, %v3218
        %v3299 = vpack.c.b16 %v3235, %v3219
        %v3300 = vpack.c.b16 %v3236, %v3220
        %v3301 = vpack.c.b16 %v3237, %v3221
        %v3302 = vpack.c.b16 %v3238, %v3222
        %v3303 = vpack.c.b16 %v3239, %v3223
        %v3304 = vpack.c.b16 %v3240, %v3224
        %v3305 = vpack.c.b16 %v3241, %v3225
        %v3306 = vpack.c.b16 %v3242, %v3226
        %v3307 = vpack.c.b16 %v3243, %v3227
        %v3308 = vpack.c.b16 %v3244, %v3228
        %v3309 = vpack.c.b16 %v3245, %v3229
        %v3310 = vpack.c.b16 %v3246, %v3230
        %v3311 = vpack.c.b16 %v3247, %v3231
        %v3377 = vsel %vm1325, %v2900, 0
        %v3380 = vsel %vm1325, %v2901, 0
        %v3383 = vsel %vm1325, %v2902, 0
        %v3386 = vsel %vm1325, %v2903, 0
        %v3389 = vsel %vm1325, %v2904, 0
        %v3392 = vsel %vm1325, %v2905, 0
        %v3395 = vsel %vm1325, %v2906, 0
        %v3398 = vsel %vm1325, %v2907, 0
        %3400 = vmatprep.subr.bf16.mxu0 %v3249
        %3401 = vmatpush1.bf16.msra.mxu0 %v3248
        %3402 = vmatprep.subr.bf16.mxu0 %v3265
        %3403 = vmatpush1.bf16.msra.mxu0 %v3264
        %3404 = vmatprep.subr.bf16.mxu0 %v3281
        %3405 = vmatpush1.bf16.msra.mxu0 %v3280
        %3406 = vmatprep.subr.bf16.mxu0 %v3297
        %3407 = vmatpush1.bf16.msra.mxu0 %v3296
        %3408 = vmatprep.subr.bf16.mxu0 0
        %3409 = vmatpush1.bf16.msra.mxu0 0
        %3410 = vmatprep.subr.bf16.mxu0 0
        %3411 = vmatpush1.bf16.msra.mxu0 0
        %3412 = vmatprep.subr.bf16.mxu0 0
        %3413 = vmatpush1.bf16.msra.mxu0 0
        %3414 = vmatprep.subr.bf16.mxu0 0
        %3415 = vmatpush1.bf16.msra.mxu0 0
        %3416 = vmatprep.subr.bf16.mxu0 0
        %3417 = vmatpush1.bf16.msra.mxu0 0
        %3418 = vmatprep.subr.bf16.mxu0 0
        %3419 = vmatpush1.bf16.msra.mxu0 0
        %3420 = vmatprep.subr.bf16.mxu0 0
        %3421 = vmatpush1.bf16.msra.mxu0 0
        %3422 = vmatprep.subr.bf16.mxu0 0
        %3423 = vmatpush1.bf16.msra.mxu0 0
        %3424 = vmatprep.subr.bf16.mxu0 0
        %3425 = vmatpush1.bf16.msra.mxu0 0
        %3426 = vmatprep.subr.bf16.mxu0 0
        %3427 = vmatpush1.bf16.msra.mxu0 0
        %3428 = vmatprep.subr.bf16.mxu0 0
        %3429 = vmatpush1.bf16.msra.mxu0 0
        %3430 = vmatprep.subr.bf16.mxu0 0
        %3431 = vmatpush1.bf16.msra.mxu0 0
        %3432 = vmatprep.mubr.bf16.mxu0 0
        %3433 = vmatmul.mubr.bf16.gmra.mrb[0].mxu0 %v3377
        %v3434 = vpop.f32.mrb[0].mxu0
        %v3435 = vadd.f32 %v2979, %v3434
        %v3436 = vpop.f32.mrb[0].mxu0
        %v3437 = vadd.f32 %v2983, %v3436
        %v3438 = vpop.f32.mrb[0].mxu0
        %v3439 = vadd.f32 %v2979, %v3438
        %v3440 = vpop.f32.mrb[0].mxu0
        %v3441 = vadd.f32 %v2983, %v3440
        %3442 = vmatprep.mubr.bf16.mxu0 0
        %3443 = vmatmul.mubr.bf16.gmra.mrb[0].mxu0 %v3380
        %v3444 = vpop.f32.mrb[0].mxu0
        %v3445 = vadd.f32 %v2979, %v3444
        %v3446 = vpop.f32.mrb[0].mxu0
        %v3447 = vadd.f32 %v2983, %v3446
        %v3448 = vpop.f32.mrb[0].mxu0
        %v3449 = vadd.f32 %v2979, %v3448
        %v3450 = vpop.f32.mrb[0].mxu0
        %v3451 = vadd.f32 %v2983, %v3450
        %3452 = vmatprep.mubr.bf16.mxu0 0
        %3453 = vmatmul.mubr.bf16.gmra.mrb[0].mxu0 %v3383
        %v3454 = vpop.f32.mrb[0].mxu0
        %v3455 = vadd.f32 %v2979, %v3454
        %v3456 = vpop.f32.mrb[0].mxu0
        %v3457 = vadd.f32 %v2983, %v3456
        %v3458 = vpop.f32.mrb[0].mxu0
        %v3459 = vadd.f32 %v2979, %v3458
        %v3460 = vpop.f32.mrb[0].mxu0
        %v3461 = vadd.f32 %v2983, %v3460
        %3462 = vmatprep.mubr.bf16.mxu0 0
        %3463 = vmatmul.mubr.bf16.gmra.mrb[0].mxu0 %v3386
        %v3464 = vpop.f32.mrb[0].mxu0
        %v3465 = vadd.f32 %v2979, %v3464
        %v3466 = vpop.f32.mrb[0].mxu0
        %v3467 = vadd.f32 %v2983, %v3466
        %v3468 = vpop.f32.mrb[0].mxu0
        %v3469 = vadd.f32 %v2979, %v3468
        %v3470 = vpop.f32.mrb[0].mxu0
        %v3471 = vadd.f32 %v2983, %v3470
        %3472 = vmatprep.mubr.bf16.mxu0 0
        %3473 = vmatmul.mubr.bf16.gmra.mrb[0].mxu0 %v3389
        %v3474 = vpop.f32.mrb[0].mxu0
        %v3475 = vadd.f32 %v2979, %v3474
        %v3476 = vpop.f32.mrb[0].mxu0
        %v3477 = vadd.f32 %v2983, %v3476
        %v3478 = vpop.f32.mrb[0].mxu0
        %v3479 = vadd.f32 %v2979, %v3478
        %v3480 = vpop.f32.mrb[0].mxu0
        %v3481 = vadd.f32 %v2983, %v3480
        %3482 = vmatprep.mubr.bf16.mxu0 0
        %3483 = vmatmul.mubr.bf16.gmra.mrb[0].mxu0 %v3392
        %v3484 = vpop.f32.mrb[0].mxu0
        %v3485 = vadd.f32 %v2979, %v3484
        %v3486 = vpop.f32.mrb[0].mxu0
        %v3487 = vadd.f32 %v2983, %v3486
        %v3488 = vpop.f32.mrb[0].mxu0
        %v3489 = vadd.f32 %v2979, %v3488
        %v3490 = vpop.f32.mrb[0].mxu0
        %v3491 = vadd.f32 %v2983, %v3490
        %3492 = vmatprep.mubr.bf16.mxu0 0
        %3493 = vmatmul.mubr.bf16.gmra.mrb[0].mxu0 %v3395
        %v3494 = vpop.f32.mrb[0].mxu0
        %v3495 = vadd.f32 %v2979, %v3494
        %v3496 = vpop.f32.mrb[0].mxu0
        %v3497 = vadd.f32 %v2983, %v3496
        %v3498 = vpop.f32.mrb[0].mxu0
        %v3499 = vadd.f32 %v2979, %v3498
        %v3500 = vpop.f32.mrb[0].mxu0
        %v3501 = vadd.f32 %v2983, %v3500
        %3502 = vmatprep.mubr.bf16.mxu0 0
        %3503 = vmatmul.mubr.bf16.gmra.mrb[0].mxu0 %v3398
        %v3504 = vpop.f32.mrb[0].mxu0
        %v3505 = vadd.f32 %v2979, %v3504
        %v3506 = vpop.f32.mrb[0].mxu0
        %v3507 = vadd.f32 %v2983, %v3506
        %v3508 = vpop.f32.mrb[0].mxu0
        %v3509 = vadd.f32 %v2979, %v3508
        %v3510 = vpop.f32.mrb[0].mxu0
        %v3511 = vadd.f32 %v2983, %v3510
        %3512 = vdwg.mxu0
        %3513 = vmatprep.subr.bf16.mxu0 %v3251
        %3514 = vmatpush1.bf16.msra.mxu0 %v3250
        %3515 = vmatprep.subr.bf16.mxu0 %v3267
        %3516 = vmatpush1.bf16.msra.mxu0 %v3266
        %3517 = vmatprep.subr.bf16.mxu0 %v3283
        %3518 = vmatpush1.bf16.msra.mxu0 %v3282
        %3519 = vmatprep.subr.bf16.mxu0 %v3299
        %3520 = vmatpush1.bf16.msra.mxu0 %v3298
        %3521 = vmatprep.subr.bf16.mxu0 0
        %3522 = vmatpush1.bf16.msra.mxu0 0
        %3523 = vmatprep.subr.bf16.mxu0 0
        %3524 = vmatpush1.bf16.msra.mxu0 0
        %3525 = vmatprep.subr.bf16.mxu0 0
        %3526 = vmatpush1.bf16.msra.mxu0 0
        %3527 = vmatprep.subr.bf16.mxu0 0
        %3528 = vmatpush1.bf16.msra.mxu0 0
        %3529 = vmatprep.subr.bf16.mxu0 0
        %3530 = vmatpush1.bf16.msra.mxu0 0
        %3531 = vmatprep.subr.bf16.mxu0 0
        %3532 = vmatpush1.bf16.msra.mxu0 0
        %3533 = vmatprep.subr.bf16.mxu0 0
        %3534 = vmatpush1.bf16.msra.mxu0 0
        %3535 = vmatprep.subr.bf16.mxu0 0
        %3536 = vmatpush1.bf16.msra.mxu0 0
        %3537 = vmatprep.subr.bf16.mxu0 0
        %3538 = vmatpush1.bf16.msra.mxu0 0
        %3539 = vmatprep.subr.bf16.mxu0 0
        %3540 = vmatpush1.bf16.msra.mxu0 0
        %3541 = vmatprep.subr.bf16.mxu0 0
        %3542 = vmatpush1.bf16.msra.mxu0 0
        %3543 = vmatprep.subr.bf16.mxu0 0
        %3544 = vmatpush1.bf16.msra.mxu0 0
        %3545 = vmatprep.mubr.bf16.mxu0 0
        %3546 = vmatmul.mubr.bf16.gmra.mrb[0].mxu0 %v3377
        %v3547 = vpop.f32.mrb[0].mxu0
        %v3548 = vadd.f32 %v2987, %v3547
        %v3549 = vpop.f32.mrb[0].mxu0
        %v3550 = vadd.f32 %v2991, %v3549
        %v3551 = vpop.f32.mrb[0].mxu0
        %v3552 = vadd.f32 %v2987, %v3551
        %v3553 = vpop.f32.mrb[0].mxu0
        %v3554 = vadd.f32 %v2991, %v3553
        %3555 = vmatprep.mubr.bf16.mxu0 0
        %3556 = vmatmul.mubr.bf16.gmra.mrb[0].mxu0 %v3380
        %v3557 = vpop.f32.mrb[0].mxu0
        %v3558 = vadd.f32 %v2987, %v3557
        %v3559 = vpop.f32.mrb[0].mxu0
        %v3560 = vadd.f32 %v2991, %v3559
        %v3561 = vpop.f32.mrb[0].mxu0
        %v3562 = vadd.f32 %v2987, %v3561
        %v3563 = vpop.f32.mrb[0].mxu0
        %v3564 = vadd.f32 %v2991, %v3563
        %3565 = vmatprep.mubr.bf16.mxu0 0
        %3566 = vmatmul.mubr.bf16.gmra.mrb[0].mxu0 %v3383
        %v3567 = vpop.f32.mrb[0].mxu0
        %v3568 = vadd.f32 %v2987, %v3567
        %v3569 = vpop.f32.mrb[0].mxu0
        %v3570 = vadd.f32 %v2991, %v3569
        %v3571 = vpop.f32.mrb[0].mxu0
        %v3572 = vadd.f32 %v2987, %v3571
        %v3573 = vpop.f32.mrb[0].mxu0
        %v3574 = vadd.f32 %v2991, %v3573
        %3575 = vmatprep.mubr.bf16.mxu0 0
        %3576 = vmatmul.mubr.bf16.gmra.mrb[0].mxu0 %v3386
        %v3577 = vpop.f32.mrb[0].mxu0
        %v3578 = vadd.f32 %v2987, %v3577
        %v3579 = vpop.f32.mrb[0].mxu0
        %v3580 = vadd.f32 %v2991, %v3579
        %v3581 = vpop.f32.mrb[0].mxu0
        %v3582 = vadd.f32 %v2987, %v3581
        %v3583 = vpop.f32.mrb[0].mxu0
        %v3584 = vadd.f32 %v2991, %v3583
        %3585 = vmatprep.mubr.bf16.mxu0 0
        %3586 = vmatmul.mubr.bf16.gmra.mrb[0].mxu0 %v3389
        %v3587 = vpop.f32.mrb[0].mxu0
        %v3588 = vadd.f32 %v2987, %v3587
        %v3589 = vpop.f32.mrb[0].mxu0
        %v3590 = vadd.f32 %v2991, %v3589
        %v3591 = vpop.f32.mrb[0].mxu0
        %v3592 = vadd.f32 %v2987, %v3591
        %v3593 = vpop.f32.mrb[0].mxu0
        %v3594 = vadd.f32 %v2991, %v3593
        %3595 = vmatprep.mubr.bf16.mxu0 0
        %3596 = vmatmul.mubr.bf16.gmra.mrb[0].mxu0 %v3392
        %v3597 = vpop.f32.mrb[0].mxu0
        %v3598 = vadd.f32 %v2987, %v3597
        %v3599 = vpop.f32.mrb[0].mxu0
        %v3600 = vadd.f32 %v2991, %v3599
        %v3601 = vpop.f32.mrb[0].mxu0
        %v3602 = vadd.f32 %v2987, %v3601
        %v3603 = vpop.f32.mrb[0].mxu0
        %v3604 = vadd.f32 %v2991, %v3603
        %3605 = vmatprep.mubr.bf16.mxu0 0
        %3606 = vmatmul.mubr.bf16.gmra.mrb[0].mxu0 %v3395
        %v3607 = vpop.f32.mrb[0].mxu0
        %v3608 = vadd.f32 %v2987, %v3607
        %v3609 = vpop.f32.mrb[0].mxu0
        %v3610 = vadd.f32 %v2991, %v3609
        %v3611 = vpop.f32.mrb[0].mxu0
        %v3612 = vadd.f32 %v2987, %v3611
        %v3613 = vpop.f32.mrb[0].mxu0
        %v3614 = vadd.f32 %v2991, %v3613
        %3615 = vmatprep.mubr.bf16.mxu0 0
        %3616 = vmatmul.mubr.bf16.gmra.mrb[0].mxu0 %v3398
        %v3617 = vpop.f32.mrb[0].mxu0
        %v3618 = vadd.f32 %v2987, %v3617
        %v3619 = vpop.f32.mrb[0].mxu0
        %v3620 = vadd.f32 %v2991, %v3619
        %v3621 = vpop.f32.mrb[0].mxu0
        %v3622 = vadd.f32 %v2987, %v3621
        %v3623 = vpop.f32.mrb[0].mxu0
        %v3624 = vadd.f32 %v2991, %v3623
        %3625 = vdwg.mxu0
        %3626 = vmatprep.subr.bf16.mxu0 %v3253
        %3627 = vmatpush1.bf16.msra.mxu0 %v3252
        %3628 = vmatprep.subr.bf16.mxu0 %v3269
        %3629 = vmatpush1.bf16.msra.mxu0 %v3268
        %3630 = vmatprep.subr.bf16.mxu0 %v3285
        %3631 = vmatpush1.bf16.msra.mxu0 %v3284
        %3632 = vmatprep.subr.bf16.mxu0 %v3301
        %3633 = vmatpush1.bf16.msra.mxu0 %v3300
        %3634 = vmatprep.subr.bf16.mxu0 0
        %3635 = vmatpush1.bf16.msra.mxu0 0
        %3636 = vmatprep.subr.bf16.mxu0 0
        %3637 = vmatpush1.bf16.msra.mxu0 0
        %3638 = vmatprep.subr.bf16.mxu0 0
        %3639 = vmatpush1.bf16.msra.mxu0 0
        %3640 = vmatprep.subr.bf16.mxu0 0
        %3641 = vmatpush1.bf16.msra.mxu0 0
        %3642 = vmatprep.subr.bf16.mxu0 0
        %3643 = vmatpush1.bf16.msra.mxu0 0
        %3644 = vmatprep.subr.bf16.mxu0 0
        %3645 = vmatpush1.bf16.msra.mxu0 0
        %3646 = vmatprep.subr.bf16.mxu0 0
        %3647 = vmatpush1.bf16.msra.mxu0 0
        %3648 = vmatprep.subr.bf16.mxu0 0
        %3649 = vmatpush1.bf16.msra.mxu0 0
        %3650 = vmatprep.subr.bf16.mxu0 0
        %3651 = vmatpush1.bf16.msra.mxu0 0
        %3652 = vmatprep.subr.bf16.mxu0 0
        %3653 = vmatpush1.bf16.msra.mxu0 0
        %3654 = vmatprep.subr.bf16.mxu0 0
        %3655 = vmatpush1.bf16.msra.mxu0 0
        %3656 = vmatprep.subr.bf16.mxu0 0
        %3657 = vmatpush1.bf16.msra.mxu0 0
        %3658 = vmatprep.mubr.bf16.mxu0 0
        %3659 = vmatmul.mubr.bf16.gmra.mrb[0].mxu0 %v3377
        %v3660 = vpop.f32.mrb[0].mxu0
        %v3661 = vadd.f32 %v2995, %v3660
        %v3662 = vpop.f32.mrb[0].mxu0
        %v3663 = vadd.f32 %v2999, %v3662
        %v3664 = vpop.f32.mrb[0].mxu0
        %v3665 = vadd.f32 %v2995, %v3664
        %v3666 = vpop.f32.mrb[0].mxu0
        %v3667 = vadd.f32 %v2999, %v3666
        %3668 = vmatprep.mubr.bf16.mxu0 0
        %3669 = vmatmul.mubr.bf16.gmra.mrb[0].mxu0 %v3380
        %v3670 = vpop.f32.mrb[0].mxu0
        %v3671 = vadd.f32 %v2995, %v3670
        %v3672 = vpop.f32.mrb[0].mxu0
        %v3673 = vadd.f32 %v2999, %v3672
        %v3674 = vpop.f32.mrb[0].mxu0
        %v3675 = vadd.f32 %v2995, %v3674
        %v3676 = vpop.f32.mrb[0].mxu0
        %v3677 = vadd.f32 %v2999, %v3676
        %3678 = vmatprep.mubr.bf16.mxu0 0
        %3679 = vmatmul.mubr.bf16.gmra.mrb[0].mxu0 %v3383
        %v3680 = vpop.f32.mrb[0].mxu0
        %v3681 = vadd.f32 %v2995, %v3680
        %v3682 = vpop.f32.mrb[0].mxu0
        %v3683 = vadd.f32 %v2999, %v3682
        %v3684 = vpop.f32.mrb[0].mxu0
        %v3685 = vadd.f32 %v2995, %v3684
        %v3686 = vpop.f32.mrb[0].mxu0
        %v3687 = vadd.f32 %v2999, %v3686
        %3688 = vmatprep.mubr.bf16.mxu0 0
        %3689 = vmatmul.mubr.bf16.gmra.mrb[0].mxu0 %v3386
        %v3690 = vpop.f32.mrb[0].mxu0
        %v3691 = vadd.f32 %v2995, %v3690
        %v3692 = vpop.f32.mrb[0].mxu0
        %v3693 = vadd.f32 %v2999, %v3692
        %v3694 = vpop.f32.mrb[0].mxu0
        %v3695 = vadd.f32 %v2995, %v3694
        %v3696 = vpop.f32.mrb[0].mxu0
        %v3697 = vadd.f32 %v2999, %v3696
        %3698 = vmatprep.mubr.bf16.mxu0 0
        %3699 = vmatmul.mubr.bf16.gmra.mrb[0].mxu0 %v3389
        %v3700 = vpop.f32.mrb[0].mxu0
        %v3701 = vadd.f32 %v2995, %v3700
        %v3702 = vpop.f32.mrb[0].mxu0
        %v3703 = vadd.f32 %v2999, %v3702
        %v3704 = vpop.f32.mrb[0].mxu0
        %v3705 = vadd.f32 %v2995, %v3704
        %v3706 = vpop.f32.mrb[0].mxu0
        %v3707 = vadd.f32 %v2999, %v3706
        %3708 = vmatprep.mubr.bf16.mxu0 0
        %3709 = vmatmul.mubr.bf16.gmra.mrb[0].mxu0 %v3392
        %v3710 = vpop.f32.mrb[0].mxu0
        %v3711 = vadd.f32 %v2995, %v3710
        %v3712 = vpop.f32.mrb[0].mxu0
        %v3713 = vadd.f32 %v2999, %v3712
        %v3714 = vpop.f32.mrb[0].mxu0
        %v3715 = vadd.f32 %v2995, %v3714
        %v3716 = vpop.f32.mrb[0].mxu0
        %v3717 = vadd.f32 %v2999, %v3716
        %3718 = vmatprep.mubr.bf16.mxu0 0
        %3719 = vmatmul.mubr.bf16.gmra.mrb[0].mxu0 %v3395
        %v3720 = vpop.f32.mrb[0].mxu0
        %v3721 = vadd.f32 %v2995, %v3720
        %v3722 = vpop.f32.mrb[0].mxu0
        %v3723 = vadd.f32 %v2999, %v3722
        %v3724 = vpop.f32.mrb[0].mxu0
        %v3725 = vadd.f32 %v2995, %v3724
        %v3726 = vpop.f32.mrb[0].mxu0
        %v3727 = vadd.f32 %v2999, %v3726
        %3728 = vmatprep.mubr.bf16.mxu0 0
        %3729 = vmatmul.mubr.bf16.gmra.mrb[0].mxu0 %v3398
        %v3730 = vpop.f32.mrb[0].mxu0
        %v3731 = vadd.f32 %v2995, %v3730
        %v3732 = vpop.f32.mrb[0].mxu0
        %v3733 = vadd.f32 %v2999, %v3732
        %v3734 = vpop.f32.mrb[0].mxu0
        %v3735 = vadd.f32 %v2995, %v3734
        %v3736 = vpop.f32.mrb[0].mxu0
        %v3737 = vadd.f32 %v2999, %v3736
        %3738 = vdwg.mxu0
        %3739 = vmatprep.subr.bf16.mxu0 %v3255
        %3740 = vmatpush1.bf16.msra.mxu0 %v3254
        %3741 = vmatprep.subr.bf16.mxu0 %v3271
        %3742 = vmatpush1.bf16.msra.mxu0 %v3270
        %3743 = vmatprep.subr.bf16.mxu0 %v3287
        %3744 = vmatpush1.bf16.msra.mxu0 %v3286
        %3745 = vmatprep.subr.bf16.mxu0 %v3303
        %3746 = vmatpush1.bf16.msra.mxu0 %v3302
        %3747 = vmatprep.subr.bf16.mxu0 0
        %3748 = vmatpush1.bf16.msra.mxu0 0
        %3749 = vmatprep.subr.bf16.mxu0 0
        %3750 = vmatpush1.bf16.msra.mxu0 0
        %3751 = vmatprep.subr.bf16.mxu0 0
        %3752 = vmatpush1.bf16.msra.mxu0 0
        %3753 = vmatprep.subr.bf16.mxu0 0
        %3754 = vmatpush1.bf16.msra.mxu0 0
        %3755 = vmatprep.subr.bf16.mxu0 0
        %3756 = vmatpush1.bf16.msra.mxu0 0
        %3757 = vmatprep.subr.bf16.mxu0 0
        %3758 = vmatpush1.bf16.msra.mxu0 0
        %3759 = vmatprep.subr.bf16.mxu0 0
        %3760 = vmatpush1.bf16.msra.mxu0 0
        %3761 = vmatprep.subr.bf16.mxu0 0
        %3762 = vmatpush1.bf16.msra.mxu0 0
        %3763 = vmatprep.subr.bf16.mxu0 0
        %3764 = vmatpush1.bf16.msra.mxu0 0
        %3765 = vmatprep.subr.bf16.mxu0 0
        %3766 = vmatpush1.bf16.msra.mxu0 0
        %3767 = vmatprep.subr.bf16.mxu0 0
        %3768 = vmatpush1.bf16.msra.mxu0 0
        %3769 = vmatprep.subr.bf16.mxu0 0
        %3770 = vmatpush1.bf16.msra.mxu0 0
        %3771 = vmatprep.mubr.bf16.mxu0 0
        %3772 = vmatmul.mubr.bf16.gmra.mrb[0].mxu0 %v3377
        %v3773 = vpop.f32.mrb[0].mxu0
        %v3774 = vadd.f32 %v3003, %v3773
        %v3775 = vpop.f32.mrb[0].mxu0
        %v3776 = vadd.f32 %v3007, %v3775
        %v3777 = vpop.f32.mrb[0].mxu0
        %v3778 = vadd.f32 %v3003, %v3777
        %v3779 = vpop.f32.mrb[0].mxu0
        %v3780 = vadd.f32 %v3007, %v3779
        %3781 = vmatprep.mubr.bf16.mxu0 0
        %3782 = vmatmul.mubr.bf16.gmra.mrb[0].mxu0 %v3380
        %v3783 = vpop.f32.mrb[0].mxu0
        %v3784 = vadd.f32 %v3003, %v3783
        %v3785 = vpop.f32.mrb[0].mxu0
        %v3786 = vadd.f32 %v3007, %v3785
        %v3787 = vpop.f32.mrb[0].mxu0
        %v3788 = vadd.f32 %v3003, %v3787
        %v3789 = vpop.f32.mrb[0].mxu0
        %v3790 = vadd.f32 %v3007, %v3789
        %3791 = vmatprep.mubr.bf16.mxu0 0
        %3792 = vmatmul.mubr.bf16.gmra.mrb[0].mxu0 %v3383
        %v3793 = vpop.f32.mrb[0].mxu0
        %v3794 = vadd.f32 %v3003, %v3793
        %v3795 = vpop.f32.mrb[0].mxu0
        %v3796 = vadd.f32 %v3007, %v3795
        %v3797 = vpop.f32.mrb[0].mxu0
        %v3798 = vadd.f32 %v3003, %v3797
        %v3799 = vpop.f32.mrb[0].mxu0
        %v3800 = vadd.f32 %v3007, %v3799
        %3801 = vmatprep.mubr.bf16.mxu0 0
        %3802 = vmatmul.mubr.bf16.gmra.mrb[0].mxu0 %v3386
        %v3803 = vpop.f32.mrb[0].mxu0
        %v3804 = vadd.f32 %v3003, %v3803
        %v3805 = vpop.f32.mrb[0].mxu0
        %v3806 = vadd.f32 %v3007, %v3805
        %v3807 = vpop.f32.mrb[0].mxu0
        %v3808 = vadd.f32 %v3003, %v3807
        %v3809 = vpop.f32.mrb[0].mxu0
        %v3810 = vadd.f32 %v3007, %v3809
        %3811 = vmatprep.mubr.bf16.mxu0 0
        %3812 = vmatmul.mubr.bf16.gmra.mrb[0].mxu0 %v3389
        %v3813 = vpop.f32.mrb[0].mxu0
        %v3814 = vadd.f32 %v3003, %v3813
        %v3815 = vpop.f32.mrb[0].mxu0
        %v3816 = vadd.f32 %v3007, %v3815
        %v3817 = vpop.f32.mrb[0].mxu0
        %v3818 = vadd.f32 %v3003, %v3817
        %v3819 = vpop.f32.mrb[0].mxu0
        %v3820 = vadd.f32 %v3007, %v3819
        %3821 = vmatprep.mubr.bf16.mxu0 0
        %3822 = vmatmul.mubr.bf16.gmra.mrb[0].mxu0 %v3392
        %v3823 = vpop.f32.mrb[0].mxu0
        %v3824 = vadd.f32 %v3003, %v3823
        %v3825 = vpop.f32.mrb[0].mxu0
        %v3826 = vadd.f32 %v3007, %v3825
        %v3827 = vpop.f32.mrb[0].mxu0
        %v3828 = vadd.f32 %v3003, %v3827
        %v3829 = vpop.f32.mrb[0].mxu0
        %v3830 = vadd.f32 %v3007, %v3829
        %3831 = vmatprep.mubr.bf16.mxu0 0
        %3832 = vmatmul.mubr.bf16.gmra.mrb[0].mxu0 %v3395
        %v3833 = vpop.f32.mrb[0].mxu0
        %v3834 = vadd.f32 %v3003, %v3833
        %v3835 = vpop.f32.mrb[0].mxu0
        %v3836 = vadd.f32 %v3007, %v3835
        %v3837 = vpop.f32.mrb[0].mxu0
        %v3838 = vadd.f32 %v3003, %v3837
        %v3839 = vpop.f32.mrb[0].mxu0
        %v3840 = vadd.f32 %v3007, %v3839
        %3841 = vmatprep.mubr.bf16.mxu0 0
        %3842 = vmatmul.mubr.bf16.gmra.mrb[0].mxu0 %v3398
        %v3843 = vpop.f32.mrb[0].mxu0
        %v3844 = vadd.f32 %v3003, %v3843
        %v3845 = vpop.f32.mrb[0].mxu0
        %v3846 = vadd.f32 %v3007, %v3845
        %v3847 = vpop.f32.mrb[0].mxu0
        %v3848 = vadd.f32 %v3003, %v3847
        %v3849 = vpop.f32.mrb[0].mxu0
        %v3850 = vadd.f32 %v3007, %v3849
        %3851 = vdwg.mxu0
        %3852 = vmatprep.subr.bf16.mxu0 %v3257
        %3853 = vmatpush1.bf16.msra.mxu0 %v3256
        %3854 = vmatprep.subr.bf16.mxu0 %v3273
        %3855 = vmatpush1.bf16.msra.mxu0 %v3272
        %3856 = vmatprep.subr.bf16.mxu0 %v3289
        %3857 = vmatpush1.bf16.msra.mxu0 %v3288
        %3858 = vmatprep.subr.bf16.mxu0 %v3305
        %3859 = vmatpush1.bf16.msra.mxu0 %v3304
        %3860 = vmatprep.subr.bf16.mxu0 0
        %3861 = vmatpush1.bf16.msra.mxu0 0
        %3862 = vmatprep.subr.bf16.mxu0 0
        %3863 = vmatpush1.bf16.msra.mxu0 0
        %3864 = vmatprep.subr.bf16.mxu0 0
        %3865 = vmatpush1.bf16.msra.mxu0 0
        %3866 = vmatprep.subr.bf16.mxu0 0
        %3867 = vmatpush1.bf16.msra.mxu0 0
        %3868 = vmatprep.subr.bf16.mxu0 0
        %3869 = vmatpush1.bf16.msra.mxu0 0
        %3870 = vmatprep.subr.bf16.mxu0 0
        %3871 = vmatpush1.bf16.msra.mxu0 0
        %3872 = vmatprep.subr.bf16.mxu0 0
        %3873 = vmatpush1.bf16.msra.mxu0 0
        %3874 = vmatprep.subr.bf16.mxu0 0
        %3875 = vmatpush1.bf16.msra.mxu0 0
        %3876 = vmatprep.subr.bf16.mxu0 0
        %3877 = vmatpush1.bf16.msra.mxu0 0
        %3878 = vmatprep.subr.bf16.mxu0 0
        %3879 = vmatpush1.bf16.msra.mxu0 0
        %3880 = vmatprep.subr.bf16.mxu0 0
        %3881 = vmatpush1.bf16.msra.mxu0 0
        %3882 = vmatprep.subr.bf16.mxu0 0
        %3883 = vmatpush1.bf16.msra.mxu0 0
        %3884 = vmatprep.mubr.bf16.mxu0 0
        %3885 = vmatmul.mubr.bf16.gmra.mrb[0].mxu0 %v3377
        %v3886 = vpop.f32.mrb[0].mxu0
        %v3887 = vadd.f32 %v3011, %v3886
        %v3888 = vpop.f32.mrb[0].mxu0
        %v3889 = vadd.f32 %v3015, %v3888
        %v3890 = vpop.f32.mrb[0].mxu0
        %v3891 = vadd.f32 %v3011, %v3890
        %v3892 = vpop.f32.mrb[0].mxu0
        %v3893 = vadd.f32 %v3015, %v3892
        %3894 = vmatprep.mubr.bf16.mxu0 0
        %3895 = vmatmul.mubr.bf16.gmra.mrb[0].mxu0 %v3380
        %v3896 = vpop.f32.mrb[0].mxu0
        %v3897 = vadd.f32 %v3011, %v3896
        %v3898 = vpop.f32.mrb[0].mxu0
        %v3899 = vadd.f32 %v3015, %v3898
        %v3900 = vpop.f32.mrb[0].mxu0
        %v3901 = vadd.f32 %v3011, %v3900
        %v3902 = vpop.f32.mrb[0].mxu0
        %v3903 = vadd.f32 %v3015, %v3902
        %3904 = vmatprep.mubr.bf16.mxu0 0
        %3905 = vmatmul.mubr.bf16.gmra.mrb[0].mxu0 %v3383
        %v3906 = vpop.f32.mrb[0].mxu0
        %v3907 = vadd.f32 %v3011, %v3906
        %v3908 = vpop.f32.mrb[0].mxu0
        %v3909 = vadd.f32 %v3015, %v3908
        %v3910 = vpop.f32.mrb[0].mxu0
        %v3911 = vadd.f32 %v3011, %v3910
        %v3912 = vpop.f32.mrb[0].mxu0
        %v3913 = vadd.f32 %v3015, %v3912
        %3914 = vmatprep.mubr.bf16.mxu0 0
        %3915 = vmatmul.mubr.bf16.gmra.mrb[0].mxu0 %v3386
        %v3916 = vpop.f32.mrb[0].mxu0
        %v3917 = vadd.f32 %v3011, %v3916
        %v3918 = vpop.f32.mrb[0].mxu0
        %v3919 = vadd.f32 %v3015, %v3918
        %v3920 = vpop.f32.mrb[0].mxu0
        %v3921 = vadd.f32 %v3011, %v3920
        %v3922 = vpop.f32.mrb[0].mxu0
        %v3923 = vadd.f32 %v3015, %v3922
        %3924 = vmatprep.mubr.bf16.mxu0 0
        %3925 = vmatmul.mubr.bf16.gmra.mrb[0].mxu0 %v3389
        %v3926 = vpop.f32.mrb[0].mxu0
        %v3927 = vadd.f32 %v3011, %v3926
        %v3928 = vpop.f32.mrb[0].mxu0
        %v3929 = vadd.f32 %v3015, %v3928
        %v3930 = vpop.f32.mrb[0].mxu0
        %v3931 = vadd.f32 %v3011, %v3930
        %v3932 = vpop.f32.mrb[0].mxu0
        %v3933 = vadd.f32 %v3015, %v3932
        %3934 = vmatprep.mubr.bf16.mxu0 0
        %3935 = vmatmul.mubr.bf16.gmra.mrb[0].mxu0 %v3392
        %v3936 = vpop.f32.mrb[0].mxu0
        %v3937 = vadd.f32 %v3011, %v3936
        %v3938 = vpop.f32.mrb[0].mxu0
        %v3939 = vadd.f32 %v3015, %v3938
        %v3940 = vpop.f32.mrb[0].mxu0
        %v3941 = vadd.f32 %v3011, %v3940
        %v3942 = vpop.f32.mrb[0].mxu0
        %v3943 = vadd.f32 %v3015, %v3942
        %3944 = vmatprep.mubr.bf16.mxu0 0
        %3945 = vmatmul.mubr.bf16.gmra.mrb[0].mxu0 %v3395
        %v3946 = vpop.f32.mrb[0].mxu0
        %v3947 = vadd.f32 %v3011, %v3946
        %v3948 = vpop.f32.mrb[0].mxu0
        %v3949 = vadd.f32 %v3015, %v3948
        %v3950 = vpop.f32.mrb[0].mxu0
        %v3951 = vadd.f32 %v3011, %v3950
        %v3952 = vpop.f32.mrb[0].mxu0
        %v3953 = vadd.f32 %v3015, %v3952
        %3954 = vmatprep.mubr.bf16.mxu0 0
        %3955 = vmatmul.mubr.bf16.gmra.mrb[0].mxu0 %v3398
        %v3956 = vpop.f32.mrb[0].mxu0
        %v3957 = vadd.f32 %v3011, %v3956
        %v3958 = vpop.f32.mrb[0].mxu0
        %v3959 = vadd.f32 %v3015, %v3958
        %v3960 = vpop.f32.mrb[0].mxu0
        %v3961 = vadd.f32 %v3011, %v3960
        %v3962 = vpop.f32.mrb[0].mxu0
        %v3963 = vadd.f32 %v3015, %v3962
        %3964 = vdwg.mxu0
        %3965 = vmatprep.subr.bf16.mxu0 %v3259
        %3966 = vmatpush1.bf16.msra.mxu0 %v3258
        %3967 = vmatprep.subr.bf16.mxu0 %v3275
        %3968 = vmatpush1.bf16.msra.mxu0 %v3274
        %3969 = vmatprep.subr.bf16.mxu0 %v3291
        %3970 = vmatpush1.bf16.msra.mxu0 %v3290
        %3971 = vmatprep.subr.bf16.mxu0 %v3307
        %3972 = vmatpush1.bf16.msra.mxu0 %v3306
        %3973 = vmatprep.subr.bf16.mxu0 0
        %3974 = vmatpush1.bf16.msra.mxu0 0
        %3975 = vmatprep.subr.bf16.mxu0 0
        %3976 = vmatpush1.bf16.msra.mxu0 0
        %3977 = vmatprep.subr.bf16.mxu0 0
        %3978 = vmatpush1.bf16.msra.mxu0 0
        %3979 = vmatprep.subr.bf16.mxu0 0
        %3980 = vmatpush1.bf16.msra.mxu0 0
        %3981 = vmatprep.subr.bf16.mxu0 0
        %3982 = vmatpush1.bf16.msra.mxu0 0
        %3983 = vmatprep.subr.bf16.mxu0 0
        %3984 = vmatpush1.bf16.msra.mxu0 0
        %3985 = vmatprep.subr.bf16.mxu0 0
        %3986 = vmatpush1.bf16.msra.mxu0 0
        %3987 = vmatprep.subr.bf16.mxu0 0
        %3988 = vmatpush1.bf16.msra.mxu0 0
        %3989 = vmatprep.subr.bf16.mxu0 0
        %3990 = vmatpush1.bf16.msra.mxu0 0
        %3991 = vmatprep.subr.bf16.mxu0 0
        %3992 = vmatpush1.bf16.msra.mxu0 0
        %3993 = vmatprep.subr.bf16.mxu0 0
        %3994 = vmatpush1.bf16.msra.mxu0 0
        %3995 = vmatprep.subr.bf16.mxu0 0
        %3996 = vmatpush1.bf16.msra.mxu0 0
        %3997 = vmatprep.mubr.bf16.mxu0 0
        %3998 = vmatmul.mubr.bf16.gmra.mrb[0].mxu0 %v3377
        %v3999 = vpop.f32.mrb[0].mxu0
        %v4000 = vadd.f32 %v3019, %v3999
        %v4001 = vpop.f32.mrb[0].mxu0
        %v4002 = vadd.f32 %v3023, %v4001
        %v4003 = vpop.f32.mrb[0].mxu0
        %v4004 = vadd.f32 %v3019, %v4003
        %v4005 = vpop.f32.mrb[0].mxu0
        %v4006 = vadd.f32 %v3023, %v4005
        %4007 = vmatprep.mubr.bf16.mxu0 0
        %4008 = vmatmul.mubr.bf16.gmra.mrb[0].mxu0 %v3380
        %v4009 = vpop.f32.mrb[0].mxu0
        %v4010 = vadd.f32 %v3019, %v4009
        %v4011 = vpop.f32.mrb[0].mxu0
        %v4012 = vadd.f32 %v3023, %v4011
        %v4013 = vpop.f32.mrb[0].mxu0
        %v4014 = vadd.f32 %v3019, %v4013
        %v4015 = vpop.f32.mrb[0].mxu0
        %v4016 = vadd.f32 %v3023, %v4015
        %4017 = vmatprep.mubr.bf16.mxu0 0
        %4018 = vmatmul.mubr.bf16.gmra.mrb[0].mxu0 %v3383
        %v4019 = vpop.f32.mrb[0].mxu0
        %v4020 = vadd.f32 %v3019, %v4019
        %v4021 = vpop.f32.mrb[0].mxu0
        %v4022 = vadd.f32 %v3023, %v4021
        %v4023 = vpop.f32.mrb[0].mxu0
        %v4024 = vadd.f32 %v3019, %v4023
        %v4025 = vpop.f32.mrb[0].mxu0
        %v4026 = vadd.f32 %v3023, %v4025
        %4027 = vmatprep.mubr.bf16.mxu0 0
        %4028 = vmatmul.mubr.bf16.gmra.mrb[0].mxu0 %v3386
        %v4029 = vpop.f32.mrb[0].mxu0
        %v4030 = vadd.f32 %v3019, %v4029
        %v4031 = vpop.f32.mrb[0].mxu0
        %v4032 = vadd.f32 %v3023, %v4031
        %v4033 = vpop.f32.mrb[0].mxu0
        %v4034 = vadd.f32 %v3019, %v4033
        %v4035 = vpop.f32.mrb[0].mxu0
        %v4036 = vadd.f32 %v3023, %v4035
        %4037 = vmatprep.mubr.bf16.mxu0 0
        %4038 = vmatmul.mubr.bf16.gmra.mrb[0].mxu0 %v3389
        %v4039 = vpop.f32.mrb[0].mxu0
        %v4040 = vadd.f32 %v3019, %v4039
        %v4041 = vpop.f32.mrb[0].mxu0
        %v4042 = vadd.f32 %v3023, %v4041
        %v4043 = vpop.f32.mrb[0].mxu0
        %v4044 = vadd.f32 %v3019, %v4043
        %v4045 = vpop.f32.mrb[0].mxu0
        %v4046 = vadd.f32 %v3023, %v4045
        %4047 = vmatprep.mubr.bf16.mxu0 0
        %4048 = vmatmul.mubr.bf16.gmra.mrb[0].mxu0 %v3392
        %v4049 = vpop.f32.mrb[0].mxu0
        %v4050 = vadd.f32 %v3019, %v4049
        %v4051 = vpop.f32.mrb[0].mxu0
        %v4052 = vadd.f32 %v3023, %v4051
        %v4053 = vpop.f32.mrb[0].mxu0
        %v4054 = vadd.f32 %v3019, %v4053
        %v4055 = vpop.f32.mrb[0].mxu0
        %v4056 = vadd.f32 %v3023, %v4055
        %4057 = vmatprep.mubr.bf16.mxu0 0
        %4058 = vmatmul.mubr.bf16.gmra.mrb[0].mxu0 %v3395
        %v4059 = vpop.f32.mrb[0].mxu0
        %v4060 = vadd.f32 %v3019, %v4059
        %v4061 = vpop.f32.mrb[0].mxu0
        %v4062 = vadd.f32 %v3023, %v4061
        %v4063 = vpop.f32.mrb[0].mxu0
        %v4064 = vadd.f32 %v3019, %v4063
        %v4065 = vpop.f32.mrb[0].mxu0
        %v4066 = vadd.f32 %v3023, %v4065
        %4067 = vmatprep.mubr.bf16.mxu0 0
        %4068 = vmatmul.mubr.bf16.gmra.mrb[0].mxu0 %v3398
        %v4069 = vpop.f32.mrb[0].mxu0
        %v4070 = vadd.f32 %v3019, %v4069
        %v4071 = vpop.f32.mrb[0].mxu0
        %v4072 = vadd.f32 %v3023, %v4071
        %v4073 = vpop.f32.mrb[0].mxu0
        %v4074 = vadd.f32 %v3019, %v4073
        %v4075 = vpop.f32.mrb[0].mxu0
        %v4076 = vadd.f32 %v3023, %v4075
        %4077 = vdwg.mxu0
        %4078 = vmatprep.subr.bf16.mxu0 %v3261
        %4079 = vmatpush1.bf16.msra.mxu0 %v3260
        %4080 = vmatprep.subr.bf16.mxu0 %v3277
        %4081 = vmatpush1.bf16.msra.mxu0 %v3276
        %4082 = vmatprep.subr.bf16.mxu0 %v3293
        %4083 = vmatpush1.bf16.msra.mxu0 %v3292
        %4084 = vmatprep.subr.bf16.mxu0 %v3309
        %4085 = vmatpush1.bf16.msra.mxu0 %v3308
        %4086 = vmatprep.subr.bf16.mxu0 0
        %4087 = vmatpush1.bf16.msra.mxu0 0
        %4088 = vmatprep.subr.bf16.mxu0 0
        %4089 = vmatpush1.bf16.msra.mxu0 0
        %4090 = vmatprep.subr.bf16.mxu0 0
        %4091 = vmatpush1.bf16.msra.mxu0 0
        %4092 = vmatprep.subr.bf16.mxu0 0
        %4093 = vmatpush1.bf16.msra.mxu0 0
        %4094 = vmatprep.subr.bf16.mxu0 0
        %4095 = vmatpush1.bf16.msra.mxu0 0
        %4096 = vmatprep.subr.bf16.mxu0 0
        %4097 = vmatpush1.bf16.msra.mxu0 0
        %4098 = vmatprep.subr.bf16.mxu0 0
        %4099 = vmatpush1.bf16.msra.mxu0 0
        %4100 = vmatprep.subr.bf16.mxu0 0
        %4101 = vmatpush1.bf16.msra.mxu0 0
        %4102 = vmatprep.subr.bf16.mxu0 0
        %4103 = vmatpush1.bf16.msra.mxu0 0
        %4104 = vmatprep.subr.bf16.mxu0 0
        %4105 = vmatpush1.bf16.msra.mxu0 0
        %4106 = vmatprep.subr.bf16.mxu0 0
        %4107 = vmatpush1.bf16.msra.mxu0 0
        %4108 = vmatprep.subr.bf16.mxu0 0
        %4109 = vmatpush1.bf16.msra.mxu0 0
        %4110 = vmatprep.mubr.bf16.mxu0 0
        %4111 = vmatmul.mubr.bf16.gmra.mrb[0].mxu0 %v3377
        %v4112 = vpop.f32.mrb[0].mxu0
        %v4113 = vadd.f32 %v3027, %v4112
        %v4114 = vpop.f32.mrb[0].mxu0
        %v4115 = vadd.f32 %v3031, %v4114
        %v4116 = vpop.f32.mrb[0].mxu0
        %v4117 = vadd.f32 %v3027, %v4116
        %v4118 = vpop.f32.mrb[0].mxu0
        %v4119 = vadd.f32 %v3031, %v4118
        %4120 = vmatprep.mubr.bf16.mxu0 0
        %4121 = vmatmul.mubr.bf16.gmra.mrb[0].mxu0 %v3380
        %v4122 = vpop.f32.mrb[0].mxu0
        %v4123 = vadd.f32 %v3027, %v4122
        %v4124 = vpop.f32.mrb[0].mxu0
        %v4125 = vadd.f32 %v3031, %v4124
        %v4126 = vpop.f32.mrb[0].mxu0
        %v4127 = vadd.f32 %v3027, %v4126
        %v4128 = vpop.f32.mrb[0].mxu0
        %v4129 = vadd.f32 %v3031, %v4128
        %4130 = vmatprep.mubr.bf16.mxu0 0
        %4131 = vmatmul.mubr.bf16.gmra.mrb[0].mxu0 %v3383
        %v4132 = vpop.f32.mrb[0].mxu0
        %v4133 = vadd.f32 %v3027, %v4132
        %v4134 = vpop.f32.mrb[0].mxu0
        %v4135 = vadd.f32 %v3031, %v4134
        %v4136 = vpop.f32.mrb[0].mxu0
        %v4137 = vadd.f32 %v3027, %v4136
        %v4138 = vpop.f32.mrb[0].mxu0
        %v4139 = vadd.f32 %v3031, %v4138
        %4140 = vmatprep.mubr.bf16.mxu0 0
        %4141 = vmatmul.mubr.bf16.gmra.mrb[0].mxu0 %v3386
        %v4142 = vpop.f32.mrb[0].mxu0
        %v4143 = vadd.f32 %v3027, %v4142
        %v4144 = vpop.f32.mrb[0].mxu0
        %v4145 = vadd.f32 %v3031, %v4144
        %v4146 = vpop.f32.mrb[0].mxu0
        %v4147 = vadd.f32 %v3027, %v4146
        %v4148 = vpop.f32.mrb[0].mxu0
        %v4149 = vadd.f32 %v3031, %v4148
        %4150 = vmatprep.mubr.bf16.mxu0 0
        %4151 = vmatmul.mubr.bf16.gmra.mrb[0].mxu0 %v3389
        %v4152 = vpop.f32.mrb[0].mxu0
        %v4153 = vadd.f32 %v3027, %v4152
        %v4154 = vpop.f32.mrb[0].mxu0
        %v4155 = vadd.f32 %v3031, %v4154
        %v4156 = vpop.f32.mrb[0].mxu0
        %v4157 = vadd.f32 %v3027, %v4156
        %v4158 = vpop.f32.mrb[0].mxu0
        %v4159 = vadd.f32 %v3031, %v4158
        %4160 = vmatprep.mubr.bf16.mxu0 0
        %4161 = vmatmul.mubr.bf16.gmra.mrb[0].mxu0 %v3392
        %v4162 = vpop.f32.mrb[0].mxu0
        %v4163 = vadd.f32 %v3027, %v4162
        %v4164 = vpop.f32.mrb[0].mxu0
        %v4165 = vadd.f32 %v3031, %v4164
        %v4166 = vpop.f32.mrb[0].mxu0
        %v4167 = vadd.f32 %v3027, %v4166
        %v4168 = vpop.f32.mrb[0].mxu0
        %v4169 = vadd.f32 %v3031, %v4168
        %4170 = vmatprep.mubr.bf16.mxu0 0
        %4171 = vmatmul.mubr.bf16.gmra.mrb[0].mxu0 %v3395
        %v4172 = vpop.f32.mrb[0].mxu0
        %v4173 = vadd.f32 %v3027, %v4172
        %v4174 = vpop.f32.mrb[0].mxu0
        %v4175 = vadd.f32 %v3031, %v4174
        %v4176 = vpop.f32.mrb[0].mxu0
        %v4177 = vadd.f32 %v3027, %v4176
        %v4178 = vpop.f32.mrb[0].mxu0
        %v4179 = vadd.f32 %v3031, %v4178
        %4180 = vmatprep.mubr.bf16.mxu0 0
        %4181 = vmatmul.mubr.bf16.gmra.mrb[0].mxu0 %v3398
        %v4182 = vpop.f32.mrb[0].mxu0
        %v4183 = vadd.f32 %v3027, %v4182
        %v4184 = vpop.f32.mrb[0].mxu0
        %v4185 = vadd.f32 %v3031, %v4184
        %v4186 = vpop.f32.mrb[0].mxu0
        %v4187 = vadd.f32 %v3027, %v4186
        %v4188 = vpop.f32.mrb[0].mxu0
        %v4189 = vadd.f32 %v3031, %v4188
        %4190 = vdwg.mxu0
        %4191 = vmatprep.subr.bf16.mxu0 %v3263
        %4192 = vmatpush1.bf16.msra.mxu0 %v3262
        %4193 = vmatprep.subr.bf16.mxu0 %v3279
        %4194 = vmatpush1.bf16.msra.mxu0 %v3278
        %4195 = vmatprep.subr.bf16.mxu0 %v3295
        %4196 = vmatpush1.bf16.msra.mxu0 %v3294
        %4197 = vmatprep.subr.bf16.mxu0 %v3311
        %4198 = vmatpush1.bf16.msra.mxu0 %v3310
        %4199 = vmatprep.subr.bf16.mxu0 0
        %4200 = vmatpush1.bf16.msra.mxu0 0
        %4201 = vmatprep.subr.bf16.mxu0 0
        %4202 = vmatpush1.bf16.msra.mxu0 0
        %4203 = vmatprep.subr.bf16.mxu0 0
        %4204 = vmatpush1.bf16.msra.mxu0 0
        %4205 = vmatprep.subr.bf16.mxu0 0
        %4206 = vmatpush1.bf16.msra.mxu0 0
        %4207 = vmatprep.subr.bf16.mxu0 0
        %4208 = vmatpush1.bf16.msra.mxu0 0
        %4209 = vmatprep.subr.bf16.mxu0 0
        %4210 = vmatpush1.bf16.msra.mxu0 0
        %4211 = vmatprep.subr.bf16.mxu0 0
        %4212 = vmatpush1.bf16.msra.mxu0 0
        %4213 = vmatprep.subr.bf16.mxu0 0
        %4214 = vmatpush1.bf16.msra.mxu0 0
        %4215 = vmatprep.subr.bf16.mxu0 0
        %4216 = vmatpush1.bf16.msra.mxu0 0
        %4217 = vmatprep.subr.bf16.mxu0 0
        %4218 = vmatpush1.bf16.msra.mxu0 0
        %4219 = vmatprep.subr.bf16.mxu0 0
        %4220 = vmatpush1.bf16.msra.mxu0 0
        %4221 = vmatprep.subr.bf16.mxu0 0
        %4222 = vmatpush1.bf16.msra.mxu0 0
        %4223 = vmatprep.mubr.bf16.mxu0 0
        %4224 = vmatmul.mubr.bf16.gmra.mrb[0].mxu0 %v3377
        %v4225 = vpop.f32.mrb[0].mxu0
        %v4226 = vadd.f32 %v3035, %v4225
        %v4227 = vpop.f32.mrb[0].mxu0
        %v4228 = vadd.f32 %v3039, %v4227
        %v4229 = vpop.f32.mrb[0].mxu0
        %v4230 = vadd.f32 %v3035, %v4229
        %v4231 = vpop.f32.mrb[0].mxu0
        %v4232 = vadd.f32 %v3039, %v4231
        %4233 = vmatprep.mubr.bf16.mxu0 0
        %4234 = vmatmul.mubr.bf16.gmra.mrb[0].mxu0 %v3380
        %v4235 = vpop.f32.mrb[0].mxu0
        %v4236 = vadd.f32 %v3035, %v4235
        %v4237 = vpop.f32.mrb[0].mxu0
        %v4238 = vadd.f32 %v3039, %v4237
        %v4239 = vpop.f32.mrb[0].mxu0
        %v4240 = vadd.f32 %v3035, %v4239
        %v4241 = vpop.f32.mrb[0].mxu0
        %v4242 = vadd.f32 %v3039, %v4241
        %4243 = vmatprep.mubr.bf16.mxu0 0
        %4244 = vmatmul.mubr.bf16.gmra.mrb[0].mxu0 %v3383
        %v4245 = vpop.f32.mrb[0].mxu0
        %v4246 = vadd.f32 %v3035, %v4245
        %v4247 = vpop.f32.mrb[0].mxu0
        %v4248 = vadd.f32 %v3039, %v4247
        %v4249 = vpop.f32.mrb[0].mxu0
        %v4250 = vadd.f32 %v3035, %v4249
        %v4251 = vpop.f32.mrb[0].mxu0
        %v4252 = vadd.f32 %v3039, %v4251
        %4253 = vmatprep.mubr.bf16.mxu0 0
        %4254 = vmatmul.mubr.bf16.gmra.mrb[0].mxu0 %v3386
        %v4255 = vpop.f32.mrb[0].mxu0
        %v4256 = vadd.f32 %v3035, %v4255
        %v4257 = vpop.f32.mrb[0].mxu0
        %v4258 = vadd.f32 %v3039, %v4257
        %v4259 = vpop.f32.mrb[0].mxu0
        %v4260 = vadd.f32 %v3035, %v4259
        %v4261 = vpop.f32.mrb[0].mxu0
        %v4262 = vadd.f32 %v3039, %v4261
        %4263 = vmatprep.mubr.bf16.mxu0 0
        %4264 = vmatmul.mubr.bf16.gmra.mrb[0].mxu0 %v3389
        %v4265 = vpop.f32.mrb[0].mxu0
        %v4266 = vadd.f32 %v3035, %v4265
        %v4267 = vpop.f32.mrb[0].mxu0
        %v4268 = vadd.f32 %v3039, %v4267
        %v4269 = vpop.f32.mrb[0].mxu0
        %v4270 = vadd.f32 %v3035, %v4269
        %v4271 = vpop.f32.mrb[0].mxu0
        %v4272 = vadd.f32 %v3039, %v4271
        %4273 = vmatprep.mubr.bf16.mxu0 0
        %4274 = vmatmul.mubr.bf16.gmra.mrb[0].mxu0 %v3392
        %v4275 = vpop.f32.mrb[0].mxu0
        %v4276 = vadd.f32 %v3035, %v4275
        %v4277 = vpop.f32.mrb[0].mxu0
        %v4278 = vadd.f32 %v3039, %v4277
        %v4279 = vpop.f32.mrb[0].mxu0
        %v4280 = vadd.f32 %v3035, %v4279
        %v4281 = vpop.f32.mrb[0].mxu0
        %v4282 = vadd.f32 %v3039, %v4281
        %4283 = vmatprep.mubr.bf16.mxu0 0
        %4284 = vmatmul.mubr.bf16.gmra.mrb[0].mxu0 %v3395
        %v4285 = vpop.f32.mrb[0].mxu0
        %v4286 = vadd.f32 %v3035, %v4285
        %v4287 = vpop.f32.mrb[0].mxu0
        %v4288 = vadd.f32 %v3039, %v4287
        %v4289 = vpop.f32.mrb[0].mxu0
        %v4290 = vadd.f32 %v3035, %v4289
        %v4291 = vpop.f32.mrb[0].mxu0
        %v4292 = vadd.f32 %v3039, %v4291
        %4293 = vmatprep.mubr.bf16.mxu0 0
        %4294 = vmatmul.mubr.bf16.gmra.mrb[0].mxu0 %v3398
        %v4295 = vpop.f32.mrb[0].mxu0
        %v4296 = vadd.f32 %v3035, %v4295
        %v4297 = vpop.f32.mrb[0].mxu0
        %v4298 = vadd.f32 %v3039, %v4297
        %v4299 = vpop.f32.mrb[0].mxu0
        %v4300 = vadd.f32 %v3035, %v4299
        %v4301 = vpop.f32.mrb[0].mxu0
        %v4302 = vadd.f32 %v3039, %v4301
        %4303 = vdwg.mxu0
        %v4304 = vpack.c.bf16 %v3439, %v3435
        %v4305 = vpack.c.bf16 %v3441, %v3437
        %v4306 = vpack.c.bf16 %v3552, %v3548
        %v4307 = vpack.c.bf16 %v3554, %v3550
        %v4308 = vpack.c.bf16 %v3665, %v3661
        %v4309 = vpack.c.bf16 %v3667, %v3663
        %v4310 = vpack.c.bf16 %v3778, %v3774
        %v4311 = vpack.c.bf16 %v3780, %v3776
        %v4312 = vpack.c.bf16 %v3891, %v3887
        %v4313 = vpack.c.bf16 %v3893, %v3889
        %v4314 = vpack.c.bf16 %v4004, %v4000
        %v4315 = vpack.c.bf16 %v4006, %v4002
        %v4316 = vpack.c.bf16 %v4117, %v4113
        %v4317 = vpack.c.bf16 %v4119, %v4115
        %v4318 = vpack.c.bf16 %v4230, %v4226
        %v4319 = vpack.c.bf16 %v4232, %v4228
        %v4320 = vpack.c.bf16 %v3449, %v3445
        %v4321 = vpack.c.bf16 %v3451, %v3447
        %v4322 = vpack.c.bf16 %v3562, %v3558
        %v4323 = vpack.c.bf16 %v3564, %v3560
        %v4324 = vpack.c.bf16 %v3675, %v3671
        %v4325 = vpack.c.bf16 %v3677, %v3673
        %v4326 = vpack.c.bf16 %v3788, %v3784
        %v4327 = vpack.c.bf16 %v3790, %v3786
        %v4328 = vpack.c.bf16 %v3901, %v3897
        %v4329 = vpack.c.bf16 %v3903, %v3899
        %v4330 = vpack.c.bf16 %v4014, %v4010
        %v4331 = vpack.c.bf16 %v4016, %v4012
        %v4332 = vpack.c.bf16 %v4127, %v4123
        %v4333 = vpack.c.bf16 %v4129, %v4125
        %v4334 = vpack.c.bf16 %v4240, %v4236
        %v4335 = vpack.c.bf16 %v4242, %v4238
        %v4336 = vpack.c.bf16 %v3459, %v3455
        %v4337 = vpack.c.bf16 %v3461, %v3457
        %v4338 = vpack.c.bf16 %v3572, %v3568
        %v4339 = vpack.c.bf16 %v3574, %v3570
        %v4340 = vpack.c.bf16 %v3685, %v3681
        %v4341 = vpack.c.bf16 %v3687, %v3683
        %v4342 = vpack.c.bf16 %v3798, %v3794
        %v4343 = vpack.c.bf16 %v3800, %v3796
        %v4344 = vpack.c.bf16 %v3911, %v3907
        %v4345 = vpack.c.bf16 %v3913, %v3909
        %v4346 = vpack.c.bf16 %v4024, %v4020
        %v4347 = vpack.c.bf16 %v4026, %v4022
        %v4348 = vpack.c.bf16 %v4137, %v4133
        %v4349 = vpack.c.bf16 %v4139, %v4135
        %v4350 = vpack.c.bf16 %v4250, %v4246
        %v4351 = vpack.c.bf16 %v4252, %v4248
        %v4352 = vpack.c.bf16 %v3469, %v3465
        %v4353 = vpack.c.bf16 %v3471, %v3467
        %v4354 = vpack.c.bf16 %v3582, %v3578
        %v4355 = vpack.c.bf16 %v3584, %v3580
        %v4356 = vpack.c.bf16 %v3695, %v3691
        %v4357 = vpack.c.bf16 %v3697, %v3693
        %v4358 = vpack.c.bf16 %v3808, %v3804
        %v4359 = vpack.c.bf16 %v3810, %v3806
        %v4360 = vpack.c.bf16 %v3921, %v3917
        %v4361 = vpack.c.bf16 %v3923, %v3919
        %v4362 = vpack.c.bf16 %v4034, %v4030
        %v4363 = vpack.c.bf16 %v4036, %v4032
        %v4364 = vpack.c.bf16 %v4147, %v4143
        %v4365 = vpack.c.bf16 %v4149, %v4145
        %v4366 = vpack.c.bf16 %v4260, %v4256
        %v4367 = vpack.c.bf16 %v4262, %v4258
        %v4368 = vpack.c.bf16 %v3479, %v3475
        %v4369 = vpack.c.bf16 %v3481, %v3477
        %v4370 = vpack.c.bf16 %v3592, %v3588
        %v4371 = vpack.c.bf16 %v3594, %v3590
        %v4372 = vpack.c.bf16 %v3705, %v3701
        %v4373 = vpack.c.bf16 %v3707, %v3703
        %v4374 = vpack.c.bf16 %v3818, %v3814
        %v4375 = vpack.c.bf16 %v3820, %v3816
        %v4376 = vpack.c.bf16 %v3931, %v3927
        %v4377 = vpack.c.bf16 %v3933, %v3929
        %v4378 = vpack.c.bf16 %v4044, %v4040
        %v4379 = vpack.c.bf16 %v4046, %v4042
        %v4380 = vpack.c.bf16 %v4157, %v4153
        %v4381 = vpack.c.bf16 %v4159, %v4155
        %v4382 = vpack.c.bf16 %v4270, %v4266
        %v4383 = vpack.c.bf16 %v4272, %v4268
        %v4384 = vpack.c.bf16 %v3489, %v3485
        %v4385 = vpack.c.bf16 %v3491, %v3487
        %v4386 = vpack.c.bf16 %v3602, %v3598
        %v4387 = vpack.c.bf16 %v3604, %v3600
        %v4388 = vpack.c.bf16 %v3715, %v3711
        %v4389 = vpack.c.bf16 %v3717, %v3713
        %v4390 = vpack.c.bf16 %v3828, %v3824
        %v4391 = vpack.c.bf16 %v3830, %v3826
        %v4392 = vpack.c.bf16 %v3941, %v3937
        %v4393 = vpack.c.bf16 %v3943, %v3939
        %v4394 = vpack.c.bf16 %v4054, %v4050
        %v4395 = vpack.c.bf16 %v4056, %v4052
        %v4396 = vpack.c.bf16 %v4167, %v4163
        %v4397 = vpack.c.bf16 %v4169, %v4165
        %v4398 = vpack.c.bf16 %v4280, %v4276
        %v4399 = vpack.c.bf16 %v4282, %v4278
        %v4400 = vpack.c.bf16 %v3499, %v3495
        %v4401 = vpack.c.bf16 %v3501, %v3497
        %v4402 = vpack.c.bf16 %v3612, %v3608
        %v4403 = vpack.c.bf16 %v3614, %v3610
        %v4404 = vpack.c.bf16 %v3725, %v3721
        %v4405 = vpack.c.bf16 %v3727, %v3723
        %v4406 = vpack.c.bf16 %v3838, %v3834
        %v4407 = vpack.c.bf16 %v3840, %v3836
        %v4408 = vpack.c.bf16 %v3951, %v3947
        %v4409 = vpack.c.bf16 %v3953, %v3949
        %v4410 = vpack.c.bf16 %v4064, %v4060
        %v4411 = vpack.c.bf16 %v4066, %v4062
        %v4412 = vpack.c.bf16 %v4177, %v4173
        %v4413 = vpack.c.bf16 %v4179, %v4175
        %v4414 = vpack.c.bf16 %v4290, %v4286
        %v4415 = vpack.c.bf16 %v4292, %v4288
        %v4416 = vpack.c.bf16 %v3509, %v3505
        %v4417 = vpack.c.bf16 %v3511, %v3507
        %v4418 = vpack.c.bf16 %v3622, %v3618
        %v4419 = vpack.c.bf16 %v3624, %v3620
        %v4420 = vpack.c.bf16 %v3735, %v3731
        %v4421 = vpack.c.bf16 %v3737, %v3733
        %v4422 = vpack.c.bf16 %v3848, %v3844
        %v4423 = vpack.c.bf16 %v3850, %v3846
        %v4424 = vpack.c.bf16 %v3961, %v3957
        %v4425 = vpack.c.bf16 %v3963, %v3959
        %v4426 = vpack.c.bf16 %v4074, %v4070
        %v4427 = vpack.c.bf16 %v4076, %v4072
        %v4428 = vpack.c.bf16 %v4187, %v4183
        %v4429 = vpack.c.bf16 %v4189, %v4185
        %v4430 = vpack.c.bf16 %v4300, %v4296
        %v4431 = vpack.c.bf16 %v4302, %v4298
        %v4432 = vmax.bf16 %v4304, 0
        %v4433 = vmax.bf16 %v4305, 0
        %v4434 = vmax.bf16 %v4306, 0
        %v4435 = vmax.bf16 %v4307, 0
        %v4436 = vmax.bf16 %v4308, 0
        %v4437 = vmax.bf16 %v4309, 0
        %v4438 = vmax.bf16 %v4310, 0
        %v4439 = vmax.bf16 %v4311, 0
        %v4440 = vmax.bf16 %v4312, 0
        %v4441 = vmax.bf16 %v4313, 0
        %v4442 = vmax.bf16 %v4314, 0
        %v4443 = vmax.bf16 %v4315, 0
        %v4444 = vmax.bf16 %v4316, 0
        %v4445 = vmax.bf16 %v4317, 0
        %v4446 = vmax.bf16 %v4318, 0
        %v4447 = vmax.bf16 %v4319, 0
        %v4448 = vmax.bf16 %v4320, 0
        %v4449 = vmax.bf16 %v4321, 0
        %v4450 = vmax.bf16 %v4322, 0
        %v4451 = vmax.bf16 %v4323, 0
        %v4452 = vmax.bf16 %v4324, 0
        %v4453 = vmax.bf16 %v4325, 0
        %v4454 = vmax.bf16 %v4326, 0
        %v4455 = vmax.bf16 %v4327, 0
        %v4456 = vmax.bf16 %v4328, 0
        %v4457 = vmax.bf16 %v4329, 0
        %v4458 = vmax.bf16 %v4330, 0
        %v4459 = vmax.bf16 %v4331, 0
        %v4460 = vmax.bf16 %v4332, 0
        %v4461 = vmax.bf16 %v4333, 0
        %v4462 = vmax.bf16 %v4334, 0
        %v4463 = vmax.bf16 %v4335, 0
        %v4464 = vmax.bf16 %v4336, 0
        %v4465 = vmax.bf16 %v4337, 0
        %v4466 = vmax.bf16 %v4338, 0
        %v4467 = vmax.bf16 %v4339, 0
        %v4468 = vmax.bf16 %v4340, 0
        %v4469 = vmax.bf16 %v4341, 0
        %v4470 = vmax.bf16 %v4342, 0
        %v4471 = vmax.bf16 %v4343, 0
        %v4472 = vmax.bf16 %v4344, 0
        %v4473 = vmax.bf16 %v4345, 0
        %v4474 = vmax.bf16 %v4346, 0
        %v4475 = vmax.bf16 %v4347, 0
        %v4476 = vmax.bf16 %v4348, 0
        %v4477 = vmax.bf16 %v4349, 0
        %v4478 = vmax.bf16 %v4350, 0
        %v4479 = vmax.bf16 %v4351, 0
        %v4480 = vmax.bf16 %v4352, 0
        %v4481 = vmax.bf16 %v4353, 0
        %v4482 = vmax.bf16 %v4354, 0
        %v4483 = vmax.bf16 %v4355, 0
        %v4484 = vmax.bf16 %v4356, 0
        %v4485 = vmax.bf16 %v4357, 0
        %v4486 = vmax.bf16 %v4358, 0
        %v4487 = vmax.bf16 %v4359, 0
        %v4488 = vmax.bf16 %v4360, 0
        %v4489 = vmax.bf16 %v4361, 0
        %v4490 = vmax.bf16 %v4362, 0
        %v4491 = vmax.bf16 %v4363, 0
        %v4492 = vmax.bf16 %v4364, 0
        %v4493 = vmax.bf16 %v4365, 0
        %v4494 = vmax.bf16 %v4366, 0
        %v4495 = vmax.bf16 %v4367, 0
        %v4496 = vmax.bf16 %v4368, 0
        %v4497 = vmax.bf16 %v4369, 0
        %v4498 = vmax.bf16 %v4370, 0
        %v4499 = vmax.bf16 %v4371, 0
        %v4500 = vmax.bf16 %v4372, 0
        %v4501 = vmax.bf16 %v4373, 0
        %v4502 = vmax.bf16 %v4374, 0
        %v4503 = vmax.bf16 %v4375, 0
        %v4504 = vmax.bf16 %v4376, 0
        %v4505 = vmax.bf16 %v4377, 0
        %v4506 = vmax.bf16 %v4378, 0
        %v4507 = vmax.bf16 %v4379, 0
        %v4508 = vmax.bf16 %v4380, 0
        %v4509 = vmax.bf16 %v4381, 0
        %v4510 = vmax.bf16 %v4382, 0
        %v4511 = vmax.bf16 %v4383, 0
        %v4512 = vmax.bf16 %v4384, 0
        %v4513 = vmax.bf16 %v4385, 0
        %v4514 = vmax.bf16 %v4386, 0
        %v4515 = vmax.bf16 %v4387, 0
        %v4516 = vmax.bf16 %v4388, 0
        %v4517 = vmax.bf16 %v4389, 0
        %v4518 = vmax.bf16 %v4390, 0
        %v4519 = vmax.bf16 %v4391, 0
        %v4520 = vmax.bf16 %v4392, 0
        %v4521 = vmax.bf16 %v4393, 0
        %v4522 = vmax.bf16 %v4394, 0
        %v4523 = vmax.bf16 %v4395, 0
        %v4524 = vmax.bf16 %v4396, 0
        %v4525 = vmax.bf16 %v4397, 0
        %v4526 = vmax.bf16 %v4398, 0
        %v4527 = vmax.bf16 %v4399, 0
        %v4528 = vmax.bf16 %v4400, 0
        %v4529 = vmax.bf16 %v4401, 0
        %v4530 = vmax.bf16 %v4402, 0
        %v4531 = vmax.bf16 %v4403, 0
        %v4532 = vmax.bf16 %v4404, 0
        %v4533 = vmax.bf16 %v4405, 0
        %v4534 = vmax.bf16 %v4406, 0
        %v4535 = vmax.bf16 %v4407, 0
        %v4536 = vmax.bf16 %v4408, 0
        %v4537 = vmax.bf16 %v4409, 0
        %v4538 = vmax.bf16 %v4410, 0
        %v4539 = vmax.bf16 %v4411, 0
        %v4540 = vmax.bf16 %v4412, 0
        %v4541 = vmax.bf16 %v4413, 0
        %v4542 = vmax.bf16 %v4414, 0
        %v4543 = vmax.bf16 %v4415, 0
        %v4544 = vmax.bf16 %v4416, 0
        %v4545 = vmax.bf16 %v4417, 0
        %v4546 = vmax.bf16 %v4418, 0
        %v4547 = vmax.bf16 %v4419, 0
        %v4548 = vmax.bf16 %v4420, 0
        %v4549 = vmax.bf16 %v4421, 0
        %v4550 = vmax.bf16 %v4422, 0
        %v4551 = vmax.bf16 %v4423, 0
        %v4552 = vmax.bf16 %v4424, 0
        %v4553 = vmax.bf16 %v4425, 0
        %v4554 = vmax.bf16 %v4426, 0
        %v4555 = vmax.bf16 %v4427, 0
        %v4556 = vmax.bf16 %v4428, 0
        %v4557 = vmax.bf16 %v4429, 0
        %v4558 = vmax.bf16 %v4430, 0
        %v4559 = vmax.bf16 %v4431, 0
        %v4560 = vld [vmem:[%s944] sm:$0xf]
        %v4561 = vld [vmem:[%s944 + $0x4] sm:$0xf]
        %v4562 = vld [vmem:[%s944 + $0x8] sm:$0xf]
        %v4563 = vld [vmem:[%s944 + $0xc] sm:$0xf]
        %v4564 = vld [vmem:[%s944 + $0x10] sm:$0xf]
        %v4565 = vld [vmem:[%s944 + $0x14] sm:$0xf]
        %v4566 = vld [vmem:[%s944 + $0x18] sm:$0xf]
        %v4567 = vld [vmem:[%s944 + $0x1c] sm:$0xf]
        %v4568 = vld [vmem:[%s944 + $0x20] sm:$0xf]
        %v4569 = vld [vmem:[%s944 + $0x24] sm:$0xf]
        %v4570 = vld [vmem:[%s944 + $0x28] sm:$0xf]
        %v4571 = vld [vmem:[%s944 + $0x2c] sm:$0xf]
        %v4572 = vld [vmem:[%s944 + $0x30] sm:$0xf]
        %v4573 = vld [vmem:[%s944 + $0x34] sm:$0xf]
        %v4574 = vld [vmem:[%s944 + $0x38] sm:$0xf]
        %v4575 = vld [vmem:[%s944 + $0x3c] sm:$0xf]
        %v4576 = vld [vmem:[%s944 + $0x40] sm:$0xf]
        %v4577 = vld [vmem:[%s944 + $0x44] sm:$0xf]
        %v4578 = vld [vmem:[%s944 + $0x48] sm:$0xf]
        %v4579 = vld [vmem:[%s944 + $0x4c] sm:$0xf]
        %v4580 = vld [vmem:[%s944 + $0x50] sm:$0xf]
        %v4581 = vld [vmem:[%s944 + $0x54] sm:$0xf]
        %v4582 = vld [vmem:[%s944 + $0x58] sm:$0xf]
        %v4583 = vld [vmem:[%s944 + $0x5c] sm:$0xf]
        %v4584 = vld [vmem:[%s944 + $0x60] sm:$0xf]
        %v4585 = vld [vmem:[%s944 + $0x64] sm:$0xf]
        %v4586 = vld [vmem:[%s944 + $0x68] sm:$0xf]
        %v4587 = vld [vmem:[%s944 + $0x6c] sm:$0xf]
        %v4588 = vld [vmem:[%s944 + $0x70] sm:$0xf]
        %v4589 = vld [vmem:[%s944 + $0x74] sm:$0xf]
        %v4590 = vld [vmem:[%s944 + $0x78] sm:$0xf]
        %v4591 = vld [vmem:[%s944 + $0x7c] sm:$0xf]
        %v4592 = vld [vmem:[%s944 + $0x80] sm:$0xf]
        %v4593 = vld [vmem:[%s944 + $0x84] sm:$0xf]
        %v4594 = vld [vmem:[%s944 + $0x88] sm:$0xf]
        %v4595 = vld [vmem:[%s944 + $0x8c] sm:$0xf]
        %v4596 = vld [vmem:[%s944 + $0x90] sm:$0xf]
        %v4597 = vld [vmem:[%s944 + $0x94] sm:$0xf]
        %v4598 = vld [vmem:[%s944 + $0x98] sm:$0xf]
        %v4599 = vld [vmem:[%s944 + $0x9c] sm:$0xf]
        %v4600 = vld [vmem:[%s944 + $0xa0] sm:$0xf]
        %v4601 = vld [vmem:[%s944 + $0xa4] sm:$0xf]
        %v4602 = vld [vmem:[%s944 + $0xa8] sm:$0xf]
        %v4603 = vld [vmem:[%s944 + $0xac] sm:$0xf]
        %v4604 = vld [vmem:[%s944 + $0xb0] sm:$0xf]
        %v4605 = vld [vmem:[%s944 + $0xb4] sm:$0xf]
        %v4606 = vld [vmem:[%s944 + $0xb8] sm:$0xf]
        %v4607 = vld [vmem:[%s944 + $0xbc] sm:$0xf]
        %v4608 = vld [vmem:[%s944 + $0xc0] sm:$0xf]
        %v4609 = vld [vmem:[%s944 + $0xc4] sm:$0xf]
        %v4610 = vld [vmem:[%s944 + $0xc8] sm:$0xf]
        %v4611 = vld [vmem:[%s944 + $0xcc] sm:$0xf]
        %v4612 = vld [vmem:[%s944 + $0xd0] sm:$0xf]
        %v4613 = vld [vmem:[%s944 + $0xd4] sm:$0xf]
        %v4614 = vld [vmem:[%s944 + $0xd8] sm:$0xf]
        %v4615 = vld [vmem:[%s944 + $0xdc] sm:$0xf]
        %v4616 = vld [vmem:[%s944 + $0xe0] sm:$0xf]
        %v4617 = vld [vmem:[%s944 + $0xe4] sm:$0xf]
        %v4618 = vld [vmem:[%s944 + $0xe8] sm:$0xf]
        %v4619 = vld [vmem:[%s944 + $0xec] sm:$0xf]
        %v4620 = vld [vmem:[%s944 + $0xf0] sm:$0xf]
        %v4621 = vld [vmem:[%s944 + $0xf4] sm:$0xf]
        %v4622 = vld [vmem:[%s944 + $0xf8] sm:$0xf]
        %v4623 = vld [vmem:[%s944 + $0xfc] sm:$0xf]
        %v4624 = vld [vmem:[%s944 + $0x100] sm:$0xf]
        %v4625 = vld [vmem:[%s944 + $0x104] sm:$0xf]
        %v4626 = vld [vmem:[%s944 + $0x108] sm:$0xf]
        %v4627 = vld [vmem:[%s944 + $0x10c] sm:$0xf]
        %v4628 = vld [vmem:[%s944 + $0x110] sm:$0xf]
        %v4629 = vld [vmem:[%s944 + $0x114] sm:$0xf]
        %v4630 = vld [vmem:[%s944 + $0x118] sm:$0xf]
        %v4631 = vld [vmem:[%s944 + $0x11c] sm:$0xf]
        %v4632 = vld [vmem:[%s944 + $0x120] sm:$0xf]
        %v4633 = vld [vmem:[%s944 + $0x124] sm:$0xf]
        %v4634 = vld [vmem:[%s944 + $0x128] sm:$0xf]
        %v4635 = vld [vmem:[%s944 + $0x12c] sm:$0xf]
        %v4636 = vld [vmem:[%s944 + $0x130] sm:$0xf]
        %v4637 = vld [vmem:[%s944 + $0x134] sm:$0xf]
        %v4638 = vld [vmem:[%s944 + $0x138] sm:$0xf]
        %v4639 = vld [vmem:[%s944 + $0x13c] sm:$0xf]
        %v4640 = vld [vmem:[%s944 + $0x140] sm:$0xf]
        %v4641 = vld [vmem:[%s944 + $0x144] sm:$0xf]
        %v4642 = vld [vmem:[%s944 + $0x148] sm:$0xf]
        %v4643 = vld [vmem:[%s944 + $0x14c] sm:$0xf]
        %v4644 = vld [vmem:[%s944 + $0x150] sm:$0xf]
        %v4645 = vld [vmem:[%s944 + $0x154] sm:$0xf]
        %v4646 = vld [vmem:[%s944 + $0x158] sm:$0xf]
        %v4647 = vld [vmem:[%s944 + $0x15c] sm:$0xf]
        %v4648 = vld [vmem:[%s944 + $0x160] sm:$0xf]
        %v4649 = vld [vmem:[%s944 + $0x164] sm:$0xf]
        %v4650 = vld [vmem:[%s944 + $0x168] sm:$0xf]
        %v4651 = vld [vmem:[%s944 + $0x16c] sm:$0xf]
        %v4652 = vld [vmem:[%s944 + $0x170] sm:$0xf]
        %v4653 = vld [vmem:[%s944 + $0x174] sm:$0xf]
        %v4654 = vld [vmem:[%s944 + $0x178] sm:$0xf]
        %v4655 = vld [vmem:[%s944 + $0x17c] sm:$0xf]
        %v4656 = vld [vmem:[%s944 + $0x180] sm:$0xf]
        %v4657 = vld [vmem:[%s944 + $0x184] sm:$0xf]
        %v4658 = vld [vmem:[%s944 + $0x188] sm:$0xf]
        %v4659 = vld [vmem:[%s944 + $0x18c] sm:$0xf]
        %v4660 = vld [vmem:[%s944 + $0x190] sm:$0xf]
        %v4661 = vld [vmem:[%s944 + $0x194] sm:$0xf]
        %v4662 = vld [vmem:[%s944 + $0x198] sm:$0xf]
        %v4663 = vld [vmem:[%s944 + $0x19c] sm:$0xf]
        %v4664 = vld [vmem:[%s944 + $0x1a0] sm:$0xf]
        %v4665 = vld [vmem:[%s944 + $0x1a4] sm:$0xf]
        %v4666 = vld [vmem:[%s944 + $0x1a8] sm:$0xf]
        %v4667 = vld [vmem:[%s944 + $0x1ac] sm:$0xf]
        %v4668 = vld [vmem:[%s944 + $0x1b0] sm:$0xf]
        %v4669 = vld [vmem:[%s944 + $0x1b4] sm:$0xf]
        %v4670 = vld [vmem:[%s944 + $0x1b8] sm:$0xf]
        %v4671 = vld [vmem:[%s944 + $0x1bc] sm:$0xf]
        %v4672 = vld [vmem:[%s944 + $0x1c0] sm:$0xf]
        %v4673 = vld [vmem:[%s944 + $0x1c4] sm:$0xf]
        %v4674 = vld [vmem:[%s944 + $0x1c8] sm:$0xf]
        %v4675 = vld [vmem:[%s944 + $0x1cc] sm:$0xf]
        %v4676 = vld [vmem:[%s944 + $0x1d0] sm:$0xf]
        %v4677 = vld [vmem:[%s944 + $0x1d4] sm:$0xf]
        %v4678 = vld [vmem:[%s944 + $0x1d8] sm:$0xf]
        %v4679 = vld [vmem:[%s944 + $0x1dc] sm:$0xf]
        %v4680 = vld [vmem:[%s944 + $0x1e0] sm:$0xf]
        %v4681 = vld [vmem:[%s944 + $0x1e4] sm:$0xf]
        %v4682 = vld [vmem:[%s944 + $0x1e8] sm:$0xf]
        %v4683 = vld [vmem:[%s944 + $0x1ec] sm:$0xf]
        %v4684 = vld [vmem:[%s944 + $0x1f0] sm:$0xf]
        %v4685 = vld [vmem:[%s944 + $0x1f4] sm:$0xf]
        %v4686 = vld [vmem:[%s944 + $0x1f8] sm:$0xf]
        %v4687 = vld [vmem:[%s944 + $0x1fc] sm:$0xf]
        %v4688 = vld [vmem:[%s944 + $0x200] sm:$0xf]
        %v4689 = vld [vmem:[%s944 + $0x204] sm:$0xf]
        %v4690 = vld [vmem:[%s944 + $0x208] sm:$0xf]
        %v4691 = vld [vmem:[%s944 + $0x20c] sm:$0xf]
        %v4692 = vld [vmem:[%s944 + $0x210] sm:$0xf]
        %v4693 = vld [vmem:[%s944 + $0x214] sm:$0xf]
        %v4694 = vld [vmem:[%s944 + $0x218] sm:$0xf]
        %v4695 = vld [vmem:[%s944 + $0x21c] sm:$0xf]
        %v4696 = vld [vmem:[%s944 + $0x220] sm:$0xf]
        %v4697 = vld [vmem:[%s944 + $0x224] sm:$0xf]
        %v4698 = vld [vmem:[%s944 + $0x228] sm:$0xf]
        %v4699 = vld [vmem:[%s944 + $0x22c] sm:$0xf]
        %v4700 = vld [vmem:[%s944 + $0x230] sm:$0xf]
        %v4701 = vld [vmem:[%s944 + $0x234] sm:$0xf]
        %v4702 = vld [vmem:[%s944 + $0x238] sm:$0xf]
        %v4703 = vld [vmem:[%s944 + $0x23c] sm:$0xf]
        %v4704 = vld [vmem:[%s944 + $0x240] sm:$0xf]
        %v4705 = vld [vmem:[%s944 + $0x244] sm:$0xf]
        %v4706 = vld [vmem:[%s944 + $0x248] sm:$0xf]
        %v4707 = vld [vmem:[%s944 + $0x24c] sm:$0xf]
        %v4708 = vld [vmem:[%s944 + $0x250] sm:$0xf]
        %v4709 = vld [vmem:[%s944 + $0x254] sm:$0xf]
        %v4710 = vld [vmem:[%s944 + $0x258] sm:$0xf]
        %v4711 = vld [vmem:[%s944 + $0x25c] sm:$0xf]
        %v4712 = vld [vmem:[%s944 + $0x260] sm:$0xf]
        %v4713 = vld [vmem:[%s944 + $0x264] sm:$0xf]
        %v4714 = vld [vmem:[%s944 + $0x268] sm:$0xf]
        %v4715 = vld [vmem:[%s944 + $0x26c] sm:$0xf]
        %v4716 = vld [vmem:[%s944 + $0x270] sm:$0xf]
        %v4717 = vld [vmem:[%s944 + $0x274] sm:$0xf]
        %v4718 = vld [vmem:[%s944 + $0x278] sm:$0xf]
        %v4719 = vld [vmem:[%s944 + $0x27c] sm:$0xf]
        %v4720 = vld [vmem:[%s944 + $0x280] sm:$0xf]
        %v4721 = vld [vmem:[%s944 + $0x284] sm:$0xf]
        %v4722 = vld [vmem:[%s944 + $0x288] sm:$0xf]
        %v4723 = vld [vmem:[%s944 + $0x28c] sm:$0xf]
        %v4724 = vld [vmem:[%s944 + $0x290] sm:$0xf]
        %v4725 = vld [vmem:[%s944 + $0x294] sm:$0xf]
        %v4726 = vld [vmem:[%s944 + $0x298] sm:$0xf]
        %v4727 = vld [vmem:[%s944 + $0x29c] sm:$0xf]
        %v4728 = vld [vmem:[%s944 + $0x2a0] sm:$0xf]
        %v4729 = vld [vmem:[%s944 + $0x2a4] sm:$0xf]
        %v4730 = vld [vmem:[%s944 + $0x2a8] sm:$0xf]
        %v4731 = vld [vmem:[%s944 + $0x2ac] sm:$0xf]
        %v4732 = vld [vmem:[%s944 + $0x2b0] sm:$0xf]
        %v4733 = vld [vmem:[%s944 + $0x2b4] sm:$0xf]
        %v4734 = vld [vmem:[%s944 + $0x2b8] sm:$0xf]
        %v4735 = vld [vmem:[%s944 + $0x2bc] sm:$0xf]
        %v4736 = vld [vmem:[%s944 + $0x2c0] sm:$0xf]
        %v4737 = vld [vmem:[%s944 + $0x2c4] sm:$0xf]
        %v4738 = vld [vmem:[%s944 + $0x2c8] sm:$0xf]
        %v4739 = vld [vmem:[%s944 + $0x2cc] sm:$0xf]
        %v4740 = vld [vmem:[%s944 + $0x2d0] sm:$0xf]
        %v4741 = vld [vmem:[%s944 + $0x2d4] sm:$0xf]
        %v4742 = vld [vmem:[%s944 + $0x2d8] sm:$0xf]
        %v4743 = vld [vmem:[%s944 + $0x2dc] sm:$0xf]
        %v4744 = vld [vmem:[%s944 + $0x2e0] sm:$0xf]
        %v4745 = vld [vmem:[%s944 + $0x2e4] sm:$0xf]
        %v4746 = vld [vmem:[%s944 + $0x2e8] sm:$0xf]
        %v4747 = vld [vmem:[%s944 + $0x2ec] sm:$0xf]
        %v4748 = vld [vmem:[%s944 + $0x2f0] sm:$0xf]
        %v4749 = vld [vmem:[%s944 + $0x2f4] sm:$0xf]
        %v4750 = vld [vmem:[%s944 + $0x2f8] sm:$0xf]
        %v4751 = vld [vmem:[%s944 + $0x2fc] sm:$0xf]
        %v4752 = vld [vmem:[%s944 + $0x300] sm:$0xf]
        %v4753 = vld [vmem:[%s944 + $0x304] sm:$0xf]
        %v4754 = vld [vmem:[%s944 + $0x308] sm:$0xf]
        %v4755 = vld [vmem:[%s944 + $0x30c] sm:$0xf]
        %v4756 = vld [vmem:[%s944 + $0x310] sm:$0xf]
        %v4757 = vld [vmem:[%s944 + $0x314] sm:$0xf]
        %v4758 = vld [vmem:[%s944 + $0x318] sm:$0xf]
        %v4759 = vld [vmem:[%s944 + $0x31c] sm:$0xf]
        %v4760 = vld [vmem:[%s944 + $0x320] sm:$0xf]
        %v4761 = vld [vmem:[%s944 + $0x324] sm:$0xf]
        %v4762 = vld [vmem:[%s944 + $0x328] sm:$0xf]
        %v4763 = vld [vmem:[%s944 + $0x32c] sm:$0xf]
        %v4764 = vld [vmem:[%s944 + $0x330] sm:$0xf]
        %v4765 = vld [vmem:[%s944 + $0x334] sm:$0xf]
        %v4766 = vld [vmem:[%s944 + $0x338] sm:$0xf]
        %v4767 = vld [vmem:[%s944 + $0x33c] sm:$0xf]
        %v4768 = vld [vmem:[%s944 + $0x340] sm:$0xf]
        %v4769 = vld [vmem:[%s944 + $0x344] sm:$0xf]
        %v4770 = vld [vmem:[%s944 + $0x348] sm:$0xf]
        %v4771 = vld [vmem:[%s944 + $0x34c] sm:$0xf]
        %v4772 = vld [vmem:[%s944 + $0x350] sm:$0xf]
        %v4773 = vld [vmem:[%s944 + $0x354] sm:$0xf]
        %v4774 = vld [vmem:[%s944 + $0x358] sm:$0xf]
        %v4775 = vld [vmem:[%s944 + $0x35c] sm:$0xf]
        %v4776 = vld [vmem:[%s944 + $0x360] sm:$0xf]
        %v4777 = vld [vmem:[%s944 + $0x364] sm:$0xf]
        %v4778 = vld [vmem:[%s944 + $0x368] sm:$0xf]
        %v4779 = vld [vmem:[%s944 + $0x36c] sm:$0xf]
        %v4780 = vld [vmem:[%s944 + $0x370] sm:$0xf]
        %v4781 = vld [vmem:[%s944 + $0x374] sm:$0xf]
        %v4782 = vld [vmem:[%s944 + $0x378] sm:$0xf]
        %v4783 = vld [vmem:[%s944 + $0x37c] sm:$0xf]
        %v4784 = vld [vmem:[%s944 + $0x380] sm:$0xf]
        %v4785 = vld [vmem:[%s944 + $0x384] sm:$0xf]
        %v4786 = vld [vmem:[%s944 + $0x388] sm:$0xf]
        %v4787 = vld [vmem:[%s944 + $0x38c] sm:$0xf]
        %v4788 = vld [vmem:[%s944 + $0x390] sm:$0xf]
        %v4789 = vld [vmem:[%s944 + $0x394] sm:$0xf]
        %v4790 = vld [vmem:[%s944 + $0x398] sm:$0xf]
        %v4791 = vld [vmem:[%s944 + $0x39c] sm:$0xf]
        %v4792 = vld [vmem:[%s944 + $0x3a0] sm:$0xf]
        %v4793 = vld [vmem:[%s944 + $0x3a4] sm:$0xf]
        %v4794 = vld [vmem:[%s944 + $0x3a8] sm:$0xf]
        %v4795 = vld [vmem:[%s944 + $0x3ac] sm:$0xf]
        %v4796 = vld [vmem:[%s944 + $0x3b0] sm:$0xf]
        %v4797 = vld [vmem:[%s944 + $0x3b4] sm:$0xf]
        %v4798 = vld [vmem:[%s944 + $0x3b8] sm:$0xf]
        %v4799 = vld [vmem:[%s944 + $0x3bc] sm:$0xf]
        %v4800 = vld [vmem:[%s944 + $0x3c0] sm:$0xf]
        %v4801 = vld [vmem:[%s944 + $0x3c4] sm:$0xf]
        %v4802 = vld [vmem:[%s944 + $0x3c8] sm:$0xf]
        %v4803 = vld [vmem:[%s944 + $0x3cc] sm:$0xf]
        %v4804 = vld [vmem:[%s944 + $0x3d0] sm:$0xf]
        %v4805 = vld [vmem:[%s944 + $0x3d4] sm:$0xf]
        %v4806 = vld [vmem:[%s944 + $0x3d8] sm:$0xf]
        %v4807 = vld [vmem:[%s944 + $0x3dc] sm:$0xf]
        %v4808 = vld [vmem:[%s944 + $0x3e0] sm:$0xf]
        %v4809 = vld [vmem:[%s944 + $0x3e4] sm:$0xf]
        %v4810 = vld [vmem:[%s944 + $0x3e8] sm:$0xf]
        %v4811 = vld [vmem:[%s944 + $0x3ec] sm:$0xf]
        %v4812 = vld [vmem:[%s944 + $0x3f0] sm:$0xf]
        %v4813 = vld [vmem:[%s944 + $0x3f4] sm:$0xf]
        %v4814 = vld [vmem:[%s944 + $0x3f8] sm:$0xf]
        %v4815 = vld [vmem:[%s944 + $0x3fc] sm:$0xf]
        %v4816 = vld [vmem:[%s947] sm:$0x1]
        %v4818 = vlaneseq
        %v4819 = vshrl.u32 %v4818, 7
        %v4820 = vsub.s32 0, %v4819
        %v4821 = vrot.slane %v4816, %v4820
        %v5079 = vunpack.c.l.b16 %v4560
        %v5080 = vunpack.c.l.b16 %v4561
        %v5081 = vunpack.c.l.b16 %v4562
        %v5082 = vunpack.c.l.b16 %v4563
        %v5083 = vunpack.c.l.b16 %v4564
        %v5084 = vunpack.c.l.b16 %v4565
        %v5085 = vunpack.c.l.b16 %v4566
        %v5086 = vunpack.c.l.b16 %v4567
        %v5087 = vunpack.c.l.b16 %v4568
        %v5088 = vunpack.c.l.b16 %v4569
        %v5089 = vunpack.c.l.b16 %v4570
        %v5090 = vunpack.c.l.b16 %v4571
        %v5091 = vunpack.c.l.b16 %v4572
        %v5092 = vunpack.c.l.b16 %v4573
        %v5093 = vunpack.c.l.b16 %v4574
        %v5094 = vunpack.c.l.b16 %v4575
        %v5095 = vunpack.c.l.b16 %v4576
        %v5096 = vunpack.c.l.b16 %v4577
        %v5097 = vunpack.c.l.b16 %v4578
        %v5098 = vunpack.c.l.b16 %v4579
        %v5099 = vunpack.c.l.b16 %v4580
        %v5100 = vunpack.c.l.b16 %v4581
        %v5101 = vunpack.c.l.b16 %v4582
        %v5102 = vunpack.c.l.b16 %v4583
        %v5103 = vunpack.c.l.b16 %v4584
        %v5104 = vunpack.c.l.b16 %v4585
        %v5105 = vunpack.c.l.b16 %v4586
        %v5106 = vunpack.c.l.b16 %v4587
        %v5107 = vunpack.c.l.b16 %v4588
        %v5108 = vunpack.c.l.b16 %v4589
        %v5109 = vunpack.c.l.b16 %v4590
        %v5110 = vunpack.c.l.b16 %v4591
        %v5111 = vunpack.c.l.b16 %v4592
        %v5112 = vunpack.c.l.b16 %v4593
        %v5113 = vunpack.c.l.b16 %v4594
        %v5114 = vunpack.c.l.b16 %v4595
        %v5115 = vunpack.c.l.b16 %v4596
        %v5116 = vunpack.c.l.b16 %v4597
        %v5117 = vunpack.c.l.b16 %v4598
        %v5118 = vunpack.c.l.b16 %v4599
        %v5119 = vunpack.c.l.b16 %v4600
        %v5120 = vunpack.c.l.b16 %v4601
        %v5121 = vunpack.c.l.b16 %v4602
        %v5122 = vunpack.c.l.b16 %v4603
        %v5123 = vunpack.c.l.b16 %v4604
        %v5124 = vunpack.c.l.b16 %v4605
        %v5125 = vunpack.c.l.b16 %v4606
        %v5126 = vunpack.c.l.b16 %v4607
        %v5127 = vunpack.c.l.b16 %v4608
        %v5128 = vunpack.c.l.b16 %v4609
        %v5129 = vunpack.c.l.b16 %v4610
        %v5130 = vunpack.c.l.b16 %v4611
        %v5131 = vunpack.c.l.b16 %v4612
        %v5132 = vunpack.c.l.b16 %v4613
        %v5133 = vunpack.c.l.b16 %v4614
        %v5134 = vunpack.c.l.b16 %v4615
        %v5135 = vunpack.c.l.b16 %v4616
        %v5136 = vunpack.c.l.b16 %v4617
        %v5137 = vunpack.c.l.b16 %v4618
        %v5138 = vunpack.c.l.b16 %v4619
        %v5139 = vunpack.c.l.b16 %v4620
        %v5140 = vunpack.c.l.b16 %v4621
        %v5141 = vunpack.c.l.b16 %v4622
        %v5142 = vunpack.c.l.b16 %v4623
        %v5143 = vunpack.c.l.b16 %v4624
        %v5144 = vunpack.c.l.b16 %v4625
        %v5145 = vunpack.c.l.b16 %v4626
        %v5146 = vunpack.c.l.b16 %v4627
        %v5147 = vunpack.c.l.b16 %v4628
        %v5148 = vunpack.c.l.b16 %v4629
        %v5149 = vunpack.c.l.b16 %v4630
        %v5150 = vunpack.c.l.b16 %v4631
        %v5151 = vunpack.c.l.b16 %v4632
        %v5152 = vunpack.c.l.b16 %v4633
        %v5153 = vunpack.c.l.b16 %v4634
        %v5154 = vunpack.c.l.b16 %v4635
        %v5155 = vunpack.c.l.b16 %v4636
        %v5156 = vunpack.c.l.b16 %v4637
        %v5157 = vunpack.c.l.b16 %v4638
        %v5158 = vunpack.c.l.b16 %v4639
        %v5159 = vunpack.c.l.b16 %v4640
        %v5160 = vunpack.c.l.b16 %v4641
        %v5161 = vunpack.c.l.b16 %v4642
        %v5162 = vunpack.c.l.b16 %v4643
        %v5163 = vunpack.c.l.b16 %v4644
        %v5164 = vunpack.c.l.b16 %v4645
        %v5165 = vunpack.c.l.b16 %v4646
        %v5166 = vunpack.c.l.b16 %v4647
        %v5167 = vunpack.c.l.b16 %v4648
        %v5168 = vunpack.c.l.b16 %v4649
        %v5169 = vunpack.c.l.b16 %v4650
        %v5170 = vunpack.c.l.b16 %v4651
        %v5171 = vunpack.c.l.b16 %v4652
        %v5172 = vunpack.c.l.b16 %v4653
        %v5173 = vunpack.c.l.b16 %v4654
        %v5174 = vunpack.c.l.b16 %v4655
        %v5175 = vunpack.c.l.b16 %v4656
        %v5176 = vunpack.c.l.b16 %v4657
        %v5177 = vunpack.c.l.b16 %v4658
        %v5178 = vunpack.c.l.b16 %v4659
        %v5179 = vunpack.c.l.b16 %v4660
        %v5180 = vunpack.c.l.b16 %v4661
        %v5181 = vunpack.c.l.b16 %v4662
        %v5182 = vunpack.c.l.b16 %v4663
        %v5183 = vunpack.c.l.b16 %v4664
        %v5184 = vunpack.c.l.b16 %v4665
        %v5185 = vunpack.c.l.b16 %v4666
        %v5186 = vunpack.c.l.b16 %v4667
        %v5187 = vunpack.c.l.b16 %v4668
        %v5188 = vunpack.c.l.b16 %v4669
        %v5189 = vunpack.c.l.b16 %v4670
        %v5190 = vunpack.c.l.b16 %v4671
        %v5191 = vunpack.c.l.b16 %v4672
        %v5192 = vunpack.c.l.b16 %v4673
        %v5193 = vunpack.c.l.b16 %v4674
        %v5194 = vunpack.c.l.b16 %v4675
        %v5195 = vunpack.c.l.b16 %v4676
        %v5196 = vunpack.c.l.b16 %v4677
        %v5197 = vunpack.c.l.b16 %v4678
        %v5198 = vunpack.c.l.b16 %v4679
        %v5199 = vunpack.c.l.b16 %v4680
        %v5200 = vunpack.c.l.b16 %v4681
        %v5201 = vunpack.c.l.b16 %v4682
        %v5202 = vunpack.c.l.b16 %v4683
        %v5203 = vunpack.c.l.b16 %v4684
        %v5204 = vunpack.c.l.b16 %v4685
        %v5205 = vunpack.c.l.b16 %v4686
        %v5206 = vunpack.c.l.b16 %v4687
        %v5207 = vunpack.c.l.b16 %v4688
        %v5208 = vunpack.c.l.b16 %v4689
        %v5209 = vunpack.c.l.b16 %v4690
        %v5210 = vunpack.c.l.b16 %v4691
        %v5211 = vunpack.c.l.b16 %v4692
        %v5212 = vunpack.c.l.b16 %v4693
        %v5213 = vunpack.c.l.b16 %v4694
        %v5214 = vunpack.c.l.b16 %v4695
        %v5215 = vunpack.c.l.b16 %v4696
        %v5216 = vunpack.c.l.b16 %v4697
        %v5217 = vunpack.c.l.b16 %v4698
        %v5218 = vunpack.c.l.b16 %v4699
        %v5219 = vunpack.c.l.b16 %v4700
        %v5220 = vunpack.c.l.b16 %v4701
        %v5221 = vunpack.c.l.b16 %v4702
        %v5222 = vunpack.c.l.b16 %v4703
        %v5223 = vunpack.c.l.b16 %v4704
        %v5224 = vunpack.c.l.b16 %v4705
        %v5225 = vunpack.c.l.b16 %v4706
        %v5226 = vunpack.c.l.b16 %v4707
        %v5227 = vunpack.c.l.b16 %v4708
        %v5228 = vunpack.c.l.b16 %v4709
        %v5229 = vunpack.c.l.b16 %v4710
        %v5230 = vunpack.c.l.b16 %v4711
        %v5231 = vunpack.c.l.b16 %v4712
        %v5232 = vunpack.c.l.b16 %v4713
        %v5233 = vunpack.c.l.b16 %v4714
        %v5234 = vunpack.c.l.b16 %v4715
        %v5235 = vunpack.c.l.b16 %v4716
        %v5236 = vunpack.c.l.b16 %v4717
        %v5237 = vunpack.c.l.b16 %v4718
        %v5238 = vunpack.c.l.b16 %v4719
        %v5239 = vunpack.c.l.b16 %v4720
        %v5240 = vunpack.c.l.b16 %v4721
        %v5241 = vunpack.c.l.b16 %v4722
        %v5242 = vunpack.c.l.b16 %v4723
        %v5243 = vunpack.c.l.b16 %v4724
        %v5244 = vunpack.c.l.b16 %v4725
        %v5245 = vunpack.c.l.b16 %v4726
        %v5246 = vunpack.c.l.b16 %v4727
        %v5247 = vunpack.c.l.b16 %v4728
        %v5248 = vunpack.c.l.b16 %v4729
        %v5249 = vunpack.c.l.b16 %v4730
        %v5250 = vunpack.c.l.b16 %v4731
        %v5251 = vunpack.c.l.b16 %v4732
        %v5252 = vunpack.c.l.b16 %v4733
        %v5253 = vunpack.c.l.b16 %v4734
        %v5254 = vunpack.c.l.b16 %v4735
        %v5255 = vunpack.c.l.b16 %v4736
        %v5256 = vunpack.c.l.b16 %v4737
        %v5257 = vunpack.c.l.b16 %v4738
        %v5258 = vunpack.c.l.b16 %v4739
        %v5259 = vunpack.c.l.b16 %v4740
        %v5260 = vunpack.c.l.b16 %v4741
        %v5261 = vunpack.c.l.b16 %v4742
        %v5262 = vunpack.c.l.b16 %v4743
        %v5263 = vunpack.c.l.b16 %v4744
        %v5264 = vunpack.c.l.b16 %v4745
        %v5265 = vunpack.c.l.b16 %v4746
        %v5266 = vunpack.c.l.b16 %v4747
        %v5267 = vunpack.c.l.b16 %v4748
        %v5268 = vunpack.c.l.b16 %v4749
        %v5269 = vunpack.c.l.b16 %v4750
        %v5270 = vunpack.c.l.b16 %v4751
        %v5271 = vunpack.c.l.b16 %v4752
        %v5272 = vunpack.c.l.b16 %v4753
        %v5273 = vunpack.c.l.b16 %v4754
        %v5274 = vunpack.c.l.b16 %v4755
        %v5275 = vunpack.c.l.b16 %v4756
        %v5276 = vunpack.c.l.b16 %v4757
        %v5277 = vunpack.c.l.b16 %v4758
        %v5278 = vunpack.c.l.b16 %v4759
        %v5279 = vunpack.c.l.b16 %v4760
        %v5280 = vunpack.c.l.b16 %v4761
        %v5281 = vunpack.c.l.b16 %v4762
        %v5282 = vunpack.c.l.b16 %v4763
        %v5283 = vunpack.c.l.b16 %v4764
        %v5284 = vunpack.c.l.b16 %v4765
        %v5285 = vunpack.c.l.b16 %v4766
        %v5286 = vunpack.c.l.b16 %v4767
        %v5287 = vunpack.c.l.b16 %v4768
        %v5288 = vunpack.c.l.b16 %v4769
        %v5289 = vunpack.c.l.b16 %v4770
        %v5290 = vunpack.c.l.b16 %v4771
        %v5291 = vunpack.c.l.b16 %v4772
        %v5292 = vunpack.c.l.b16 %v4773
        %v5293 = vunpack.c.l.b16 %v4774
        %v5294 = vunpack.c.l.b16 %v4775
        %v5295 = vunpack.c.l.b16 %v4776
        %v5296 = vunpack.c.l.b16 %v4777
        %v5297 = vunpack.c.l.b16 %v4778
        %v5298 = vunpack.c.l.b16 %v4779
        %v5299 = vunpack.c.l.b16 %v4780
        %v5300 = vunpack.c.l.b16 %v4781
        %v5301 = vunpack.c.l.b16 %v4782
        %v5302 = vunpack.c.l.b16 %v4783
        %v5303 = vunpack.c.l.b16 %v4784
        %v5304 = vunpack.c.l.b16 %v4785
        %v5305 = vunpack.c.l.b16 %v4786
        %v5306 = vunpack.c.l.b16 %v4787
        %v5307 = vunpack.c.l.b16 %v4788
        %v5308 = vunpack.c.l.b16 %v4789
        %v5309 = vunpack.c.l.b16 %v4790
        %v5310 = vunpack.c.l.b16 %v4791
        %v5311 = vunpack.c.l.b16 %v4792
        %v5312 = vunpack.c.l.b16 %v4793
        %v5313 = vunpack.c.l.b16 %v4794
        %v5314 = vunpack.c.l.b16 %v4795
        %v5315 = vunpack.c.l.b16 %v4796
        %v5316 = vunpack.c.l.b16 %v4797
        %v5317 = vunpack.c.l.b16 %v4798
        %v5318 = vunpack.c.l.b16 %v4799
        %v5319 = vunpack.c.l.b16 %v4800
        %v5320 = vunpack.c.l.b16 %v4801
        %v5321 = vunpack.c.l.b16 %v4802
        %v5322 = vunpack.c.l.b16 %v4803
        %v5323 = vunpack.c.l.b16 %v4804
        %v5324 = vunpack.c.l.b16 %v4805
        %v5325 = vunpack.c.l.b16 %v4806
        %v5326 = vunpack.c.l.b16 %v4807
        %v5327 = vunpack.c.l.b16 %v4808
        %v5328 = vunpack.c.l.b16 %v4809
        %v5329 = vunpack.c.l.b16 %v4810
        %v5330 = vunpack.c.l.b16 %v4811
        %v5331 = vunpack.c.l.b16 %v4812
        %v5332 = vunpack.c.l.b16 %v4813
        %v5333 = vunpack.c.l.b16 %v4814
        %v5334 = vunpack.c.l.b16 %v4815
        %v5335 = vpack.c.b16 %v5080, %v5079
        %v5336 = vpack.c.b16 %v5082, %v5081
        %v5337 = vpack.c.b16 %v5084, %v5083
        %v5338 = vpack.c.b16 %v5086, %v5085
        %v5339 = vpack.c.b16 %v5088, %v5087
        %v5340 = vpack.c.b16 %v5090, %v5089
        %v5341 = vpack.c.b16 %v5092, %v5091
        %v5342 = vpack.c.b16 %v5094, %v5093
        %v5343 = vpack.c.b16 %v5096, %v5095
        %v5344 = vpack.c.b16 %v5098, %v5097
        %v5345 = vpack.c.b16 %v5100, %v5099
        %v5346 = vpack.c.b16 %v5102, %v5101
        %v5347 = vpack.c.b16 %v5104, %v5103
        %v5348 = vpack.c.b16 %v5106, %v5105
        %v5349 = vpack.c.b16 %v5108, %v5107
        %v5350 = vpack.c.b16 %v5110, %v5109
        %v5351 = vpack.c.b16 %v5112, %v5111
        %v5352 = vpack.c.b16 %v5114, %v5113
        %v5353 = vpack.c.b16 %v5116, %v5115
        %v5354 = vpack.c.b16 %v5118, %v5117
        %v5355 = vpack.c.b16 %v5120, %v5119
        %v5356 = vpack.c.b16 %v5122, %v5121
        %v5357 = vpack.c.b16 %v5124, %v5123
        %v5358 = vpack.c.b16 %v5126, %v5125
        %v5359 = vpack.c.b16 %v5128, %v5127
        %v5360 = vpack.c.b16 %v5130, %v5129
        %v5361 = vpack.c.b16 %v5132, %v5131
        %v5362 = vpack.c.b16 %v5134, %v5133
        %v5363 = vpack.c.b16 %v5136, %v5135
        %v5364 = vpack.c.b16 %v5138, %v5137
        %v5365 = vpack.c.b16 %v5140, %v5139
        %v5366 = vpack.c.b16 %v5142, %v5141
        %v5367 = vpack.c.b16 %v5144, %v5143
        %v5368 = vpack.c.b16 %v5146, %v5145
        %v5369 = vpack.c.b16 %v5148, %v5147
        %v5370 = vpack.c.b16 %v5150, %v5149
        %v5371 = vpack.c.b16 %v5152, %v5151
        %v5372 = vpack.c.b16 %v5154, %v5153
        %v5373 = vpack.c.b16 %v5156, %v5155
        %v5374 = vpack.c.b16 %v5158, %v5157
        %v5375 = vpack.c.b16 %v5160, %v5159
        %v5376 = vpack.c.b16 %v5162, %v5161
        %v5377 = vpack.c.b16 %v5164, %v5163
        %v5378 = vpack.c.b16 %v5166, %v5165
        %v5379 = vpack.c.b16 %v5168, %v5167
        %v5380 = vpack.c.b16 %v5170, %v5169
        %v5381 = vpack.c.b16 %v5172, %v5171
        %v5382 = vpack.c.b16 %v5174, %v5173
        %v5383 = vpack.c.b16 %v5176, %v5175
        %v5384 = vpack.c.b16 %v5178, %v5177
        %v5385 = vpack.c.b16 %v5180, %v5179
        %v5386 = vpack.c.b16 %v5182, %v5181
        %v5387 = vpack.c.b16 %v5184, %v5183
        %v5388 = vpack.c.b16 %v5186, %v5185
        %v5389 = vpack.c.b16 %v5188, %v5187
        %v5390 = vpack.c.b16 %v5190, %v5189
        %v5391 = vpack.c.b16 %v5192, %v5191
        %v5392 = vpack.c.b16 %v5194, %v5193
        %v5393 = vpack.c.b16 %v5196, %v5195
        %v5394 = vpack.c.b16 %v5198, %v5197
        %v5395 = vpack.c.b16 %v5200, %v5199
        %v5396 = vpack.c.b16 %v5202, %v5201
        %v5397 = vpack.c.b16 %v5204, %v5203
        %v5398 = vpack.c.b16 %v5206, %v5205
        %v5399 = vpack.c.b16 %v5208, %v5207
        %v5400 = vpack.c.b16 %v5210, %v5209
        %v5401 = vpack.c.b16 %v5212, %v5211
        %v5402 = vpack.c.b16 %v5214, %v5213
        %v5403 = vpack.c.b16 %v5216, %v5215
        %v5404 = vpack.c.b16 %v5218, %v5217
        %v5405 = vpack.c.b16 %v5220, %v5219
        %v5406 = vpack.c.b16 %v5222, %v5221
        %v5407 = vpack.c.b16 %v5224, %v5223
        %v5408 = vpack.c.b16 %v5226, %v5225
        %v5409 = vpack.c.b16 %v5228, %v5227
        %v5410 = vpack.c.b16 %v5230, %v5229
        %v5411 = vpack.c.b16 %v5232, %v5231
        %v5412 = vpack.c.b16 %v5234, %v5233
        %v5413 = vpack.c.b16 %v5236, %v5235
        %v5414 = vpack.c.b16 %v5238, %v5237
        %v5415 = vpack.c.b16 %v5240, %v5239
        %v5416 = vpack.c.b16 %v5242, %v5241
        %v5417 = vpack.c.b16 %v5244, %v5243
        %v5418 = vpack.c.b16 %v5246, %v5245
        %v5419 = vpack.c.b16 %v5248, %v5247
        %v5420 = vpack.c.b16 %v5250, %v5249
        %v5421 = vpack.c.b16 %v5252, %v5251
        %v5422 = vpack.c.b16 %v5254, %v5253
        %v5423 = vpack.c.b16 %v5256, %v5255
        %v5424 = vpack.c.b16 %v5258, %v5257
        %v5425 = vpack.c.b16 %v5260, %v5259
        %v5426 = vpack.c.b16 %v5262, %v5261
        %v5427 = vpack.c.b16 %v5264, %v5263
        %v5428 = vpack.c.b16 %v5266, %v5265
        %v5429 = vpack.c.b16 %v5268, %v5267
        %v5430 = vpack.c.b16 %v5270, %v5269
        %v5431 = vpack.c.b16 %v5272, %v5271
        %v5432 = vpack.c.b16 %v5274, %v5273
        %v5433 = vpack.c.b16 %v5276, %v5275
        %v5434 = vpack.c.b16 %v5278, %v5277
        %v5435 = vpack.c.b16 %v5280, %v5279
        %v5436 = vpack.c.b16 %v5282, %v5281
        %v5437 = vpack.c.b16 %v5284, %v5283
        %v5438 = vpack.c.b16 %v5286, %v5285
        %v5439 = vpack.c.b16 %v5288, %v5287
        %v5440 = vpack.c.b16 %v5290, %v5289
        %v5441 = vpack.c.b16 %v5292, %v5291
        %v5442 = vpack.c.b16 %v5294, %v5293
        %v5443 = vpack.c.b16 %v5296, %v5295
        %v5444 = vpack.c.b16 %v5298, %v5297
        %v5445 = vpack.c.b16 %v5300, %v5299
        %v5446 = vpack.c.b16 %v5302, %v5301
        %v5447 = vpack.c.b16 %v5304, %v5303
        %v5448 = vpack.c.b16 %v5306, %v5305
        %v5449 = vpack.c.b16 %v5308, %v5307
        %v5450 = vpack.c.b16 %v5310, %v5309
        %v5451 = vpack.c.b16 %v5312, %v5311
        %v5452 = vpack.c.b16 %v5314, %v5313
        %v5453 = vpack.c.b16 %v5316, %v5315
        %v5454 = vpack.c.b16 %v5318, %v5317
        %v5455 = vpack.c.b16 %v5320, %v5319
        %v5456 = vpack.c.b16 %v5322, %v5321
        %v5457 = vpack.c.b16 %v5324, %v5323
        %v5458 = vpack.c.b16 %v5326, %v5325
        %v5459 = vpack.c.b16 %v5328, %v5327
        %v5460 = vpack.c.b16 %v5330, %v5329
        %v5461 = vpack.c.b16 %v5332, %v5331
        %v5462 = vpack.c.b16 %v5334, %v5333
        %5591 = vmatprep.subr.bf16.mxu0 0
        %5592 = vmatpush1.bf16.msra.mxu0 %v5335
        %5593 = vmatprep.subr.bf16.mxu0 0
        %5594 = vmatpush1.bf16.msra.mxu0 %v5336
        %5595 = vmatprep.subr.bf16.mxu0 0
        %5596 = vmatpush1.bf16.msra.mxu0 %v5337
        %5597 = vmatprep.subr.bf16.mxu0 0
        %5598 = vmatpush1.bf16.msra.mxu0 %v5338
        %5599 = vmatprep.subr.bf16.mxu0 0
        %5600 = vmatpush1.bf16.msra.mxu0 %v5339
        %5601 = vmatprep.subr.bf16.mxu0 0
        %5602 = vmatpush1.bf16.msra.mxu0 %v5340
        %5603 = vmatprep.subr.bf16.mxu0 0
        %5604 = vmatpush1.bf16.msra.mxu0 %v5341
        %5605 = vmatprep.subr.bf16.mxu0 0
        %5606 = vmatpush1.bf16.msra.mxu0 %v5342
        %5607 = vmatprep.subr.bf16.mxu0 0
        %5608 = vmatpush1.bf16.msra.mxu0 %v5343
        %5609 = vmatprep.subr.bf16.mxu0 0
        %5610 = vmatpush1.bf16.msra.mxu0 %v5344
        %5611 = vmatprep.subr.bf16.mxu0 0
        %5612 = vmatpush1.bf16.msra.mxu0 %v5345
        %5613 = vmatprep.subr.bf16.mxu0 0
        %5614 = vmatpush1.bf16.msra.mxu0 %v5346
        %5615 = vmatprep.subr.bf16.mxu0 0
        %5616 = vmatpush1.bf16.msra.mxu0 %v5347
        %5617 = vmatprep.subr.bf16.mxu0 0
        %5618 = vmatpush1.bf16.msra.mxu0 %v5348
        %5619 = vmatprep.subr.bf16.mxu0 0
        %5620 = vmatpush1.bf16.msra.mxu0 %v5349
        %5621 = vmatprep.subr.bf16.mxu0 0
        %5622 = vmatpush1.bf16.msra.mxu0 %v5350
        %5623 = vmatprep.mubr.bf16.mxu0 %v4433
        %5624 = vmatmul.mubr.bf16.gmra.mrb[0].mxu0 %v4432
        %v5625 = vpop.f32.mrb[0].mxu0
        %v5626 = vadd.f32 %v4821, %v5625
        %v5627 = vpop.f32.mrb[0].mxu0
        %v5628 = vpop.f32.mrb[0].mxu0
        %v5629 = vadd.f32 %v4821, %v5628
        %v5630 = vpop.f32.mrb[0].mxu0
        %5631 = vmatprep.mubr.bf16.mxu0 %v4449
        %5632 = vmatmul.mubr.bf16.gmra.mrb[0].mxu0 %v4448
        %v5633 = vpop.f32.mrb[0].mxu0
        %v5634 = vadd.f32 %v4821, %v5633
        %v5635 = vpop.f32.mrb[0].mxu0
        %v5636 = vpop.f32.mrb[0].mxu0
        %v5637 = vadd.f32 %v4821, %v5636
        %v5638 = vpop.f32.mrb[0].mxu0
        %5639 = vmatprep.mubr.bf16.mxu0 %v4465
        %5640 = vmatmul.mubr.bf16.gmra.mrb[0].mxu0 %v4464
        %v5641 = vpop.f32.mrb[0].mxu0
        %v5642 = vadd.f32 %v4821, %v5641
        %v5643 = vpop.f32.mrb[0].mxu0
        %v5644 = vpop.f32.mrb[0].mxu0
        %v5645 = vadd.f32 %v4821, %v5644
        %v5646 = vpop.f32.mrb[0].mxu0
        %5647 = vmatprep.mubr.bf16.mxu0 %v4481
        %5648 = vmatmul.mubr.bf16.gmra.mrb[0].mxu0 %v4480
        %v5649 = vpop.f32.mrb[0].mxu0
        %v5650 = vadd.f32 %v4821, %v5649
        %v5651 = vpop.f32.mrb[0].mxu0
        %v5652 = vpop.f32.mrb[0].mxu0
        %v5653 = vadd.f32 %v4821, %v5652
        %v5654 = vpop.f32.mrb[0].mxu0
        %5655 = vmatprep.mubr.bf16.mxu0 %v4497
        %5656 = vmatmul.mubr.bf16.gmra.mrb[0].mxu0 %v4496
        %v5657 = vpop.f32.mrb[0].mxu0
        %v5658 = vadd.f32 %v4821, %v5657
        %v5659 = vpop.f32.mrb[0].mxu0
        %v5660 = vpop.f32.mrb[0].mxu0
        %v5661 = vadd.f32 %v4821, %v5660
        %v5662 = vpop.f32.mrb[0].mxu0
        %5663 = vmatprep.mubr.bf16.mxu0 %v4513
        %5664 = vmatmul.mubr.bf16.gmra.mrb[0].mxu0 %v4512
        %v5665 = vpop.f32.mrb[0].mxu0
        %v5666 = vadd.f32 %v4821, %v5665
        %v5667 = vpop.f32.mrb[0].mxu0
        %v5668 = vpop.f32.mrb[0].mxu0
        %v5669 = vadd.f32 %v4821, %v5668
        %v5670 = vpop.f32.mrb[0].mxu0
        %5671 = vmatprep.mubr.bf16.mxu0 %v4529
        %5672 = vmatmul.mubr.bf16.gmra.mrb[0].mxu0 %v4528
        %v5673 = vpop.f32.mrb[0].mxu0
        %v5674 = vadd.f32 %v4821, %v5673
        %v5675 = vpop.f32.mrb[0].mxu0
        %v5676 = vpop.f32.mrb[0].mxu0
        %v5677 = vadd.f32 %v4821, %v5676
        %v5678 = vpop.f32.mrb[0].mxu0
        %5679 = vmatprep.mubr.bf16.mxu0 %v4545
        %5680 = vmatmul.mubr.bf16.gmra.mrb[0].mxu0 %v4544
        %v5681 = vpop.f32.mrb[0].mxu0
        %v5682 = vadd.f32 %v4821, %v5681
        %v5683 = vpop.f32.mrb[0].mxu0
        %v5684 = vpop.f32.mrb[0].mxu0
        %v5685 = vadd.f32 %v4821, %v5684
        %v5686 = vpop.f32.mrb[0].mxu0
        %5687 = vdwg.mxu0
        %5688 = vmatprep.subr.bf16.mxu0 0
        %5689 = vmatpush1.bf16.msra.mxu0 %v5351
        %5690 = vmatprep.subr.bf16.mxu0 0
        %5691 = vmatpush1.bf16.msra.mxu0 %v5352
        %5692 = vmatprep.subr.bf16.mxu0 0
        %5693 = vmatpush1.bf16.msra.mxu0 %v5353
        %5694 = vmatprep.subr.bf16.mxu0 0
        %5695 = vmatpush1.bf16.msra.mxu0 %v5354
        %5696 = vmatprep.subr.bf16.mxu0 0
        %5697 = vmatpush1.bf16.msra.mxu0 %v5355
        %5698 = vmatprep.subr.bf16.mxu0 0
        %5699 = vmatpush1.bf16.msra.mxu0 %v5356
        %5700 = vmatprep.subr.bf16.mxu0 0
        %5701 = vmatpush1.bf16.msra.mxu0 %v5357
        %5702 = vmatprep.subr.bf16.mxu0 0
        %5703 = vmatpush1.bf16.msra.mxu0 %v5358
        %5704 = vmatprep.subr.bf16.mxu0 0
        %5705 = vmatpush1.bf16.msra.mxu0 %v5359
        %5706 = vmatprep.subr.bf16.mxu0 0
        %5707 = vmatpush1.bf16.msra.mxu0 %v5360
        %5708 = vmatprep.subr.bf16.mxu0 0
        %5709 = vmatpush1.bf16.msra.mxu0 %v5361
        %5710 = vmatprep.subr.bf16.mxu0 0
        %5711 = vmatpush1.bf16.msra.mxu0 %v5362
        %5712 = vmatprep.subr.bf16.mxu0 0
        %5713 = vmatpush1.bf16.msra.mxu0 %v5363
        %5714 = vmatprep.subr.bf16.mxu0 0
        %5715 = vmatpush1.bf16.msra.mxu0 %v5364
        %5716 = vmatprep.subr.bf16.mxu0 0
        %5717 = vmatpush1.bf16.msra.mxu0 %v5365
        %5718 = vmatprep.subr.bf16.mxu0 0
        %5719 = vmatpush1.bf16.msra.mxu0 %v5366
        %5720 = vmatprep.mubr.bf16.mxu0 %v4435
        %5721 = vmatmul.mubr.bf16.gmra.mrb[0].mxu0 %v4434
        %v5722 = vpop.f32.mrb[0].mxu0
        %v5723 = vadd.f32 %v5626, %v5722
        %v5724 = vpop.f32.mrb[0].mxu0
        %v5725 = vpop.f32.mrb[0].mxu0
        %v5726 = vadd.f32 %v5629, %v5725
        %v5727 = vpop.f32.mrb[0].mxu0
        %5728 = vmatprep.mubr.bf16.mxu0 %v4451
        %5729 = vmatmul.mubr.bf16.gmra.mrb[0].mxu0 %v4450
        %v5730 = vpop.f32.mrb[0].mxu0
        %v5731 = vadd.f32 %v5634, %v5730
        %v5732 = vpop.f32.mrb[0].mxu0
        %v5733 = vpop.f32.mrb[0].mxu0
        %v5734 = vadd.f32 %v5637, %v5733
        %v5735 = vpop.f32.mrb[0].mxu0
        %5736 = vmatprep.mubr.bf16.mxu0 %v4467
        %5737 = vmatmul.mubr.bf16.gmra.mrb[0].mxu0 %v4466
        %v5738 = vpop.f32.mrb[0].mxu0
        %v5739 = vadd.f32 %v5642, %v5738
        %v5740 = vpop.f32.mrb[0].mxu0
        %v5741 = vpop.f32.mrb[0].mxu0
        %v5742 = vadd.f32 %v5645, %v5741
        %v5743 = vpop.f32.mrb[0].mxu0
        %5744 = vmatprep.mubr.bf16.mxu0 %v4483
        %5745 = vmatmul.mubr.bf16.gmra.mrb[0].mxu0 %v4482
        %v5746 = vpop.f32.mrb[0].mxu0
        %v5747 = vadd.f32 %v5650, %v5746
        %v5748 = vpop.f32.mrb[0].mxu0
        %v5749 = vpop.f32.mrb[0].mxu0
        %v5750 = vadd.f32 %v5653, %v5749
        %v5751 = vpop.f32.mrb[0].mxu0
        %5752 = vmatprep.mubr.bf16.mxu0 %v4499
        %5753 = vmatmul.mubr.bf16.gmra.mrb[0].mxu0 %v4498
        %v5754 = vpop.f32.mrb[0].mxu0
        %v5755 = vadd.f32 %v5658, %v5754
        %v5756 = vpop.f32.mrb[0].mxu0
        %v5757 = vpop.f32.mrb[0].mxu0
        %v5758 = vadd.f32 %v5661, %v5757
        %v5759 = vpop.f32.mrb[0].mxu0
        %5760 = vmatprep.mubr.bf16.mxu0 %v4515
        %5761 = vmatmul.mubr.bf16.gmra.mrb[0].mxu0 %v4514
        %v5762 = vpop.f32.mrb[0].mxu0
        %v5763 = vadd.f32 %v5666, %v5762
        %v5764 = vpop.f32.mrb[0].mxu0
        %v5765 = vpop.f32.mrb[0].mxu0
        %v5766 = vadd.f32 %v5669, %v5765
        %v5767 = vpop.f32.mrb[0].mxu0
        %5768 = vmatprep.mubr.bf16.mxu0 %v4531
        %5769 = vmatmul.mubr.bf16.gmra.mrb[0].mxu0 %v4530
        %v5770 = vpop.f32.mrb[0].mxu0
        %v5771 = vadd.f32 %v5674, %v5770
        %v5772 = vpop.f32.mrb[0].mxu0
        %v5773 = vpop.f32.mrb[0].mxu0
        %v5774 = vadd.f32 %v5677, %v5773
        %v5775 = vpop.f32.mrb[0].mxu0
        %5776 = vmatprep.mubr.bf16.mxu0 %v4547
        %5777 = vmatmul.mubr.bf16.gmra.mrb[0].mxu0 %v4546
        %v5778 = vpop.f32.mrb[0].mxu0
        %v5779 = vadd.f32 %v5682, %v5778
        %v5780 = vpop.f32.mrb[0].mxu0
        %v5781 = vpop.f32.mrb[0].mxu0
        %v5782 = vadd.f32 %v5685, %v5781
        %v5783 = vpop.f32.mrb[0].mxu0
        %5784 = vdwg.mxu0
        %5785 = vmatprep.subr.bf16.mxu0 0
        %5786 = vmatpush1.bf16.msra.mxu0 %v5367
        %5787 = vmatprep.subr.bf16.mxu0 0
        %5788 = vmatpush1.bf16.msra.mxu0 %v5368
        %5789 = vmatprep.subr.bf16.mxu0 0
        %5790 = vmatpush1.bf16.msra.mxu0 %v5369
        %5791 = vmatprep.subr.bf16.mxu0 0
        %5792 = vmatpush1.bf16.msra.mxu0 %v5370
        %5793 = vmatprep.subr.bf16.mxu0 0
        %5794 = vmatpush1.bf16.msra.mxu0 %v5371
        %5795 = vmatprep.subr.bf16.mxu0 0
        %5796 = vmatpush1.bf16.msra.mxu0 %v5372
        %5797 = vmatprep.subr.bf16.mxu0 0
        %5798 = vmatpush1.bf16.msra.mxu0 %v5373
        %5799 = vmatprep.subr.bf16.mxu0 0
        %5800 = vmatpush1.bf16.msra.mxu0 %v5374
        %5801 = vmatprep.subr.bf16.mxu0 0
        %5802 = vmatpush1.bf16.msra.mxu0 %v5375
        %5803 = vmatprep.subr.bf16.mxu0 0
        %5804 = vmatpush1.bf16.msra.mxu0 %v5376
        %5805 = vmatprep.subr.bf16.mxu0 0
        %5806 = vmatpush1.bf16.msra.mxu0 %v5377
        %5807 = vmatprep.subr.bf16.mxu0 0
        %5808 = vmatpush1.bf16.msra.mxu0 %v5378
        %5809 = vmatprep.subr.bf16.mxu0 0
        %5810 = vmatpush1.bf16.msra.mxu0 %v5379
        %5811 = vmatprep.subr.bf16.mxu0 0
        %5812 = vmatpush1.bf16.msra.mxu0 %v5380
        %5813 = vmatprep.subr.bf16.mxu0 0
        %5814 = vmatpush1.bf16.msra.mxu0 %v5381
        %5815 = vmatprep.subr.bf16.mxu0 0
        %5816 = vmatpush1.bf16.msra.mxu0 %v5382
        %5817 = vmatprep.mubr.bf16.mxu0 %v4437
        %5818 = vmatmul.mubr.bf16.gmra.mrb[0].mxu0 %v4436
        %v5819 = vpop.f32.mrb[0].mxu0
        %v5820 = vadd.f32 %v5723, %v5819
        %v5821 = vpop.f32.mrb[0].mxu0
        %v5822 = vpop.f32.mrb[0].mxu0
        %v5823 = vadd.f32 %v5726, %v5822
        %v5824 = vpop.f32.mrb[0].mxu0
        %5825 = vmatprep.mubr.bf16.mxu0 %v4453
        %5826 = vmatmul.mubr.bf16.gmra.mrb[0].mxu0 %v4452
        %v5827 = vpop.f32.mrb[0].mxu0
        %v5828 = vadd.f32 %v5731, %v5827
        %v5829 = vpop.f32.mrb[0].mxu0
        %v5830 = vpop.f32.mrb[0].mxu0
        %v5831 = vadd.f32 %v5734, %v5830
        %v5832 = vpop.f32.mrb[0].mxu0
        %5833 = vmatprep.mubr.bf16.mxu0 %v4469
        %5834 = vmatmul.mubr.bf16.gmra.mrb[0].mxu0 %v4468
        %v5835 = vpop.f32.mrb[0].mxu0
        %v5836 = vadd.f32 %v5739, %v5835
        %v5837 = vpop.f32.mrb[0].mxu0
        %v5838 = vpop.f32.mrb[0].mxu0
        %v5839 = vadd.f32 %v5742, %v5838
        %v5840 = vpop.f32.mrb[0].mxu0
        %5841 = vmatprep.mubr.bf16.mxu0 %v4485
        %5842 = vmatmul.mubr.bf16.gmra.mrb[0].mxu0 %v4484
        %v5843 = vpop.f32.mrb[0].mxu0
        %v5844 = vadd.f32 %v5747, %v5843
        %v5845 = vpop.f32.mrb[0].mxu0
        %v5846 = vpop.f32.mrb[0].mxu0
        %v5847 = vadd.f32 %v5750, %v5846
        %v5848 = vpop.f32.mrb[0].mxu0
        %5849 = vmatprep.mubr.bf16.mxu0 %v4501
        %5850 = vmatmul.mubr.bf16.gmra.mrb[0].mxu0 %v4500
        %v5851 = vpop.f32.mrb[0].mxu0
        %v5852 = vadd.f32 %v5755, %v5851
        %v5853 = vpop.f32.mrb[0].mxu0
        %v5854 = vpop.f32.mrb[0].mxu0
        %v5855 = vadd.f32 %v5758, %v5854
        %v5856 = vpop.f32.mrb[0].mxu0
        %5857 = vmatprep.mubr.bf16.mxu0 %v4517
        %5858 = vmatmul.mubr.bf16.gmra.mrb[0].mxu0 %v4516
        %v5859 = vpop.f32.mrb[0].mxu0
        %v5860 = vadd.f32 %v5763, %v5859
        %v5861 = vpop.f32.mrb[0].mxu0
        %v5862 = vpop.f32.mrb[0].mxu0
        %v5863 = vadd.f32 %v5766, %v5862
        %v5864 = vpop.f32.mrb[0].mxu0
        %5865 = vmatprep.mubr.bf16.mxu0 %v4533
        %5866 = vmatmul.mubr.bf16.gmra.mrb[0].mxu0 %v4532
        %v5867 = vpop.f32.mrb[0].mxu0
        %v5868 = vadd.f32 %v5771, %v5867
        %v5869 = vpop.f32.mrb[0].mxu0
        %v5870 = vpop.f32.mrb[0].mxu0
        %v5871 = vadd.f32 %v5774, %v5870
        %v5872 = vpop.f32.mrb[0].mxu0
        %5873 = vmatprep.mubr.bf16.mxu0 %v4549
        %5874 = vmatmul.mubr.bf16.gmra.mrb[0].mxu0 %v4548
        %v5875 = vpop.f32.mrb[0].mxu0
        %v5876 = vadd.f32 %v5779, %v5875
        %v5877 = vpop.f32.mrb[0].mxu0
        %v5878 = vpop.f32.mrb[0].mxu0
        %v5879 = vadd.f32 %v5782, %v5878
        %v5880 = vpop.f32.mrb[0].mxu0
        %5881 = vdwg.mxu0
        %5882 = vmatprep.subr.bf16.mxu0 0
        %5883 = vmatpush1.bf16.msra.mxu0 %v5383
        %5884 = vmatprep.subr.bf16.mxu0 0
        %5885 = vmatpush1.bf16.msra.mxu0 %v5384
        %5886 = vmatprep.subr.bf16.mxu0 0
        %5887 = vmatpush1.bf16.msra.mxu0 %v5385
        %5888 = vmatprep.subr.bf16.mxu0 0
        %5889 = vmatpush1.bf16.msra.mxu0 %v5386
        %5890 = vmatprep.subr.bf16.mxu0 0
        %5891 = vmatpush1.bf16.msra.mxu0 %v5387
        %5892 = vmatprep.subr.bf16.mxu0 0
        %5893 = vmatpush1.bf16.msra.mxu0 %v5388
        %5894 = vmatprep.subr.bf16.mxu0 0
        %5895 = vmatpush1.bf16.msra.mxu0 %v5389
        %5896 = vmatprep.subr.bf16.mxu0 0
        %5897 = vmatpush1.bf16.msra.mxu0 %v5390
        %5898 = vmatprep.subr.bf16.mxu0 0
        %5899 = vmatpush1.bf16.msra.mxu0 %v5391
        %5900 = vmatprep.subr.bf16.mxu0 0
        %5901 = vmatpush1.bf16.msra.mxu0 %v5392
        %5902 = vmatprep.subr.bf16.mxu0 0
        %5903 = vmatpush1.bf16.msra.mxu0 %v5393
        %5904 = vmatprep.subr.bf16.mxu0 0
        %5905 = vmatpush1.bf16.msra.mxu0 %v5394
        %5906 = vmatprep.subr.bf16.mxu0 0
        %5907 = vmatpush1.bf16.msra.mxu0 %v5395
        %5908 = vmatprep.subr.bf16.mxu0 0
        %5909 = vmatpush1.bf16.msra.mxu0 %v5396
        %5910 = vmatprep.subr.bf16.mxu0 0
        %5911 = vmatpush1.bf16.msra.mxu0 %v5397
        %5912 = vmatprep.subr.bf16.mxu0 0
        %5913 = vmatpush1.bf16.msra.mxu0 %v5398
        %5914 = vmatprep.mubr.bf16.mxu0 %v4439
        %5915 = vmatmul.mubr.bf16.gmra.mrb[0].mxu0 %v4438
        %v5916 = vpop.f32.mrb[0].mxu0
        %v5917 = vadd.f32 %v5820, %v5916
        %v5918 = vpop.f32.mrb[0].mxu0
        %v5919 = vpop.f32.mrb[0].mxu0
        %v5920 = vadd.f32 %v5823, %v5919
        %v5921 = vpop.f32.mrb[0].mxu0
        %5922 = vmatprep.mubr.bf16.mxu0 %v4455
        %5923 = vmatmul.mubr.bf16.gmra.mrb[0].mxu0 %v4454
        %v5924 = vpop.f32.mrb[0].mxu0
        %v5925 = vadd.f32 %v5828, %v5924
        %v5926 = vpop.f32.mrb[0].mxu0
        %v5927 = vpop.f32.mrb[0].mxu0
        %v5928 = vadd.f32 %v5831, %v5927
        %v5929 = vpop.f32.mrb[0].mxu0
        %5930 = vmatprep.mubr.bf16.mxu0 %v4471
        %5931 = vmatmul.mubr.bf16.gmra.mrb[0].mxu0 %v4470
        %v5932 = vpop.f32.mrb[0].mxu0
        %v5933 = vadd.f32 %v5836, %v5932
        %v5934 = vpop.f32.mrb[0].mxu0
        %v5935 = vpop.f32.mrb[0].mxu0
        %v5936 = vadd.f32 %v5839, %v5935
        %v5937 = vpop.f32.mrb[0].mxu0
        %5938 = vmatprep.mubr.bf16.mxu0 %v4487
        %5939 = vmatmul.mubr.bf16.gmra.mrb[0].mxu0 %v4486
        %v5940 = vpop.f32.mrb[0].mxu0
        %v5941 = vadd.f32 %v5844, %v5940
        %v5942 = vpop.f32.mrb[0].mxu0
        %v5943 = vpop.f32.mrb[0].mxu0
        %v5944 = vadd.f32 %v5847, %v5943
        %v5945 = vpop.f32.mrb[0].mxu0
        %5946 = vmatprep.mubr.bf16.mxu0 %v4503
        %5947 = vmatmul.mubr.bf16.gmra.mrb[0].mxu0 %v4502
        %v5948 = vpop.f32.mrb[0].mxu0
        %v5949 = vadd.f32 %v5852, %v5948
        %v5950 = vpop.f32.mrb[0].mxu0
        %v5951 = vpop.f32.mrb[0].mxu0
        %v5952 = vadd.f32 %v5855, %v5951
        %v5953 = vpop.f32.mrb[0].mxu0
        %5954 = vmatprep.mubr.bf16.mxu0 %v4519
        %5955 = vmatmul.mubr.bf16.gmra.mrb[0].mxu0 %v4518
        %v5956 = vpop.f32.mrb[0].mxu0
        %v5957 = vadd.f32 %v5860, %v5956
        %v5958 = vpop.f32.mrb[0].mxu0
        %v5959 = vpop.f32.mrb[0].mxu0
        %v5960 = vadd.f32 %v5863, %v5959
        %v5961 = vpop.f32.mrb[0].mxu0
        %5962 = vmatprep.mubr.bf16.mxu0 %v4535
        %5963 = vmatmul.mubr.bf16.gmra.mrb[0].mxu0 %v4534
        %v5964 = vpop.f32.mrb[0].mxu0
        %v5965 = vadd.f32 %v5868, %v5964
        %v5966 = vpop.f32.mrb[0].mxu0
        %v5967 = vpop.f32.mrb[0].mxu0
        %v5968 = vadd.f32 %v5871, %v5967
        %v5969 = vpop.f32.mrb[0].mxu0
        %5970 = vmatprep.mubr.bf16.mxu0 %v4551
        %5971 = vmatmul.mubr.bf16.gmra.mrb[0].mxu0 %v4550
        %v5972 = vpop.f32.mrb[0].mxu0
        %v5973 = vadd.f32 %v5876, %v5972
        %v5974 = vpop.f32.mrb[0].mxu0
        %v5975 = vpop.f32.mrb[0].mxu0
        %v5976 = vadd.f32 %v5879, %v5975
        %v5977 = vpop.f32.mrb[0].mxu0
        %5978 = vdwg.mxu0
        %5979 = vmatprep.subr.bf16.mxu0 0
        %5980 = vmatpush1.bf16.msra.mxu0 %v5399
        %5981 = vmatprep.subr.bf16.mxu0 0
        %5982 = vmatpush1.bf16.msra.mxu0 %v5400
        %5983 = vmatprep.subr.bf16.mxu0 0
        %5984 = vmatpush1.bf16.msra.mxu0 %v5401
        %5985 = vmatprep.subr.bf16.mxu0 0
        %5986 = vmatpush1.bf16.msra.mxu0 %v5402
        %5987 = vmatprep.subr.bf16.mxu0 0
        %5988 = vmatpush1.bf16.msra.mxu0 %v5403
        %5989 = vmatprep.subr.bf16.mxu0 0
        %5990 = vmatpush1.bf16.msra.mxu0 %v5404
        %5991 = vmatprep.subr.bf16.mxu0 0
        %5992 = vmatpush1.bf16.msra.mxu0 %v5405
        %5993 = vmatprep.subr.bf16.mxu0 0
        %5994 = vmatpush1.bf16.msra.mxu0 %v5406
        %5995 = vmatprep.subr.bf16.mxu0 0
        %5996 = vmatpush1.bf16.msra.mxu0 %v5407
        %5997 = vmatprep.subr.bf16.mxu0 0
        %5998 = vmatpush1.bf16.msra.mxu0 %v5408
        %5999 = vmatprep.subr.bf16.mxu0 0
        %6000 = vmatpush1.bf16.msra.mxu0 %v5409
        %6001 = vmatprep.subr.bf16.mxu0 0
        %6002 = vmatpush1.bf16.msra.mxu0 %v5410
        %6003 = vmatprep.subr.bf16.mxu0 0
        %6004 = vmatpush1.bf16.msra.mxu0 %v5411
        %6005 = vmatprep.subr.bf16.mxu0 0
        %6006 = vmatpush1.bf16.msra.mxu0 %v5412
        %6007 = vmatprep.subr.bf16.mxu0 0
        %6008 = vmatpush1.bf16.msra.mxu0 %v5413
        %6009 = vmatprep.subr.bf16.mxu0 0
        %6010 = vmatpush1.bf16.msra.mxu0 %v5414
        %6011 = vmatprep.mubr.bf16.mxu0 %v4441
        %6012 = vmatmul.mubr.bf16.gmra.mrb[0].mxu0 %v4440
        %v6013 = vpop.f32.mrb[0].mxu0
        %v6014 = vadd.f32 %v5917, %v6013
        %v6015 = vpop.f32.mrb[0].mxu0
        %v6016 = vpop.f32.mrb[0].mxu0
        %v6017 = vadd.f32 %v5920, %v6016
        %v6018 = vpop.f32.mrb[0].mxu0
        %6019 = vmatprep.mubr.bf16.mxu0 %v4457
        %6020 = vmatmul.mubr.bf16.gmra.mrb[0].mxu0 %v4456
        %v6021 = vpop.f32.mrb[0].mxu0
        %v6022 = vadd.f32 %v5925, %v6021
        %v6023 = vpop.f32.mrb[0].mxu0
        %v6024 = vpop.f32.mrb[0].mxu0
        %v6025 = vadd.f32 %v5928, %v6024
        %v6026 = vpop.f32.mrb[0].mxu0
        %6027 = vmatprep.mubr.bf16.mxu0 %v4473
        %6028 = vmatmul.mubr.bf16.gmra.mrb[0].mxu0 %v4472
        %v6029 = vpop.f32.mrb[0].mxu0
        %v6030 = vadd.f32 %v5933, %v6029
        %v6031 = vpop.f32.mrb[0].mxu0
        %v6032 = vpop.f32.mrb[0].mxu0
        %v6033 = vadd.f32 %v5936, %v6032
        %v6034 = vpop.f32.mrb[0].mxu0
        %6035 = vmatprep.mubr.bf16.mxu0 %v4489
        %6036 = vmatmul.mubr.bf16.gmra.mrb[0].mxu0 %v4488
        %v6037 = vpop.f32.mrb[0].mxu0
        %v6038 = vadd.f32 %v5941, %v6037
        %v6039 = vpop.f32.mrb[0].mxu0
        %v6040 = vpop.f32.mrb[0].mxu0
        %v6041 = vadd.f32 %v5944, %v6040
        %v6042 = vpop.f32.mrb[0].mxu0
        %6043 = vmatprep.mubr.bf16.mxu0 %v4505
        %6044 = vmatmul.mubr.bf16.gmra.mrb[0].mxu0 %v4504
        %v6045 = vpop.f32.mrb[0].mxu0
        %v6046 = vadd.f32 %v5949, %v6045
        %v6047 = vpop.f32.mrb[0].mxu0
        %v6048 = vpop.f32.mrb[0].mxu0
        %v6049 = vadd.f32 %v5952, %v6048
        %v6050 = vpop.f32.mrb[0].mxu0
        %6051 = vmatprep.mubr.bf16.mxu0 %v4521
        %6052 = vmatmul.mubr.bf16.gmra.mrb[0].mxu0 %v4520
        %v6053 = vpop.f32.mrb[0].mxu0
        %v6054 = vadd.f32 %v5957, %v6053
        %v6055 = vpop.f32.mrb[0].mxu0
        %v6056 = vpop.f32.mrb[0].mxu0
        %v6057 = vadd.f32 %v5960, %v6056
        %v6058 = vpop.f32.mrb[0].mxu0
        %6059 = vmatprep.mubr.bf16.mxu0 %v4537
        %6060 = vmatmul.mubr.bf16.gmra.mrb[0].mxu0 %v4536
        %v6061 = vpop.f32.mrb[0].mxu0
        %v6062 = vadd.f32 %v5965, %v6061
        %v6063 = vpop.f32.mrb[0].mxu0
        %v6064 = vpop.f32.mrb[0].mxu0
        %v6065 = vadd.f32 %v5968, %v6064
        %v6066 = vpop.f32.mrb[0].mxu0
        %6067 = vmatprep.mubr.bf16.mxu0 %v4553
        %6068 = vmatmul.mubr.bf16.gmra.mrb[0].mxu0 %v4552
        %v6069 = vpop.f32.mrb[0].mxu0
        %v6070 = vadd.f32 %v5973, %v6069
        %v6071 = vpop.f32.mrb[0].mxu0
        %v6072 = vpop.f32.mrb[0].mxu0
        %v6073 = vadd.f32 %v5976, %v6072
        %v6074 = vpop.f32.mrb[0].mxu0
        %6075 = vdwg.mxu0
        %6076 = vmatprep.subr.bf16.mxu0 0
        %6077 = vmatpush1.bf16.msra.mxu0 %v5415
        %6078 = vmatprep.subr.bf16.mxu0 0
        %6079 = vmatpush1.bf16.msra.mxu0 %v5416
        %6080 = vmatprep.subr.bf16.mxu0 0
        %6081 = vmatpush1.bf16.msra.mxu0 %v5417
        %6082 = vmatprep.subr.bf16.mxu0 0
        %6083 = vmatpush1.bf16.msra.mxu0 %v5418
        %6084 = vmatprep.subr.bf16.mxu0 0
        %6085 = vmatpush1.bf16.msra.mxu0 %v5419
        %6086 = vmatprep.subr.bf16.mxu0 0
        %6087 = vmatpush1.bf16.msra.mxu0 %v5420
        %6088 = vmatprep.subr.bf16.mxu0 0
        %6089 = vmatpush1.bf16.msra.mxu0 %v5421
        %6090 = vmatprep.subr.bf16.mxu0 0
        %6091 = vmatpush1.bf16.msra.mxu0 %v5422
        %6092 = vmatprep.subr.bf16.mxu0 0
        %6093 = vmatpush1.bf16.msra.mxu0 %v5423
        %6094 = vmatprep.subr.bf16.mxu0 0
        %6095 = vmatpush1.bf16.msra.mxu0 %v5424
        %6096 = vmatprep.subr.bf16.mxu0 0
        %6097 = vmatpush1.bf16.msra.mxu0 %v5425
        %6098 = vmatprep.subr.bf16.mxu0 0
        %6099 = vmatpush1.bf16.msra.mxu0 %v5426
        %6100 = vmatprep.subr.bf16.mxu0 0
        %6101 = vmatpush1.bf16.msra.mxu0 %v5427
        %6102 = vmatprep.subr.bf16.mxu0 0
        %6103 = vmatpush1.bf16.msra.mxu0 %v5428
        %6104 = vmatprep.subr.bf16.mxu0 0
        %6105 = vmatpush1.bf16.msra.mxu0 %v5429
        %6106 = vmatprep.subr.bf16.mxu0 0
        %6107 = vmatpush1.bf16.msra.mxu0 %v5430
        %6108 = vmatprep.mubr.bf16.mxu0 %v4443
        %6109 = vmatmul.mubr.bf16.gmra.mrb[0].mxu0 %v4442
        %v6110 = vpop.f32.mrb[0].mxu0
        %v6111 = vadd.f32 %v6014, %v6110
        %v6112 = vpop.f32.mrb[0].mxu0
        %v6113 = vpop.f32.mrb[0].mxu0
        %v6114 = vadd.f32 %v6017, %v6113
        %v6115 = vpop.f32.mrb[0].mxu0
        %6116 = vmatprep.mubr.bf16.mxu0 %v4459
        %6117 = vmatmul.mubr.bf16.gmra.mrb[0].mxu0 %v4458
        %v6118 = vpop.f32.mrb[0].mxu0
        %v6119 = vadd.f32 %v6022, %v6118
        %v6120 = vpop.f32.mrb[0].mxu0
        %v6121 = vpop.f32.mrb[0].mxu0
        %v6122 = vadd.f32 %v6025, %v6121
        %v6123 = vpop.f32.mrb[0].mxu0
        %6124 = vmatprep.mubr.bf16.mxu0 %v4475
        %6125 = vmatmul.mubr.bf16.gmra.mrb[0].mxu0 %v4474
        %v6126 = vpop.f32.mrb[0].mxu0
        %v6127 = vadd.f32 %v6030, %v6126
        %v6128 = vpop.f32.mrb[0].mxu0
        %v6129 = vpop.f32.mrb[0].mxu0
        %v6130 = vadd.f32 %v6033, %v6129
        %v6131 = vpop.f32.mrb[0].mxu0
        %6132 = vmatprep.mubr.bf16.mxu0 %v4491
        %6133 = vmatmul.mubr.bf16.gmra.mrb[0].mxu0 %v4490
        %v6134 = vpop.f32.mrb[0].mxu0
        %v6135 = vadd.f32 %v6038, %v6134
        %v6136 = vpop.f32.mrb[0].mxu0
        %v6137 = vpop.f32.mrb[0].mxu0
        %v6138 = vadd.f32 %v6041, %v6137
        %v6139 = vpop.f32.mrb[0].mxu0
        %6140 = vmatprep.mubr.bf16.mxu0 %v4507
        %6141 = vmatmul.mubr.bf16.gmra.mrb[0].mxu0 %v4506
        %v6142 = vpop.f32.mrb[0].mxu0
        %v6143 = vadd.f32 %v6046, %v6142
        %v6144 = vpop.f32.mrb[0].mxu0
        %v6145 = vpop.f32.mrb[0].mxu0
        %v6146 = vadd.f32 %v6049, %v6145
        %v6147 = vpop.f32.mrb[0].mxu0
        %6148 = vmatprep.mubr.bf16.mxu0 %v4523
        %6149 = vmatmul.mubr.bf16.gmra.mrb[0].mxu0 %v4522
        %v6150 = vpop.f32.mrb[0].mxu0
        %v6151 = vadd.f32 %v6054, %v6150
        %v6152 = vpop.f32.mrb[0].mxu0
        %v6153 = vpop.f32.mrb[0].mxu0
        %v6154 = vadd.f32 %v6057, %v6153
        %v6155 = vpop.f32.mrb[0].mxu0
        %6156 = vmatprep.mubr.bf16.mxu0 %v4539
        %6157 = vmatmul.mubr.bf16.gmra.mrb[0].mxu0 %v4538
        %v6158 = vpop.f32.mrb[0].mxu0
        %v6159 = vadd.f32 %v6062, %v6158
        %v6160 = vpop.f32.mrb[0].mxu0
        %v6161 = vpop.f32.mrb[0].mxu0
        %v6162 = vadd.f32 %v6065, %v6161
        %v6163 = vpop.f32.mrb[0].mxu0
        %6164 = vmatprep.mubr.bf16.mxu0 %v4555
        %6165 = vmatmul.mubr.bf16.gmra.mrb[0].mxu0 %v4554
        %v6166 = vpop.f32.mrb[0].mxu0
        %v6167 = vadd.f32 %v6070, %v6166
        %v6168 = vpop.f32.mrb[0].mxu0
        %v6169 = vpop.f32.mrb[0].mxu0
        %v6170 = vadd.f32 %v6073, %v6169
        %v6171 = vpop.f32.mrb[0].mxu0
        %6172 = vdwg.mxu0
        %6173 = vmatprep.subr.bf16.mxu0 0
        %6174 = vmatpush1.bf16.msra.mxu0 %v5431
        %6175 = vmatprep.subr.bf16.mxu0 0
        %6176 = vmatpush1.bf16.msra.mxu0 %v5432
        %6177 = vmatprep.subr.bf16.mxu0 0
        %6178 = vmatpush1.bf16.msra.mxu0 %v5433
        %6179 = vmatprep.subr.bf16.mxu0 0
        %6180 = vmatpush1.bf16.msra.mxu0 %v5434
        %6181 = vmatprep.subr.bf16.mxu0 0
        %6182 = vmatpush1.bf16.msra.mxu0 %v5435
        %6183 = vmatprep.subr.bf16.mxu0 0
        %6184 = vmatpush1.bf16.msra.mxu0 %v5436
        %6185 = vmatprep.subr.bf16.mxu0 0
        %6186 = vmatpush1.bf16.msra.mxu0 %v5437
        %6187 = vmatprep.subr.bf16.mxu0 0
        %6188 = vmatpush1.bf16.msra.mxu0 %v5438
        %6189 = vmatprep.subr.bf16.mxu0 0
        %6190 = vmatpush1.bf16.msra.mxu0 %v5439
        %6191 = vmatprep.subr.bf16.mxu0 0
        %6192 = vmatpush1.bf16.msra.mxu0 %v5440
        %6193 = vmatprep.subr.bf16.mxu0 0
        %6194 = vmatpush1.bf16.msra.mxu0 %v5441
        %6195 = vmatprep.subr.bf16.mxu0 0
        %6196 = vmatpush1.bf16.msra.mxu0 %v5442
        %6197 = vmatprep.subr.bf16.mxu0 0
        %6198 = vmatpush1.bf16.msra.mxu0 %v5443
        %6199 = vmatprep.subr.bf16.mxu0 0
        %6200 = vmatpush1.bf16.msra.mxu0 %v5444
        %6201 = vmatprep.subr.bf16.mxu0 0
        %6202 = vmatpush1.bf16.msra.mxu0 %v5445
        %6203 = vmatprep.subr.bf16.mxu0 0
        %6204 = vmatpush1.bf16.msra.mxu0 %v5446
        %6205 = vmatprep.mubr.bf16.mxu0 %v4445
        %6206 = vmatmul.mubr.bf16.gmra.mrb[0].mxu0 %v4444
        %v6207 = vpop.f32.mrb[0].mxu0
        %v6208 = vadd.f32 %v6111, %v6207
        %v6209 = vpop.f32.mrb[0].mxu0
        %v6210 = vpop.f32.mrb[0].mxu0
        %v6211 = vadd.f32 %v6114, %v6210
        %v6212 = vpop.f32.mrb[0].mxu0
        %6213 = vmatprep.mubr.bf16.mxu0 %v4461
        %6214 = vmatmul.mubr.bf16.gmra.mrb[0].mxu0 %v4460
        %v6215 = vpop.f32.mrb[0].mxu0
        %v6216 = vadd.f32 %v6119, %v6215
        %v6217 = vpop.f32.mrb[0].mxu0
        %v6218 = vpop.f32.mrb[0].mxu0
        %v6219 = vadd.f32 %v6122, %v6218
        %v6220 = vpop.f32.mrb[0].mxu0
        %6221 = vmatprep.mubr.bf16.mxu0 %v4477
        %6222 = vmatmul.mubr.bf16.gmra.mrb[0].mxu0 %v4476
        %v6223 = vpop.f32.mrb[0].mxu0
        %v6224 = vadd.f32 %v6127, %v6223
        %v6225 = vpop.f32.mrb[0].mxu0
        %v6226 = vpop.f32.mrb[0].mxu0
        %v6227 = vadd.f32 %v6130, %v6226
        %v6228 = vpop.f32.mrb[0].mxu0
        %6229 = vmatprep.mubr.bf16.mxu0 %v4493
        %6230 = vmatmul.mubr.bf16.gmra.mrb[0].mxu0 %v4492
        %v6231 = vpop.f32.mrb[0].mxu0
        %v6232 = vadd.f32 %v6135, %v6231
        %v6233 = vpop.f32.mrb[0].mxu0
        %v6234 = vpop.f32.mrb[0].mxu0
        %v6235 = vadd.f32 %v6138, %v6234
        %v6236 = vpop.f32.mrb[0].mxu0
        %6237 = vmatprep.mubr.bf16.mxu0 %v4509
        %6238 = vmatmul.mubr.bf16.gmra.mrb[0].mxu0 %v4508
        %v6239 = vpop.f32.mrb[0].mxu0
        %v6240 = vadd.f32 %v6143, %v6239
        %v6241 = vpop.f32.mrb[0].mxu0
        %v6242 = vpop.f32.mrb[0].mxu0
        %v6243 = vadd.f32 %v6146, %v6242
        %v6244 = vpop.f32.mrb[0].mxu0
        %6245 = vmatprep.mubr.bf16.mxu0 %v4525
        %6246 = vmatmul.mubr.bf16.gmra.mrb[0].mxu0 %v4524
        %v6247 = vpop.f32.mrb[0].mxu0
        %v6248 = vadd.f32 %v6151, %v6247
        %v6249 = vpop.f32.mrb[0].mxu0
        %v6250 = vpop.f32.mrb[0].mxu0
        %v6251 = vadd.f32 %v6154, %v6250
        %v6252 = vpop.f32.mrb[0].mxu0
        %6253 = vmatprep.mubr.bf16.mxu0 %v4541
        %6254 = vmatmul.mubr.bf16.gmra.mrb[0].mxu0 %v4540
        %v6255 = vpop.f32.mrb[0].mxu0
        %v6256 = vadd.f32 %v6159, %v6255
        %v6257 = vpop.f32.mrb[0].mxu0
        %v6258 = vpop.f32.mrb[0].mxu0
        %v6259 = vadd.f32 %v6162, %v6258
        %v6260 = vpop.f32.mrb[0].mxu0
        %6261 = vmatprep.mubr.bf16.mxu0 %v4557
        %6262 = vmatmul.mubr.bf16.gmra.mrb[0].mxu0 %v4556
        %v6263 = vpop.f32.mrb[0].mxu0
        %v6264 = vadd.f32 %v6167, %v6263
        %v6265 = vpop.f32.mrb[0].mxu0
        %v6266 = vpop.f32.mrb[0].mxu0
        %v6267 = vadd.f32 %v6170, %v6266
        %v6268 = vpop.f32.mrb[0].mxu0
        %6269 = vdwg.mxu0
        %6270 = vmatprep.subr.bf16.mxu0 0
        %6271 = vmatpush1.bf16.msra.mxu0 %v5447
        %6272 = vmatprep.subr.bf16.mxu0 0
        %6273 = vmatpush1.bf16.msra.mxu0 %v5448
        %6274 = vmatprep.subr.bf16.mxu0 0
        %6275 = vmatpush1.bf16.msra.mxu0 %v5449
        %6276 = vmatprep.subr.bf16.mxu0 0
        %6277 = vmatpush1.bf16.msra.mxu0 %v5450
        %6278 = vmatprep.subr.bf16.mxu0 0
        %6279 = vmatpush1.bf16.msra.mxu0 %v5451
        %6280 = vmatprep.subr.bf16.mxu0 0
        %6281 = vmatpush1.bf16.msra.mxu0 %v5452
        %6282 = vmatprep.subr.bf16.mxu0 0
        %6283 = vmatpush1.bf16.msra.mxu0 %v5453
        %6284 = vmatprep.subr.bf16.mxu0 0
        %6285 = vmatpush1.bf16.msra.mxu0 %v5454
        %6286 = vmatprep.subr.bf16.mxu0 0
        %6287 = vmatpush1.bf16.msra.mxu0 %v5455
        %6288 = vmatprep.subr.bf16.mxu0 0
        %6289 = vmatpush1.bf16.msra.mxu0 %v5456
        %6290 = vmatprep.subr.bf16.mxu0 0
        %6291 = vmatpush1.bf16.msra.mxu0 %v5457
        %6292 = vmatprep.subr.bf16.mxu0 0
        %6293 = vmatpush1.bf16.msra.mxu0 %v5458
        %6294 = vmatprep.subr.bf16.mxu0 0
        %6295 = vmatpush1.bf16.msra.mxu0 %v5459
        %6296 = vmatprep.subr.bf16.mxu0 0
        %6297 = vmatpush1.bf16.msra.mxu0 %v5460
        %6298 = vmatprep.subr.bf16.mxu0 0
        %6299 = vmatpush1.bf16.msra.mxu0 %v5461
        %6300 = vmatprep.subr.bf16.mxu0 0
        %6301 = vmatpush1.bf16.msra.mxu0 %v5462
        %6302 = vmatprep.mubr.bf16.mxu0 %v4447
        %6303 = vmatmul.mubr.bf16.gmra.mrb[0].mxu0 %v4446
        %v6304 = vpop.f32.mrb[0].mxu0
        %v6305 = vadd.f32 %v6208, %v6304
        %v6306 = vpop.f32.mrb[0].mxu0
        %v6307 = vpop.f32.mrb[0].mxu0
        %v6308 = vadd.f32 %v6211, %v6307
        %v6309 = vpop.f32.mrb[0].mxu0
        %6310 = vmatprep.mubr.bf16.mxu0 %v4463
        %6311 = vmatmul.mubr.bf16.gmra.mrb[0].mxu0 %v4462
        %v6312 = vpop.f32.mrb[0].mxu0
        %v6313 = vadd.f32 %v6216, %v6312
        %v6314 = vpop.f32.mrb[0].mxu0
        %v6315 = vpop.f32.mrb[0].mxu0
        %v6316 = vadd.f32 %v6219, %v6315
        %v6317 = vpop.f32.mrb[0].mxu0
        %6318 = vmatprep.mubr.bf16.mxu0 %v4479
        %6319 = vmatmul.mubr.bf16.gmra.mrb[0].mxu0 %v4478
        %v6320 = vpop.f32.mrb[0].mxu0
        %v6321 = vadd.f32 %v6224, %v6320
        %v6322 = vpop.f32.mrb[0].mxu0
        %v6323 = vpop.f32.mrb[0].mxu0
        %v6324 = vadd.f32 %v6227, %v6323
        %v6325 = vpop.f32.mrb[0].mxu0
        %6326 = vmatprep.mubr.bf16.mxu0 %v4495
        %6327 = vmatmul.mubr.bf16.gmra.mrb[0].mxu0 %v4494
        %v6328 = vpop.f32.mrb[0].mxu0
        %v6329 = vadd.f32 %v6232, %v6328
        %v6330 = vpop.f32.mrb[0].mxu0
        %v6331 = vpop.f32.mrb[0].mxu0
        %v6332 = vadd.f32 %v6235, %v6331
        %v6333 = vpop.f32.mrb[0].mxu0
        %6334 = vmatprep.mubr.bf16.mxu0 %v4511
        %6335 = vmatmul.mubr.bf16.gmra.mrb[0].mxu0 %v4510
        %v6336 = vpop.f32.mrb[0].mxu0
        %v6337 = vadd.f32 %v6240, %v6336
        %v6338 = vpop.f32.mrb[0].mxu0
        %v6339 = vpop.f32.mrb[0].mxu0
        %v6340 = vadd.f32 %v6243, %v6339
        %v6341 = vpop.f32.mrb[0].mxu0
        %6342 = vmatprep.mubr.bf16.mxu0 %v4527
        %6343 = vmatmul.mubr.bf16.gmra.mrb[0].mxu0 %v4526
        %v6344 = vpop.f32.mrb[0].mxu0
        %v6345 = vadd.f32 %v6248, %v6344
        %v6346 = vpop.f32.mrb[0].mxu0
        %v6347 = vpop.f32.mrb[0].mxu0
        %v6348 = vadd.f32 %v6251, %v6347
        %v6349 = vpop.f32.mrb[0].mxu0
        %6350 = vmatprep.mubr.bf16.mxu0 %v4543
        %6351 = vmatmul.mubr.bf16.gmra.mrb[0].mxu0 %v4542
        %v6352 = vpop.f32.mrb[0].mxu0
        %v6353 = vadd.f32 %v6256, %v6352
        %v6354 = vpop.f32.mrb[0].mxu0
        %v6355 = vpop.f32.mrb[0].mxu0
        %v6356 = vadd.f32 %v6259, %v6355
        %v6357 = vpop.f32.mrb[0].mxu0
        %6358 = vmatprep.mubr.bf16.mxu0 %v4559
        %6359 = vmatmul.mubr.bf16.gmra.mrb[0].mxu0 %v4558
        %v6360 = vpop.f32.mrb[0].mxu0
        %v6361 = vadd.f32 %v6264, %v6360
        %v6362 = vpop.f32.mrb[0].mxu0
        %v6363 = vpop.f32.mrb[0].mxu0
        %v6364 = vadd.f32 %v6267, %v6363
        %v6365 = vpop.f32.mrb[0].mxu0
        %6366 = vdwg.mxu0
        %v6367 = vadd.f32 %v2884, %v6305
        %v6368 = vadd.f32 %v2885, %v6308
        %v6369 = vadd.f32 %v2886, %v6313
        %v6370 = vadd.f32 %v2887, %v6316
        %v6371 = vadd.f32 %v2888, %v6321
        %v6372 = vadd.f32 %v2889, %v6324
        %v6373 = vadd.f32 %v2890, %v6329
        %v6374 = vadd.f32 %v2891, %v6332
        %v6375 = vadd.f32 %v2892, %v6337
        %v6376 = vadd.f32 %v2893, %v6340
        %v6377 = vadd.f32 %v2894, %v6345
        %v6378 = vadd.f32 %v2895, %v6348
        %v6379 = vadd.f32 %v2896, %v6353
        %v6380 = vadd.f32 %v2897, %v6356
        %v6381 = vadd.f32 %v2898, %v6361
        %v6382 = vadd.f32 %v2899, %v6364
        %v6383 = vsel %vm1325, %v6367, 0.0
        %6384 = vadd.xlane.f32.xlu0 %v6383
        %v6385 = vpop.xlane.xlu0 %6384
        %v6386 = vsel %vm1325, %v6368, 0.0
        %6387 = vadd.xlane.f32.xlu0 %v6386
        %v6388 = vpop.xlane.xlu0 %6387
        %v6389 = vsel %vm1325, %v6369, 0.0
        %6390 = vadd.xlane.f32.xlu0 %v6389
        %v6391 = vpop.xlane.xlu0 %6390
        %v6392 = vsel %vm1325, %v6370, 0.0
        %6393 = vadd.xlane.f32.xlu0 %v6392
        %v6394 = vpop.xlane.xlu0 %6393
        %v6395 = vsel %vm1325, %v6371, 0.0
        %6396 = vadd.xlane.f32.xlu0 %v6395
        %v6397 = vpop.xlane.xlu0 %6396
        %v6398 = vsel %vm1325, %v6372, 0.0
        %6399 = vadd.xlane.f32.xlu0 %v6398
        %v6400 = vpop.xlane.xlu0 %6399
        %v6401 = vsel %vm1325, %v6373, 0.0
        %6402 = vadd.xlane.f32.xlu0 %v6401
        %v6403 = vpop.xlane.xlu0 %6402
        %v6404 = vsel %vm1325, %v6374, 0.0
        %6405 = vadd.xlane.f32.xlu0 %v6404
        %v6406 = vpop.xlane.xlu0 %6405
        %v6407 = vsel %vm1325, %v6375, 0.0
        %6408 = vadd.xlane.f32.xlu0 %v6407
        %v6409 = vpop.xlane.xlu0 %6408
        %v6410 = vsel %vm1325, %v6376, 0.0
        %6411 = vadd.xlane.f32.xlu0 %v6410
        %v6412 = vpop.xlane.xlu0 %6411
        %v6413 = vsel %vm1325, %v6377, 0.0
        %6414 = vadd.xlane.f32.xlu0 %v6413
        %v6415 = vpop.xlane.xlu0 %6414
        %v6416 = vsel %vm1325, %v6378, 0.0
        %6417 = vadd.xlane.f32.xlu0 %v6416
        %v6418 = vpop.xlane.xlu0 %6417
        %v6419 = vsel %vm1325, %v6379, 0.0
        %6420 = vadd.xlane.f32.xlu0 %v6419
        %v6421 = vpop.xlane.xlu0 %6420
        %v6422 = vsel %vm1325, %v6380, 0.0
        %6423 = vadd.xlane.f32.xlu0 %v6422
        %v6424 = vpop.xlane.xlu0 %6423
        %v6425 = vsel %vm1325, %v6381, 0.0
        %6426 = vadd.xlane.f32.xlu0 %v6425
        %v6427 = vpop.xlane.xlu0 %6426
        %v6428 = vsel %vm1325, %v6382, 0.0
        %6429 = vadd.xlane.f32.xlu0 %v6428
        %v6430 = vpop.xlane.xlu0 %6429
        %v6431 = vmul.f32 %v6385, %v2693
        %v6432 = vmul.f32 %v6388, %v2693
        %v6433 = vmul.f32 %v6391, %v2693
        %v6434 = vmul.f32 %v6394, %v2693
        %v6435 = vmul.f32 %v6397, %v2693
        %v6436 = vmul.f32 %v6400, %v2693
        %v6437 = vmul.f32 %v6403, %v2693
        %v6438 = vmul.f32 %v6406, %v2693
        %v6439 = vmul.f32 %v6409, %v2693
        %v6440 = vmul.f32 %v6412, %v2693
        %v6441 = vmul.f32 %v6415, %v2693
        %v6442 = vmul.f32 %v6418, %v2693
        %v6443 = vmul.f32 %v6421, %v2693
        %v6444 = vmul.f32 %v6424, %v2693
        %v6445 = vmul.f32 %v6427, %v2693
        %v6446 = vmul.f32 %v6430, %v2693
        %v6447 = vsub.f32 %v6367, %v6431
        %v6448 = vsub.f32 %v6368, %v6432
        %v6449 = vsub.f32 %v6369, %v6433
        %v6450 = vsub.f32 %v6370, %v6434
        %v6451 = vsub.f32 %v6371, %v6435
        %v6452 = vsub.f32 %v6372, %v6436
        %v6453 = vsub.f32 %v6373, %v6437
        %v6454 = vsub.f32 %v6374, %v6438
        %v6455 = vsub.f32 %v6375, %v6439
        %v6456 = vsub.f32 %v6376, %v6440
        %v6457 = vsub.f32 %v6377, %v6441
        %v6458 = vsub.f32 %v6378, %v6442
        %v6459 = vsub.f32 %v6379, %v6443
        %v6460 = vsub.f32 %v6380, %v6444
        %v6461 = vsub.f32 %v6381, %v6445
        %v6462 = vsub.f32 %v6382, %v6446
        %v6463 = vmul.f32 %v6447, %v6447
        %v6464 = vmul.f32 %v6448, %v6448
        %v6465 = vmul.f32 %v6449, %v6449
        %v6466 = vmul.f32 %v6450, %v6450
        %v6467 = vmul.f32 %v6451, %v6451
        %v6468 = vmul.f32 %v6452, %v6452
        %v6469 = vmul.f32 %v6453, %v6453
        %v6470 = vmul.f32 %v6454, %v6454
        %v6471 = vmul.f32 %v6455, %v6455
        %v6472 = vmul.f32 %v6456, %v6456
        %v6473 = vmul.f32 %v6457, %v6457
        %v6474 = vmul.f32 %v6458, %v6458
        %v6475 = vmul.f32 %v6459, %v6459
        %v6476 = vmul.f32 %v6460, %v6460
        %v6477 = vmul.f32 %v6461, %v6461
        %v6478 = vmul.f32 %v6462, %v6462
        %v6479 = vsel %vm1325, %v6463, 0.0
        %6480 = vadd.xlane.f32.xlu0 %v6479
        %v6481 = vpop.xlane.xlu0 %6480
        %v6482 = vsel %vm1325, %v6464, 0.0
        %6483 = vadd.xlane.f32.xlu0 %v6482
        %v6484 = vpop.xlane.xlu0 %6483
        %v6485 = vsel %vm1325, %v6465, 0.0
        %6486 = vadd.xlane.f32.xlu0 %v6485
        %v6487 = vpop.xlane.xlu0 %6486
        %v6488 = vsel %vm1325, %v6466, 0.0
        %6489 = vadd.xlane.f32.xlu0 %v6488
        %v6490 = vpop.xlane.xlu0 %6489
        %v6491 = vsel %vm1325, %v6467, 0.0
        %6492 = vadd.xlane.f32.xlu0 %v6491
        %v6493 = vpop.xlane.xlu0 %6492
        %v6494 = vsel %vm1325, %v6468, 0.0
        %6495 = vadd.xlane.f32.xlu0 %v6494
        %v6496 = vpop.xlane.xlu0 %6495
        %v6497 = vsel %vm1325, %v6469, 0.0
        %6498 = vadd.xlane.f32.xlu0 %v6497
        %v6499 = vpop.xlane.xlu0 %6498
        %v6500 = vsel %vm1325, %v6470, 0.0
        %6501 = vadd.xlane.f32.xlu0 %v6500
        %v6502 = vpop.xlane.xlu0 %6501
        %v6503 = vsel %vm1325, %v6471, 0.0
        %6504 = vadd.xlane.f32.xlu0 %v6503
        %v6505 = vpop.xlane.xlu0 %6504
        %v6506 = vsel %vm1325, %v6472, 0.0
        %6507 = vadd.xlane.f32.xlu0 %v6506
        %v6508 = vpop.xlane.xlu0 %6507
        %v6509 = vsel %vm1325, %v6473, 0.0
        %6510 = vadd.xlane.f32.xlu0 %v6509
        %v6511 = vpop.xlane.xlu0 %6510
        %v6512 = vsel %vm1325, %v6474, 0.0
        %6513 = vadd.xlane.f32.xlu0 %v6512
        %v6514 = vpop.xlane.xlu0 %6513
        %v6515 = vsel %vm1325, %v6475, 0.0
        %6516 = vadd.xlane.f32.xlu0 %v6515
        %v6517 = vpop.xlane.xlu0 %6516
        %v6518 = vsel %vm1325, %v6476, 0.0
        %6519 = vadd.xlane.f32.xlu0 %v6518
        %v6520 = vpop.xlane.xlu0 %6519
        %v6521 = vsel %vm1325, %v6477, 0.0
        %6522 = vadd.xlane.f32.xlu0 %v6521
        %v6523 = vpop.xlane.xlu0 %6522
        %v6524 = vsel %vm1325, %v6478, 0.0
        %6525 = vadd.xlane.f32.xlu0 %v6524
        %v6526 = vpop.xlane.xlu0 %6525
        %v6527 = vmul.f32 %v6481, %v2693
        %v6528 = vmul.f32 %v6484, %v2693
        %v6529 = vmul.f32 %v6487, %v2693
        %v6530 = vmul.f32 %v6490, %v2693
        %v6531 = vmul.f32 %v6493, %v2693
        %v6532 = vmul.f32 %v6496, %v2693
        %v6533 = vmul.f32 %v6499, %v2693
        %v6534 = vmul.f32 %v6502, %v2693
        %v6535 = vmul.f32 %v6505, %v2693
        %v6536 = vmul.f32 %v6508, %v2693
        %v6537 = vmul.f32 %v6511, %v2693
        %v6538 = vmul.f32 %v6514, %v2693
        %v6539 = vmul.f32 %v6517, %v2693
        %v6540 = vmul.f32 %v6520, %v2693
        %v6541 = vmul.f32 %v6523, %v2693
        %v6542 = vmul.f32 %v6526, %v2693
        %v6543 = vadd.f32 %v6527, 1e-05
        %v6544 = vadd.f32 %v6528, 1e-05
        %v6545 = vadd.f32 %v6529, 1e-05
        %v6546 = vadd.f32 %v6530, 1e-05
        %v6547 = vadd.f32 %v6531, 1e-05
        %v6548 = vadd.f32 %v6532, 1e-05
        %v6549 = vadd.f32 %v6533, 1e-05
        %v6550 = vadd.f32 %v6534, 1e-05
        %v6551 = vadd.f32 %v6535, 1e-05
        %v6552 = vadd.f32 %v6536, 1e-05
        %v6553 = vadd.f32 %v6537, 1e-05
        %v6554 = vadd.f32 %v6538, 1e-05
        %v6555 = vadd.f32 %v6539, 1e-05
        %v6556 = vadd.f32 %v6540, 1e-05
        %v6557 = vadd.f32 %v6541, 1e-05
        %v6558 = vadd.f32 %v6542, 1e-05
        %v6559 = vrsqrt.pop %v6543
        %v6560 = vrsqrt.pop %v6544
        %v6561 = vrsqrt.pop %v6545
        %v6562 = vrsqrt.pop %v6546
        %v6563 = vrsqrt.pop %v6547
        %v6564 = vrsqrt.pop %v6548
        %v6565 = vrsqrt.pop %v6549
        %v6566 = vrsqrt.pop %v6550
        %v6567 = vrsqrt.pop %v6551
        %v6568 = vrsqrt.pop %v6552
        %v6569 = vrsqrt.pop %v6553
        %v6570 = vrsqrt.pop %v6554
        %v6571 = vrsqrt.pop %v6555
        %v6572 = vrsqrt.pop %v6556
        %v6573 = vrsqrt.pop %v6557
        %v6574 = vrsqrt.pop %v6558
        %v6575 = vmul.f32 %v6447, %v6559
        %v6576 = vmul.f32 %v6448, %v6560
        %v6577 = vmul.f32 %v6449, %v6561
        %v6578 = vmul.f32 %v6450, %v6562
        %v6579 = vmul.f32 %v6451, %v6563
        %v6580 = vmul.f32 %v6452, %v6564
        %v6581 = vmul.f32 %v6453, %v6565
        %v6582 = vmul.f32 %v6454, %v6566
        %v6583 = vmul.f32 %v6455, %v6567
        %v6584 = vmul.f32 %v6456, %v6568
        %v6585 = vmul.f32 %v6457, %v6569
        %v6586 = vmul.f32 %v6458, %v6570
        %v6587 = vmul.f32 %v6459, %v6571
        %v6588 = vmul.f32 %v6460, %v6572
        %v6589 = vmul.f32 %v6461, %v6573
        %v6590 = vmul.f32 %v6462, %v6574
        %v6591 = vld [vmem:[%s950] sm:$0x1]
        %v6593 = vlaneseq
        %v6594 = vshrl.u32 %v6593, 7
        %v6595 = vsub.s32 0, %v6594
        %v6596 = vrot.slane %v6591, %v6595
        %v6598 = vmul.f32 %v6575, %v6596
        %v6599 = vmul.f32 %v6576, %v6596
        %v6600 = vmul.f32 %v6577, %v6596
        %v6601 = vmul.f32 %v6578, %v6596
        %v6602 = vmul.f32 %v6579, %v6596
        %v6603 = vmul.f32 %v6580, %v6596
        %v6604 = vmul.f32 %v6581, %v6596
        %v6605 = vmul.f32 %v6582, %v6596
        %v6606 = vmul.f32 %v6583, %v6596
        %v6607 = vmul.f32 %v6584, %v6596
        %v6608 = vmul.f32 %v6585, %v6596
        %v6609 = vmul.f32 %v6586, %v6596
        %v6610 = vmul.f32 %v6587, %v6596
        %v6611 = vmul.f32 %v6588, %v6596
        %v6612 = vmul.f32 %v6589, %v6596
        %v6613 = vmul.f32 %v6590, %v6596
        %v6614 = vld [vmem:[%s953] sm:$0x1]
        %v6616 = vlaneseq
        %v6617 = vshrl.u32 %v6616, 7
        %v6618 = vsub.s32 0, %v6617
        %v6619 = vrot.slane %v6614, %v6618
        %v6621 = vadd.f32 %v6598, %v6619
        %v6622 = vadd.f32 %v6599, %v6619
        %v6623 = vadd.f32 %v6600, %v6619
        %v6624 = vadd.f32 %v6601, %v6619
        %v6625 = vadd.f32 %v6602, %v6619
        %v6626 = vadd.f32 %v6603, %v6619
        %v6627 = vadd.f32 %v6604, %v6619
        %v6628 = vadd.f32 %v6605, %v6619
        %v6629 = vadd.f32 %v6606, %v6619
        %v6630 = vadd.f32 %v6607, %v6619
        %v6631 = vadd.f32 %v6608, %v6619
        %v6632 = vadd.f32 %v6609, %v6619
        %v6633 = vadd.f32 %v6610, %v6619
        %v6634 = vadd.f32 %v6611, %v6619
        %v6635 = vadd.f32 %v6612, %v6619
        %v6636 = vadd.f32 %v6613, %v6619
        %6637 = vst.msk [vmem:[#allocation2] sm:$0xff] %vm1325, %v6621
        %6638 = vst.msk [vmem:[#allocation2 + $0x8] sm:$0xff] %vm1325, %v6622
        %6639 = vst.msk [vmem:[#allocation2 + $0x10] sm:$0xff] %vm1325, %v6623
        %6640 = vst.msk [vmem:[#allocation2 + $0x18] sm:$0xff] %vm1325, %v6624
        %6641 = vst.msk [vmem:[#allocation2 + $0x20] sm:$0xff] %vm1325, %v6625
        %6642 = vst.msk [vmem:[#allocation2 + $0x28] sm:$0xff] %vm1325, %v6626
        %6643 = vst.msk [vmem:[#allocation2 + $0x30] sm:$0xff] %vm1325, %v6627
        %6644 = vst.msk [vmem:[#allocation2 + $0x38] sm:$0xff] %vm1325, %v6628
        %6645 = vst.msk [vmem:[#allocation2 + $0x40] sm:$0xff] %vm1325, %v6629
        %6646 = vst.msk [vmem:[#allocation2 + $0x48] sm:$0xff] %vm1325, %v6630
        %6647 = vst.msk [vmem:[#allocation2 + $0x50] sm:$0xff] %vm1325, %v6631
        %6648 = vst.msk [vmem:[#allocation2 + $0x58] sm:$0xff] %vm1325, %v6632
        %6649 = vst.msk [vmem:[#allocation2 + $0x60] sm:$0xff] %vm1325, %v6633
        %6650 = vst.msk [vmem:[#allocation2 + $0x68] sm:$0xff] %vm1325, %v6634
        %6651 = vst.msk [vmem:[#allocation2 + $0x70] sm:$0xff] %vm1325, %v6635
        %6652 = vst.msk [vmem:[#allocation2 + $0x78] sm:$0xff] %vm1325, %v6636
        %p6653 = scmp.eq.s32.totalorder %s39, 10
        // Predicated region
        $region125: #{vit_forward.1} parent=119 // pred_check
          %p6654 = pneg %p6653
        $region126: #{vit_forward.1} parent=119 // pred_check_branch
          %6656 = sbr.rel (%p6654) target = $region128
        $region127: #{vit_forward.1} parent=119 // pred_region
          %v6657 = vsel %vm1325, %v6621, 0.0
          %v6658 = vsel %vm1325, %v6622, 0.0
          %v6659 = vadd.f32 %v6657, %v6658
          %v6660 = vsel %vm1325, %v6623, 0.0
          %v6661 = vadd.f32 %v6659, %v6660
          %v6662 = vsel %vm1325, %v6624, 0.0
          %v6663 = vadd.f32 %v6661, %v6662
          %v6664 = vsel %vm1325, %v6625, 0.0
          %v6665 = vadd.f32 %v6663, %v6664
          %v6666 = vsel %vm1325, %v6626, 0.0
          %v6667 = vadd.f32 %v6665, %v6666
          %v6668 = vsel %vm1325, %v6627, 0.0
          %v6669 = vadd.f32 %v6667, %v6668
          %v6670 = vsel %vm1325, %v6628, 0.0
          %v6671 = vadd.f32 %v6669, %v6670
          %v6672 = vrot.slane %v6671, 4
          %v6673 = vadd.f32 %v6671, %v6672
          %v6674 = vrot.slane %v6673, 2
          %v6675 = vadd.f32 %v6673, %v6674
          %v6676 = vrot.slane %v6675, 1
          %v6677 = vadd.f32 %v6675, %v6676
          %v6678 = vmul.f32 %v6677, %v2693
          %v6679 = vsel %vm1325, %v6629, 0.0
          %v6680 = vsel %vm1325, %v6630, 0.0
          %v6681 = vadd.f32 %v6679, %v6680
          %v6682 = vsel %vm1325, %v6631, 0.0
          %v6683 = vadd.f32 %v6681, %v6682
          %v6684 = vsel %vm1325, %v6632, 0.0
          %v6685 = vadd.f32 %v6683, %v6684
          %v6686 = vsel %vm1325, %v6633, 0.0
          %v6687 = vadd.f32 %v6685, %v6686
          %v6688 = vsel %vm1325, %v6634, 0.0
          %v6689 = vadd.f32 %v6687, %v6688
          %v6690 = vsel %vm1325, %v6635, 0.0
          %v6691 = vadd.f32 %v6689, %v6690
          %v6692 = vsel %vm1325, %v6636, 0.0
          %v6693 = vadd.f32 %v6691, %v6692
          %v6694 = vrot.slane %v6693, 4
          %v6695 = vadd.f32 %v6693, %v6694
          %v6696 = vrot.slane %v6695, 2
          %v6697 = vadd.f32 %v6695, %v6696
          %v6698 = vrot.slane %v6697, 1
          %v6699 = vadd.f32 %v6697, %v6698
          %v6700 = vmul.f32 %v6699, %v2693
          %vm6701 = vcmask 1040384
          %v6702 = vsel %vm6701, %v6678, %v6700
          %v6703 = vpack.c.bf16 %v6702, %v6702
          %v6704 = vld [vmem:[%s19] sm:$0xf]
          %v6705 = vld [vmem:[%s19 + $0x4] sm:$0xf]
          %v6706 = vld [vmem:[%s19 + $0x8] sm:$0xf]
          %v6707 = vld [vmem:[%s19 + $0xc] sm:$0xf]
          %v6708 = vld [vmem:[%s19 + $0x10] sm:$0xf]
          %v6709 = vld [vmem:[%s19 + $0x14] sm:$0xf]
          %v6710 = vld [vmem:[%s19 + $0x18] sm:$0xf]
          %v6711 = vld [vmem:[%s19 + $0x1c] sm:$0xf]
          %v6712 = vld [vmem:[%s20] sm:$0x1]
          %v6714 = vlaneseq
          %v6715 = vshrl.u32 %v6714, 7
          %v6716 = vsub.s32 0, %v6715
          %v6717 = vrot.slane %v6712, %v6716
          %v6727 = vunpack.c.l.b16 %v6704
          %v6728 = vunpack.c.l.b16 %v6705
          %v6729 = vunpack.c.l.b16 %v6706
          %v6730 = vunpack.c.l.b16 %v6707
          %v6731 = vunpack.c.l.b16 %v6708
          %v6732 = vunpack.c.l.b16 %v6709
          %v6733 = vunpack.c.l.b16 %v6710
          %v6734 = vunpack.c.l.b16 %v6711
          %v6735 = vpack.c.b16 %v6728, %v6727
          %v6736 = vpack.c.b16 %v6730, %v6729
          %v6737 = vpack.c.b16 %v6732, %v6731
          %v6738 = vpack.c.b16 %v6734, %v6733
          %v6744 = vsel %vm1325, %v6703, 0
          %6746 = vmatprep.subr.bf16.mxu0 0
          %6747 = vmatpush1.bf16.msra.mxu0 %v6735
          %6748 = vmatprep.subr.bf16.mxu0 0
          %6749 = vmatpush1.bf16.msra.mxu0 %v6736
          %6750 = vmatprep.subr.bf16.mxu0 0
          %6751 = vmatpush1.bf16.msra.mxu0 %v6737
          %6752 = vmatprep.subr.bf16.mxu0 0
          %6753 = vmatpush1.bf16.msra.mxu0 %v6738
          %6754 = vmatprep.subr.bf16.mxu0 0
          %6755 = vmatpush1.bf16.msra.mxu0 0
          %6756 = vmatprep.subr.bf16.mxu0 0
          %6757 = vmatpush1.bf16.msra.mxu0 0
          %6758 = vmatprep.subr.bf16.mxu0 0
          %6759 = vmatpush1.bf16.msra.mxu0 0
          %6760 = vmatprep.subr.bf16.mxu0 0
          %6761 = vmatpush1.bf16.msra.mxu0 0
          %6762 = vmatprep.subr.bf16.mxu0 0
          %6763 = vmatpush1.bf16.msra.mxu0 0
          %6764 = vmatprep.subr.bf16.mxu0 0
          %6765 = vmatpush1.bf16.msra.mxu0 0
          %6766 = vmatprep.subr.bf16.mxu0 0
          %6767 = vmatpush1.bf16.msra.mxu0 0
          %6768 = vmatprep.subr.bf16.mxu0 0
          %6769 = vmatpush1.bf16.msra.mxu0 0
          %6770 = vmatprep.subr.bf16.mxu0 0
          %6771 = vmatpush1.bf16.msra.mxu0 0
          %6772 = vmatprep.subr.bf16.mxu0 0
          %6773 = vmatpush1.bf16.msra.mxu0 0
          %6774 = vmatprep.subr.bf16.mxu0 0
          %6775 = vmatpush1.bf16.msra.mxu0 0
          %6776 = vmatprep.subr.bf16.mxu0 0
          %6777 = vmatpush1.bf16.msra.mxu0 0
          %6778 = vmatprep.mubr.bf16.mxu0 0
          %6779 = vmatmul.mubr.bf16.gmra.mrb[0].mxu0 %v6744
          %v6780 = vpop.f32.mrb[0].mxu0
          %v6781 = vadd.f32 %v6717, %v6780
          %v6782 = vpop.f32.mrb[0].mxu0
          %v6783 = vpop.f32.mrb[0].mxu0
          %v6784 = vpop.f32.mrb[0].mxu0
          %6785 = vdwg.mxu0
          %vm6786 = vcmask 74752
          %6787 = vst.msk [vmem:[#allocation3] sm:$0x3] %vm6786, %v6781
          %v6788 = vpack.c.bf16 %v6622, %v6621
          %v6789 = vpack.c.bf16 %v6624, %v6623
          %v6790 = vpack.c.bf16 %v6626, %v6625
          %v6791 = vpack.c.bf16 %v6628, %v6627
          %v6792 = vpack.c.bf16 %v6630, %v6629
          %v6793 = vpack.c.bf16 %v6632, %v6631
          %v6794 = vpack.c.bf16 %v6634, %v6633
          %v6795 = vpack.c.bf16 %v6636, %v6635
          %v6796 = vld [vmem:[%s21] sm:$0xf]
          %v6797 = vld [vmem:[%s21 + $0x4] sm:$0xf]
          %v6798 = vld [vmem:[%s21 + $0x8] sm:$0xf]
          %v6799 = vld [vmem:[%s21 + $0xc] sm:$0xf]
          %v6800 = vld [vmem:[%s21 + $0x10] sm:$0xf]
          %v6801 = vld [vmem:[%s21 + $0x14] sm:$0xf]
          %v6802 = vld [vmem:[%s21 + $0x18] sm:$0xf]
          %v6803 = vld [vmem:[%s21 + $0x1c] sm:$0xf]
          %v6804 = vld [vmem:[%s22] sm:$0x1]
          %v6806 = vlaneseq
          %v6807 = vshrl.u32 %v6806, 7
          %v6808 = vsub.s32 0, %v6807
          %v6809 = vrot.slane %v6804, %v6808
          %v6819 = vunpack.c.l.b16 %v6796
          %v6820 = vunpack.c.l.b16 %v6797
          %v6821 = vunpack.c.l.b16 %v6798
          %v6822 = vunpack.c.l.b16 %v6799
          %v6823 = vunpack.c.l.b16 %v6800
          %v6824 = vunpack.c.l.b16 %v6801
          %v6825 = vunpack.c.l.b16 %v6802
          %v6826 = vunpack.c.l.b16 %v6803
          %v6827 = vpack.c.b16 %v6820, %v6819
          %v6828 = vpack.c.b16 %v6822, %v6821
          %v6829 = vpack.c.b16 %v6824, %v6823
          %v6830 = vpack.c.b16 %v6826, %v6825
          %v6836 = vsel %vm1325, %v6788, 0
          %v6839 = vsel %vm1325, %v6789, 0
          %v6842 = vsel %vm1325, %v6790, 0
          %v6845 = vsel %vm1325, %v6791, 0
          %v6848 = vsel %vm1325, %v6792, 0
          %v6851 = vsel %vm1325, %v6793, 0
          %v6854 = vsel %vm1325, %v6794, 0
          %v6857 = vsel %vm1325, %v6795, 0
          %6859 = vmatprep.subr.bf16.mxu0 0
          %6860 = vmatpush1.bf16.msra.mxu0 %v6827
          %6861 = vmatprep.subr.bf16.mxu0 0
          %6862 = vmatpush1.bf16.msra.mxu0 %v6828
          %6863 = vmatprep.subr.bf16.mxu0 0
          %6864 = vmatpush1.bf16.msra.mxu0 %v6829
          %6865 = vmatprep.subr.bf16.mxu0 0
          %6866 = vmatpush1.bf16.msra.mxu0 %v6830
          %6867 = vmatprep.subr.bf16.mxu0 0
          %6868 = vmatpush1.bf16.msra.mxu0 0
          %6869 = vmatprep.subr.bf16.mxu0 0
          %6870 = vmatpush1.bf16.msra.mxu0 0
          %6871 = vmatprep.subr.bf16.mxu0 0
          %6872 = vmatpush1.bf16.msra.mxu0 0
          %6873 = vmatprep.subr.bf16.mxu0 0
          %6874 = vmatpush1.bf16.msra.mxu0 0
          %6875 = vmatprep.subr.bf16.mxu0 0
          %6876 = vmatpush1.bf16.msra.mxu0 0
          %6877 = vmatprep.subr.bf16.mxu0 0
          %6878 = vmatpush1.bf16.msra.mxu0 0
          %6879 = vmatprep.subr.bf16.mxu0 0
          %6880 = vmatpush1.bf16.msra.mxu0 0
          %6881 = vmatprep.subr.bf16.mxu0 0
          %6882 = vmatpush1.bf16.msra.mxu0 0
          %6883 = vmatprep.subr.bf16.mxu0 0
          %6884 = vmatpush1.bf16.msra.mxu0 0
          %6885 = vmatprep.subr.bf16.mxu0 0
          %6886 = vmatpush1.bf16.msra.mxu0 0
          %6887 = vmatprep.subr.bf16.mxu0 0
          %6888 = vmatpush1.bf16.msra.mxu0 0
          %6889 = vmatprep.subr.bf16.mxu0 0
          %6890 = vmatpush1.bf16.msra.mxu0 0
          %6891 = vmatprep.mubr.bf16.mxu0 0
          %6892 = vmatmul.mubr.bf16.gmra.mrb[0].mxu0 %v6836
          %v6893 = vpop.f32.mrb[0].mxu0
          %v6894 = vadd.f32 %v6809, %v6893
          %v6895 = vpop.f32.mrb[0].mxu0
          %v6896 = vpop.f32.mrb[0].mxu0
          %v6897 = vadd.f32 %v6809, %v6896
          %v6898 = vpop.f32.mrb[0].mxu0
          %6899 = vmatprep.mubr.bf16.mxu0 0
          %6900 = vmatmul.mubr.bf16.gmra.mrb[0].mxu0 %v6839
          %v6901 = vpop.f32.mrb[0].mxu0
          %v6902 = vadd.f32 %v6809, %v6901
          %v6903 = vpop.f32.mrb[0].mxu0
          %v6904 = vpop.f32.mrb[0].mxu0
          %v6905 = vadd.f32 %v6809, %v6904
          %v6906 = vpop.f32.mrb[0].mxu0
          %6907 = vmatprep.mubr.bf16.mxu0 0
          %6908 = vmatmul.mubr.bf16.gmra.mrb[0].mxu0 %v6842
          %v6909 = vpop.f32.mrb[0].mxu0
          %v6910 = vadd.f32 %v6809, %v6909
          %v6911 = vpop.f32.mrb[0].mxu0
          %v6912 = vpop.f32.mrb[0].mxu0
          %v6913 = vadd.f32 %v6809, %v6912
          %v6914 = vpop.f32.mrb[0].mxu0
          %6915 = vmatprep.mubr.bf16.mxu0 0
          %6916 = vmatmul.mubr.bf16.gmra.mrb[0].mxu0 %v6845
          %v6917 = vpop.f32.mrb[0].mxu0
          %v6918 = vadd.f32 %v6809, %v6917
          %v6919 = vpop.f32.mrb[0].mxu0
          %v6920 = vpop.f32.mrb[0].mxu0
          %v6921 = vadd.f32 %v6809, %v6920
          %v6922 = vpop.f32.mrb[0].mxu0
          %6923 = vmatprep.mubr.bf16.mxu0 0
          %6924 = vmatmul.mubr.bf16.gmra.mrb[0].mxu0 %v6848
          %v6925 = vpop.f32.mrb[0].mxu0
          %v6926 = vadd.f32 %v6809, %v6925
          %v6927 = vpop.f32.mrb[0].mxu0
          %v6928 = vpop.f32.mrb[0].mxu0
          %v6929 = vadd.f32 %v6809, %v6928
          %v6930 = vpop.f32.mrb[0].mxu0
          %6931 = vmatprep.mubr.bf16.mxu0 0
          %6932 = vmatmul.mubr.bf16.gmra.mrb[0].mxu0 %v6851
          %v6933 = vpop.f32.mrb[0].mxu0
          %v6934 = vadd.f32 %v6809, %v6933
          %v6935 = vpop.f32.mrb[0].mxu0
          %v6936 = vpop.f32.mrb[0].mxu0
          %v6937 = vadd.f32 %v6809, %v6936
          %v6938 = vpop.f32.mrb[0].mxu0
          %6939 = vmatprep.mubr.bf16.mxu0 0
          %6940 = vmatmul.mubr.bf16.gmra.mrb[0].mxu0 %v6854
          %v6941 = vpop.f32.mrb[0].mxu0
          %v6942 = vadd.f32 %v6809, %v6941
          %v6943 = vpop.f32.mrb[0].mxu0
          %v6944 = vpop.f32.mrb[0].mxu0
          %v6945 = vadd.f32 %v6809, %v6944
          %v6946 = vpop.f32.mrb[0].mxu0
          %6947 = vmatprep.mubr.bf16.mxu0 0
          %6948 = vmatmul.mubr.bf16.gmra.mrb[0].mxu0 %v6857
          %v6949 = vpop.f32.mrb[0].mxu0
          %v6950 = vadd.f32 %v6809, %v6949
          %v6951 = vpop.f32.mrb[0].mxu0
          %v6952 = vpop.f32.mrb[0].mxu0
          %v6953 = vadd.f32 %v6809, %v6952
          %v6954 = vpop.f32.mrb[0].mxu0
          %6955 = vdwg.mxu0
          %v6956 = vmax.f32 %v6894, 0.0
          %v6957 = vmax.f32 %v6897, 0.0
          %v6958 = vmax.f32 %v6902, 0.0
          %v6959 = vmax.f32 %v6905, 0.0
          %v6960 = vmax.f32 %v6910, 0.0
          %v6961 = vmax.f32 %v6913, 0.0
          %v6962 = vmax.f32 %v6918, 0.0
          %v6963 = vmax.f32 %v6921, 0.0
          %v6964 = vmax.f32 %v6926, 0.0
          %v6965 = vmax.f32 %v6929, 0.0
          %v6966 = vmax.f32 %v6934, 0.0
          %v6967 = vmax.f32 %v6937, 0.0
          %v6968 = vmax.f32 %v6942, 0.0
          %v6969 = vmax.f32 %v6945, 0.0
          %v6970 = vmax.f32 %v6950, 0.0
          %v6971 = vmax.f32 %v6953, 0.0
          %v6972 = vpack.c.bf16 %v6957, %v6956
          %v6973 = vpack.c.bf16 %v6959, %v6958
          %v6974 = vpack.c.bf16 %v6961, %v6960
          %v6975 = vpack.c.bf16 %v6963, %v6962
          %v6976 = vpack.c.bf16 %v6965, %v6964
          %v6977 = vpack.c.bf16 %v6967, %v6966
          %v6978 = vpack.c.bf16 %v6969, %v6968
          %v6979 = vpack.c.bf16 %v6971, %v6970
          %v6980 = vld [vmem:[%s23] sm:$0xf]
          %v6981 = vld [vmem:[%s23 + $0x4] sm:$0xf]
          %v6982 = vld [vmem:[%s23 + $0x8] sm:$0xf]
          %v6983 = vld [vmem:[%s23 + $0xc] sm:$0xf]
          %v6984 = vld [vmem:[%s23 + $0x10] sm:$0xf]
          %v6985 = vld [vmem:[%s23 + $0x14] sm:$0xf]
          %v6986 = vld [vmem:[%s23 + $0x18] sm:$0xf]
          %v6987 = vld [vmem:[%s23 + $0x1c] sm:$0xf]
          %v6988 = vld [vmem:[%s24] sm:$0x1]
          %v6990 = vlaneseq
          %v6991 = vshrl.u32 %v6990, 7
          %v6992 = vsub.s32 0, %v6991
          %v6993 = vrot.slane %v6988, %v6992
          %v7003 = vunpack.c.l.b16 %v6980
          %v7004 = vunpack.c.l.b16 %v6981
          %v7005 = vunpack.c.l.b16 %v6982
          %v7006 = vunpack.c.l.b16 %v6983
          %v7007 = vunpack.c.l.b16 %v6984
          %v7008 = vunpack.c.l.b16 %v6985
          %v7009 = vunpack.c.l.b16 %v6986
          %v7010 = vunpack.c.l.b16 %v6987
          %v7011 = vpack.c.b16 %v7004, %v7003
          %v7012 = vpack.c.b16 %v7006, %v7005
          %v7013 = vpack.c.b16 %v7008, %v7007
          %v7014 = vpack.c.b16 %v7010, %v7009
          %v7020 = vsel %vm1325, %v6972, 0
          %v7023 = vsel %vm1325, %v6973, 0
          %v7026 = vsel %vm1325, %v6974, 0
          %v7029 = vsel %vm1325, %v6975, 0
          %v7032 = vsel %vm1325, %v6976, 0
          %v7035 = vsel %vm1325, %v6977, 0
          %v7038 = vsel %vm1325, %v6978, 0
          %v7041 = vsel %vm1325, %v6979, 0
          %7043 = vmatprep.subr.bf16.mxu0 0
          %7044 = vmatpush1.bf16.msra.mxu0 %v7011
          %7045 = vmatprep.subr.bf16.mxu0 0
          %7046 = vmatpush1.bf16.msra.mxu0 %v7012
          %7047 = vmatprep.subr.bf16.mxu0 0
          %7048 = vmatpush1.bf16.msra.mxu0 %v7013
          %7049 = vmatprep.subr.bf16.mxu0 0
          %7050 = vmatpush1.bf16.msra.mxu0 %v7014
          %7051 = vmatprep.subr.bf16.mxu0 0
          %7052 = vmatpush1.bf16.msra.mxu0 0
          %7053 = vmatprep.subr.bf16.mxu0 0
          %7054 = vmatpush1.bf16.msra.mxu0 0
          %7055 = vmatprep.subr.bf16.mxu0 0
          %7056 = vmatpush1.bf16.msra.mxu0 0
          %7057 = vmatprep.subr.bf16.mxu0 0
          %7058 = vmatpush1.bf16.msra.mxu0 0
          %7059 = vmatprep.subr.bf16.mxu0 0
          %7060 = vmatpush1.bf16.msra.mxu0 0
          %7061 = vmatprep.subr.bf16.mxu0 0
          %7062 = vmatpush1.bf16.msra.mxu0 0
          %7063 = vmatprep.subr.bf16.mxu0 0
          %7064 = vmatpush1.bf16.msra.mxu0 0
          %7065 = vmatprep.subr.bf16.mxu0 0
          %7066 = vmatpush1.bf16.msra.mxu0 0
          %7067 = vmatprep.subr.bf16.mxu0 0
          %7068 = vmatpush1.bf16.msra.mxu0 0
          %7069 = vmatprep.subr.bf16.mxu0 0
          %7070 = vmatpush1.bf16.msra.mxu0 0
          %7071 = vmatprep.subr.bf16.mxu0 0
          %7072 = vmatpush1.bf16.msra.mxu0 0
          %7073 = vmatprep.subr.bf16.mxu0 0
          %7074 = vmatpush1.bf16.msra.mxu0 0
          %7075 = vmatprep.mubr.bf16.mxu0 0
          %7076 = vmatmul.mubr.bf16.gmra.mrb[0].mxu0 %v7020
          %v7077 = vpop.f32.mrb[0].mxu0
          %v7078 = vadd.f32 %v6993, %v7077
          %v7079 = vpop.f32.mrb[0].mxu0
          %v7080 = vpop.f32.mrb[0].mxu0
          %v7081 = vadd.f32 %v6993, %v7080
          %v7082 = vpop.f32.mrb[0].mxu0
          %7083 = vmatprep.mubr.bf16.mxu0 0
          %7084 = vmatmul.mubr.bf16.gmra.mrb[0].mxu0 %v7023
          %v7085 = vpop.f32.mrb[0].mxu0
          %v7086 = vadd.f32 %v6993, %v7085
          %v7087 = vpop.f32.mrb[0].mxu0
          %v7088 = vpop.f32.mrb[0].mxu0
          %v7089 = vadd.f32 %v6993, %v7088
          %v7090 = vpop.f32.mrb[0].mxu0
          %7091 = vmatprep.mubr.bf16.mxu0 0
          %7092 = vmatmul.mubr.bf16.gmra.mrb[0].mxu0 %v7026
          %v7093 = vpop.f32.mrb[0].mxu0
          %v7094 = vadd.f32 %v6993, %v7093
          %v7095 = vpop.f32.mrb[0].mxu0
          %v7096 = vpop.f32.mrb[0].mxu0
          %v7097 = vadd.f32 %v6993, %v7096
          %v7098 = vpop.f32.mrb[0].mxu0
          %7099 = vmatprep.mubr.bf16.mxu0 0
          %7100 = vmatmul.mubr.bf16.gmra.mrb[0].mxu0 %v7029
          %v7101 = vpop.f32.mrb[0].mxu0
          %v7102 = vadd.f32 %v6993, %v7101
          %v7103 = vpop.f32.mrb[0].mxu0
          %v7104 = vpop.f32.mrb[0].mxu0
          %v7105 = vadd.f32 %v6993, %v7104
          %v7106 = vpop.f32.mrb[0].mxu0
          %7107 = vmatprep.mubr.bf16.mxu0 0
          %7108 = vmatmul.mubr.bf16.gmra.mrb[0].mxu0 %v7032
          %v7109 = vpop.f32.mrb[0].mxu0
          %v7110 = vadd.f32 %v6993, %v7109
          %v7111 = vpop.f32.mrb[0].mxu0
          %v7112 = vpop.f32.mrb[0].mxu0
          %v7113 = vadd.f32 %v6993, %v7112
          %v7114 = vpop.f32.mrb[0].mxu0
          %7115 = vmatprep.mubr.bf16.mxu0 0
          %7116 = vmatmul.mubr.bf16.gmra.mrb[0].mxu0 %v7035
          %v7117 = vpop.f32.mrb[0].mxu0
          %v7118 = vadd.f32 %v6993, %v7117
          %v7119 = vpop.f32.mrb[0].mxu0
          %v7120 = vpop.f32.mrb[0].mxu0
          %v7121 = vadd.f32 %v6993, %v7120
          %v7122 = vpop.f32.mrb[0].mxu0
          %7123 = vmatprep.mubr.bf16.mxu0 0
          %7124 = vmatmul.mubr.bf16.gmra.mrb[0].mxu0 %v7038
          %v7125 = vpop.f32.mrb[0].mxu0
          %v7126 = vadd.f32 %v6993, %v7125
          %v7127 = vpop.f32.mrb[0].mxu0
          %v7128 = vpop.f32.mrb[0].mxu0
          %v7129 = vadd.f32 %v6993, %v7128
          %v7130 = vpop.f32.mrb[0].mxu0
          %7131 = vmatprep.mubr.bf16.mxu0 0
          %7132 = vmatmul.mubr.bf16.gmra.mrb[0].mxu0 %v7041
          %v7133 = vpop.f32.mrb[0].mxu0
          %v7134 = vadd.f32 %v6993, %v7133
          %v7135 = vpop.f32.mrb[0].mxu0
          %v7136 = vpop.f32.mrb[0].mxu0
          %v7137 = vadd.f32 %v6993, %v7136
          %v7138 = vpop.f32.mrb[0].mxu0
          %7139 = vdwg.mxu0
          %vm7140 = vcmask 392192
          %7141 = vst.msk [vmem:[%s26] sm:$0xff] %vm7140, %v7078
          %7142 = vst.msk [vmem:[%s26 + $0x8] sm:$0xff] %vm7140, %v7081
          %7143 = vst.msk [vmem:[%s26 + $0x10] sm:$0xff] %vm7140, %v7086
          %7144 = vst.msk [vmem:[%s26 + $0x18] sm:$0xff] %vm7140, %v7089
          %7145 = vst.msk [vmem:[%s26 + $0x20] sm:$0xff] %vm7140, %v7094
          %7146 = vst.msk [vmem:[%s26 + $0x28] sm:$0xff] %vm7140, %v7097
          %7147 = vst.msk [vmem:[%s26 + $0x30] sm:$0xff] %vm7140, %v7102
          %7148 = vst.msk [vmem:[%s26 + $0x38] sm:$0xff] %vm7140, %v7105
          %7149 = vst.msk [vmem:[%s26 + $0x40] sm:$0xff] %vm7140, %v7110
          %7150 = vst.msk [vmem:[%s26 + $0x48] sm:$0xff] %vm7140, %v7113
          %7151 = vst.msk [vmem:[%s26 + $0x50] sm:$0xff] %vm7140, %v7118
          %7152 = vst.msk [vmem:[%s26 + $0x58] sm:$0xff] %vm7140, %v7121
          %7153 = vst.msk [vmem:[%s26 + $0x60] sm:$0xff] %vm7140, %v7126
          %7154 = vst.msk [vmem:[%s26 + $0x68] sm:$0xff] %vm7140, %v7129
          %7155 = vst.msk [vmem:[%s26 + $0x70] sm:$0xff] %vm7140, %v7134
          %7156 = vst.msk [vmem:[%s26 + $0x78] sm:$0xff] %vm7140, %v7137
        $region128: #{vit_forward.1} parent=119 // pred_fallthru
          _
        // Predicated region
        $region129: #{vit_forward.1} parent=119 // pred_check
          %p7157 = pneg %p637
        $region130: #{vit_forward.1} parent=119 // pred_check_branch
          %7159 = sbr.rel (%p7157) target = $region132
        $region131: #{vit_forward.1} parent=119 // pred_region
          %s7161 = ssub.s32 32, 32
          %7162 = vsyncadd [#allocation4], %s7161
          %s7164 = sshll.u32 [#allocation3], 4
          %s7165 = int_to_ptr.vmem [resolvable:$true] %s7164
          %7167 = dma.vmem_to_hbm [thread:$0]  %s7165, 32, %s25, [#allocation4]
        $region132: #{vit_forward.1} parent=119 // pred_fallthru
          _
        // Predicated region
        $region133: #{vit_forward.1} parent=119 // pred_check
          %p7168 = pneg %p658
        $region134: #{vit_forward.1} parent=119 // pred_check_branch
          %7170 = sbr.rel (%p7168) target = $region136
        $region135: #{vit_forward.1} parent=119 // pred_region
          _
        $region136: #{vit_forward.1} parent=119 // pred_fallthru
          _
        // Predicated region
        $region137: #{vit_forward.1} parent=119 // pred_check
          %p7171 = pneg %p637
        $region138: #{vit_forward.1} parent=119 // pred_check_branch
          %7173 = sbr.rel (%p7171) target = $region140
        $region139: #{vit_forward.1} parent=119 // pred_region
          %7174 = dma.done [#allocation4], 32
        $region140: #{vit_forward.1} parent=119 // pred_fallthru
          _
        // Predicated region
        $region141: #{vit_forward.1} parent=119 // pred_check
          %p7175 = pneg %p658
        $region142: #{vit_forward.1} parent=119 // pred_check_branch
          %7177 = sbr.rel (%p7175) target = $region144
        $region143: #{vit_forward.1} parent=119 // pred_region
          _
        $region144: #{vit_forward.1} parent=119 // pred_fallthru
          _
      $region120: #{vit_forward.1} parent=5 // pred_fallthru
        _
      %p7178 = scmp.le.s32.totalorder 2, %s34
      // Predicated region
      $region145: #{vit_forward.1} parent=5 // pred_check
        %p7179 = pneg %p7178
      $region146: #{vit_forward.1} parent=5 // pred_check_branch
        %7181 = sbr.rel (%p7179) target = $region148
      $region147: #{vit_forward.1} parent=5 // pred_region
        %s7182 = ssub.s32 %s34, 2
      $region148: #{vit_forward.1} parent=5 // pred_fallthru
        _
    $region6: #{vit_forward.1} parent=1 // loop_footer
      %s38 = sadd.s32 1, %s34
    $region7: #{vit_forward.1} parent=1 // loop_footer_branch
      %33 = sbr.rel target = $region3
    $region8: #{vit_forward.1} parent=1 // loop_exit
      _
    %7183 = vsyncpa [#allocation4], 1
    %s7184 = scalar_lea.sflag [#allocation4], 1
    %7185 = vsyncpa %s7184, 1

</llo_original>
